<compile_context>
chip_gen: v6e
topology: v6e:2x2x1
jax: 0.10.0
libtpu: 0.0.40
codegen_flags: <defaults>
</compile_context>

<pallas_src>
import jax
import jax.numpy as jnp
from jax.experimental import pallas as pl
from jax.experimental.pallas import tpu as pltpu

CHANNELS = 35
CLASSES = 5
H = W = 28
FEATURES = CHANNELS * H * W            # 27440
_LANE = 128
_SUBLANE = 8
_PADDED_K = pl.cdiv(FEATURES, _LANE) * _LANE   # 27520 (VMEM lane padding)


def _round_up(x, m):
    return ((x + m - 1) // m) * m


def _vmem_capacity_bytes():
    """Per-generation VMEM capacity (falls back to the smallest, v7x's 64 MiB)."""
    try:
        info = pltpu.get_tpu_info()
        cap = getattr(info, "vmem_capacity_bytes", None)
        if cap:
            return int(cap)
    except Exception:
        pass
    return 64 << 20


def classifier_kernel(x_ref, wt_ref, b_ref, o_ref):
    # x_ref : (TB, FEATURES)        one batch tile of flattened activations
    # wt_ref: (CLASSES, FEATURES)   pre-transposed Linear weight (resident across grid)
    # b_ref : (1, CLASSES)          bias (f32)
    # o_ref : (TB, CLASSES)         logits tile (f32)
    acc = jax.lax.dot_general(
        x_ref[...],
        wt_ref[...],
        dimension_numbers=(((1,), (1,)), ((), ())),   # contract the feature axis
        preferred_element_type=jnp.float32,           # f32 accumulation on the MXU
    )
    # TODO(synk): if the Mosaic dump shows a per-step XLU re-transpose of the resident
    # rhs, pre-layout the weight in MXU-native orientation once instead.
    o_ref[...] = (acc + b_ref[...]).astype(o_ref.dtype)


def prepare_classifier_params(weight, bias):
    """One-time parameter prep (do at model init, NOT per forward).

    weight (FEATURES, CLASSES) -> (CLASSES, FEATURES) resident layout; bias -> (1, CLASSES) f32.
    """
    weight_t = jnp.asarray(weight).T
    bias_2d = jnp.asarray(bias).reshape(1, CLASSES).astype(jnp.float32)
    return weight_t, bias_2d


def mynet_classifier(x, weight_t, bias_2d, *, block_b=None):
    """MyNet's own compute: flatten + Linear(27440 -> 5); Dropout = identity at eval.

    x        : (B, FEATURES) flattened base-model activations (f32 or bf16).  A 4D
               NCHW (B, 35, 28, 28) tensor is also accepted and reshaped, but prefer
               having the producer emit the flat (and, optionally, bf16) activation so
               no relayout / convert pass over x is materialized before the kernel.
    weight_t : (CLASSES, FEATURES) pre-transposed weight (see prepare_classifier_params).
    bias_2d  : (1, CLASSES) f32 bias.
    block_b  : batch rows per grid step.  Default: 64 for f32, 128 for bf16 operands
               (portable across v5e / v6e / v7x VMEM budgets; already at HBM roofline).
    """
    if x.ndim == 4:
        # TODO(synk): ideally the external base model emits (B, FEATURES) directly so
        # this reshape is a no-op view; check the HLO for a materialized copy/transpose.
        x = x.reshape(x.shape[0], -1)
    B, K = x.shape
    assert K == FEATURES, f"expected {FEATURES} features, got {K}"
    assert weight_t.shape == (CLASSES, FEATURES)
    assert bias_2d.shape == (1, CLASSES)

    if weight_t.dtype != x.dtype:
        # tiny (5 x 27440) one-off convert so the MXU sees matching operand dtypes
        weight_t = weight_t.astype(x.dtype)

    itemsize = jnp.dtype(x.dtype).itemsize
    if block_b is None:
        block_b = 128 if itemsize <= 2 else 64

    if B > _SUBLANE:
        # keep >= 2 batch tiles so v7x can shard the grid over its 2 TensorCores
        tb = max(_SUBLANE, min(block_b, _round_up(pl.cdiv(B, 2), _SUBLANE)))
    else:
        tb = B                      # single full-extent block for tiny batches
    grid_b = pl.cdiv(B, tb)

    # Generation-aware scoped-VMEM budget: double-buffered x tiles + weight + out + headroom,
    # capped well under the smallest physical VMEM (v7x: 64 MiB / TensorCore).
    x_tile_bytes = tb * _PADDED_K * itemsize
    w_tile_bytes = _SUBLANE * _PADDED_K * jnp.dtype(weight_t.dtype).itemsize
    out_tile_bytes = tb * _LANE * 4
    vmem_cap = _vmem_capacity_bytes()
    vmem_limit = int(min(
        2 * x_tile_bytes + 2 * w_tile_bytes + 2 * out_tile_bytes + (8 << 20),
        (vmem_cap * 7) // 8,
        48 << 20,
    ))

    cost = pl.CostEstimate(
        flops=2 * B * FEATURES * CLASSES,
        transcendentals=0,
        bytes_accessed=(B * FEATURES * itemsize
                        + CLASSES * FEATURES * jnp.dtype(weight_t.dtype).itemsize
                        + B * CLASSES * 4),
    )

    return pl.pallas_call(
        classifier_kernel,
        out_shape=jax.ShapeDtypeStruct((B, CLASSES), jnp.float32),
        grid_spec=pltpu.PrefetchScalarGridSpec(
            num_scalar_prefetch=0,
            grid=(grid_b,),
            in_specs=[
                # x: one batch tile per grid step (pipelined / double-buffered DMA)
                pl.BlockSpec((tb, FEATURES), lambda i: (i, 0)),
                # weight & bias: constant block index -> stay resident across the grid
                pl.BlockSpec((CLASSES, FEATURES), lambda i: (0, 0)),
                pl.BlockSpec((1, CLASSES), lambda i: (0, 0)),
            ],
            out_specs=pl.BlockSpec((tb, CLASSES), lambda i: (i, 0)),
        ),
        compiler_params=pltpu.CompilerParams(
            dimension_semantics=("parallel",),   # independent batch tiles (2 TCs on v7x)
            vmem_limit_bytes=vmem_limit,
        ),
        cost_estimate=cost,
    )(x, weight_t, bias_2d)


if __name__ == "__main__":
    key = jax.random.PRNGKey(0)
    k_x, k_w, k_b, k_x2 = jax.random.split(key, 4)

    # Small example consistent with the module: batch=2 feature maps of (35, 28, 28)
    # produced by the external base model; the flat view is torch's `out.view(B, -1)`.
    B = 2
    x_nchw = jax.random.normal(k_x, (B, CHANNELS, H, W), dtype=jnp.float32)
    x_flat = x_nchw.reshape(B, FEATURES)

    # Deterministic Linear(27440 -> 5) parameters (nn.Linear-style uniform bound).
    bound = 1.0 / jnp.sqrt(jnp.float32(FEATURES))
    weight = jax.random.uniform(k_w, (FEATURES, CLASSES), jnp.float32, -bound, bound)
    bias = jax.random.uniform(k_b, (CLASSES,), jnp.float32, -bound, bound)

    # One-time parameter prep (hoisted out of the per-forward path).
    weight_t, bias_2d = prepare_classifier_params(weight, bias)

    # Plain-JAX reference (flatten + Linear; dropout identity at eval).
    ref = x_flat @ weight + bias

    # f32 path.
    out = jax.block_until_ready(mynet_classifier(x_flat, weight_t, bias_2d))
    assert out.shape == (B, CLASSES)
    assert jnp.allclose(out, ref, atol=1e-3, rtol=1e-3)

    # Multi-tile path (grid >= 2 tiles, partial trailing tile) smoke test.
    B2 = 20
    x2 = jax.random.normal(k_x2, (B2, FEATURES), dtype=jnp.float32)
    ref2 = x2 @ weight + bias
    out2 = jax.block_until_ready(mynet_classifier(x2, weight_t, bias_2d, block_b=8))
    assert out2.shape == (B2, CLASSES)
    assert jnp.allclose(out2, ref2, atol=1e-3, rtol=1e-3)

    # bf16 operand path: the producer (base model) emits bf16 activations; no wrapper-side
    # convert, f32 accumulation stays in-kernel.
    x_bf16 = x_flat.astype(jnp.bfloat16)
    wt_bf16 = weight_t.astype(jnp.bfloat16)
    out_bf16 = jax.block_until_ready(mynet_classifier(x_bf16, wt_bf16, bias_2d))
    assert out_bf16.shape == (B, CLASSES)
    assert jnp.allclose(out_bf16, ref, atol=2e-2, rtol=2e-2)

    print("KERNEL_OK")
</pallas_src>

<mosaic_0001>
module attributes {stable_mosaic.version = 11 : i64} {
  func.func @classifier_kernel(%arg0: i32, %arg1: memref<2x27440xf32, #tpu.memory_space<vmem>>, %arg2: memref<5x27440xf32, #tpu.memory_space<vmem>>, %arg3: memref<1x5xf32, #tpu.memory_space<vmem>>, %arg4: memref<2x5xf32, #tpu.memory_space<vmem>>) attributes {dimension_semantics = [#tpu.dimension_semantics<parallel>], iteration_bounds = array<i64: 1>, scalar_prefetch = 0 : i64, scratch_operands = 0 : i64, tpu.core_type = #tpu.core_type<tc>, window_params = [{transform_indices = @transform_0, window_bounds = array<i64: 2, 27440>}, {pipeline_mode = #tpu.pipeline_mode<synchronous>, transform_indices = @transform_1, window_bounds = array<i64: 5, 27440>}, {pipeline_mode = #tpu.pipeline_mode<synchronous>, transform_indices = @transform_2, window_bounds = array<i64: 1, 5>}, {transform_indices = @transform_3, window_bounds = array<i64: 2, 5>}]} {
    %c0 = arith.constant 0 : index
    %c0_0 = arith.constant 0 : index
    %0 = vector.load %arg1[%c0, %c0_0] : memref<2x27440xf32, #tpu.memory_space<vmem>>, vector<2x27440xf32>
    %c0_1 = arith.constant 0 : index
    %c0_2 = arith.constant 0 : index
    %1 = vector.load %arg2[%c0_1, %c0_2] : memref<5x27440xf32, #tpu.memory_space<vmem>>, vector<5x27440xf32>
    %cst = arith.constant dense<0.000000e+00> : vector<2x5xf32>
    %2 = tpu.matmul %0, %1, %cst {dimension_numbers = #tpu.dot_dimension_numbers<[1], [1], [0], [0], [0, 0, 1, 0], [], []>} : vector<2x27440xf32>, vector<5x27440xf32>, vector<2x5xf32> -> vector<2x5xf32>
    %c0_3 = arith.constant 0 : index
    %c0_4 = arith.constant 0 : index
    %3 = vector.load %arg3[%c0_3, %c0_4] : memref<1x5xf32, #tpu.memory_space<vmem>>, vector<1x5xf32>
    %4 = vector.broadcast %3 : vector<1x5xf32> to vector<2x5xf32>
    %5 = arith.addf %2, %4 : vector<2x5xf32>
    %c0_5 = arith.constant 0 : index
    %c0_6 = arith.constant 0 : index
    %6 = vector.load %arg4[%c0_5, %c0_6] : memref<2x5xf32, #tpu.memory_space<vmem>>, vector<2x5xf32>
    tpu.vector_store %arg4[%c0_5, %c0_6], %5 {strides = array<i32>} : memref<2x5xf32, #tpu.memory_space<vmem>>, vector<2x5xf32>,
    return
  }
  func.func @transform_0(%arg0: i32) -> (i32, i32) {
    %c0_i32 = arith.constant 0 : i32
    %c0_i32_0 = arith.constant 0 : i32
    return %arg0, %c0_i32 : i32, i32
  }
  func.func @transform_1(%arg0: i32) -> (i32, i32) {
    %c0_i32 = arith.constant 0 : i32
    %c0_i32_0 = arith.constant 0 : i32
    %c0_i32_1 = arith.constant 0 : i32
    return %c0_i32, %c0_i32_0 : i32, i32
  }
  func.func @transform_2(%arg0: i32) -> (i32, i32) {
    %c0_i32 = arith.constant 0 : i32
    %c0_i32_0 = arith.constant 0 : i32
    %c0_i32_1 = arith.constant 0 : i32
    return %c0_i32, %c0_i32_0 : i32, i32
  }
  func.func @transform_3(%arg0: i32) -> (i32, i32) {
    %c0_i32 = arith.constant 0 : i32
    %c0_i32_0 = arith.constant 0 : i32
    return %arg0, %c0_i32 : i32, i32
  }
}

</mosaic_0001>

<llo_original>
// kernel: tpu_custom_call.1
$region0: #{tpu_custom_call.1}
  #allocation0 [shape = 'u32[]', space=smem, size = 0x4, offset = 0x4, fixed_abs, tag = 'smem constant byte address 0x4 - core index']
  #allocation1 [shape = 'u32[144,128]{1,0:T(1,128)}', space=vmem, size = 0x12000, scoped, tag = 'internal scratch']
  %s0 = inlined_call_operand.hbm [shape: f32[2,27440], index: 0, kind: input, shape index: {}]
  %s1 = inlined_call_operand.hbm [shape: f32[5,27440], index: 1, kind: input, shape index: {}]
  %s2 = inlined_call_operand.vmem [shape: f32[1,5], index: 2, kind: input, shape index: {}]
  %s3 = inlined_call_operand.hbm [shape: f32[2,5], index: 3, kind: output, shape index: {}]
  %s4 = sld [smem:[#allocation0]]
  $region30: #{tpu_custom_call.1} parent=0
    _
  %s6 = ssub.s32 1, %s4
  %s7 = scalar_select 0, %s6, %s4
  $region1: #{tpu_custom_call.1} parent=0
    #allocation2 [shape = 'u8[220160]{0}', space=vmem, size = 0x35c00, scoped, tag = 'input window, operand 0, single buffered']
    #allocation3 [shape = 's32[1]{0}', space=sflag, size = 0x4, scoped, tag = 'scoped memory for tpu_custom_call.1']
    #allocation4 [shape = 's32[1]{0}', space=sflag, size = 0x4, scoped, tag = 'scoped memory for tpu_custom_call.1']
    #allocation5 [shape = 'u8[880640]{0}', space=vmem, size = 0xd7000, scoped, tag = 'input window, operand 1, single buffered']
    #allocation6 [shape = 's32[1]{0}', space=sflag, size = 0x4, scoped, tag = 'scoped memory for tpu_custom_call.1']
    #allocation7 [shape = 'u8[1024]{0}', space=vmem, size = 0x400, scoped, tag = 'output window, operand 0, single buffered']
    %8 = vsyncpa [#allocation3], 0
    %9 = vsyncpa [#allocation6], 0
    %10 = vsyncpa [#allocation4], 0
    // Predicated region
    $region2: #{tpu_custom_call.1} parent=1 // pred_check
      _
    $region3: #{tpu_custom_call.1} parent=1 // pred_check_branch
      %12 = sbr.rel (0) target = $region5
    $region4: #{tpu_custom_call.1} parent=1 // pred_region
      %s14 = ssub.s32 6880, 6880
      %15 = vsyncadd [#allocation3], %s14
      %s17 = sshll.u32 [#allocation2], 4
      %s18 = int_to_ptr.vmem [resolvable:$true] %s17
      %20 = dma.hbm_to_vmem [thread:$0]  %s0, 6880, %s18, [#allocation3]
    $region5: #{tpu_custom_call.1} parent=1 // pred_fallthru
      _
    // Predicated region
    $region6: #{tpu_custom_call.1} parent=1 // pred_check
      _
    $region7: #{tpu_custom_call.1} parent=1 // pred_check_branch
      %22 = sbr.rel (0) target = $region9
    $region8: #{tpu_custom_call.1} parent=1 // pred_region
      %s24 = ssub.s32 27520, 27520
      %25 = vsyncadd [#allocation6], %s24
      %s27 = sshll.u32 [#allocation5], 4
      %s28 = int_to_ptr.vmem [resolvable:$true] %s27
      %30 = dma.hbm_to_vmem [thread:$0]  %s1, 27520, %s28, [#allocation6]
    $region9: #{tpu_custom_call.1} parent=1 // pred_fallthru
      _
    // Predicated region
    $region10: #{tpu_custom_call.1} parent=1 // pred_check
      _
    $region11: #{tpu_custom_call.1} parent=1 // pred_check_branch
      %32 = sbr.rel (0) target = $region13
    $region12: #{tpu_custom_call.1} parent=1 // pred_region
      _
    $region13: #{tpu_custom_call.1} parent=1 // pred_fallthru
      _
    // Predicated region
    $region14: #{tpu_custom_call.1} parent=1 // pred_check
      _
    $region15: #{tpu_custom_call.1} parent=1 // pred_check_branch
      %34 = sbr.rel (0) target = $region17
    $region16: #{tpu_custom_call.1} parent=1 // pred_region
      %35 = dma.done [#allocation3], 6880
    $region17: #{tpu_custom_call.1} parent=1 // pred_fallthru
      _
    // Predicated region
    $region18: #{tpu_custom_call.1} parent=1 // pred_check
      _
    $region19: #{tpu_custom_call.1} parent=1 // pred_check_branch
      %37 = sbr.rel (0) target = $region21
    $region20: #{tpu_custom_call.1} parent=1 // pred_region
      %38 = dma.done [#allocation6], 27520
    $region21: #{tpu_custom_call.1} parent=1 // pred_fallthru
      _
    %v39 = vld [vmem:[#allocation2] sm:$0xff]
    %v40 = vld [vmem:[#allocation2 + $0x8] sm:$0xff]
    %v41 = vld [vmem:[#allocation2 + $0x10] sm:$0xff]
    %v42 = vld [vmem:[#allocation2 + $0x18] sm:$0xff]
    %v43 = vld [vmem:[#allocation2 + $0x20] sm:$0xff]
    %v44 = vld [vmem:[#allocation2 + $0x28] sm:$0xff]
    %v45 = vld [vmem:[#allocation2 + $0x30] sm:$0xff]
    %v46 = vld [vmem:[#allocation2 + $0x38] sm:$0xff]
    %v47 = vld [vmem:[#allocation2 + $0x40] sm:$0xff]
    %v48 = vld [vmem:[#allocation2 + $0x48] sm:$0xff]
    %v49 = vld [vmem:[#allocation2 + $0x50] sm:$0xff]
    %v50 = vld [vmem:[#allocation2 + $0x58] sm:$0xff]
    %v51 = vld [vmem:[#allocation2 + $0x60] sm:$0xff]
    %v52 = vld [vmem:[#allocation2 + $0x68] sm:$0xff]
    %v53 = vld [vmem:[#allocation2 + $0x70] sm:$0xff]
    %v54 = vld [vmem:[#allocation2 + $0x78] sm:$0xff]
    %v55 = vld [vmem:[#allocation2 + $0x80] sm:$0xff]
    %v56 = vld [vmem:[#allocation2 + $0x88] sm:$0xff]
    %v57 = vld [vmem:[#allocation2 + $0x90] sm:$0xff]
    %v58 = vld [vmem:[#allocation2 + $0x98] sm:$0xff]
    %v59 = vld [vmem:[#allocation2 + $0xa0] sm:$0xff]
    %v60 = vld [vmem:[#allocation2 + $0xa8] sm:$0xff]
    %v61 = vld [vmem:[#allocation2 + $0xb0] sm:$0xff]
    %v62 = vld [vmem:[#allocation2 + $0xb8] sm:$0xff]
    %v63 = vld [vmem:[#allocation2 + $0xc0] sm:$0xff]
    %v64 = vld [vmem:[#allocation2 + $0xc8] sm:$0xff]
    %v65 = vld [vmem:[#allocation2 + $0xd0] sm:$0xff]
    %v66 = vld [vmem:[#allocation2 + $0xd8] sm:$0xff]
    %v67 = vld [vmem:[#allocation2 + $0xe0] sm:$0xff]
    %v68 = vld [vmem:[#allocation2 + $0xe8] sm:$0xff]
    %v69 = vld [vmem:[#allocation2 + $0xf0] sm:$0xff]
    %v70 = vld [vmem:[#allocation2 + $0xf8] sm:$0xff]
    %v71 = vld [vmem:[#allocation2 + $0x100] sm:$0xff]
    %v72 = vld [vmem:[#allocation2 + $0x108] sm:$0xff]
    %v73 = vld [vmem:[#allocation2 + $0x110] sm:$0xff]
    %v74 = vld [vmem:[#allocation2 + $0x118] sm:$0xff]
    %v75 = vld [vmem:[#allocation2 + $0x120] sm:$0xff]
    %v76 = vld [vmem:[#allocation2 + $0x128] sm:$0xff]
    %v77 = vld [vmem:[#allocation2 + $0x130] sm:$0xff]
    %v78 = vld [vmem:[#allocation2 + $0x138] sm:$0xff]
    %v79 = vld [vmem:[#allocation2 + $0x140] sm:$0xff]
    %v80 = vld [vmem:[#allocation2 + $0x148] sm:$0xff]
    %v81 = vld [vmem:[#allocation2 + $0x150] sm:$0xff]
    %v82 = vld [vmem:[#allocation2 + $0x158] sm:$0xff]
    %v83 = vld [vmem:[#allocation2 + $0x160] sm:$0xff]
    %v84 = vld [vmem:[#allocation2 + $0x168] sm:$0xff]
    %v85 = vld [vmem:[#allocation2 + $0x170] sm:$0xff]
    %v86 = vld [vmem:[#allocation2 + $0x178] sm:$0xff]
    %v87 = vld [vmem:[#allocation2 + $0x180] sm:$0xff]
    %v88 = vld [vmem:[#allocation2 + $0x188] sm:$0xff]
    %v89 = vld [vmem:[#allocation2 + $0x190] sm:$0xff]
    %v90 = vld [vmem:[#allocation2 + $0x198] sm:$0xff]
    %v91 = vld [vmem:[#allocation2 + $0x1a0] sm:$0xff]
    %v92 = vld [vmem:[#allocation2 + $0x1a8] sm:$0x3f]
    %v93 = vld [vmem:[#allocation5] sm:$0x1f]
    %v94 = vld [vmem:[#allocation5 + $0x8] sm:$0x1f]
    %v95 = vld [vmem:[#allocation5 + $0x10] sm:$0x1f]
    %v96 = vld [vmem:[#allocation5 + $0x18] sm:$0x1f]
    %v97 = vld [vmem:[#allocation5 + $0x20] sm:$0x1f]
    %v98 = vld [vmem:[#allocation5 + $0x28] sm:$0x1f]
    %v99 = vld [vmem:[#allocation5 + $0x30] sm:$0x1f]
    %v100 = vld [vmem:[#allocation5 + $0x38] sm:$0x1f]
    %v101 = vld [vmem:[#allocation5 + $0x40] sm:$0x1f]
    %v102 = vld [vmem:[#allocation5 + $0x48] sm:$0x1f]
    %v103 = vld [vmem:[#allocation5 + $0x50] sm:$0x1f]
    %v104 = vld [vmem:[#allocation5 + $0x58] sm:$0x1f]
    %v105 = vld [vmem:[#allocation5 + $0x60] sm:$0x1f]
    %v106 = vld [vmem:[#allocation5 + $0x68] sm:$0x1f]
    %v107 = vld [vmem:[#allocation5 + $0x70] sm:$0x1f]
    %v108 = vld [vmem:[#allocation5 + $0x78] sm:$0x1f]
    %v109 = vld [vmem:[#allocation5 + $0x80] sm:$0x1f]
    %v110 = vld [vmem:[#allocation5 + $0x88] sm:$0x1f]
    %v111 = vld [vmem:[#allocation5 + $0x90] sm:$0x1f]
    %v112 = vld [vmem:[#allocation5 + $0x98] sm:$0x1f]
    %v113 = vld [vmem:[#allocation5 + $0xa0] sm:$0x1f]
    %v114 = vld [vmem:[#allocation5 + $0xa8] sm:$0x1f]
    %v115 = vld [vmem:[#allocation5 + $0xb0] sm:$0x1f]
    %v116 = vld [vmem:[#allocation5 + $0xb8] sm:$0x1f]
    %v117 = vld [vmem:[#allocation5 + $0xc0] sm:$0x1f]
    %v118 = vld [vmem:[#allocation5 + $0xc8] sm:$0x1f]
    %v119 = vld [vmem:[#allocation5 + $0xd0] sm:$0x1f]
    %v120 = vld [vmem:[#allocation5 + $0xd8] sm:$0x1f]
    %v121 = vld [vmem:[#allocation5 + $0xe0] sm:$0x1f]
    %v122 = vld [vmem:[#allocation5 + $0xe8] sm:$0x1f]
    %v123 = vld [vmem:[#allocation5 + $0xf0] sm:$0x1f]
    %v124 = vld [vmem:[#allocation5 + $0xf8] sm:$0x1f]
    %v125 = vld [vmem:[#allocation5 + $0x100] sm:$0x1f]
    %v126 = vld [vmem:[#allocation5 + $0x108] sm:$0x1f]
    %v127 = vld [vmem:[#allocation5 + $0x110] sm:$0x1f]
    %v128 = vld [vmem:[#allocation5 + $0x118] sm:$0x1f]
    %v129 = vld [vmem:[#allocation5 + $0x120] sm:$0x1f]
    %v130 = vld [vmem:[#allocation5 + $0x128] sm:$0x1f]
    %v131 = vld [vmem:[#allocation5 + $0x130] sm:$0x1f]
    %v132 = vld [vmem:[#allocation5 + $0x138] sm:$0x1f]
    %v133 = vld [vmem:[#allocation5 + $0x140] sm:$0x1f]
    %v134 = vld [vmem:[#allocation5 + $0x148] sm:$0x1f]
    %v135 = vld [vmem:[#allocation5 + $0x150] sm:$0x1f]
    %v136 = vld [vmem:[#allocation5 + $0x158] sm:$0x1f]
    %v137 = vld [vmem:[#allocation5 + $0x160] sm:$0x1f]
    %v138 = vld [vmem:[#allocation5 + $0x168] sm:$0x1f]
    %v139 = vld [vmem:[#allocation5 + $0x170] sm:$0x1f]
    %v140 = vld [vmem:[#allocation5 + $0x178] sm:$0x1f]
    %v141 = vld [vmem:[#allocation5 + $0x180] sm:$0x1f]
    %v142 = vld [vmem:[#allocation5 + $0x188] sm:$0x1f]
    %v143 = vld [vmem:[#allocation5 + $0x190] sm:$0x1f]
    %v144 = vld [vmem:[#allocation5 + $0x198] sm:$0x1f]
    %v145 = vld [vmem:[#allocation5 + $0x1a0] sm:$0x1f]
    %v146 = vld [vmem:[#allocation5 + $0x1a8] sm:$0x1f]
    %v147 = vld [vmem:[#allocation5 + $0x1b0] sm:$0x1f]
    %v148 = vld [vmem:[#allocation5 + $0x1b8] sm:$0x1f]
    %v149 = vld [vmem:[#allocation5 + $0x1c0] sm:$0x1f]
    %v150 = vld [vmem:[#allocation5 + $0x1c8] sm:$0x1f]
    %v151 = vld [vmem:[#allocation5 + $0x1d0] sm:$0x1f]
    %v152 = vld [vmem:[#allocation5 + $0x1d8] sm:$0x1f]
    %v153 = vld [vmem:[#allocation5 + $0x1e0] sm:$0x1f]
    %v154 = vld [vmem:[#allocation5 + $0x1e8] sm:$0x1f]
    %v155 = vld [vmem:[#allocation5 + $0x1f0] sm:$0x1f]
    %v156 = vld [vmem:[#allocation5 + $0x1f8] sm:$0x1f]
    %v157 = vld [vmem:[#allocation5 + $0x200] sm:$0x1f]
    %v158 = vld [vmem:[#allocation5 + $0x208] sm:$0x1f]
    %v159 = vld [vmem:[#allocation5 + $0x210] sm:$0x1f]
    %v160 = vld [vmem:[#allocation5 + $0x218] sm:$0x1f]
    %v161 = vld [vmem:[#allocation5 + $0x220] sm:$0x1f]
    %v162 = vld [vmem:[#allocation5 + $0x228] sm:$0x1f]
    %v163 = vld [vmem:[#allocation5 + $0x230] sm:$0x1f]
    %v164 = vld [vmem:[#allocation5 + $0x238] sm:$0x1f]
    %v165 = vld [vmem:[#allocation5 + $0x240] sm:$0x1f]
    %v166 = vld [vmem:[#allocation5 + $0x248] sm:$0x1f]
    %v167 = vld [vmem:[#allocation5 + $0x250] sm:$0x1f]
    %v168 = vld [vmem:[#allocation5 + $0x258] sm:$0x1f]
    %v169 = vld [vmem:[#allocation5 + $0x260] sm:$0x1f]
    %v170 = vld [vmem:[#allocation5 + $0x268] sm:$0x1f]
    %v171 = vld [vmem:[#allocation5 + $0x270] sm:$0x1f]
    %v172 = vld [vmem:[#allocation5 + $0x278] sm:$0x1f]
    %v173 = vld [vmem:[#allocation5 + $0x280] sm:$0x1f]
    %v174 = vld [vmem:[#allocation5 + $0x288] sm:$0x1f]
    %v175 = vld [vmem:[#allocation5 + $0x290] sm:$0x1f]
    %v176 = vld [vmem:[#allocation5 + $0x298] sm:$0x1f]
    %v177 = vld [vmem:[#allocation5 + $0x2a0] sm:$0x1f]
    %v178 = vld [vmem:[#allocation5 + $0x2a8] sm:$0x1f]
    %v179 = vld [vmem:[#allocation5 + $0x2b0] sm:$0x1f]
    %v180 = vld [vmem:[#allocation5 + $0x2b8] sm:$0x1f]
    %v181 = vld [vmem:[#allocation5 + $0x2c0] sm:$0x1f]
    %v182 = vld [vmem:[#allocation5 + $0x2c8] sm:$0x1f]
    %v183 = vld [vmem:[#allocation5 + $0x2d0] sm:$0x1f]
    %v184 = vld [vmem:[#allocation5 + $0x2d8] sm:$0x1f]
    %v185 = vld [vmem:[#allocation5 + $0x2e0] sm:$0x1f]
    %v186 = vld [vmem:[#allocation5 + $0x2e8] sm:$0x1f]
    %v187 = vld [vmem:[#allocation5 + $0x2f0] sm:$0x1f]
    %v188 = vld [vmem:[#allocation5 + $0x2f8] sm:$0x1f]
    %v189 = vld [vmem:[#allocation5 + $0x300] sm:$0x1f]
    %v190 = vld [vmem:[#allocation5 + $0x308] sm:$0x1f]
    %v191 = vld [vmem:[#allocation5 + $0x310] sm:$0x1f]
    %v192 = vld [vmem:[#allocation5 + $0x318] sm:$0x1f]
    %v193 = vld [vmem:[#allocation5 + $0x320] sm:$0x1f]
    %v194 = vld [vmem:[#allocation5 + $0x328] sm:$0x1f]
    %v195 = vld [vmem:[#allocation5 + $0x330] sm:$0x1f]
    %v196 = vld [vmem:[#allocation5 + $0x338] sm:$0x1f]
    %v197 = vld [vmem:[#allocation5 + $0x340] sm:$0x1f]
    %v198 = vld [vmem:[#allocation5 + $0x348] sm:$0x1f]
    %v199 = vld [vmem:[#allocation5 + $0x350] sm:$0x1f]
    %v200 = vld [vmem:[#allocation5 + $0x358] sm:$0x1f]
    %v201 = vld [vmem:[#allocation5 + $0x360] sm:$0x1f]
    %v202 = vld [vmem:[#allocation5 + $0x368] sm:$0x1f]
    %v203 = vld [vmem:[#allocation5 + $0x370] sm:$0x1f]
    %v204 = vld [vmem:[#allocation5 + $0x378] sm:$0x1f]
    %v205 = vld [vmem:[#allocation5 + $0x380] sm:$0x1f]
    %v206 = vld [vmem:[#allocation5 + $0x388] sm:$0x1f]
    %v207 = vld [vmem:[#allocation5 + $0x390] sm:$0x1f]
    %v208 = vld [vmem:[#allocation5 + $0x398] sm:$0x1f]
    %v209 = vld [vmem:[#allocation5 + $0x3a0] sm:$0x1f]
    %v210 = vld [vmem:[#allocation5 + $0x3a8] sm:$0x1f]
    %v211 = vld [vmem:[#allocation5 + $0x3b0] sm:$0x1f]
    %v212 = vld [vmem:[#allocation5 + $0x3b8] sm:$0x1f]
    %v213 = vld [vmem:[#allocation5 + $0x3c0] sm:$0x1f]
    %v214 = vld [vmem:[#allocation5 + $0x3c8] sm:$0x1f]
    %v215 = vld [vmem:[#allocation5 + $0x3d0] sm:$0x1f]
    %v216 = vld [vmem:[#allocation5 + $0x3d8] sm:$0x1f]
    %v217 = vld [vmem:[#allocation5 + $0x3e0] sm:$0x1f]
    %v218 = vld [vmem:[#allocation5 + $0x3e8] sm:$0x1f]
    %v219 = vld [vmem:[#allocation5 + $0x3f0] sm:$0x1f]
    %v220 = vld [vmem:[#allocation5 + $0x3f8] sm:$0x1f]
    %v221 = vld [vmem:[#allocation5 + $0x400] sm:$0x1f]
    %v222 = vld [vmem:[#allocation5 + $0x408] sm:$0x1f]
    %v223 = vld [vmem:[#allocation5 + $0x410] sm:$0x1f]
    %v224 = vld [vmem:[#allocation5 + $0x418] sm:$0x1f]
    %v225 = vld [vmem:[#allocation5 + $0x420] sm:$0x1f]
    %v226 = vld [vmem:[#allocation5 + $0x428] sm:$0x1f]
    %v227 = vld [vmem:[#allocation5 + $0x430] sm:$0x1f]
    %v228 = vld [vmem:[#allocation5 + $0x438] sm:$0x1f]
    %v229 = vld [vmem:[#allocation5 + $0x440] sm:$0x1f]
    %v230 = vld [vmem:[#allocation5 + $0x448] sm:$0x1f]
    %v231 = vld [vmem:[#allocation5 + $0x450] sm:$0x1f]
    %v232 = vld [vmem:[#allocation5 + $0x458] sm:$0x1f]
    %v233 = vld [vmem:[#allocation5 + $0x460] sm:$0x1f]
    %v234 = vld [vmem:[#allocation5 + $0x468] sm:$0x1f]
    %v235 = vld [vmem:[#allocation5 + $0x470] sm:$0x1f]
    %v236 = vld [vmem:[#allocation5 + $0x478] sm:$0x1f]
    %v237 = vld [vmem:[#allocation5 + $0x480] sm:$0x1f]
    %v238 = vld [vmem:[#allocation5 + $0x488] sm:$0x1f]
    %v239 = vld [vmem:[#allocation5 + $0x490] sm:$0x1f]
    %v240 = vld [vmem:[#allocation5 + $0x498] sm:$0x1f]
    %v241 = vld [vmem:[#allocation5 + $0x4a0] sm:$0x1f]
    %v242 = vld [vmem:[#allocation5 + $0x4a8] sm:$0x1f]
    %v243 = vld [vmem:[#allocation5 + $0x4b0] sm:$0x1f]
    %v244 = vld [vmem:[#allocation5 + $0x4b8] sm:$0x1f]
    %v245 = vld [vmem:[#allocation5 + $0x4c0] sm:$0x1f]
    %v246 = vld [vmem:[#allocation5 + $0x4c8] sm:$0x1f]
    %v247 = vld [vmem:[#allocation5 + $0x4d0] sm:$0x1f]
    %v248 = vld [vmem:[#allocation5 + $0x4d8] sm:$0x1f]
    %v249 = vld [vmem:[#allocation5 + $0x4e0] sm:$0x1f]
    %v250 = vld [vmem:[#allocation5 + $0x4e8] sm:$0x1f]
    %v251 = vld [vmem:[#allocation5 + $0x4f0] sm:$0x1f]
    %v252 = vld [vmem:[#allocation5 + $0x4f8] sm:$0x1f]
    %v253 = vld [vmem:[#allocation5 + $0x500] sm:$0x1f]
    %v254 = vld [vmem:[#allocation5 + $0x508] sm:$0x1f]
    %v255 = vld [vmem:[#allocation5 + $0x510] sm:$0x1f]
    %v256 = vld [vmem:[#allocation5 + $0x518] sm:$0x1f]
    %v257 = vld [vmem:[#allocation5 + $0x520] sm:$0x1f]
    %v258 = vld [vmem:[#allocation5 + $0x528] sm:$0x1f]
    %v259 = vld [vmem:[#allocation5 + $0x530] sm:$0x1f]
    %v260 = vld [vmem:[#allocation5 + $0x538] sm:$0x1f]
    %v261 = vld [vmem:[#allocation5 + $0x540] sm:$0x1f]
    %v262 = vld [vmem:[#allocation5 + $0x548] sm:$0x1f]
    %v263 = vld [vmem:[#allocation5 + $0x550] sm:$0x1f]
    %v264 = vld [vmem:[#allocation5 + $0x558] sm:$0x1f]
    %v265 = vld [vmem:[#allocation5 + $0x560] sm:$0x1f]
    %v266 = vld [vmem:[#allocation5 + $0x568] sm:$0x1f]
    %v267 = vld [vmem:[#allocation5 + $0x570] sm:$0x1f]
    %v268 = vld [vmem:[#allocation5 + $0x578] sm:$0x1f]
    %v269 = vld [vmem:[#allocation5 + $0x580] sm:$0x1f]
    %v270 = vld [vmem:[#allocation5 + $0x588] sm:$0x1f]
    %v271 = vld [vmem:[#allocation5 + $0x590] sm:$0x1f]
    %v272 = vld [vmem:[#allocation5 + $0x598] sm:$0x1f]
    %v273 = vld [vmem:[#allocation5 + $0x5a0] sm:$0x1f]
    %v274 = vld [vmem:[#allocation5 + $0x5a8] sm:$0x1f]
    %v275 = vld [vmem:[#allocation5 + $0x5b0] sm:$0x1f]
    %v276 = vld [vmem:[#allocation5 + $0x5b8] sm:$0x1f]
    %v277 = vld [vmem:[#allocation5 + $0x5c0] sm:$0x1f]
    %v278 = vld [vmem:[#allocation5 + $0x5c8] sm:$0x1f]
    %v279 = vld [vmem:[#allocation5 + $0x5d0] sm:$0x1f]
    %v280 = vld [vmem:[#allocation5 + $0x5d8] sm:$0x1f]
    %v281 = vld [vmem:[#allocation5 + $0x5e0] sm:$0x1f]
    %v282 = vld [vmem:[#allocation5 + $0x5e8] sm:$0x1f]
    %v283 = vld [vmem:[#allocation5 + $0x5f0] sm:$0x1f]
    %v284 = vld [vmem:[#allocation5 + $0x5f8] sm:$0x1f]
    %v285 = vld [vmem:[#allocation5 + $0x600] sm:$0x1f]
    %v286 = vld [vmem:[#allocation5 + $0x608] sm:$0x1f]
    %v287 = vld [vmem:[#allocation5 + $0x610] sm:$0x1f]
    %v288 = vld [vmem:[#allocation5 + $0x618] sm:$0x1f]
    %v289 = vld [vmem:[#allocation5 + $0x620] sm:$0x1f]
    %v290 = vld [vmem:[#allocation5 + $0x628] sm:$0x1f]
    %v291 = vld [vmem:[#allocation5 + $0x630] sm:$0x1f]
    %v292 = vld [vmem:[#allocation5 + $0x638] sm:$0x1f]
    %v293 = vld [vmem:[#allocation5 + $0x640] sm:$0x1f]
    %v294 = vld [vmem:[#allocation5 + $0x648] sm:$0x1f]
    %v295 = vld [vmem:[#allocation5 + $0x650] sm:$0x1f]
    %v296 = vld [vmem:[#allocation5 + $0x658] sm:$0x1f]
    %v297 = vld [vmem:[#allocation5 + $0x660] sm:$0x1f]
    %v298 = vld [vmem:[#allocation5 + $0x668] sm:$0x1f]
    %v299 = vld [vmem:[#allocation5 + $0x670] sm:$0x1f]
    %v300 = vld [vmem:[#allocation5 + $0x678] sm:$0x1f]
    %v301 = vld [vmem:[#allocation5 + $0x680] sm:$0x1f]
    %v302 = vld [vmem:[#allocation5 + $0x688] sm:$0x1f]
    %v303 = vld [vmem:[#allocation5 + $0x690] sm:$0x1f]
    %v304 = vld [vmem:[#allocation5 + $0x698] sm:$0x1f]
    %v305 = vld [vmem:[#allocation5 + $0x6a0] sm:$0x1f]
    %v306 = vld [vmem:[#allocation5 + $0x6a8] sm:$0x1f]
    %v307 = vld [vmem:[#allocation5 + $0x6b0] sm:$0x1f]
    %v308 = vld [vmem:[%s2] sm:$0x1]
    %v310 = vlaneseq
    %v311 = vshrl.u32 %v310, 7
    %v312 = vsub.s32 0, %v311
    %v313 = vrot.slane %v308, %v312
    %v369 = vcombine.high %v39, %v39
    %v371 = vunpack.c.l.s4 1983009808
    %v372 = vunpack.c.0.s8 %v371
    %v373 = vlaneseq
    %v374 = vshrl.u32 %v373, 7
    %v375 = vsub.s32 %v372, %v374
    %v376 = vrot.slane %v39, %v375
    %v378 = vunpack.c.l.s4 1983009808
    %v379 = vunpack.c.0.s8 %v378
    %v380 = vlaneseq
    %v381 = vshrl.u32 %v380, 7
    %v382 = vsub.s32 %v379, %v381
    %v383 = vrot.slane %v369, %v382
    %v384 = vcombine.high %v376, %v376
    %v385 = vcombine.high %v383, %v383
    %v386 = vcombine.high %v40, %v40
    %v388 = vunpack.c.l.s4 1983009808
    %v389 = vunpack.c.0.s8 %v388
    %v390 = vlaneseq
    %v391 = vshrl.u32 %v390, 7
    %v392 = vsub.s32 %v389, %v391
    %v393 = vrot.slane %v40, %v392
    %v395 = vunpack.c.l.s4 1983009808
    %v396 = vunpack.c.0.s8 %v395
    %v397 = vlaneseq
    %v398 = vshrl.u32 %v397, 7
    %v399 = vsub.s32 %v396, %v398
    %v400 = vrot.slane %v386, %v399
    %v401 = vcombine.high %v393, %v393
    %v402 = vcombine.high %v400, %v400
    %v403 = vcombine.high %v41, %v41
    %v405 = vunpack.c.l.s4 1983009808
    %v406 = vunpack.c.0.s8 %v405
    %v407 = vlaneseq
    %v408 = vshrl.u32 %v407, 7
    %v409 = vsub.s32 %v406, %v408
    %v410 = vrot.slane %v41, %v409
    %v412 = vunpack.c.l.s4 1983009808
    %v413 = vunpack.c.0.s8 %v412
    %v414 = vlaneseq
    %v415 = vshrl.u32 %v414, 7
    %v416 = vsub.s32 %v413, %v415
    %v417 = vrot.slane %v403, %v416
    %v418 = vcombine.high %v410, %v410
    %v419 = vcombine.high %v417, %v417
    %v420 = vcombine.high %v42, %v42
    %v422 = vunpack.c.l.s4 1983009808
    %v423 = vunpack.c.0.s8 %v422
    %v424 = vlaneseq
    %v425 = vshrl.u32 %v424, 7
    %v426 = vsub.s32 %v423, %v425
    %v427 = vrot.slane %v42, %v426
    %v429 = vunpack.c.l.s4 1983009808
    %v430 = vunpack.c.0.s8 %v429
    %v431 = vlaneseq
    %v432 = vshrl.u32 %v431, 7
    %v433 = vsub.s32 %v430, %v432
    %v434 = vrot.slane %v420, %v433
    %v435 = vcombine.high %v427, %v427
    %v436 = vcombine.high %v434, %v434
    %v437 = vcombine.high %v43, %v43
    %v439 = vunpack.c.l.s4 1983009808
    %v440 = vunpack.c.0.s8 %v439
    %v441 = vlaneseq
    %v442 = vshrl.u32 %v441, 7
    %v443 = vsub.s32 %v440, %v442
    %v444 = vrot.slane %v43, %v443
    %v446 = vunpack.c.l.s4 1983009808
    %v447 = vunpack.c.0.s8 %v446
    %v448 = vlaneseq
    %v449 = vshrl.u32 %v448, 7
    %v450 = vsub.s32 %v447, %v449
    %v451 = vrot.slane %v437, %v450
    %v452 = vcombine.high %v444, %v444
    %v453 = vcombine.high %v451, %v451
    %v454 = vcombine.high %v44, %v44
    %v456 = vunpack.c.l.s4 1983009808
    %v457 = vunpack.c.0.s8 %v456
    %v458 = vlaneseq
    %v459 = vshrl.u32 %v458, 7
    %v460 = vsub.s32 %v457, %v459
    %v461 = vrot.slane %v44, %v460
    %v463 = vunpack.c.l.s4 1983009808
    %v464 = vunpack.c.0.s8 %v463
    %v465 = vlaneseq
    %v466 = vshrl.u32 %v465, 7
    %v467 = vsub.s32 %v464, %v466
    %v468 = vrot.slane %v454, %v467
    %v469 = vcombine.high %v461, %v461
    %v470 = vcombine.high %v468, %v468
    %v471 = vcombine.high %v45, %v45
    %v473 = vunpack.c.l.s4 1983009808
    %v474 = vunpack.c.0.s8 %v473
    %v475 = vlaneseq
    %v476 = vshrl.u32 %v475, 7
    %v477 = vsub.s32 %v474, %v476
    %v478 = vrot.slane %v45, %v477
    %v480 = vunpack.c.l.s4 1983009808
    %v481 = vunpack.c.0.s8 %v480
    %v482 = vlaneseq
    %v483 = vshrl.u32 %v482, 7
    %v484 = vsub.s32 %v481, %v483
    %v485 = vrot.slane %v471, %v484
    %v486 = vcombine.high %v478, %v478
    %v487 = vcombine.high %v485, %v485
    %v488 = vcombine.high %v46, %v46
    %v490 = vunpack.c.l.s4 1983009808
    %v491 = vunpack.c.0.s8 %v490
    %v492 = vlaneseq
    %v493 = vshrl.u32 %v492, 7
    %v494 = vsub.s32 %v491, %v493
    %v495 = vrot.slane %v46, %v494
    %v497 = vunpack.c.l.s4 1983009808
    %v498 = vunpack.c.0.s8 %v497
    %v499 = vlaneseq
    %v500 = vshrl.u32 %v499, 7
    %v501 = vsub.s32 %v498, %v500
    %v502 = vrot.slane %v488, %v501
    %v503 = vcombine.high %v495, %v495
    %v504 = vcombine.high %v502, %v502
    %v505 = vcombine.high %v47, %v47
    %v507 = vunpack.c.l.s4 1983009808
    %v508 = vunpack.c.0.s8 %v507
    %v509 = vlaneseq
    %v510 = vshrl.u32 %v509, 7
    %v511 = vsub.s32 %v508, %v510
    %v512 = vrot.slane %v47, %v511
    %v514 = vunpack.c.l.s4 1983009808
    %v515 = vunpack.c.0.s8 %v514
    %v516 = vlaneseq
    %v517 = vshrl.u32 %v516, 7
    %v518 = vsub.s32 %v515, %v517
    %v519 = vrot.slane %v505, %v518
    %v520 = vcombine.high %v512, %v512
    %v521 = vcombine.high %v519, %v519
    %v522 = vcombine.high %v48, %v48
    %v524 = vunpack.c.l.s4 1983009808
    %v525 = vunpack.c.0.s8 %v524
    %v526 = vlaneseq
    %v527 = vshrl.u32 %v526, 7
    %v528 = vsub.s32 %v525, %v527
    %v529 = vrot.slane %v48, %v528
    %v531 = vunpack.c.l.s4 1983009808
    %v532 = vunpack.c.0.s8 %v531
    %v533 = vlaneseq
    %v534 = vshrl.u32 %v533, 7
    %v535 = vsub.s32 %v532, %v534
    %v536 = vrot.slane %v522, %v535
    %v537 = vcombine.high %v529, %v529
    %v538 = vcombine.high %v536, %v536
    %v539 = vcombine.high %v49, %v49
    %v541 = vunpack.c.l.s4 1983009808
    %v542 = vunpack.c.0.s8 %v541
    %v543 = vlaneseq
    %v544 = vshrl.u32 %v543, 7
    %v545 = vsub.s32 %v542, %v544
    %v546 = vrot.slane %v49, %v545
    %v548 = vunpack.c.l.s4 1983009808
    %v549 = vunpack.c.0.s8 %v548
    %v550 = vlaneseq
    %v551 = vshrl.u32 %v550, 7
    %v552 = vsub.s32 %v549, %v551
    %v553 = vrot.slane %v539, %v552
    %v554 = vcombine.high %v546, %v546
    %v555 = vcombine.high %v553, %v553
    %v556 = vcombine.high %v50, %v50
    %v558 = vunpack.c.l.s4 1983009808
    %v559 = vunpack.c.0.s8 %v558
    %v560 = vlaneseq
    %v561 = vshrl.u32 %v560, 7
    %v562 = vsub.s32 %v559, %v561
    %v563 = vrot.slane %v50, %v562
    %v565 = vunpack.c.l.s4 1983009808
    %v566 = vunpack.c.0.s8 %v565
    %v567 = vlaneseq
    %v568 = vshrl.u32 %v567, 7
    %v569 = vsub.s32 %v566, %v568
    %v570 = vrot.slane %v556, %v569
    %v571 = vcombine.high %v563, %v563
    %v572 = vcombine.high %v570, %v570
    %v573 = vcombine.high %v51, %v51
    %v575 = vunpack.c.l.s4 1983009808
    %v576 = vunpack.c.0.s8 %v575
    %v577 = vlaneseq
    %v578 = vshrl.u32 %v577, 7
    %v579 = vsub.s32 %v576, %v578
    %v580 = vrot.slane %v51, %v579
    %v582 = vunpack.c.l.s4 1983009808
    %v583 = vunpack.c.0.s8 %v582
    %v584 = vlaneseq
    %v585 = vshrl.u32 %v584, 7
    %v586 = vsub.s32 %v583, %v585
    %v587 = vrot.slane %v573, %v586
    %v588 = vcombine.high %v580, %v580
    %v589 = vcombine.high %v587, %v587
    %v590 = vcombine.high %v52, %v52
    %v592 = vunpack.c.l.s4 1983009808
    %v593 = vunpack.c.0.s8 %v592
    %v594 = vlaneseq
    %v595 = vshrl.u32 %v594, 7
    %v596 = vsub.s32 %v593, %v595
    %v597 = vrot.slane %v52, %v596
    %v599 = vunpack.c.l.s4 1983009808
    %v600 = vunpack.c.0.s8 %v599
    %v601 = vlaneseq
    %v602 = vshrl.u32 %v601, 7
    %v603 = vsub.s32 %v600, %v602
    %v604 = vrot.slane %v590, %v603
    %v605 = vcombine.high %v597, %v597
    %v606 = vcombine.high %v604, %v604
    %v607 = vcombine.high %v53, %v53
    %v609 = vunpack.c.l.s4 1983009808
    %v610 = vunpack.c.0.s8 %v609
    %v611 = vlaneseq
    %v612 = vshrl.u32 %v611, 7
    %v613 = vsub.s32 %v610, %v612
    %v614 = vrot.slane %v53, %v613
    %v616 = vunpack.c.l.s4 1983009808
    %v617 = vunpack.c.0.s8 %v616
    %v618 = vlaneseq
    %v619 = vshrl.u32 %v618, 7
    %v620 = vsub.s32 %v617, %v619
    %v621 = vrot.slane %v607, %v620
    %v622 = vcombine.high %v614, %v614
    %v623 = vcombine.high %v621, %v621
    %v624 = vcombine.high %v54, %v54
    %v626 = vunpack.c.l.s4 1983009808
    %v627 = vunpack.c.0.s8 %v626
    %v628 = vlaneseq
    %v629 = vshrl.u32 %v628, 7
    %v630 = vsub.s32 %v627, %v629
    %v631 = vrot.slane %v54, %v630
    %v633 = vunpack.c.l.s4 1983009808
    %v634 = vunpack.c.0.s8 %v633
    %v635 = vlaneseq
    %v636 = vshrl.u32 %v635, 7
    %v637 = vsub.s32 %v634, %v636
    %v638 = vrot.slane %v624, %v637
    %v639 = vcombine.high %v631, %v631
    %v640 = vcombine.high %v638, %v638
    %v641 = vcombine.high %v55, %v55
    %v643 = vunpack.c.l.s4 1983009808
    %v644 = vunpack.c.0.s8 %v643
    %v645 = vlaneseq
    %v646 = vshrl.u32 %v645, 7
    %v647 = vsub.s32 %v644, %v646
    %v648 = vrot.slane %v55, %v647
    %v650 = vunpack.c.l.s4 1983009808
    %v651 = vunpack.c.0.s8 %v650
    %v652 = vlaneseq
    %v653 = vshrl.u32 %v652, 7
    %v654 = vsub.s32 %v651, %v653
    %v655 = vrot.slane %v641, %v654
    %v656 = vcombine.high %v648, %v648
    %v657 = vcombine.high %v655, %v655
    %v658 = vcombine.high %v56, %v56
    %v660 = vunpack.c.l.s4 1983009808
    %v661 = vunpack.c.0.s8 %v660
    %v662 = vlaneseq
    %v663 = vshrl.u32 %v662, 7
    %v664 = vsub.s32 %v661, %v663
    %v665 = vrot.slane %v56, %v664
    %v667 = vunpack.c.l.s4 1983009808
    %v668 = vunpack.c.0.s8 %v667
    %v669 = vlaneseq
    %v670 = vshrl.u32 %v669, 7
    %v671 = vsub.s32 %v668, %v670
    %v672 = vrot.slane %v658, %v671
    %v673 = vcombine.high %v665, %v665
    %v674 = vcombine.high %v672, %v672
    %v675 = vcombine.high %v57, %v57
    %v677 = vunpack.c.l.s4 1983009808
    %v678 = vunpack.c.0.s8 %v677
    %v679 = vlaneseq
    %v680 = vshrl.u32 %v679, 7
    %v681 = vsub.s32 %v678, %v680
    %v682 = vrot.slane %v57, %v681
    %v684 = vunpack.c.l.s4 1983009808
    %v685 = vunpack.c.0.s8 %v684
    %v686 = vlaneseq
    %v687 = vshrl.u32 %v686, 7
    %v688 = vsub.s32 %v685, %v687
    %v689 = vrot.slane %v675, %v688
    %v690 = vcombine.high %v682, %v682
    %v691 = vcombine.high %v689, %v689
    %v692 = vcombine.high %v58, %v58
    %v694 = vunpack.c.l.s4 1983009808
    %v695 = vunpack.c.0.s8 %v694
    %v696 = vlaneseq
    %v697 = vshrl.u32 %v696, 7
    %v698 = vsub.s32 %v695, %v697
    %v699 = vrot.slane %v58, %v698
    %v701 = vunpack.c.l.s4 1983009808
    %v702 = vunpack.c.0.s8 %v701
    %v703 = vlaneseq
    %v704 = vshrl.u32 %v703, 7
    %v705 = vsub.s32 %v702, %v704
    %v706 = vrot.slane %v692, %v705
    %v707 = vcombine.high %v699, %v699
    %v708 = vcombine.high %v706, %v706
    %v709 = vcombine.high %v59, %v59
    %v711 = vunpack.c.l.s4 1983009808
    %v712 = vunpack.c.0.s8 %v711
    %v713 = vlaneseq
    %v714 = vshrl.u32 %v713, 7
    %v715 = vsub.s32 %v712, %v714
    %v716 = vrot.slane %v59, %v715
    %v718 = vunpack.c.l.s4 1983009808
    %v719 = vunpack.c.0.s8 %v718
    %v720 = vlaneseq
    %v721 = vshrl.u32 %v720, 7
    %v722 = vsub.s32 %v719, %v721
    %v723 = vrot.slane %v709, %v722
    %v724 = vcombine.high %v716, %v716
    %v725 = vcombine.high %v723, %v723
    %v726 = vcombine.high %v60, %v60
    %v728 = vunpack.c.l.s4 1983009808
    %v729 = vunpack.c.0.s8 %v728
    %v730 = vlaneseq
    %v731 = vshrl.u32 %v730, 7
    %v732 = vsub.s32 %v729, %v731
    %v733 = vrot.slane %v60, %v732
    %v735 = vunpack.c.l.s4 1983009808
    %v736 = vunpack.c.0.s8 %v735
    %v737 = vlaneseq
    %v738 = vshrl.u32 %v737, 7
    %v739 = vsub.s32 %v736, %v738
    %v740 = vrot.slane %v726, %v739
    %v741 = vcombine.high %v733, %v733
    %v742 = vcombine.high %v740, %v740
    %v743 = vcombine.high %v61, %v61
    %v745 = vunpack.c.l.s4 1983009808
    %v746 = vunpack.c.0.s8 %v745
    %v747 = vlaneseq
    %v748 = vshrl.u32 %v747, 7
    %v749 = vsub.s32 %v746, %v748
    %v750 = vrot.slane %v61, %v749
    %v752 = vunpack.c.l.s4 1983009808
    %v753 = vunpack.c.0.s8 %v752
    %v754 = vlaneseq
    %v755 = vshrl.u32 %v754, 7
    %v756 = vsub.s32 %v753, %v755
    %v757 = vrot.slane %v743, %v756
    %v758 = vcombine.high %v750, %v750
    %v759 = vcombine.high %v757, %v757
    %v760 = vcombine.high %v62, %v62
    %v762 = vunpack.c.l.s4 1983009808
    %v763 = vunpack.c.0.s8 %v762
    %v764 = vlaneseq
    %v765 = vshrl.u32 %v764, 7
    %v766 = vsub.s32 %v763, %v765
    %v767 = vrot.slane %v62, %v766
    %v769 = vunpack.c.l.s4 1983009808
    %v770 = vunpack.c.0.s8 %v769
    %v771 = vlaneseq
    %v772 = vshrl.u32 %v771, 7
    %v773 = vsub.s32 %v770, %v772
    %v774 = vrot.slane %v760, %v773
    %v775 = vcombine.high %v767, %v767
    %v776 = vcombine.high %v774, %v774
    %v777 = vcombine.high %v63, %v63
    %v779 = vunpack.c.l.s4 1983009808
    %v780 = vunpack.c.0.s8 %v779
    %v781 = vlaneseq
    %v782 = vshrl.u32 %v781, 7
    %v783 = vsub.s32 %v780, %v782
    %v784 = vrot.slane %v63, %v783
    %v786 = vunpack.c.l.s4 1983009808
    %v787 = vunpack.c.0.s8 %v786
    %v788 = vlaneseq
    %v789 = vshrl.u32 %v788, 7
    %v790 = vsub.s32 %v787, %v789
    %v791 = vrot.slane %v777, %v790
    %v792 = vcombine.high %v784, %v784
    %v793 = vcombine.high %v791, %v791
    %v794 = vcombine.high %v64, %v64
    %v796 = vunpack.c.l.s4 1983009808
    %v797 = vunpack.c.0.s8 %v796
    %v798 = vlaneseq
    %v799 = vshrl.u32 %v798, 7
    %v800 = vsub.s32 %v797, %v799
    %v801 = vrot.slane %v64, %v800
    %v803 = vunpack.c.l.s4 1983009808
    %v804 = vunpack.c.0.s8 %v803
    %v805 = vlaneseq
    %v806 = vshrl.u32 %v805, 7
    %v807 = vsub.s32 %v804, %v806
    %v808 = vrot.slane %v794, %v807
    %v809 = vcombine.high %v801, %v801
    %v810 = vcombine.high %v808, %v808
    %v811 = vcombine.high %v65, %v65
    %v813 = vunpack.c.l.s4 1983009808
    %v814 = vunpack.c.0.s8 %v813
    %v815 = vlaneseq
    %v816 = vshrl.u32 %v815, 7
    %v817 = vsub.s32 %v814, %v816
    %v818 = vrot.slane %v65, %v817
    %v820 = vunpack.c.l.s4 1983009808
    %v821 = vunpack.c.0.s8 %v820
    %v822 = vlaneseq
    %v823 = vshrl.u32 %v822, 7
    %v824 = vsub.s32 %v821, %v823
    %v825 = vrot.slane %v811, %v824
    %v826 = vcombine.high %v818, %v818
    %v827 = vcombine.high %v825, %v825
    %v828 = vcombine.high %v66, %v66
    %v830 = vunpack.c.l.s4 1983009808
    %v831 = vunpack.c.0.s8 %v830
    %v832 = vlaneseq
    %v833 = vshrl.u32 %v832, 7
    %v834 = vsub.s32 %v831, %v833
    %v835 = vrot.slane %v66, %v834
    %v837 = vunpack.c.l.s4 1983009808
    %v838 = vunpack.c.0.s8 %v837
    %v839 = vlaneseq
    %v840 = vshrl.u32 %v839, 7
    %v841 = vsub.s32 %v838, %v840
    %v842 = vrot.slane %v828, %v841
    %v843 = vcombine.high %v835, %v835
    %v844 = vcombine.high %v842, %v842
    %v845 = vcombine.high %v67, %v67
    %v847 = vunpack.c.l.s4 1983009808
    %v848 = vunpack.c.0.s8 %v847
    %v849 = vlaneseq
    %v850 = vshrl.u32 %v849, 7
    %v851 = vsub.s32 %v848, %v850
    %v852 = vrot.slane %v67, %v851
    %v854 = vunpack.c.l.s4 1983009808
    %v855 = vunpack.c.0.s8 %v854
    %v856 = vlaneseq
    %v857 = vshrl.u32 %v856, 7
    %v858 = vsub.s32 %v855, %v857
    %v859 = vrot.slane %v845, %v858
    %v860 = vcombine.high %v852, %v852
    %v861 = vcombine.high %v859, %v859
    %v862 = vcombine.high %v68, %v68
    %v864 = vunpack.c.l.s4 1983009808
    %v865 = vunpack.c.0.s8 %v864
    %v866 = vlaneseq
    %v867 = vshrl.u32 %v866, 7
    %v868 = vsub.s32 %v865, %v867
    %v869 = vrot.slane %v68, %v868
    %v871 = vunpack.c.l.s4 1983009808
    %v872 = vunpack.c.0.s8 %v871
    %v873 = vlaneseq
    %v874 = vshrl.u32 %v873, 7
    %v875 = vsub.s32 %v872, %v874
    %v876 = vrot.slane %v862, %v875
    %v877 = vcombine.high %v869, %v869
    %v878 = vcombine.high %v876, %v876
    %v879 = vcombine.high %v69, %v69
    %v881 = vunpack.c.l.s4 1983009808
    %v882 = vunpack.c.0.s8 %v881
    %v883 = vlaneseq
    %v884 = vshrl.u32 %v883, 7
    %v885 = vsub.s32 %v882, %v884
    %v886 = vrot.slane %v69, %v885
    %v888 = vunpack.c.l.s4 1983009808
    %v889 = vunpack.c.0.s8 %v888
    %v890 = vlaneseq
    %v891 = vshrl.u32 %v890, 7
    %v892 = vsub.s32 %v889, %v891
    %v893 = vrot.slane %v879, %v892
    %v894 = vcombine.high %v886, %v886
    %v895 = vcombine.high %v893, %v893
    %v896 = vcombine.high %v70, %v70
    %v898 = vunpack.c.l.s4 1983009808
    %v899 = vunpack.c.0.s8 %v898
    %v900 = vlaneseq
    %v901 = vshrl.u32 %v900, 7
    %v902 = vsub.s32 %v899, %v901
    %v903 = vrot.slane %v70, %v902
    %v905 = vunpack.c.l.s4 1983009808
    %v906 = vunpack.c.0.s8 %v905
    %v907 = vlaneseq
    %v908 = vshrl.u32 %v907, 7
    %v909 = vsub.s32 %v906, %v908
    %v910 = vrot.slane %v896, %v909
    %v911 = vcombine.high %v903, %v903
    %v912 = vcombine.high %v910, %v910
    %v913 = vcombine.high %v71, %v71
    %v915 = vunpack.c.l.s4 1983009808
    %v916 = vunpack.c.0.s8 %v915
    %v917 = vlaneseq
    %v918 = vshrl.u32 %v917, 7
    %v919 = vsub.s32 %v916, %v918
    %v920 = vrot.slane %v71, %v919
    %v922 = vunpack.c.l.s4 1983009808
    %v923 = vunpack.c.0.s8 %v922
    %v924 = vlaneseq
    %v925 = vshrl.u32 %v924, 7
    %v926 = vsub.s32 %v923, %v925
    %v927 = vrot.slane %v913, %v926
    %v928 = vcombine.high %v920, %v920
    %v929 = vcombine.high %v927, %v927
    %v930 = vcombine.high %v72, %v72
    %v932 = vunpack.c.l.s4 1983009808
    %v933 = vunpack.c.0.s8 %v932
    %v934 = vlaneseq
    %v935 = vshrl.u32 %v934, 7
    %v936 = vsub.s32 %v933, %v935
    %v937 = vrot.slane %v72, %v936
    %v939 = vunpack.c.l.s4 1983009808
    %v940 = vunpack.c.0.s8 %v939
    %v941 = vlaneseq
    %v942 = vshrl.u32 %v941, 7
    %v943 = vsub.s32 %v940, %v942
    %v944 = vrot.slane %v930, %v943
    %v945 = vcombine.high %v937, %v937
    %v946 = vcombine.high %v944, %v944
    %v947 = vcombine.high %v73, %v73
    %v949 = vunpack.c.l.s4 1983009808
    %v950 = vunpack.c.0.s8 %v949
    %v951 = vlaneseq
    %v952 = vshrl.u32 %v951, 7
    %v953 = vsub.s32 %v950, %v952
    %v954 = vrot.slane %v73, %v953
    %v956 = vunpack.c.l.s4 1983009808
    %v957 = vunpack.c.0.s8 %v956
    %v958 = vlaneseq
    %v959 = vshrl.u32 %v958, 7
    %v960 = vsub.s32 %v957, %v959
    %v961 = vrot.slane %v947, %v960
    %v962 = vcombine.high %v954, %v954
    %v963 = vcombine.high %v961, %v961
    %v964 = vcombine.high %v74, %v74
    %v966 = vunpack.c.l.s4 1983009808
    %v967 = vunpack.c.0.s8 %v966
    %v968 = vlaneseq
    %v969 = vshrl.u32 %v968, 7
    %v970 = vsub.s32 %v967, %v969
    %v971 = vrot.slane %v74, %v970
    %v973 = vunpack.c.l.s4 1983009808
    %v974 = vunpack.c.0.s8 %v973
    %v975 = vlaneseq
    %v976 = vshrl.u32 %v975, 7
    %v977 = vsub.s32 %v974, %v976
    %v978 = vrot.slane %v964, %v977
    %v979 = vcombine.high %v971, %v971
    %v980 = vcombine.high %v978, %v978
    %v981 = vcombine.high %v75, %v75
    %v983 = vunpack.c.l.s4 1983009808
    %v984 = vunpack.c.0.s8 %v983
    %v985 = vlaneseq
    %v986 = vshrl.u32 %v985, 7
    %v987 = vsub.s32 %v984, %v986
    %v988 = vrot.slane %v75, %v987
    %v990 = vunpack.c.l.s4 1983009808
    %v991 = vunpack.c.0.s8 %v990
    %v992 = vlaneseq
    %v993 = vshrl.u32 %v992, 7
    %v994 = vsub.s32 %v991, %v993
    %v995 = vrot.slane %v981, %v994
    %v996 = vcombine.high %v988, %v988
    %v997 = vcombine.high %v995, %v995
    %v998 = vcombine.high %v76, %v76
    %v1000 = vunpack.c.l.s4 1983009808
    %v1001 = vunpack.c.0.s8 %v1000
    %v1002 = vlaneseq
    %v1003 = vshrl.u32 %v1002, 7
    %v1004 = vsub.s32 %v1001, %v1003
    %v1005 = vrot.slane %v76, %v1004
    %v1007 = vunpack.c.l.s4 1983009808
    %v1008 = vunpack.c.0.s8 %v1007
    %v1009 = vlaneseq
    %v1010 = vshrl.u32 %v1009, 7
    %v1011 = vsub.s32 %v1008, %v1010
    %v1012 = vrot.slane %v998, %v1011
    %v1013 = vcombine.high %v1005, %v1005
    %v1014 = vcombine.high %v1012, %v1012
    %v1015 = vcombine.high %v77, %v77
    %v1017 = vunpack.c.l.s4 1983009808
    %v1018 = vunpack.c.0.s8 %v1017
    %v1019 = vlaneseq
    %v1020 = vshrl.u32 %v1019, 7
    %v1021 = vsub.s32 %v1018, %v1020
    %v1022 = vrot.slane %v77, %v1021
    %v1024 = vunpack.c.l.s4 1983009808
    %v1025 = vunpack.c.0.s8 %v1024
    %v1026 = vlaneseq
    %v1027 = vshrl.u32 %v1026, 7
    %v1028 = vsub.s32 %v1025, %v1027
    %v1029 = vrot.slane %v1015, %v1028
    %v1030 = vcombine.high %v1022, %v1022
    %v1031 = vcombine.high %v1029, %v1029
    %v1032 = vcombine.high %v78, %v78
    %v1034 = vunpack.c.l.s4 1983009808
    %v1035 = vunpack.c.0.s8 %v1034
    %v1036 = vlaneseq
    %v1037 = vshrl.u32 %v1036, 7
    %v1038 = vsub.s32 %v1035, %v1037
    %v1039 = vrot.slane %v78, %v1038
    %v1041 = vunpack.c.l.s4 1983009808
    %v1042 = vunpack.c.0.s8 %v1041
    %v1043 = vlaneseq
    %v1044 = vshrl.u32 %v1043, 7
    %v1045 = vsub.s32 %v1042, %v1044
    %v1046 = vrot.slane %v1032, %v1045
    %v1047 = vcombine.high %v1039, %v1039
    %v1048 = vcombine.high %v1046, %v1046
    %v1049 = vcombine.high %v79, %v79
    %v1051 = vunpack.c.l.s4 1983009808
    %v1052 = vunpack.c.0.s8 %v1051
    %v1053 = vlaneseq
    %v1054 = vshrl.u32 %v1053, 7
    %v1055 = vsub.s32 %v1052, %v1054
    %v1056 = vrot.slane %v79, %v1055
    %v1058 = vunpack.c.l.s4 1983009808
    %v1059 = vunpack.c.0.s8 %v1058
    %v1060 = vlaneseq
    %v1061 = vshrl.u32 %v1060, 7
    %v1062 = vsub.s32 %v1059, %v1061
    %v1063 = vrot.slane %v1049, %v1062
    %v1064 = vcombine.high %v1056, %v1056
    %v1065 = vcombine.high %v1063, %v1063
    %v1066 = vcombine.high %v80, %v80
    %v1068 = vunpack.c.l.s4 1983009808
    %v1069 = vunpack.c.0.s8 %v1068
    %v1070 = vlaneseq
    %v1071 = vshrl.u32 %v1070, 7
    %v1072 = vsub.s32 %v1069, %v1071
    %v1073 = vrot.slane %v80, %v1072
    %v1075 = vunpack.c.l.s4 1983009808
    %v1076 = vunpack.c.0.s8 %v1075
    %v1077 = vlaneseq
    %v1078 = vshrl.u32 %v1077, 7
    %v1079 = vsub.s32 %v1076, %v1078
    %v1080 = vrot.slane %v1066, %v1079
    %v1081 = vcombine.high %v1073, %v1073
    %v1082 = vcombine.high %v1080, %v1080
    %v1083 = vcombine.high %v81, %v81
    %v1085 = vunpack.c.l.s4 1983009808
    %v1086 = vunpack.c.0.s8 %v1085
    %v1087 = vlaneseq
    %v1088 = vshrl.u32 %v1087, 7
    %v1089 = vsub.s32 %v1086, %v1088
    %v1090 = vrot.slane %v81, %v1089
    %v1092 = vunpack.c.l.s4 1983009808
    %v1093 = vunpack.c.0.s8 %v1092
    %v1094 = vlaneseq
    %v1095 = vshrl.u32 %v1094, 7
    %v1096 = vsub.s32 %v1093, %v1095
    %v1097 = vrot.slane %v1083, %v1096
    %v1098 = vcombine.high %v1090, %v1090
    %v1099 = vcombine.high %v1097, %v1097
    %v1100 = vcombine.high %v82, %v82
    %v1102 = vunpack.c.l.s4 1983009808
    %v1103 = vunpack.c.0.s8 %v1102
    %v1104 = vlaneseq
    %v1105 = vshrl.u32 %v1104, 7
    %v1106 = vsub.s32 %v1103, %v1105
    %v1107 = vrot.slane %v82, %v1106
    %v1109 = vunpack.c.l.s4 1983009808
    %v1110 = vunpack.c.0.s8 %v1109
    %v1111 = vlaneseq
    %v1112 = vshrl.u32 %v1111, 7
    %v1113 = vsub.s32 %v1110, %v1112
    %v1114 = vrot.slane %v1100, %v1113
    %v1115 = vcombine.high %v1107, %v1107
    %v1116 = vcombine.high %v1114, %v1114
    %v1117 = vcombine.high %v83, %v83
    %v1119 = vunpack.c.l.s4 1983009808
    %v1120 = vunpack.c.0.s8 %v1119
    %v1121 = vlaneseq
    %v1122 = vshrl.u32 %v1121, 7
    %v1123 = vsub.s32 %v1120, %v1122
    %v1124 = vrot.slane %v83, %v1123
    %v1126 = vunpack.c.l.s4 1983009808
    %v1127 = vunpack.c.0.s8 %v1126
    %v1128 = vlaneseq
    %v1129 = vshrl.u32 %v1128, 7
    %v1130 = vsub.s32 %v1127, %v1129
    %v1131 = vrot.slane %v1117, %v1130
    %v1132 = vcombine.high %v1124, %v1124
    %v1133 = vcombine.high %v1131, %v1131
    %v1134 = vcombine.high %v84, %v84
    %v1136 = vunpack.c.l.s4 1983009808
    %v1137 = vunpack.c.0.s8 %v1136
    %v1138 = vlaneseq
    %v1139 = vshrl.u32 %v1138, 7
    %v1140 = vsub.s32 %v1137, %v1139
    %v1141 = vrot.slane %v84, %v1140
    %v1143 = vunpack.c.l.s4 1983009808
    %v1144 = vunpack.c.0.s8 %v1143
    %v1145 = vlaneseq
    %v1146 = vshrl.u32 %v1145, 7
    %v1147 = vsub.s32 %v1144, %v1146
    %v1148 = vrot.slane %v1134, %v1147
    %v1149 = vcombine.high %v1141, %v1141
    %v1150 = vcombine.high %v1148, %v1148
    %v1151 = vcombine.high %v85, %v85
    %v1153 = vunpack.c.l.s4 1983009808
    %v1154 = vunpack.c.0.s8 %v1153
    %v1155 = vlaneseq
    %v1156 = vshrl.u32 %v1155, 7
    %v1157 = vsub.s32 %v1154, %v1156
    %v1158 = vrot.slane %v85, %v1157
    %v1160 = vunpack.c.l.s4 1983009808
    %v1161 = vunpack.c.0.s8 %v1160
    %v1162 = vlaneseq
    %v1163 = vshrl.u32 %v1162, 7
    %v1164 = vsub.s32 %v1161, %v1163
    %v1165 = vrot.slane %v1151, %v1164
    %v1166 = vcombine.high %v1158, %v1158
    %v1167 = vcombine.high %v1165, %v1165
    %v1168 = vcombine.high %v86, %v86
    %v1170 = vunpack.c.l.s4 1983009808
    %v1171 = vunpack.c.0.s8 %v1170
    %v1172 = vlaneseq
    %v1173 = vshrl.u32 %v1172, 7
    %v1174 = vsub.s32 %v1171, %v1173
    %v1175 = vrot.slane %v86, %v1174
    %v1177 = vunpack.c.l.s4 1983009808
    %v1178 = vunpack.c.0.s8 %v1177
    %v1179 = vlaneseq
    %v1180 = vshrl.u32 %v1179, 7
    %v1181 = vsub.s32 %v1178, %v1180
    %v1182 = vrot.slane %v1168, %v1181
    %v1183 = vcombine.high %v1175, %v1175
    %v1184 = vcombine.high %v1182, %v1182
    %v1185 = vcombine.high %v87, %v87
    %v1187 = vunpack.c.l.s4 1983009808
    %v1188 = vunpack.c.0.s8 %v1187
    %v1189 = vlaneseq
    %v1190 = vshrl.u32 %v1189, 7
    %v1191 = vsub.s32 %v1188, %v1190
    %v1192 = vrot.slane %v87, %v1191
    %v1194 = vunpack.c.l.s4 1983009808
    %v1195 = vunpack.c.0.s8 %v1194
    %v1196 = vlaneseq
    %v1197 = vshrl.u32 %v1196, 7
    %v1198 = vsub.s32 %v1195, %v1197
    %v1199 = vrot.slane %v1185, %v1198
    %v1200 = vcombine.high %v1192, %v1192
    %v1201 = vcombine.high %v1199, %v1199
    %v1202 = vcombine.high %v88, %v88
    %v1204 = vunpack.c.l.s4 1983009808
    %v1205 = vunpack.c.0.s8 %v1204
    %v1206 = vlaneseq
    %v1207 = vshrl.u32 %v1206, 7
    %v1208 = vsub.s32 %v1205, %v1207
    %v1209 = vrot.slane %v88, %v1208
    %v1211 = vunpack.c.l.s4 1983009808
    %v1212 = vunpack.c.0.s8 %v1211
    %v1213 = vlaneseq
    %v1214 = vshrl.u32 %v1213, 7
    %v1215 = vsub.s32 %v1212, %v1214
    %v1216 = vrot.slane %v1202, %v1215
    %v1217 = vcombine.high %v1209, %v1209
    %v1218 = vcombine.high %v1216, %v1216
    %v1219 = vcombine.high %v89, %v89
    %v1221 = vunpack.c.l.s4 1983009808
    %v1222 = vunpack.c.0.s8 %v1221
    %v1223 = vlaneseq
    %v1224 = vshrl.u32 %v1223, 7
    %v1225 = vsub.s32 %v1222, %v1224
    %v1226 = vrot.slane %v89, %v1225
    %v1228 = vunpack.c.l.s4 1983009808
    %v1229 = vunpack.c.0.s8 %v1228
    %v1230 = vlaneseq
    %v1231 = vshrl.u32 %v1230, 7
    %v1232 = vsub.s32 %v1229, %v1231
    %v1233 = vrot.slane %v1219, %v1232
    %v1234 = vcombine.high %v1226, %v1226
    %v1235 = vcombine.high %v1233, %v1233
    %v1236 = vcombine.high %v90, %v90
    %v1238 = vunpack.c.l.s4 1983009808
    %v1239 = vunpack.c.0.s8 %v1238
    %v1240 = vlaneseq
    %v1241 = vshrl.u32 %v1240, 7
    %v1242 = vsub.s32 %v1239, %v1241
    %v1243 = vrot.slane %v90, %v1242
    %v1245 = vunpack.c.l.s4 1983009808
    %v1246 = vunpack.c.0.s8 %v1245
    %v1247 = vlaneseq
    %v1248 = vshrl.u32 %v1247, 7
    %v1249 = vsub.s32 %v1246, %v1248
    %v1250 = vrot.slane %v1236, %v1249
    %v1251 = vcombine.high %v1243, %v1243
    %v1252 = vcombine.high %v1250, %v1250
    %v1253 = vcombine.high %v91, %v91
    %v1255 = vunpack.c.l.s4 1983009808
    %v1256 = vunpack.c.0.s8 %v1255
    %v1257 = vlaneseq
    %v1258 = vshrl.u32 %v1257, 7
    %v1259 = vsub.s32 %v1256, %v1258
    %v1260 = vrot.slane %v91, %v1259
    %v1262 = vunpack.c.l.s4 1983009808
    %v1263 = vunpack.c.0.s8 %v1262
    %v1264 = vlaneseq
    %v1265 = vshrl.u32 %v1264, 7
    %v1266 = vsub.s32 %v1263, %v1265
    %v1267 = vrot.slane %v1253, %v1266
    %v1268 = vcombine.high %v1260, %v1260
    %v1269 = vcombine.high %v1267, %v1267
    %v1270 = vcombine.high %v92, %v92
    %v1272 = vunpack.c.l.s4 1983009808
    %v1273 = vunpack.c.0.s8 %v1272
    %v1274 = vlaneseq
    %v1275 = vshrl.u32 %v1274, 7
    %v1276 = vsub.s32 %v1273, %v1275
    %v1277 = vrot.slane %v92, %v1276
    %v1279 = vunpack.c.l.s4 1983009808
    %v1280 = vunpack.c.0.s8 %v1279
    %v1281 = vlaneseq
    %v1282 = vshrl.u32 %v1281, 7
    %v1283 = vsub.s32 %v1280, %v1282
    %v1284 = vrot.slane %v1270, %v1283
    %v1285 = vcombine.high %v1277, %v1277
    %vm1500 = vcmask 392192
    %v1501 = vsel %vm1500, %v1284, 0
    %v1504 = vsel %vm1500, %v307, 0
    %1506 = vmatprep.subr.mxu0 0.0
    %1507 = vmatpush1.xpose.msra.mxu0 0.0
    %1508 = vmatprep.subr.mxu0 0.0
    %1509 = vmatpush1.xpose.msra.mxu0 0.0
    %1510 = vmatprep.subr.mxu0 0.0
    %1511 = vmatpush1.xpose.msra.mxu0 0.0
    %1512 = vmatprep.subr.mxu0 0.0
    %1513 = vmatpush1.xpose.msra.mxu0 0.0
    %1514 = vmatprep.subr.mxu0 0.0
    %1515 = vmatpush1.xpose.msra.mxu0 0.0
    %1516 = vmatprep.subr.mxu0 0.0
    %1517 = vmatpush1.xpose.msra.mxu0 0.0
    %1518 = vmatprep.subr.mxu0 0.0
    %1519 = vmatpush1.xpose.msra.mxu0 0.0
    %1520 = vmatprep.subr.mxu0 0.0
    %1521 = vmatpush1.xpose.msra.mxu0 0.0
    %1522 = vmatprep.subr.mxu0 0.0
    %1523 = vmatpush1.xpose.msra.mxu0 0.0
    %1524 = vmatprep.subr.mxu0 0.0
    %1525 = vmatpush1.xpose.msra.mxu0 0.0
    %1526 = vmatprep.subr.mxu0 0.0
    %1527 = vmatpush1.xpose.msra.mxu0 0.0
    %1528 = vmatprep.subr.mxu0 0.0
    %1529 = vmatpush1.xpose.msra.mxu0 0.0
    %1530 = vmatprep.subr.mxu0 0.0
    %1531 = vmatpush1.xpose.msra.mxu0 0.0
    %1532 = vmatprep.subr.mxu0 0.0
    %1533 = vmatpush1.xpose.msra.mxu0 0.0
    %1534 = vmatprep.subr.mxu0 0.0
    %1535 = vmatpush1.xpose.msra.mxu0 0.0
    %1536 = vmatprep.subr.mxu0 %v94
    %1537 = vmatpush1.xpose.msra.mxu0 %v93
    %1538 = vmatprep.subr.mxu0 0.0
    %1539 = vmatpush2.xpose.msra.mxu0 0.0
    %1540 = vmatprep.subr.mxu0 0.0
    %1541 = vmatpush2.xpose.msra.mxu0 0.0
    %1542 = vmatprep.subr.mxu0 0.0
    %1543 = vmatpush2.xpose.msra.mxu0 0.0
    %1544 = vmatprep.subr.mxu0 0.0
    %1545 = vmatpush2.xpose.msra.mxu0 0.0
    %1546 = vmatprep.subr.mxu0 0.0
    %1547 = vmatpush2.xpose.msra.mxu0 0.0
    %1548 = vmatprep.subr.mxu0 0.0
    %1549 = vmatpush2.xpose.msra.mxu0 0.0
    %1550 = vmatprep.subr.mxu0 0.0
    %1551 = vmatpush2.xpose.msra.mxu0 0.0
    %1552 = vmatprep.subr.mxu0 0.0
    %1553 = vmatpush2.xpose.msra.mxu0 0.0
    %1554 = vmatprep.subr.mxu0 0.0
    %1555 = vmatpush2.xpose.msra.mxu0 0.0
    %1556 = vmatprep.subr.mxu0 0.0
    %1557 = vmatpush2.xpose.msra.mxu0 0.0
    %1558 = vmatprep.subr.mxu0 0.0
    %1559 = vmatpush2.xpose.msra.mxu0 0.0
    %1560 = vmatprep.subr.mxu0 0.0
    %1561 = vmatpush2.xpose.msra.mxu0 0.0
    %1562 = vmatprep.subr.mxu0 0.0
    %1563 = vmatpush2.xpose.msra.mxu0 0.0
    %1564 = vmatprep.subr.mxu0 0.0
    %1565 = vmatpush2.xpose.msra.mxu0 0.0
    %1566 = vmatprep.subr.mxu0 0.0
    %1567 = vmatpush2.xpose.msra.mxu0 0.0
    %1568 = vmatprep.subr.mxu0 0.0
    %1569 = vmatpush2.xpose.msra.mxu0 0.0
    %1570 = vmatprep.mubr.f32.mxu0 %v384
    %1571 = vmatmul.mubr.f32.gmra.mxu0 %v376
    %v1572 = vpop.f32.mrf.mxu0
    %v1573 = vadd.f32 %v313, %v1572
    %v1574 = vpop.f32.mrf.mxu0
    %1575 = vdwg.mxu0
    %1576 = vmatprep.subr.mxu0 0.0
    %1577 = vmatpush1.xpose.msra.mxu0 0.0
    %1578 = vmatprep.subr.mxu0 0.0
    %1579 = vmatpush1.xpose.msra.mxu0 0.0
    %1580 = vmatprep.subr.mxu0 0.0
    %1581 = vmatpush1.xpose.msra.mxu0 0.0
    %1582 = vmatprep.subr.mxu0 0.0
    %1583 = vmatpush1.xpose.msra.mxu0 0.0
    %1584 = vmatprep.subr.mxu0 0.0
    %1585 = vmatpush1.xpose.msra.mxu0 0.0
    %1586 = vmatprep.subr.mxu0 0.0
    %1587 = vmatpush1.xpose.msra.mxu0 0.0
    %1588 = vmatprep.subr.mxu0 0.0
    %1589 = vmatpush1.xpose.msra.mxu0 0.0
    %1590 = vmatprep.subr.mxu0 0.0
    %1591 = vmatpush1.xpose.msra.mxu0 0.0
    %1592 = vmatprep.subr.mxu0 0.0
    %1593 = vmatpush1.xpose.msra.mxu0 0.0
    %1594 = vmatprep.subr.mxu0 0.0
    %1595 = vmatpush1.xpose.msra.mxu0 0.0
    %1596 = vmatprep.subr.mxu0 0.0
    %1597 = vmatpush1.xpose.msra.mxu0 0.0
    %1598 = vmatprep.subr.mxu0 0.0
    %1599 = vmatpush1.xpose.msra.mxu0 0.0
    %1600 = vmatprep.subr.mxu0 0.0
    %1601 = vmatpush1.xpose.msra.mxu0 0.0
    %1602 = vmatprep.subr.mxu0 0.0
    %1603 = vmatpush1.xpose.msra.mxu0 0.0
    %1604 = vmatprep.subr.mxu0 0.0
    %1605 = vmatpush1.xpose.msra.mxu0 0.0
    %1606 = vmatprep.subr.mxu0 %v96
    %1607 = vmatpush1.xpose.msra.mxu0 %v95
    %1608 = vmatprep.subr.mxu0 0.0
    %1609 = vmatpush2.xpose.msra.mxu0 0.0
    %1610 = vmatprep.subr.mxu0 0.0
    %1611 = vmatpush2.xpose.msra.mxu0 0.0
    %1612 = vmatprep.subr.mxu0 0.0
    %1613 = vmatpush2.xpose.msra.mxu0 0.0
    %1614 = vmatprep.subr.mxu0 0.0
    %1615 = vmatpush2.xpose.msra.mxu0 0.0
    %1616 = vmatprep.subr.mxu0 0.0
    %1617 = vmatpush2.xpose.msra.mxu0 0.0
    %1618 = vmatprep.subr.mxu0 0.0
    %1619 = vmatpush2.xpose.msra.mxu0 0.0
    %1620 = vmatprep.subr.mxu0 0.0
    %1621 = vmatpush2.xpose.msra.mxu0 0.0
    %1622 = vmatprep.subr.mxu0 0.0
    %1623 = vmatpush2.xpose.msra.mxu0 0.0
    %1624 = vmatprep.subr.mxu0 0.0
    %1625 = vmatpush2.xpose.msra.mxu0 0.0
    %1626 = vmatprep.subr.mxu0 0.0
    %1627 = vmatpush2.xpose.msra.mxu0 0.0
    %1628 = vmatprep.subr.mxu0 0.0
    %1629 = vmatpush2.xpose.msra.mxu0 0.0
    %1630 = vmatprep.subr.mxu0 0.0
    %1631 = vmatpush2.xpose.msra.mxu0 0.0
    %1632 = vmatprep.subr.mxu0 0.0
    %1633 = vmatpush2.xpose.msra.mxu0 0.0
    %1634 = vmatprep.subr.mxu0 0.0
    %1635 = vmatpush2.xpose.msra.mxu0 0.0
    %1636 = vmatprep.subr.mxu0 0.0
    %1637 = vmatpush2.xpose.msra.mxu0 0.0
    %1638 = vmatprep.subr.mxu0 0.0
    %1639 = vmatpush2.xpose.msra.mxu0 0.0
    %1640 = vmatprep.mubr.f32.mxu0 %v385
    %1641 = vmatmul.mubr.f32.gmra.mxu0 %v383
    %v1642 = vpop.f32.mrf.mxu0
    %v1643 = vadd.f32 %v1573, %v1642
    %v1644 = vpop.f32.mrf.mxu0
    %1645 = vdwg.mxu0
    %1646 = vmatprep.subr.mxu0 0.0
    %1647 = vmatpush1.xpose.msra.mxu0 0.0
    %1648 = vmatprep.subr.mxu0 0.0
    %1649 = vmatpush1.xpose.msra.mxu0 0.0
    %1650 = vmatprep.subr.mxu0 0.0
    %1651 = vmatpush1.xpose.msra.mxu0 0.0
    %1652 = vmatprep.subr.mxu0 0.0
    %1653 = vmatpush1.xpose.msra.mxu0 0.0
    %1654 = vmatprep.subr.mxu0 0.0
    %1655 = vmatpush1.xpose.msra.mxu0 0.0
    %1656 = vmatprep.subr.mxu0 0.0
    %1657 = vmatpush1.xpose.msra.mxu0 0.0
    %1658 = vmatprep.subr.mxu0 0.0
    %1659 = vmatpush1.xpose.msra.mxu0 0.0
    %1660 = vmatprep.subr.mxu0 0.0
    %1661 = vmatpush1.xpose.msra.mxu0 0.0
    %1662 = vmatprep.subr.mxu0 0.0
    %1663 = vmatpush1.xpose.msra.mxu0 0.0
    %1664 = vmatprep.subr.mxu0 0.0
    %1665 = vmatpush1.xpose.msra.mxu0 0.0
    %1666 = vmatprep.subr.mxu0 0.0
    %1667 = vmatpush1.xpose.msra.mxu0 0.0
    %1668 = vmatprep.subr.mxu0 0.0
    %1669 = vmatpush1.xpose.msra.mxu0 0.0
    %1670 = vmatprep.subr.mxu0 0.0
    %1671 = vmatpush1.xpose.msra.mxu0 0.0
    %1672 = vmatprep.subr.mxu0 0.0
    %1673 = vmatpush1.xpose.msra.mxu0 0.0
    %1674 = vmatprep.subr.mxu0 0.0
    %1675 = vmatpush1.xpose.msra.mxu0 0.0
    %1676 = vmatprep.subr.mxu0 %v98
    %1677 = vmatpush1.xpose.msra.mxu0 %v97
    %1678 = vmatprep.subr.mxu0 0.0
    %1679 = vmatpush2.xpose.msra.mxu0 0.0
    %1680 = vmatprep.subr.mxu0 0.0
    %1681 = vmatpush2.xpose.msra.mxu0 0.0
    %1682 = vmatprep.subr.mxu0 0.0
    %1683 = vmatpush2.xpose.msra.mxu0 0.0
    %1684 = vmatprep.subr.mxu0 0.0
    %1685 = vmatpush2.xpose.msra.mxu0 0.0
    %1686 = vmatprep.subr.mxu0 0.0
    %1687 = vmatpush2.xpose.msra.mxu0 0.0
    %1688 = vmatprep.subr.mxu0 0.0
    %1689 = vmatpush2.xpose.msra.mxu0 0.0
    %1690 = vmatprep.subr.mxu0 0.0
    %1691 = vmatpush2.xpose.msra.mxu0 0.0
    %1692 = vmatprep.subr.mxu0 0.0
    %1693 = vmatpush2.xpose.msra.mxu0 0.0
    %1694 = vmatprep.subr.mxu0 0.0
    %1695 = vmatpush2.xpose.msra.mxu0 0.0
    %1696 = vmatprep.subr.mxu0 0.0
    %1697 = vmatpush2.xpose.msra.mxu0 0.0
    %1698 = vmatprep.subr.mxu0 0.0
    %1699 = vmatpush2.xpose.msra.mxu0 0.0
    %1700 = vmatprep.subr.mxu0 0.0
    %1701 = vmatpush2.xpose.msra.mxu0 0.0
    %1702 = vmatprep.subr.mxu0 0.0
    %1703 = vmatpush2.xpose.msra.mxu0 0.0
    %1704 = vmatprep.subr.mxu0 0.0
    %1705 = vmatpush2.xpose.msra.mxu0 0.0
    %1706 = vmatprep.subr.mxu0 0.0
    %1707 = vmatpush2.xpose.msra.mxu0 0.0
    %1708 = vmatprep.subr.mxu0 0.0
    %1709 = vmatpush2.xpose.msra.mxu0 0.0
    %1710 = vmatprep.mubr.f32.mxu0 %v401
    %1711 = vmatmul.mubr.f32.gmra.mxu0 %v393
    %v1712 = vpop.f32.mrf.mxu0
    %v1713 = vadd.f32 %v1643, %v1712
    %v1714 = vpop.f32.mrf.mxu0
    %1715 = vdwg.mxu0
    %1716 = vmatprep.subr.mxu0 0.0
    %1717 = vmatpush1.xpose.msra.mxu0 0.0
    %1718 = vmatprep.subr.mxu0 0.0
    %1719 = vmatpush1.xpose.msra.mxu0 0.0
    %1720 = vmatprep.subr.mxu0 0.0
    %1721 = vmatpush1.xpose.msra.mxu0 0.0
    %1722 = vmatprep.subr.mxu0 0.0
    %1723 = vmatpush1.xpose.msra.mxu0 0.0
    %1724 = vmatprep.subr.mxu0 0.0
    %1725 = vmatpush1.xpose.msra.mxu0 0.0
    %1726 = vmatprep.subr.mxu0 0.0
    %1727 = vmatpush1.xpose.msra.mxu0 0.0
    %1728 = vmatprep.subr.mxu0 0.0
    %1729 = vmatpush1.xpose.msra.mxu0 0.0
    %1730 = vmatprep.subr.mxu0 0.0
    %1731 = vmatpush1.xpose.msra.mxu0 0.0
    %1732 = vmatprep.subr.mxu0 0.0
    %1733 = vmatpush1.xpose.msra.mxu0 0.0
    %1734 = vmatprep.subr.mxu0 0.0
    %1735 = vmatpush1.xpose.msra.mxu0 0.0
    %1736 = vmatprep.subr.mxu0 0.0
    %1737 = vmatpush1.xpose.msra.mxu0 0.0
    %1738 = vmatprep.subr.mxu0 0.0
    %1739 = vmatpush1.xpose.msra.mxu0 0.0
    %1740 = vmatprep.subr.mxu0 0.0
    %1741 = vmatpush1.xpose.msra.mxu0 0.0
    %1742 = vmatprep.subr.mxu0 0.0
    %1743 = vmatpush1.xpose.msra.mxu0 0.0
    %1744 = vmatprep.subr.mxu0 0.0
    %1745 = vmatpush1.xpose.msra.mxu0 0.0
    %1746 = vmatprep.subr.mxu0 %v100
    %1747 = vmatpush1.xpose.msra.mxu0 %v99
    %1748 = vmatprep.subr.mxu0 0.0
    %1749 = vmatpush2.xpose.msra.mxu0 0.0
    %1750 = vmatprep.subr.mxu0 0.0
    %1751 = vmatpush2.xpose.msra.mxu0 0.0
    %1752 = vmatprep.subr.mxu0 0.0
    %1753 = vmatpush2.xpose.msra.mxu0 0.0
    %1754 = vmatprep.subr.mxu0 0.0
    %1755 = vmatpush2.xpose.msra.mxu0 0.0
    %1756 = vmatprep.subr.mxu0 0.0
    %1757 = vmatpush2.xpose.msra.mxu0 0.0
    %1758 = vmatprep.subr.mxu0 0.0
    %1759 = vmatpush2.xpose.msra.mxu0 0.0
    %1760 = vmatprep.subr.mxu0 0.0
    %1761 = vmatpush2.xpose.msra.mxu0 0.0
    %1762 = vmatprep.subr.mxu0 0.0
    %1763 = vmatpush2.xpose.msra.mxu0 0.0
    %1764 = vmatprep.subr.mxu0 0.0
    %1765 = vmatpush2.xpose.msra.mxu0 0.0
    %1766 = vmatprep.subr.mxu0 0.0
    %1767 = vmatpush2.xpose.msra.mxu0 0.0
    %1768 = vmatprep.subr.mxu0 0.0
    %1769 = vmatpush2.xpose.msra.mxu0 0.0
    %1770 = vmatprep.subr.mxu0 0.0
    %1771 = vmatpush2.xpose.msra.mxu0 0.0
    %1772 = vmatprep.subr.mxu0 0.0
    %1773 = vmatpush2.xpose.msra.mxu0 0.0
    %1774 = vmatprep.subr.mxu0 0.0
    %1775 = vmatpush2.xpose.msra.mxu0 0.0
    %1776 = vmatprep.subr.mxu0 0.0
    %1777 = vmatpush2.xpose.msra.mxu0 0.0
    %1778 = vmatprep.subr.mxu0 0.0
    %1779 = vmatpush2.xpose.msra.mxu0 0.0
    %1780 = vmatprep.mubr.f32.mxu0 %v402
    %1781 = vmatmul.mubr.f32.gmra.mxu0 %v400
    %v1782 = vpop.f32.mrf.mxu0
    %v1783 = vadd.f32 %v1713, %v1782
    %v1784 = vpop.f32.mrf.mxu0
    %1785 = vdwg.mxu0
    %1786 = vmatprep.subr.mxu0 0.0
    %1787 = vmatpush1.xpose.msra.mxu0 0.0
    %1788 = vmatprep.subr.mxu0 0.0
    %1789 = vmatpush1.xpose.msra.mxu0 0.0
    %1790 = vmatprep.subr.mxu0 0.0
    %1791 = vmatpush1.xpose.msra.mxu0 0.0
    %1792 = vmatprep.subr.mxu0 0.0
    %1793 = vmatpush1.xpose.msra.mxu0 0.0
    %1794 = vmatprep.subr.mxu0 0.0
    %1795 = vmatpush1.xpose.msra.mxu0 0.0
    %1796 = vmatprep.subr.mxu0 0.0
    %1797 = vmatpush1.xpose.msra.mxu0 0.0
    %1798 = vmatprep.subr.mxu0 0.0
    %1799 = vmatpush1.xpose.msra.mxu0 0.0
    %1800 = vmatprep.subr.mxu0 0.0
    %1801 = vmatpush1.xpose.msra.mxu0 0.0
    %1802 = vmatprep.subr.mxu0 0.0
    %1803 = vmatpush1.xpose.msra.mxu0 0.0
    %1804 = vmatprep.subr.mxu0 0.0
    %1805 = vmatpush1.xpose.msra.mxu0 0.0
    %1806 = vmatprep.subr.mxu0 0.0
    %1807 = vmatpush1.xpose.msra.mxu0 0.0
    %1808 = vmatprep.subr.mxu0 0.0
    %1809 = vmatpush1.xpose.msra.mxu0 0.0
    %1810 = vmatprep.subr.mxu0 0.0
    %1811 = vmatpush1.xpose.msra.mxu0 0.0
    %1812 = vmatprep.subr.mxu0 0.0
    %1813 = vmatpush1.xpose.msra.mxu0 0.0
    %1814 = vmatprep.subr.mxu0 0.0
    %1815 = vmatpush1.xpose.msra.mxu0 0.0
    %1816 = vmatprep.subr.mxu0 %v102
    %1817 = vmatpush1.xpose.msra.mxu0 %v101
    %1818 = vmatprep.subr.mxu0 0.0
    %1819 = vmatpush2.xpose.msra.mxu0 0.0
    %1820 = vmatprep.subr.mxu0 0.0
    %1821 = vmatpush2.xpose.msra.mxu0 0.0
    %1822 = vmatprep.subr.mxu0 0.0
    %1823 = vmatpush2.xpose.msra.mxu0 0.0
    %1824 = vmatprep.subr.mxu0 0.0
    %1825 = vmatpush2.xpose.msra.mxu0 0.0
    %1826 = vmatprep.subr.mxu0 0.0
    %1827 = vmatpush2.xpose.msra.mxu0 0.0
    %1828 = vmatprep.subr.mxu0 0.0
    %1829 = vmatpush2.xpose.msra.mxu0 0.0
    %1830 = vmatprep.subr.mxu0 0.0
    %1831 = vmatpush2.xpose.msra.mxu0 0.0
    %1832 = vmatprep.subr.mxu0 0.0
    %1833 = vmatpush2.xpose.msra.mxu0 0.0
    %1834 = vmatprep.subr.mxu0 0.0
    %1835 = vmatpush2.xpose.msra.mxu0 0.0
    %1836 = vmatprep.subr.mxu0 0.0
    %1837 = vmatpush2.xpose.msra.mxu0 0.0
    %1838 = vmatprep.subr.mxu0 0.0
    %1839 = vmatpush2.xpose.msra.mxu0 0.0
    %1840 = vmatprep.subr.mxu0 0.0
    %1841 = vmatpush2.xpose.msra.mxu0 0.0
    %1842 = vmatprep.subr.mxu0 0.0
    %1843 = vmatpush2.xpose.msra.mxu0 0.0
    %1844 = vmatprep.subr.mxu0 0.0
    %1845 = vmatpush2.xpose.msra.mxu0 0.0
    %1846 = vmatprep.subr.mxu0 0.0
    %1847 = vmatpush2.xpose.msra.mxu0 0.0
    %1848 = vmatprep.subr.mxu0 0.0
    %1849 = vmatpush2.xpose.msra.mxu0 0.0
    %1850 = vmatprep.mubr.f32.mxu0 %v418
    %1851 = vmatmul.mubr.f32.gmra.mxu0 %v410
    %v1852 = vpop.f32.mrf.mxu0
    %v1853 = vadd.f32 %v1783, %v1852
    %v1854 = vpop.f32.mrf.mxu0
    %1855 = vdwg.mxu0
    %1856 = vmatprep.subr.mxu0 0.0
    %1857 = vmatpush1.xpose.msra.mxu0 0.0
    %1858 = vmatprep.subr.mxu0 0.0
    %1859 = vmatpush1.xpose.msra.mxu0 0.0
    %1860 = vmatprep.subr.mxu0 0.0
    %1861 = vmatpush1.xpose.msra.mxu0 0.0
    %1862 = vmatprep.subr.mxu0 0.0
    %1863 = vmatpush1.xpose.msra.mxu0 0.0
    %1864 = vmatprep.subr.mxu0 0.0
    %1865 = vmatpush1.xpose.msra.mxu0 0.0
    %1866 = vmatprep.subr.mxu0 0.0
    %1867 = vmatpush1.xpose.msra.mxu0 0.0
    %1868 = vmatprep.subr.mxu0 0.0
    %1869 = vmatpush1.xpose.msra.mxu0 0.0
    %1870 = vmatprep.subr.mxu0 0.0
    %1871 = vmatpush1.xpose.msra.mxu0 0.0
    %1872 = vmatprep.subr.mxu0 0.0
    %1873 = vmatpush1.xpose.msra.mxu0 0.0
    %1874 = vmatprep.subr.mxu0 0.0
    %1875 = vmatpush1.xpose.msra.mxu0 0.0
    %1876 = vmatprep.subr.mxu0 0.0
    %1877 = vmatpush1.xpose.msra.mxu0 0.0
    %1878 = vmatprep.subr.mxu0 0.0
    %1879 = vmatpush1.xpose.msra.mxu0 0.0
    %1880 = vmatprep.subr.mxu0 0.0
    %1881 = vmatpush1.xpose.msra.mxu0 0.0
    %1882 = vmatprep.subr.mxu0 0.0
    %1883 = vmatpush1.xpose.msra.mxu0 0.0
    %1884 = vmatprep.subr.mxu0 0.0
    %1885 = vmatpush1.xpose.msra.mxu0 0.0
    %1886 = vmatprep.subr.mxu0 %v104
    %1887 = vmatpush1.xpose.msra.mxu0 %v103
    %1888 = vmatprep.subr.mxu0 0.0
    %1889 = vmatpush2.xpose.msra.mxu0 0.0
    %1890 = vmatprep.subr.mxu0 0.0
    %1891 = vmatpush2.xpose.msra.mxu0 0.0
    %1892 = vmatprep.subr.mxu0 0.0
    %1893 = vmatpush2.xpose.msra.mxu0 0.0
    %1894 = vmatprep.subr.mxu0 0.0
    %1895 = vmatpush2.xpose.msra.mxu0 0.0
    %1896 = vmatprep.subr.mxu0 0.0
    %1897 = vmatpush2.xpose.msra.mxu0 0.0
    %1898 = vmatprep.subr.mxu0 0.0
    %1899 = vmatpush2.xpose.msra.mxu0 0.0
    %1900 = vmatprep.subr.mxu0 0.0
    %1901 = vmatpush2.xpose.msra.mxu0 0.0
    %1902 = vmatprep.subr.mxu0 0.0
    %1903 = vmatpush2.xpose.msra.mxu0 0.0
    %1904 = vmatprep.subr.mxu0 0.0
    %1905 = vmatpush2.xpose.msra.mxu0 0.0
    %1906 = vmatprep.subr.mxu0 0.0
    %1907 = vmatpush2.xpose.msra.mxu0 0.0
    %1908 = vmatprep.subr.mxu0 0.0
    %1909 = vmatpush2.xpose.msra.mxu0 0.0
    %1910 = vmatprep.subr.mxu0 0.0
    %1911 = vmatpush2.xpose.msra.mxu0 0.0
    %1912 = vmatprep.subr.mxu0 0.0
    %1913 = vmatpush2.xpose.msra.mxu0 0.0
    %1914 = vmatprep.subr.mxu0 0.0
    %1915 = vmatpush2.xpose.msra.mxu0 0.0
    %1916 = vmatprep.subr.mxu0 0.0
    %1917 = vmatpush2.xpose.msra.mxu0 0.0
    %1918 = vmatprep.subr.mxu0 0.0
    %1919 = vmatpush2.xpose.msra.mxu0 0.0
    %1920 = vmatprep.mubr.f32.mxu0 %v419
    %1921 = vmatmul.mubr.f32.gmra.mxu0 %v417
    %v1922 = vpop.f32.mrf.mxu0
    %v1923 = vadd.f32 %v1853, %v1922
    %v1924 = vpop.f32.mrf.mxu0
    %1925 = vdwg.mxu0
    %1926 = vmatprep.subr.mxu0 0.0
    %1927 = vmatpush1.xpose.msra.mxu0 0.0
    %1928 = vmatprep.subr.mxu0 0.0
    %1929 = vmatpush1.xpose.msra.mxu0 0.0
    %1930 = vmatprep.subr.mxu0 0.0
    %1931 = vmatpush1.xpose.msra.mxu0 0.0
    %1932 = vmatprep.subr.mxu0 0.0
    %1933 = vmatpush1.xpose.msra.mxu0 0.0
    %1934 = vmatprep.subr.mxu0 0.0
    %1935 = vmatpush1.xpose.msra.mxu0 0.0
    %1936 = vmatprep.subr.mxu0 0.0
    %1937 = vmatpush1.xpose.msra.mxu0 0.0
    %1938 = vmatprep.subr.mxu0 0.0
    %1939 = vmatpush1.xpose.msra.mxu0 0.0
    %1940 = vmatprep.subr.mxu0 0.0
    %1941 = vmatpush1.xpose.msra.mxu0 0.0
    %1942 = vmatprep.subr.mxu0 0.0
    %1943 = vmatpush1.xpose.msra.mxu0 0.0
    %1944 = vmatprep.subr.mxu0 0.0
    %1945 = vmatpush1.xpose.msra.mxu0 0.0
    %1946 = vmatprep.subr.mxu0 0.0
    %1947 = vmatpush1.xpose.msra.mxu0 0.0
    %1948 = vmatprep.subr.mxu0 0.0
    %1949 = vmatpush1.xpose.msra.mxu0 0.0
    %1950 = vmatprep.subr.mxu0 0.0
    %1951 = vmatpush1.xpose.msra.mxu0 0.0
    %1952 = vmatprep.subr.mxu0 0.0
    %1953 = vmatpush1.xpose.msra.mxu0 0.0
    %1954 = vmatprep.subr.mxu0 0.0
    %1955 = vmatpush1.xpose.msra.mxu0 0.0
    %1956 = vmatprep.subr.mxu0 %v106
    %1957 = vmatpush1.xpose.msra.mxu0 %v105
    %1958 = vmatprep.subr.mxu0 0.0
    %1959 = vmatpush2.xpose.msra.mxu0 0.0
    %1960 = vmatprep.subr.mxu0 0.0
    %1961 = vmatpush2.xpose.msra.mxu0 0.0
    %1962 = vmatprep.subr.mxu0 0.0
    %1963 = vmatpush2.xpose.msra.mxu0 0.0
    %1964 = vmatprep.subr.mxu0 0.0
    %1965 = vmatpush2.xpose.msra.mxu0 0.0
    %1966 = vmatprep.subr.mxu0 0.0
    %1967 = vmatpush2.xpose.msra.mxu0 0.0
    %1968 = vmatprep.subr.mxu0 0.0
    %1969 = vmatpush2.xpose.msra.mxu0 0.0
    %1970 = vmatprep.subr.mxu0 0.0
    %1971 = vmatpush2.xpose.msra.mxu0 0.0
    %1972 = vmatprep.subr.mxu0 0.0
    %1973 = vmatpush2.xpose.msra.mxu0 0.0
    %1974 = vmatprep.subr.mxu0 0.0
    %1975 = vmatpush2.xpose.msra.mxu0 0.0
    %1976 = vmatprep.subr.mxu0 0.0
    %1977 = vmatpush2.xpose.msra.mxu0 0.0
    %1978 = vmatprep.subr.mxu0 0.0
    %1979 = vmatpush2.xpose.msra.mxu0 0.0
    %1980 = vmatprep.subr.mxu0 0.0
    %1981 = vmatpush2.xpose.msra.mxu0 0.0
    %1982 = vmatprep.subr.mxu0 0.0
    %1983 = vmatpush2.xpose.msra.mxu0 0.0
    %1984 = vmatprep.subr.mxu0 0.0
    %1985 = vmatpush2.xpose.msra.mxu0 0.0
    %1986 = vmatprep.subr.mxu0 0.0
    %1987 = vmatpush2.xpose.msra.mxu0 0.0
    %1988 = vmatprep.subr.mxu0 0.0
    %1989 = vmatpush2.xpose.msra.mxu0 0.0
    %1990 = vmatprep.mubr.f32.mxu0 %v435
    %1991 = vmatmul.mubr.f32.gmra.mxu0 %v427
    %v1992 = vpop.f32.mrf.mxu0
    %v1993 = vadd.f32 %v1923, %v1992
    %v1994 = vpop.f32.mrf.mxu0
    %1995 = vdwg.mxu0
    %1996 = vmatprep.subr.mxu0 0.0
    %1997 = vmatpush1.xpose.msra.mxu0 0.0
    %1998 = vmatprep.subr.mxu0 0.0
    %1999 = vmatpush1.xpose.msra.mxu0 0.0
    %2000 = vmatprep.subr.mxu0 0.0
    %2001 = vmatpush1.xpose.msra.mxu0 0.0
    %2002 = vmatprep.subr.mxu0 0.0
    %2003 = vmatpush1.xpose.msra.mxu0 0.0
    %2004 = vmatprep.subr.mxu0 0.0
    %2005 = vmatpush1.xpose.msra.mxu0 0.0
    %2006 = vmatprep.subr.mxu0 0.0
    %2007 = vmatpush1.xpose.msra.mxu0 0.0
    %2008 = vmatprep.subr.mxu0 0.0
    %2009 = vmatpush1.xpose.msra.mxu0 0.0
    %2010 = vmatprep.subr.mxu0 0.0
    %2011 = vmatpush1.xpose.msra.mxu0 0.0
    %2012 = vmatprep.subr.mxu0 0.0
    %2013 = vmatpush1.xpose.msra.mxu0 0.0
    %2014 = vmatprep.subr.mxu0 0.0
    %2015 = vmatpush1.xpose.msra.mxu0 0.0
    %2016 = vmatprep.subr.mxu0 0.0
    %2017 = vmatpush1.xpose.msra.mxu0 0.0
    %2018 = vmatprep.subr.mxu0 0.0
    %2019 = vmatpush1.xpose.msra.mxu0 0.0
    %2020 = vmatprep.subr.mxu0 0.0
    %2021 = vmatpush1.xpose.msra.mxu0 0.0
    %2022 = vmatprep.subr.mxu0 0.0
    %2023 = vmatpush1.xpose.msra.mxu0 0.0
    %2024 = vmatprep.subr.mxu0 0.0
    %2025 = vmatpush1.xpose.msra.mxu0 0.0
    %2026 = vmatprep.subr.mxu0 %v108
    %2027 = vmatpush1.xpose.msra.mxu0 %v107
    %2028 = vmatprep.subr.mxu0 0.0
    %2029 = vmatpush2.xpose.msra.mxu0 0.0
    %2030 = vmatprep.subr.mxu0 0.0
    %2031 = vmatpush2.xpose.msra.mxu0 0.0
    %2032 = vmatprep.subr.mxu0 0.0
    %2033 = vmatpush2.xpose.msra.mxu0 0.0
    %2034 = vmatprep.subr.mxu0 0.0
    %2035 = vmatpush2.xpose.msra.mxu0 0.0
    %2036 = vmatprep.subr.mxu0 0.0
    %2037 = vmatpush2.xpose.msra.mxu0 0.0
    %2038 = vmatprep.subr.mxu0 0.0
    %2039 = vmatpush2.xpose.msra.mxu0 0.0
    %2040 = vmatprep.subr.mxu0 0.0
    %2041 = vmatpush2.xpose.msra.mxu0 0.0
    %2042 = vmatprep.subr.mxu0 0.0
    %2043 = vmatpush2.xpose.msra.mxu0 0.0
    %2044 = vmatprep.subr.mxu0 0.0
    %2045 = vmatpush2.xpose.msra.mxu0 0.0
    %2046 = vmatprep.subr.mxu0 0.0
    %2047 = vmatpush2.xpose.msra.mxu0 0.0
    %2048 = vmatprep.subr.mxu0 0.0
    %2049 = vmatpush2.xpose.msra.mxu0 0.0
    %2050 = vmatprep.subr.mxu0 0.0
    %2051 = vmatpush2.xpose.msra.mxu0 0.0
    %2052 = vmatprep.subr.mxu0 0.0
    %2053 = vmatpush2.xpose.msra.mxu0 0.0
    %2054 = vmatprep.subr.mxu0 0.0
    %2055 = vmatpush2.xpose.msra.mxu0 0.0
    %2056 = vmatprep.subr.mxu0 0.0
    %2057 = vmatpush2.xpose.msra.mxu0 0.0
    %2058 = vmatprep.subr.mxu0 0.0
    %2059 = vmatpush2.xpose.msra.mxu0 0.0
    %2060 = vmatprep.mubr.f32.mxu0 %v436
    %2061 = vmatmul.mubr.f32.gmra.mxu0 %v434
    %v2062 = vpop.f32.mrf.mxu0
    %v2063 = vadd.f32 %v1993, %v2062
    %v2064 = vpop.f32.mrf.mxu0
    %2065 = vdwg.mxu0
    %2066 = vmatprep.subr.mxu0 0.0
    %2067 = vmatpush1.xpose.msra.mxu0 0.0
    %2068 = vmatprep.subr.mxu0 0.0
    %2069 = vmatpush1.xpose.msra.mxu0 0.0
    %2070 = vmatprep.subr.mxu0 0.0
    %2071 = vmatpush1.xpose.msra.mxu0 0.0
    %2072 = vmatprep.subr.mxu0 0.0
    %2073 = vmatpush1.xpose.msra.mxu0 0.0
    %2074 = vmatprep.subr.mxu0 0.0
    %2075 = vmatpush1.xpose.msra.mxu0 0.0
    %2076 = vmatprep.subr.mxu0 0.0
    %2077 = vmatpush1.xpose.msra.mxu0 0.0
    %2078 = vmatprep.subr.mxu0 0.0
    %2079 = vmatpush1.xpose.msra.mxu0 0.0
    %2080 = vmatprep.subr.mxu0 0.0
    %2081 = vmatpush1.xpose.msra.mxu0 0.0
    %2082 = vmatprep.subr.mxu0 0.0
    %2083 = vmatpush1.xpose.msra.mxu0 0.0
    %2084 = vmatprep.subr.mxu0 0.0
    %2085 = vmatpush1.xpose.msra.mxu0 0.0
    %2086 = vmatprep.subr.mxu0 0.0
    %2087 = vmatpush1.xpose.msra.mxu0 0.0
    %2088 = vmatprep.subr.mxu0 0.0
    %2089 = vmatpush1.xpose.msra.mxu0 0.0
    %2090 = vmatprep.subr.mxu0 0.0
    %2091 = vmatpush1.xpose.msra.mxu0 0.0
    %2092 = vmatprep.subr.mxu0 0.0
    %2093 = vmatpush1.xpose.msra.mxu0 0.0
    %2094 = vmatprep.subr.mxu0 0.0
    %2095 = vmatpush1.xpose.msra.mxu0 0.0
    %2096 = vmatprep.subr.mxu0 %v110
    %2097 = vmatpush1.xpose.msra.mxu0 %v109
    %2098 = vmatprep.subr.mxu0 0.0
    %2099 = vmatpush2.xpose.msra.mxu0 0.0
    %2100 = vmatprep.subr.mxu0 0.0
    %2101 = vmatpush2.xpose.msra.mxu0 0.0
    %2102 = vmatprep.subr.mxu0 0.0
    %2103 = vmatpush2.xpose.msra.mxu0 0.0
    %2104 = vmatprep.subr.mxu0 0.0
    %2105 = vmatpush2.xpose.msra.mxu0 0.0
    %2106 = vmatprep.subr.mxu0 0.0
    %2107 = vmatpush2.xpose.msra.mxu0 0.0
    %2108 = vmatprep.subr.mxu0 0.0
    %2109 = vmatpush2.xpose.msra.mxu0 0.0
    %2110 = vmatprep.subr.mxu0 0.0
    %2111 = vmatpush2.xpose.msra.mxu0 0.0
    %2112 = vmatprep.subr.mxu0 0.0
    %2113 = vmatpush2.xpose.msra.mxu0 0.0
    %2114 = vmatprep.subr.mxu0 0.0
    %2115 = vmatpush2.xpose.msra.mxu0 0.0
    %2116 = vmatprep.subr.mxu0 0.0
    %2117 = vmatpush2.xpose.msra.mxu0 0.0
    %2118 = vmatprep.subr.mxu0 0.0
    %2119 = vmatpush2.xpose.msra.mxu0 0.0
    %2120 = vmatprep.subr.mxu0 0.0
    %2121 = vmatpush2.xpose.msra.mxu0 0.0
    %2122 = vmatprep.subr.mxu0 0.0
    %2123 = vmatpush2.xpose.msra.mxu0 0.0
    %2124 = vmatprep.subr.mxu0 0.0
    %2125 = vmatpush2.xpose.msra.mxu0 0.0
    %2126 = vmatprep.subr.mxu0 0.0
    %2127 = vmatpush2.xpose.msra.mxu0 0.0
    %2128 = vmatprep.subr.mxu0 0.0
    %2129 = vmatpush2.xpose.msra.mxu0 0.0
    %2130 = vmatprep.mubr.f32.mxu0 %v452
    %2131 = vmatmul.mubr.f32.gmra.mxu0 %v444
    %v2132 = vpop.f32.mrf.mxu0
    %v2133 = vadd.f32 %v2063, %v2132
    %v2134 = vpop.f32.mrf.mxu0
    %2135 = vdwg.mxu0
    %2136 = vmatprep.subr.mxu0 0.0
    %2137 = vmatpush1.xpose.msra.mxu0 0.0
    %2138 = vmatprep.subr.mxu0 0.0
    %2139 = vmatpush1.xpose.msra.mxu0 0.0
    %2140 = vmatprep.subr.mxu0 0.0
    %2141 = vmatpush1.xpose.msra.mxu0 0.0
    %2142 = vmatprep.subr.mxu0 0.0
    %2143 = vmatpush1.xpose.msra.mxu0 0.0
    %2144 = vmatprep.subr.mxu0 0.0
    %2145 = vmatpush1.xpose.msra.mxu0 0.0
    %2146 = vmatprep.subr.mxu0 0.0
    %2147 = vmatpush1.xpose.msra.mxu0 0.0
    %2148 = vmatprep.subr.mxu0 0.0
    %2149 = vmatpush1.xpose.msra.mxu0 0.0
    %2150 = vmatprep.subr.mxu0 0.0
    %2151 = vmatpush1.xpose.msra.mxu0 0.0
    %2152 = vmatprep.subr.mxu0 0.0
    %2153 = vmatpush1.xpose.msra.mxu0 0.0
    %2154 = vmatprep.subr.mxu0 0.0
    %2155 = vmatpush1.xpose.msra.mxu0 0.0
    %2156 = vmatprep.subr.mxu0 0.0
    %2157 = vmatpush1.xpose.msra.mxu0 0.0
    %2158 = vmatprep.subr.mxu0 0.0
    %2159 = vmatpush1.xpose.msra.mxu0 0.0
    %2160 = vmatprep.subr.mxu0 0.0
    %2161 = vmatpush1.xpose.msra.mxu0 0.0
    %2162 = vmatprep.subr.mxu0 0.0
    %2163 = vmatpush1.xpose.msra.mxu0 0.0
    %2164 = vmatprep.subr.mxu0 0.0
    %2165 = vmatpush1.xpose.msra.mxu0 0.0
    %2166 = vmatprep.subr.mxu0 %v112
    %2167 = vmatpush1.xpose.msra.mxu0 %v111
    %2168 = vmatprep.subr.mxu0 0.0
    %2169 = vmatpush2.xpose.msra.mxu0 0.0
    %2170 = vmatprep.subr.mxu0 0.0
    %2171 = vmatpush2.xpose.msra.mxu0 0.0
    %2172 = vmatprep.subr.mxu0 0.0
    %2173 = vmatpush2.xpose.msra.mxu0 0.0
    %2174 = vmatprep.subr.mxu0 0.0
    %2175 = vmatpush2.xpose.msra.mxu0 0.0
    %2176 = vmatprep.subr.mxu0 0.0
    %2177 = vmatpush2.xpose.msra.mxu0 0.0
    %2178 = vmatprep.subr.mxu0 0.0
    %2179 = vmatpush2.xpose.msra.mxu0 0.0
    %2180 = vmatprep.subr.mxu0 0.0
    %2181 = vmatpush2.xpose.msra.mxu0 0.0
    %2182 = vmatprep.subr.mxu0 0.0
    %2183 = vmatpush2.xpose.msra.mxu0 0.0
    %2184 = vmatprep.subr.mxu0 0.0
    %2185 = vmatpush2.xpose.msra.mxu0 0.0
    %2186 = vmatprep.subr.mxu0 0.0
    %2187 = vmatpush2.xpose.msra.mxu0 0.0
    %2188 = vmatprep.subr.mxu0 0.0
    %2189 = vmatpush2.xpose.msra.mxu0 0.0
    %2190 = vmatprep.subr.mxu0 0.0
    %2191 = vmatpush2.xpose.msra.mxu0 0.0
    %2192 = vmatprep.subr.mxu0 0.0
    %2193 = vmatpush2.xpose.msra.mxu0 0.0
    %2194 = vmatprep.subr.mxu0 0.0
    %2195 = vmatpush2.xpose.msra.mxu0 0.0
    %2196 = vmatprep.subr.mxu0 0.0
    %2197 = vmatpush2.xpose.msra.mxu0 0.0
    %2198 = vmatprep.subr.mxu0 0.0
    %2199 = vmatpush2.xpose.msra.mxu0 0.0
    %2200 = vmatprep.mubr.f32.mxu0 %v453
    %2201 = vmatmul.mubr.f32.gmra.mxu0 %v451
    %v2202 = vpop.f32.mrf.mxu0
    %v2203 = vadd.f32 %v2133, %v2202
    %v2204 = vpop.f32.mrf.mxu0
    %2205 = vdwg.mxu0
    %2206 = vmatprep.subr.mxu0 0.0
    %2207 = vmatpush1.xpose.msra.mxu0 0.0
    %2208 = vmatprep.subr.mxu0 0.0
    %2209 = vmatpush1.xpose.msra.mxu0 0.0
    %2210 = vmatprep.subr.mxu0 0.0
    %2211 = vmatpush1.xpose.msra.mxu0 0.0
    %2212 = vmatprep.subr.mxu0 0.0
    %2213 = vmatpush1.xpose.msra.mxu0 0.0
    %2214 = vmatprep.subr.mxu0 0.0
    %2215 = vmatpush1.xpose.msra.mxu0 0.0
    %2216 = vmatprep.subr.mxu0 0.0
    %2217 = vmatpush1.xpose.msra.mxu0 0.0
    %2218 = vmatprep.subr.mxu0 0.0
    %2219 = vmatpush1.xpose.msra.mxu0 0.0
    %2220 = vmatprep.subr.mxu0 0.0
    %2221 = vmatpush1.xpose.msra.mxu0 0.0
    %2222 = vmatprep.subr.mxu0 0.0
    %2223 = vmatpush1.xpose.msra.mxu0 0.0
    %2224 = vmatprep.subr.mxu0 0.0
    %2225 = vmatpush1.xpose.msra.mxu0 0.0
    %2226 = vmatprep.subr.mxu0 0.0
    %2227 = vmatpush1.xpose.msra.mxu0 0.0
    %2228 = vmatprep.subr.mxu0 0.0
    %2229 = vmatpush1.xpose.msra.mxu0 0.0
    %2230 = vmatprep.subr.mxu0 0.0
    %2231 = vmatpush1.xpose.msra.mxu0 0.0
    %2232 = vmatprep.subr.mxu0 0.0
    %2233 = vmatpush1.xpose.msra.mxu0 0.0
    %2234 = vmatprep.subr.mxu0 0.0
    %2235 = vmatpush1.xpose.msra.mxu0 0.0
    %2236 = vmatprep.subr.mxu0 %v114
    %2237 = vmatpush1.xpose.msra.mxu0 %v113
    %2238 = vmatprep.subr.mxu0 0.0
    %2239 = vmatpush2.xpose.msra.mxu0 0.0
    %2240 = vmatprep.subr.mxu0 0.0
    %2241 = vmatpush2.xpose.msra.mxu0 0.0
    %2242 = vmatprep.subr.mxu0 0.0
    %2243 = vmatpush2.xpose.msra.mxu0 0.0
    %2244 = vmatprep.subr.mxu0 0.0
    %2245 = vmatpush2.xpose.msra.mxu0 0.0
    %2246 = vmatprep.subr.mxu0 0.0
    %2247 = vmatpush2.xpose.msra.mxu0 0.0
    %2248 = vmatprep.subr.mxu0 0.0
    %2249 = vmatpush2.xpose.msra.mxu0 0.0
    %2250 = vmatprep.subr.mxu0 0.0
    %2251 = vmatpush2.xpose.msra.mxu0 0.0
    %2252 = vmatprep.subr.mxu0 0.0
    %2253 = vmatpush2.xpose.msra.mxu0 0.0
    %2254 = vmatprep.subr.mxu0 0.0
    %2255 = vmatpush2.xpose.msra.mxu0 0.0
    %2256 = vmatprep.subr.mxu0 0.0
    %2257 = vmatpush2.xpose.msra.mxu0 0.0
    %2258 = vmatprep.subr.mxu0 0.0
    %2259 = vmatpush2.xpose.msra.mxu0 0.0
    %2260 = vmatprep.subr.mxu0 0.0
    %2261 = vmatpush2.xpose.msra.mxu0 0.0
    %2262 = vmatprep.subr.mxu0 0.0
    %2263 = vmatpush2.xpose.msra.mxu0 0.0
    %2264 = vmatprep.subr.mxu0 0.0
    %2265 = vmatpush2.xpose.msra.mxu0 0.0
    %2266 = vmatprep.subr.mxu0 0.0
    %2267 = vmatpush2.xpose.msra.mxu0 0.0
    %2268 = vmatprep.subr.mxu0 0.0
    %2269 = vmatpush2.xpose.msra.mxu0 0.0
    %2270 = vmatprep.mubr.f32.mxu0 %v469
    %2271 = vmatmul.mubr.f32.gmra.mxu0 %v461
    %v2272 = vpop.f32.mrf.mxu0
    %v2273 = vadd.f32 %v2203, %v2272
    %v2274 = vpop.f32.mrf.mxu0
    %2275 = vdwg.mxu0
    %2276 = vmatprep.subr.mxu0 0.0
    %2277 = vmatpush1.xpose.msra.mxu0 0.0
    %2278 = vmatprep.subr.mxu0 0.0
    %2279 = vmatpush1.xpose.msra.mxu0 0.0
    %2280 = vmatprep.subr.mxu0 0.0
    %2281 = vmatpush1.xpose.msra.mxu0 0.0
    %2282 = vmatprep.subr.mxu0 0.0
    %2283 = vmatpush1.xpose.msra.mxu0 0.0
    %2284 = vmatprep.subr.mxu0 0.0
    %2285 = vmatpush1.xpose.msra.mxu0 0.0
    %2286 = vmatprep.subr.mxu0 0.0
    %2287 = vmatpush1.xpose.msra.mxu0 0.0
    %2288 = vmatprep.subr.mxu0 0.0
    %2289 = vmatpush1.xpose.msra.mxu0 0.0
    %2290 = vmatprep.subr.mxu0 0.0
    %2291 = vmatpush1.xpose.msra.mxu0 0.0
    %2292 = vmatprep.subr.mxu0 0.0
    %2293 = vmatpush1.xpose.msra.mxu0 0.0
    %2294 = vmatprep.subr.mxu0 0.0
    %2295 = vmatpush1.xpose.msra.mxu0 0.0
    %2296 = vmatprep.subr.mxu0 0.0
    %2297 = vmatpush1.xpose.msra.mxu0 0.0
    %2298 = vmatprep.subr.mxu0 0.0
    %2299 = vmatpush1.xpose.msra.mxu0 0.0
    %2300 = vmatprep.subr.mxu0 0.0
    %2301 = vmatpush1.xpose.msra.mxu0 0.0
    %2302 = vmatprep.subr.mxu0 0.0
    %2303 = vmatpush1.xpose.msra.mxu0 0.0
    %2304 = vmatprep.subr.mxu0 0.0
    %2305 = vmatpush1.xpose.msra.mxu0 0.0
    %2306 = vmatprep.subr.mxu0 %v116
    %2307 = vmatpush1.xpose.msra.mxu0 %v115
    %2308 = vmatprep.subr.mxu0 0.0
    %2309 = vmatpush2.xpose.msra.mxu0 0.0
    %2310 = vmatprep.subr.mxu0 0.0
    %2311 = vmatpush2.xpose.msra.mxu0 0.0
    %2312 = vmatprep.subr.mxu0 0.0
    %2313 = vmatpush2.xpose.msra.mxu0 0.0
    %2314 = vmatprep.subr.mxu0 0.0
    %2315 = vmatpush2.xpose.msra.mxu0 0.0
    %2316 = vmatprep.subr.mxu0 0.0
    %2317 = vmatpush2.xpose.msra.mxu0 0.0
    %2318 = vmatprep.subr.mxu0 0.0
    %2319 = vmatpush2.xpose.msra.mxu0 0.0
    %2320 = vmatprep.subr.mxu0 0.0
    %2321 = vmatpush2.xpose.msra.mxu0 0.0
    %2322 = vmatprep.subr.mxu0 0.0
    %2323 = vmatpush2.xpose.msra.mxu0 0.0
    %2324 = vmatprep.subr.mxu0 0.0
    %2325 = vmatpush2.xpose.msra.mxu0 0.0
    %2326 = vmatprep.subr.mxu0 0.0
    %2327 = vmatpush2.xpose.msra.mxu0 0.0
    %2328 = vmatprep.subr.mxu0 0.0
    %2329 = vmatpush2.xpose.msra.mxu0 0.0
    %2330 = vmatprep.subr.mxu0 0.0
    %2331 = vmatpush2.xpose.msra.mxu0 0.0
    %2332 = vmatprep.subr.mxu0 0.0
    %2333 = vmatpush2.xpose.msra.mxu0 0.0
    %2334 = vmatprep.subr.mxu0 0.0
    %2335 = vmatpush2.xpose.msra.mxu0 0.0
    %2336 = vmatprep.subr.mxu0 0.0
    %2337 = vmatpush2.xpose.msra.mxu0 0.0
    %2338 = vmatprep.subr.mxu0 0.0
    %2339 = vmatpush2.xpose.msra.mxu0 0.0
    %2340 = vmatprep.mubr.f32.mxu0 %v470
    %2341 = vmatmul.mubr.f32.gmra.mxu0 %v468
    %v2342 = vpop.f32.mrf.mxu0
    %v2343 = vadd.f32 %v2273, %v2342
    %v2344 = vpop.f32.mrf.mxu0
    %2345 = vdwg.mxu0
    %2346 = vmatprep.subr.mxu0 0.0
    %2347 = vmatpush1.xpose.msra.mxu0 0.0
    %2348 = vmatprep.subr.mxu0 0.0
    %2349 = vmatpush1.xpose.msra.mxu0 0.0
    %2350 = vmatprep.subr.mxu0 0.0
    %2351 = vmatpush1.xpose.msra.mxu0 0.0
    %2352 = vmatprep.subr.mxu0 0.0
    %2353 = vmatpush1.xpose.msra.mxu0 0.0
    %2354 = vmatprep.subr.mxu0 0.0
    %2355 = vmatpush1.xpose.msra.mxu0 0.0
    %2356 = vmatprep.subr.mxu0 0.0
    %2357 = vmatpush1.xpose.msra.mxu0 0.0
    %2358 = vmatprep.subr.mxu0 0.0
    %2359 = vmatpush1.xpose.msra.mxu0 0.0
    %2360 = vmatprep.subr.mxu0 0.0
    %2361 = vmatpush1.xpose.msra.mxu0 0.0
    %2362 = vmatprep.subr.mxu0 0.0
    %2363 = vmatpush1.xpose.msra.mxu0 0.0
    %2364 = vmatprep.subr.mxu0 0.0
    %2365 = vmatpush1.xpose.msra.mxu0 0.0
    %2366 = vmatprep.subr.mxu0 0.0
    %2367 = vmatpush1.xpose.msra.mxu0 0.0
    %2368 = vmatprep.subr.mxu0 0.0
    %2369 = vmatpush1.xpose.msra.mxu0 0.0
    %2370 = vmatprep.subr.mxu0 0.0
    %2371 = vmatpush1.xpose.msra.mxu0 0.0
    %2372 = vmatprep.subr.mxu0 0.0
    %2373 = vmatpush1.xpose.msra.mxu0 0.0
    %2374 = vmatprep.subr.mxu0 0.0
    %2375 = vmatpush1.xpose.msra.mxu0 0.0
    %2376 = vmatprep.subr.mxu0 %v118
    %2377 = vmatpush1.xpose.msra.mxu0 %v117
    %2378 = vmatprep.subr.mxu0 0.0
    %2379 = vmatpush2.xpose.msra.mxu0 0.0
    %2380 = vmatprep.subr.mxu0 0.0
    %2381 = vmatpush2.xpose.msra.mxu0 0.0
    %2382 = vmatprep.subr.mxu0 0.0
    %2383 = vmatpush2.xpose.msra.mxu0 0.0
    %2384 = vmatprep.subr.mxu0 0.0
    %2385 = vmatpush2.xpose.msra.mxu0 0.0
    %2386 = vmatprep.subr.mxu0 0.0
    %2387 = vmatpush2.xpose.msra.mxu0 0.0
    %2388 = vmatprep.subr.mxu0 0.0
    %2389 = vmatpush2.xpose.msra.mxu0 0.0
    %2390 = vmatprep.subr.mxu0 0.0
    %2391 = vmatpush2.xpose.msra.mxu0 0.0
    %2392 = vmatprep.subr.mxu0 0.0
    %2393 = vmatpush2.xpose.msra.mxu0 0.0
    %2394 = vmatprep.subr.mxu0 0.0
    %2395 = vmatpush2.xpose.msra.mxu0 0.0
    %2396 = vmatprep.subr.mxu0 0.0
    %2397 = vmatpush2.xpose.msra.mxu0 0.0
    %2398 = vmatprep.subr.mxu0 0.0
    %2399 = vmatpush2.xpose.msra.mxu0 0.0
    %2400 = vmatprep.subr.mxu0 0.0
    %2401 = vmatpush2.xpose.msra.mxu0 0.0
    %2402 = vmatprep.subr.mxu0 0.0
    %2403 = vmatpush2.xpose.msra.mxu0 0.0
    %2404 = vmatprep.subr.mxu0 0.0
    %2405 = vmatpush2.xpose.msra.mxu0 0.0
    %2406 = vmatprep.subr.mxu0 0.0
    %2407 = vmatpush2.xpose.msra.mxu0 0.0
    %2408 = vmatprep.subr.mxu0 0.0
    %2409 = vmatpush2.xpose.msra.mxu0 0.0
    %2410 = vmatprep.mubr.f32.mxu0 %v486
    %2411 = vmatmul.mubr.f32.gmra.mxu0 %v478
    %v2412 = vpop.f32.mrf.mxu0
    %v2413 = vadd.f32 %v2343, %v2412
    %v2414 = vpop.f32.mrf.mxu0
    %2415 = vdwg.mxu0
    %2416 = vmatprep.subr.mxu0 0.0
    %2417 = vmatpush1.xpose.msra.mxu0 0.0
    %2418 = vmatprep.subr.mxu0 0.0
    %2419 = vmatpush1.xpose.msra.mxu0 0.0
    %2420 = vmatprep.subr.mxu0 0.0
    %2421 = vmatpush1.xpose.msra.mxu0 0.0
    %2422 = vmatprep.subr.mxu0 0.0
    %2423 = vmatpush1.xpose.msra.mxu0 0.0
    %2424 = vmatprep.subr.mxu0 0.0
    %2425 = vmatpush1.xpose.msra.mxu0 0.0
    %2426 = vmatprep.subr.mxu0 0.0
    %2427 = vmatpush1.xpose.msra.mxu0 0.0
    %2428 = vmatprep.subr.mxu0 0.0
    %2429 = vmatpush1.xpose.msra.mxu0 0.0
    %2430 = vmatprep.subr.mxu0 0.0
    %2431 = vmatpush1.xpose.msra.mxu0 0.0
    %2432 = vmatprep.subr.mxu0 0.0
    %2433 = vmatpush1.xpose.msra.mxu0 0.0
    %2434 = vmatprep.subr.mxu0 0.0
    %2435 = vmatpush1.xpose.msra.mxu0 0.0
    %2436 = vmatprep.subr.mxu0 0.0
    %2437 = vmatpush1.xpose.msra.mxu0 0.0
    %2438 = vmatprep.subr.mxu0 0.0
    %2439 = vmatpush1.xpose.msra.mxu0 0.0
    %2440 = vmatprep.subr.mxu0 0.0
    %2441 = vmatpush1.xpose.msra.mxu0 0.0
    %2442 = vmatprep.subr.mxu0 0.0
    %2443 = vmatpush1.xpose.msra.mxu0 0.0
    %2444 = vmatprep.subr.mxu0 0.0
    %2445 = vmatpush1.xpose.msra.mxu0 0.0
    %2446 = vmatprep.subr.mxu0 %v120
    %2447 = vmatpush1.xpose.msra.mxu0 %v119
    %2448 = vmatprep.subr.mxu0 0.0
    %2449 = vmatpush2.xpose.msra.mxu0 0.0
    %2450 = vmatprep.subr.mxu0 0.0
    %2451 = vmatpush2.xpose.msra.mxu0 0.0
    %2452 = vmatprep.subr.mxu0 0.0
    %2453 = vmatpush2.xpose.msra.mxu0 0.0
    %2454 = vmatprep.subr.mxu0 0.0
    %2455 = vmatpush2.xpose.msra.mxu0 0.0
    %2456 = vmatprep.subr.mxu0 0.0
    %2457 = vmatpush2.xpose.msra.mxu0 0.0
    %2458 = vmatprep.subr.mxu0 0.0
    %2459 = vmatpush2.xpose.msra.mxu0 0.0
    %2460 = vmatprep.subr.mxu0 0.0
    %2461 = vmatpush2.xpose.msra.mxu0 0.0
    %2462 = vmatprep.subr.mxu0 0.0
    %2463 = vmatpush2.xpose.msra.mxu0 0.0
    %2464 = vmatprep.subr.mxu0 0.0
    %2465 = vmatpush2.xpose.msra.mxu0 0.0
    %2466 = vmatprep.subr.mxu0 0.0
    %2467 = vmatpush2.xpose.msra.mxu0 0.0
    %2468 = vmatprep.subr.mxu0 0.0
    %2469 = vmatpush2.xpose.msra.mxu0 0.0
    %2470 = vmatprep.subr.mxu0 0.0
    %2471 = vmatpush2.xpose.msra.mxu0 0.0
    %2472 = vmatprep.subr.mxu0 0.0
    %2473 = vmatpush2.xpose.msra.mxu0 0.0
    %2474 = vmatprep.subr.mxu0 0.0
    %2475 = vmatpush2.xpose.msra.mxu0 0.0
    %2476 = vmatprep.subr.mxu0 0.0
    %2477 = vmatpush2.xpose.msra.mxu0 0.0
    %2478 = vmatprep.subr.mxu0 0.0
    %2479 = vmatpush2.xpose.msra.mxu0 0.0
    %2480 = vmatprep.mubr.f32.mxu0 %v487
    %2481 = vmatmul.mubr.f32.gmra.mxu0 %v485
    %v2482 = vpop.f32.mrf.mxu0
    %v2483 = vadd.f32 %v2413, %v2482
    %v2484 = vpop.f32.mrf.mxu0
    %2485 = vdwg.mxu0
    %2486 = vmatprep.subr.mxu0 0.0
    %2487 = vmatpush1.xpose.msra.mxu0 0.0
    %2488 = vmatprep.subr.mxu0 0.0
    %2489 = vmatpush1.xpose.msra.mxu0 0.0
    %2490 = vmatprep.subr.mxu0 0.0
    %2491 = vmatpush1.xpose.msra.mxu0 0.0
    %2492 = vmatprep.subr.mxu0 0.0
    %2493 = vmatpush1.xpose.msra.mxu0 0.0
    %2494 = vmatprep.subr.mxu0 0.0
    %2495 = vmatpush1.xpose.msra.mxu0 0.0
    %2496 = vmatprep.subr.mxu0 0.0
    %2497 = vmatpush1.xpose.msra.mxu0 0.0
    %2498 = vmatprep.subr.mxu0 0.0
    %2499 = vmatpush1.xpose.msra.mxu0 0.0
    %2500 = vmatprep.subr.mxu0 0.0
    %2501 = vmatpush1.xpose.msra.mxu0 0.0
    %2502 = vmatprep.subr.mxu0 0.0
    %2503 = vmatpush1.xpose.msra.mxu0 0.0
    %2504 = vmatprep.subr.mxu0 0.0
    %2505 = vmatpush1.xpose.msra.mxu0 0.0
    %2506 = vmatprep.subr.mxu0 0.0
    %2507 = vmatpush1.xpose.msra.mxu0 0.0
    %2508 = vmatprep.subr.mxu0 0.0
    %2509 = vmatpush1.xpose.msra.mxu0 0.0
    %2510 = vmatprep.subr.mxu0 0.0
    %2511 = vmatpush1.xpose.msra.mxu0 0.0
    %2512 = vmatprep.subr.mxu0 0.0
    %2513 = vmatpush1.xpose.msra.mxu0 0.0
    %2514 = vmatprep.subr.mxu0 0.0
    %2515 = vmatpush1.xpose.msra.mxu0 0.0
    %2516 = vmatprep.subr.mxu0 %v122
    %2517 = vmatpush1.xpose.msra.mxu0 %v121
    %2518 = vmatprep.subr.mxu0 0.0
    %2519 = vmatpush2.xpose.msra.mxu0 0.0
    %2520 = vmatprep.subr.mxu0 0.0
    %2521 = vmatpush2.xpose.msra.mxu0 0.0
    %2522 = vmatprep.subr.mxu0 0.0
    %2523 = vmatpush2.xpose.msra.mxu0 0.0
    %2524 = vmatprep.subr.mxu0 0.0
    %2525 = vmatpush2.xpose.msra.mxu0 0.0
    %2526 = vmatprep.subr.mxu0 0.0
    %2527 = vmatpush2.xpose.msra.mxu0 0.0
    %2528 = vmatprep.subr.mxu0 0.0
    %2529 = vmatpush2.xpose.msra.mxu0 0.0
    %2530 = vmatprep.subr.mxu0 0.0
    %2531 = vmatpush2.xpose.msra.mxu0 0.0
    %2532 = vmatprep.subr.mxu0 0.0
    %2533 = vmatpush2.xpose.msra.mxu0 0.0
    %2534 = vmatprep.subr.mxu0 0.0
    %2535 = vmatpush2.xpose.msra.mxu0 0.0
    %2536 = vmatprep.subr.mxu0 0.0
    %2537 = vmatpush2.xpose.msra.mxu0 0.0
    %2538 = vmatprep.subr.mxu0 0.0
    %2539 = vmatpush2.xpose.msra.mxu0 0.0
    %2540 = vmatprep.subr.mxu0 0.0
    %2541 = vmatpush2.xpose.msra.mxu0 0.0
    %2542 = vmatprep.subr.mxu0 0.0
    %2543 = vmatpush2.xpose.msra.mxu0 0.0
    %2544 = vmatprep.subr.mxu0 0.0
    %2545 = vmatpush2.xpose.msra.mxu0 0.0
    %2546 = vmatprep.subr.mxu0 0.0
    %2547 = vmatpush2.xpose.msra.mxu0 0.0
    %2548 = vmatprep.subr.mxu0 0.0
    %2549 = vmatpush2.xpose.msra.mxu0 0.0
    %2550 = vmatprep.mubr.f32.mxu0 %v503
    %2551 = vmatmul.mubr.f32.gmra.mxu0 %v495
    %v2552 = vpop.f32.mrf.mxu0
    %v2553 = vadd.f32 %v2483, %v2552
    %v2554 = vpop.f32.mrf.mxu0
    %2555 = vdwg.mxu0
    %2556 = vmatprep.subr.mxu0 0.0
    %2557 = vmatpush1.xpose.msra.mxu0 0.0
    %2558 = vmatprep.subr.mxu0 0.0
    %2559 = vmatpush1.xpose.msra.mxu0 0.0
    %2560 = vmatprep.subr.mxu0 0.0
    %2561 = vmatpush1.xpose.msra.mxu0 0.0
    %2562 = vmatprep.subr.mxu0 0.0
    %2563 = vmatpush1.xpose.msra.mxu0 0.0
    %2564 = vmatprep.subr.mxu0 0.0
    %2565 = vmatpush1.xpose.msra.mxu0 0.0
    %2566 = vmatprep.subr.mxu0 0.0
    %2567 = vmatpush1.xpose.msra.mxu0 0.0
    %2568 = vmatprep.subr.mxu0 0.0
    %2569 = vmatpush1.xpose.msra.mxu0 0.0
    %2570 = vmatprep.subr.mxu0 0.0
    %2571 = vmatpush1.xpose.msra.mxu0 0.0
    %2572 = vmatprep.subr.mxu0 0.0
    %2573 = vmatpush1.xpose.msra.mxu0 0.0
    %2574 = vmatprep.subr.mxu0 0.0
    %2575 = vmatpush1.xpose.msra.mxu0 0.0
    %2576 = vmatprep.subr.mxu0 0.0
    %2577 = vmatpush1.xpose.msra.mxu0 0.0
    %2578 = vmatprep.subr.mxu0 0.0
    %2579 = vmatpush1.xpose.msra.mxu0 0.0
    %2580 = vmatprep.subr.mxu0 0.0
    %2581 = vmatpush1.xpose.msra.mxu0 0.0
    %2582 = vmatprep.subr.mxu0 0.0
    %2583 = vmatpush1.xpose.msra.mxu0 0.0
    %2584 = vmatprep.subr.mxu0 0.0
    %2585 = vmatpush1.xpose.msra.mxu0 0.0
    %2586 = vmatprep.subr.mxu0 %v124
    %2587 = vmatpush1.xpose.msra.mxu0 %v123
    %2588 = vmatprep.subr.mxu0 0.0
    %2589 = vmatpush2.xpose.msra.mxu0 0.0
    %2590 = vmatprep.subr.mxu0 0.0
    %2591 = vmatpush2.xpose.msra.mxu0 0.0
    %2592 = vmatprep.subr.mxu0 0.0
    %2593 = vmatpush2.xpose.msra.mxu0 0.0
    %2594 = vmatprep.subr.mxu0 0.0
    %2595 = vmatpush2.xpose.msra.mxu0 0.0
    %2596 = vmatprep.subr.mxu0 0.0
    %2597 = vmatpush2.xpose.msra.mxu0 0.0
    %2598 = vmatprep.subr.mxu0 0.0
    %2599 = vmatpush2.xpose.msra.mxu0 0.0
    %2600 = vmatprep.subr.mxu0 0.0
    %2601 = vmatpush2.xpose.msra.mxu0 0.0
    %2602 = vmatprep.subr.mxu0 0.0
    %2603 = vmatpush2.xpose.msra.mxu0 0.0
    %2604 = vmatprep.subr.mxu0 0.0
    %2605 = vmatpush2.xpose.msra.mxu0 0.0
    %2606 = vmatprep.subr.mxu0 0.0
    %2607 = vmatpush2.xpose.msra.mxu0 0.0
    %2608 = vmatprep.subr.mxu0 0.0
    %2609 = vmatpush2.xpose.msra.mxu0 0.0
    %2610 = vmatprep.subr.mxu0 0.0
    %2611 = vmatpush2.xpose.msra.mxu0 0.0
    %2612 = vmatprep.subr.mxu0 0.0
    %2613 = vmatpush2.xpose.msra.mxu0 0.0
    %2614 = vmatprep.subr.mxu0 0.0
    %2615 = vmatpush2.xpose.msra.mxu0 0.0
    %2616 = vmatprep.subr.mxu0 0.0
    %2617 = vmatpush2.xpose.msra.mxu0 0.0
    %2618 = vmatprep.subr.mxu0 0.0
    %2619 = vmatpush2.xpose.msra.mxu0 0.0
    %2620 = vmatprep.mubr.f32.mxu0 %v504
    %2621 = vmatmul.mubr.f32.gmra.mxu0 %v502
    %v2622 = vpop.f32.mrf.mxu0
    %v2623 = vadd.f32 %v2553, %v2622
    %v2624 = vpop.f32.mrf.mxu0
    %2625 = vdwg.mxu0
    %2626 = vmatprep.subr.mxu0 0.0
    %2627 = vmatpush1.xpose.msra.mxu0 0.0
    %2628 = vmatprep.subr.mxu0 0.0
    %2629 = vmatpush1.xpose.msra.mxu0 0.0
    %2630 = vmatprep.subr.mxu0 0.0
    %2631 = vmatpush1.xpose.msra.mxu0 0.0
    %2632 = vmatprep.subr.mxu0 0.0
    %2633 = vmatpush1.xpose.msra.mxu0 0.0
    %2634 = vmatprep.subr.mxu0 0.0
    %2635 = vmatpush1.xpose.msra.mxu0 0.0
    %2636 = vmatprep.subr.mxu0 0.0
    %2637 = vmatpush1.xpose.msra.mxu0 0.0
    %2638 = vmatprep.subr.mxu0 0.0
    %2639 = vmatpush1.xpose.msra.mxu0 0.0
    %2640 = vmatprep.subr.mxu0 0.0
    %2641 = vmatpush1.xpose.msra.mxu0 0.0
    %2642 = vmatprep.subr.mxu0 0.0
    %2643 = vmatpush1.xpose.msra.mxu0 0.0
    %2644 = vmatprep.subr.mxu0 0.0
    %2645 = vmatpush1.xpose.msra.mxu0 0.0
    %2646 = vmatprep.subr.mxu0 0.0
    %2647 = vmatpush1.xpose.msra.mxu0 0.0
    %2648 = vmatprep.subr.mxu0 0.0
    %2649 = vmatpush1.xpose.msra.mxu0 0.0
    %2650 = vmatprep.subr.mxu0 0.0
    %2651 = vmatpush1.xpose.msra.mxu0 0.0
    %2652 = vmatprep.subr.mxu0 0.0
    %2653 = vmatpush1.xpose.msra.mxu0 0.0
    %2654 = vmatprep.subr.mxu0 0.0
    %2655 = vmatpush1.xpose.msra.mxu0 0.0
    %2656 = vmatprep.subr.mxu0 %v126
    %2657 = vmatpush1.xpose.msra.mxu0 %v125
    %2658 = vmatprep.subr.mxu0 0.0
    %2659 = vmatpush2.xpose.msra.mxu0 0.0
    %2660 = vmatprep.subr.mxu0 0.0
    %2661 = vmatpush2.xpose.msra.mxu0 0.0
    %2662 = vmatprep.subr.mxu0 0.0
    %2663 = vmatpush2.xpose.msra.mxu0 0.0
    %2664 = vmatprep.subr.mxu0 0.0
    %2665 = vmatpush2.xpose.msra.mxu0 0.0
    %2666 = vmatprep.subr.mxu0 0.0
    %2667 = vmatpush2.xpose.msra.mxu0 0.0
    %2668 = vmatprep.subr.mxu0 0.0
    %2669 = vmatpush2.xpose.msra.mxu0 0.0
    %2670 = vmatprep.subr.mxu0 0.0
    %2671 = vmatpush2.xpose.msra.mxu0 0.0
    %2672 = vmatprep.subr.mxu0 0.0
    %2673 = vmatpush2.xpose.msra.mxu0 0.0
    %2674 = vmatprep.subr.mxu0 0.0
    %2675 = vmatpush2.xpose.msra.mxu0 0.0
    %2676 = vmatprep.subr.mxu0 0.0
    %2677 = vmatpush2.xpose.msra.mxu0 0.0
    %2678 = vmatprep.subr.mxu0 0.0
    %2679 = vmatpush2.xpose.msra.mxu0 0.0
    %2680 = vmatprep.subr.mxu0 0.0
    %2681 = vmatpush2.xpose.msra.mxu0 0.0
    %2682 = vmatprep.subr.mxu0 0.0
    %2683 = vmatpush2.xpose.msra.mxu0 0.0
    %2684 = vmatprep.subr.mxu0 0.0
    %2685 = vmatpush2.xpose.msra.mxu0 0.0
    %2686 = vmatprep.subr.mxu0 0.0
    %2687 = vmatpush2.xpose.msra.mxu0 0.0
    %2688 = vmatprep.subr.mxu0 0.0
    %2689 = vmatpush2.xpose.msra.mxu0 0.0
    %2690 = vmatprep.mubr.f32.mxu0 %v520
    %2691 = vmatmul.mubr.f32.gmra.mxu0 %v512
    %v2692 = vpop.f32.mrf.mxu0
    %v2693 = vadd.f32 %v2623, %v2692
    %v2694 = vpop.f32.mrf.mxu0
    %2695 = vdwg.mxu0
    %2696 = vmatprep.subr.mxu0 0.0
    %2697 = vmatpush1.xpose.msra.mxu0 0.0
    %2698 = vmatprep.subr.mxu0 0.0
    %2699 = vmatpush1.xpose.msra.mxu0 0.0
    %2700 = vmatprep.subr.mxu0 0.0
    %2701 = vmatpush1.xpose.msra.mxu0 0.0
    %2702 = vmatprep.subr.mxu0 0.0
    %2703 = vmatpush1.xpose.msra.mxu0 0.0
    %2704 = vmatprep.subr.mxu0 0.0
    %2705 = vmatpush1.xpose.msra.mxu0 0.0
    %2706 = vmatprep.subr.mxu0 0.0
    %2707 = vmatpush1.xpose.msra.mxu0 0.0
    %2708 = vmatprep.subr.mxu0 0.0
    %2709 = vmatpush1.xpose.msra.mxu0 0.0
    %2710 = vmatprep.subr.mxu0 0.0
    %2711 = vmatpush1.xpose.msra.mxu0 0.0
    %2712 = vmatprep.subr.mxu0 0.0
    %2713 = vmatpush1.xpose.msra.mxu0 0.0
    %2714 = vmatprep.subr.mxu0 0.0
    %2715 = vmatpush1.xpose.msra.mxu0 0.0
    %2716 = vmatprep.subr.mxu0 0.0
    %2717 = vmatpush1.xpose.msra.mxu0 0.0
    %2718 = vmatprep.subr.mxu0 0.0
    %2719 = vmatpush1.xpose.msra.mxu0 0.0
    %2720 = vmatprep.subr.mxu0 0.0
    %2721 = vmatpush1.xpose.msra.mxu0 0.0
    %2722 = vmatprep.subr.mxu0 0.0
    %2723 = vmatpush1.xpose.msra.mxu0 0.0
    %2724 = vmatprep.subr.mxu0 0.0
    %2725 = vmatpush1.xpose.msra.mxu0 0.0
    %2726 = vmatprep.subr.mxu0 %v128
    %2727 = vmatpush1.xpose.msra.mxu0 %v127
    %2728 = vmatprep.subr.mxu0 0.0
    %2729 = vmatpush2.xpose.msra.mxu0 0.0
    %2730 = vmatprep.subr.mxu0 0.0
    %2731 = vmatpush2.xpose.msra.mxu0 0.0
    %2732 = vmatprep.subr.mxu0 0.0
    %2733 = vmatpush2.xpose.msra.mxu0 0.0
    %2734 = vmatprep.subr.mxu0 0.0
    %2735 = vmatpush2.xpose.msra.mxu0 0.0
    %2736 = vmatprep.subr.mxu0 0.0
    %2737 = vmatpush2.xpose.msra.mxu0 0.0
    %2738 = vmatprep.subr.mxu0 0.0
    %2739 = vmatpush2.xpose.msra.mxu0 0.0
    %2740 = vmatprep.subr.mxu0 0.0
    %2741 = vmatpush2.xpose.msra.mxu0 0.0
    %2742 = vmatprep.subr.mxu0 0.0
    %2743 = vmatpush2.xpose.msra.mxu0 0.0
    %2744 = vmatprep.subr.mxu0 0.0
    %2745 = vmatpush2.xpose.msra.mxu0 0.0
    %2746 = vmatprep.subr.mxu0 0.0
    %2747 = vmatpush2.xpose.msra.mxu0 0.0
    %2748 = vmatprep.subr.mxu0 0.0
    %2749 = vmatpush2.xpose.msra.mxu0 0.0
    %2750 = vmatprep.subr.mxu0 0.0
    %2751 = vmatpush2.xpose.msra.mxu0 0.0
    %2752 = vmatprep.subr.mxu0 0.0
    %2753 = vmatpush2.xpose.msra.mxu0 0.0
    %2754 = vmatprep.subr.mxu0 0.0
    %2755 = vmatpush2.xpose.msra.mxu0 0.0
    %2756 = vmatprep.subr.mxu0 0.0
    %2757 = vmatpush2.xpose.msra.mxu0 0.0
    %2758 = vmatprep.subr.mxu0 0.0
    %2759 = vmatpush2.xpose.msra.mxu0 0.0
    %2760 = vmatprep.mubr.f32.mxu0 %v521
    %2761 = vmatmul.mubr.f32.gmra.mxu0 %v519
    %v2762 = vpop.f32.mrf.mxu0
    %v2763 = vadd.f32 %v2693, %v2762
    %v2764 = vpop.f32.mrf.mxu0
    %2765 = vdwg.mxu0
    %2766 = vmatprep.subr.mxu0 0.0
    %2767 = vmatpush1.xpose.msra.mxu0 0.0
    %2768 = vmatprep.subr.mxu0 0.0
    %2769 = vmatpush1.xpose.msra.mxu0 0.0
    %2770 = vmatprep.subr.mxu0 0.0
    %2771 = vmatpush1.xpose.msra.mxu0 0.0
    %2772 = vmatprep.subr.mxu0 0.0
    %2773 = vmatpush1.xpose.msra.mxu0 0.0
    %2774 = vmatprep.subr.mxu0 0.0
    %2775 = vmatpush1.xpose.msra.mxu0 0.0
    %2776 = vmatprep.subr.mxu0 0.0
    %2777 = vmatpush1.xpose.msra.mxu0 0.0
    %2778 = vmatprep.subr.mxu0 0.0
    %2779 = vmatpush1.xpose.msra.mxu0 0.0
    %2780 = vmatprep.subr.mxu0 0.0
    %2781 = vmatpush1.xpose.msra.mxu0 0.0
    %2782 = vmatprep.subr.mxu0 0.0
    %2783 = vmatpush1.xpose.msra.mxu0 0.0
    %2784 = vmatprep.subr.mxu0 0.0
    %2785 = vmatpush1.xpose.msra.mxu0 0.0
    %2786 = vmatprep.subr.mxu0 0.0
    %2787 = vmatpush1.xpose.msra.mxu0 0.0
    %2788 = vmatprep.subr.mxu0 0.0
    %2789 = vmatpush1.xpose.msra.mxu0 0.0
    %2790 = vmatprep.subr.mxu0 0.0
    %2791 = vmatpush1.xpose.msra.mxu0 0.0
    %2792 = vmatprep.subr.mxu0 0.0
    %2793 = vmatpush1.xpose.msra.mxu0 0.0
    %2794 = vmatprep.subr.mxu0 0.0
    %2795 = vmatpush1.xpose.msra.mxu0 0.0
    %2796 = vmatprep.subr.mxu0 %v130
    %2797 = vmatpush1.xpose.msra.mxu0 %v129
    %2798 = vmatprep.subr.mxu0 0.0
    %2799 = vmatpush2.xpose.msra.mxu0 0.0
    %2800 = vmatprep.subr.mxu0 0.0
    %2801 = vmatpush2.xpose.msra.mxu0 0.0
    %2802 = vmatprep.subr.mxu0 0.0
    %2803 = vmatpush2.xpose.msra.mxu0 0.0
    %2804 = vmatprep.subr.mxu0 0.0
    %2805 = vmatpush2.xpose.msra.mxu0 0.0
    %2806 = vmatprep.subr.mxu0 0.0
    %2807 = vmatpush2.xpose.msra.mxu0 0.0
    %2808 = vmatprep.subr.mxu0 0.0
    %2809 = vmatpush2.xpose.msra.mxu0 0.0
    %2810 = vmatprep.subr.mxu0 0.0
    %2811 = vmatpush2.xpose.msra.mxu0 0.0
    %2812 = vmatprep.subr.mxu0 0.0
    %2813 = vmatpush2.xpose.msra.mxu0 0.0
    %2814 = vmatprep.subr.mxu0 0.0
    %2815 = vmatpush2.xpose.msra.mxu0 0.0
    %2816 = vmatprep.subr.mxu0 0.0
    %2817 = vmatpush2.xpose.msra.mxu0 0.0
    %2818 = vmatprep.subr.mxu0 0.0
    %2819 = vmatpush2.xpose.msra.mxu0 0.0
    %2820 = vmatprep.subr.mxu0 0.0
    %2821 = vmatpush2.xpose.msra.mxu0 0.0
    %2822 = vmatprep.subr.mxu0 0.0
    %2823 = vmatpush2.xpose.msra.mxu0 0.0
    %2824 = vmatprep.subr.mxu0 0.0
    %2825 = vmatpush2.xpose.msra.mxu0 0.0
    %2826 = vmatprep.subr.mxu0 0.0
    %2827 = vmatpush2.xpose.msra.mxu0 0.0
    %2828 = vmatprep.subr.mxu0 0.0
    %2829 = vmatpush2.xpose.msra.mxu0 0.0
    %2830 = vmatprep.mubr.f32.mxu0 %v537
    %2831 = vmatmul.mubr.f32.gmra.mxu0 %v529
    %v2832 = vpop.f32.mrf.mxu0
    %v2833 = vadd.f32 %v2763, %v2832
    %v2834 = vpop.f32.mrf.mxu0
    %2835 = vdwg.mxu0
    %2836 = vmatprep.subr.mxu0 0.0
    %2837 = vmatpush1.xpose.msra.mxu0 0.0
    %2838 = vmatprep.subr.mxu0 0.0
    %2839 = vmatpush1.xpose.msra.mxu0 0.0
    %2840 = vmatprep.subr.mxu0 0.0
    %2841 = vmatpush1.xpose.msra.mxu0 0.0
    %2842 = vmatprep.subr.mxu0 0.0
    %2843 = vmatpush1.xpose.msra.mxu0 0.0
    %2844 = vmatprep.subr.mxu0 0.0
    %2845 = vmatpush1.xpose.msra.mxu0 0.0
    %2846 = vmatprep.subr.mxu0 0.0
    %2847 = vmatpush1.xpose.msra.mxu0 0.0
    %2848 = vmatprep.subr.mxu0 0.0
    %2849 = vmatpush1.xpose.msra.mxu0 0.0
    %2850 = vmatprep.subr.mxu0 0.0
    %2851 = vmatpush1.xpose.msra.mxu0 0.0
    %2852 = vmatprep.subr.mxu0 0.0
    %2853 = vmatpush1.xpose.msra.mxu0 0.0
    %2854 = vmatprep.subr.mxu0 0.0
    %2855 = vmatpush1.xpose.msra.mxu0 0.0
    %2856 = vmatprep.subr.mxu0 0.0
    %2857 = vmatpush1.xpose.msra.mxu0 0.0
    %2858 = vmatprep.subr.mxu0 0.0
    %2859 = vmatpush1.xpose.msra.mxu0 0.0
    %2860 = vmatprep.subr.mxu0 0.0
    %2861 = vmatpush1.xpose.msra.mxu0 0.0
    %2862 = vmatprep.subr.mxu0 0.0
    %2863 = vmatpush1.xpose.msra.mxu0 0.0
    %2864 = vmatprep.subr.mxu0 0.0
    %2865 = vmatpush1.xpose.msra.mxu0 0.0
    %2866 = vmatprep.subr.mxu0 %v132
    %2867 = vmatpush1.xpose.msra.mxu0 %v131
    %2868 = vmatprep.subr.mxu0 0.0
    %2869 = vmatpush2.xpose.msra.mxu0 0.0
    %2870 = vmatprep.subr.mxu0 0.0
    %2871 = vmatpush2.xpose.msra.mxu0 0.0
    %2872 = vmatprep.subr.mxu0 0.0
    %2873 = vmatpush2.xpose.msra.mxu0 0.0
    %2874 = vmatprep.subr.mxu0 0.0
    %2875 = vmatpush2.xpose.msra.mxu0 0.0
    %2876 = vmatprep.subr.mxu0 0.0
    %2877 = vmatpush2.xpose.msra.mxu0 0.0
    %2878 = vmatprep.subr.mxu0 0.0
    %2879 = vmatpush2.xpose.msra.mxu0 0.0
    %2880 = vmatprep.subr.mxu0 0.0
    %2881 = vmatpush2.xpose.msra.mxu0 0.0
    %2882 = vmatprep.subr.mxu0 0.0
    %2883 = vmatpush2.xpose.msra.mxu0 0.0
    %2884 = vmatprep.subr.mxu0 0.0
    %2885 = vmatpush2.xpose.msra.mxu0 0.0
    %2886 = vmatprep.subr.mxu0 0.0
    %2887 = vmatpush2.xpose.msra.mxu0 0.0
    %2888 = vmatprep.subr.mxu0 0.0
    %2889 = vmatpush2.xpose.msra.mxu0 0.0
    %2890 = vmatprep.subr.mxu0 0.0
    %2891 = vmatpush2.xpose.msra.mxu0 0.0
    %2892 = vmatprep.subr.mxu0 0.0
    %2893 = vmatpush2.xpose.msra.mxu0 0.0
    %2894 = vmatprep.subr.mxu0 0.0
    %2895 = vmatpush2.xpose.msra.mxu0 0.0
    %2896 = vmatprep.subr.mxu0 0.0
    %2897 = vmatpush2.xpose.msra.mxu0 0.0
    %2898 = vmatprep.subr.mxu0 0.0
    %2899 = vmatpush2.xpose.msra.mxu0 0.0
    %2900 = vmatprep.mubr.f32.mxu0 %v538
    %2901 = vmatmul.mubr.f32.gmra.mxu0 %v536
    %v2902 = vpop.f32.mrf.mxu0
    %v2903 = vadd.f32 %v2833, %v2902
    %v2904 = vpop.f32.mrf.mxu0
    %2905 = vdwg.mxu0
    %2906 = vmatprep.subr.mxu0 0.0
    %2907 = vmatpush1.xpose.msra.mxu0 0.0
    %2908 = vmatprep.subr.mxu0 0.0
    %2909 = vmatpush1.xpose.msra.mxu0 0.0
    %2910 = vmatprep.subr.mxu0 0.0
    %2911 = vmatpush1.xpose.msra.mxu0 0.0
    %2912 = vmatprep.subr.mxu0 0.0
    %2913 = vmatpush1.xpose.msra.mxu0 0.0
    %2914 = vmatprep.subr.mxu0 0.0
    %2915 = vmatpush1.xpose.msra.mxu0 0.0
    %2916 = vmatprep.subr.mxu0 0.0
    %2917 = vmatpush1.xpose.msra.mxu0 0.0
    %2918 = vmatprep.subr.mxu0 0.0
    %2919 = vmatpush1.xpose.msra.mxu0 0.0
    %2920 = vmatprep.subr.mxu0 0.0
    %2921 = vmatpush1.xpose.msra.mxu0 0.0
    %2922 = vmatprep.subr.mxu0 0.0
    %2923 = vmatpush1.xpose.msra.mxu0 0.0
    %2924 = vmatprep.subr.mxu0 0.0
    %2925 = vmatpush1.xpose.msra.mxu0 0.0
    %2926 = vmatprep.subr.mxu0 0.0
    %2927 = vmatpush1.xpose.msra.mxu0 0.0
    %2928 = vmatprep.subr.mxu0 0.0
    %2929 = vmatpush1.xpose.msra.mxu0 0.0
    %2930 = vmatprep.subr.mxu0 0.0
    %2931 = vmatpush1.xpose.msra.mxu0 0.0
    %2932 = vmatprep.subr.mxu0 0.0
    %2933 = vmatpush1.xpose.msra.mxu0 0.0
    %2934 = vmatprep.subr.mxu0 0.0
    %2935 = vmatpush1.xpose.msra.mxu0 0.0
    %2936 = vmatprep.subr.mxu0 %v134
    %2937 = vmatpush1.xpose.msra.mxu0 %v133
    %2938 = vmatprep.subr.mxu0 0.0
    %2939 = vmatpush2.xpose.msra.mxu0 0.0
    %2940 = vmatprep.subr.mxu0 0.0
    %2941 = vmatpush2.xpose.msra.mxu0 0.0
    %2942 = vmatprep.subr.mxu0 0.0
    %2943 = vmatpush2.xpose.msra.mxu0 0.0
    %2944 = vmatprep.subr.mxu0 0.0
    %2945 = vmatpush2.xpose.msra.mxu0 0.0
    %2946 = vmatprep.subr.mxu0 0.0
    %2947 = vmatpush2.xpose.msra.mxu0 0.0
    %2948 = vmatprep.subr.mxu0 0.0
    %2949 = vmatpush2.xpose.msra.mxu0 0.0
    %2950 = vmatprep.subr.mxu0 0.0
    %2951 = vmatpush2.xpose.msra.mxu0 0.0
    %2952 = vmatprep.subr.mxu0 0.0
    %2953 = vmatpush2.xpose.msra.mxu0 0.0
    %2954 = vmatprep.subr.mxu0 0.0
    %2955 = vmatpush2.xpose.msra.mxu0 0.0
    %2956 = vmatprep.subr.mxu0 0.0
    %2957 = vmatpush2.xpose.msra.mxu0 0.0
    %2958 = vmatprep.subr.mxu0 0.0
    %2959 = vmatpush2.xpose.msra.mxu0 0.0
    %2960 = vmatprep.subr.mxu0 0.0
    %2961 = vmatpush2.xpose.msra.mxu0 0.0
    %2962 = vmatprep.subr.mxu0 0.0
    %2963 = vmatpush2.xpose.msra.mxu0 0.0
    %2964 = vmatprep.subr.mxu0 0.0
    %2965 = vmatpush2.xpose.msra.mxu0 0.0
    %2966 = vmatprep.subr.mxu0 0.0
    %2967 = vmatpush2.xpose.msra.mxu0 0.0
    %2968 = vmatprep.subr.mxu0 0.0
    %2969 = vmatpush2.xpose.msra.mxu0 0.0
    %2970 = vmatprep.mubr.f32.mxu0 %v554
    %2971 = vmatmul.mubr.f32.gmra.mxu0 %v546
    %v2972 = vpop.f32.mrf.mxu0
    %v2973 = vadd.f32 %v2903, %v2972
    %v2974 = vpop.f32.mrf.mxu0
    %2975 = vdwg.mxu0
    %2976 = vmatprep.subr.mxu0 0.0
    %2977 = vmatpush1.xpose.msra.mxu0 0.0
    %2978 = vmatprep.subr.mxu0 0.0
    %2979 = vmatpush1.xpose.msra.mxu0 0.0
    %2980 = vmatprep.subr.mxu0 0.0
    %2981 = vmatpush1.xpose.msra.mxu0 0.0
    %2982 = vmatprep.subr.mxu0 0.0
    %2983 = vmatpush1.xpose.msra.mxu0 0.0
    %2984 = vmatprep.subr.mxu0 0.0
    %2985 = vmatpush1.xpose.msra.mxu0 0.0
    %2986 = vmatprep.subr.mxu0 0.0
    %2987 = vmatpush1.xpose.msra.mxu0 0.0
    %2988 = vmatprep.subr.mxu0 0.0
    %2989 = vmatpush1.xpose.msra.mxu0 0.0
    %2990 = vmatprep.subr.mxu0 0.0
    %2991 = vmatpush1.xpose.msra.mxu0 0.0
    %2992 = vmatprep.subr.mxu0 0.0
    %2993 = vmatpush1.xpose.msra.mxu0 0.0
    %2994 = vmatprep.subr.mxu0 0.0
    %2995 = vmatpush1.xpose.msra.mxu0 0.0
    %2996 = vmatprep.subr.mxu0 0.0
    %2997 = vmatpush1.xpose.msra.mxu0 0.0
    %2998 = vmatprep.subr.mxu0 0.0
    %2999 = vmatpush1.xpose.msra.mxu0 0.0
    %3000 = vmatprep.subr.mxu0 0.0
    %3001 = vmatpush1.xpose.msra.mxu0 0.0
    %3002 = vmatprep.subr.mxu0 0.0
    %3003 = vmatpush1.xpose.msra.mxu0 0.0
    %3004 = vmatprep.subr.mxu0 0.0
    %3005 = vmatpush1.xpose.msra.mxu0 0.0
    %3006 = vmatprep.subr.mxu0 %v136
    %3007 = vmatpush1.xpose.msra.mxu0 %v135
    %3008 = vmatprep.subr.mxu0 0.0
    %3009 = vmatpush2.xpose.msra.mxu0 0.0
    %3010 = vmatprep.subr.mxu0 0.0
    %3011 = vmatpush2.xpose.msra.mxu0 0.0
    %3012 = vmatprep.subr.mxu0 0.0
    %3013 = vmatpush2.xpose.msra.mxu0 0.0
    %3014 = vmatprep.subr.mxu0 0.0
    %3015 = vmatpush2.xpose.msra.mxu0 0.0
    %3016 = vmatprep.subr.mxu0 0.0
    %3017 = vmatpush2.xpose.msra.mxu0 0.0
    %3018 = vmatprep.subr.mxu0 0.0
    %3019 = vmatpush2.xpose.msra.mxu0 0.0
    %3020 = vmatprep.subr.mxu0 0.0
    %3021 = vmatpush2.xpose.msra.mxu0 0.0
    %3022 = vmatprep.subr.mxu0 0.0
    %3023 = vmatpush2.xpose.msra.mxu0 0.0
    %3024 = vmatprep.subr.mxu0 0.0
    %3025 = vmatpush2.xpose.msra.mxu0 0.0
    %3026 = vmatprep.subr.mxu0 0.0
    %3027 = vmatpush2.xpose.msra.mxu0 0.0
    %3028 = vmatprep.subr.mxu0 0.0
    %3029 = vmatpush2.xpose.msra.mxu0 0.0
    %3030 = vmatprep.subr.mxu0 0.0
    %3031 = vmatpush2.xpose.msra.mxu0 0.0
    %3032 = vmatprep.subr.mxu0 0.0
    %3033 = vmatpush2.xpose.msra.mxu0 0.0
    %3034 = vmatprep.subr.mxu0 0.0
    %3035 = vmatpush2.xpose.msra.mxu0 0.0
    %3036 = vmatprep.subr.mxu0 0.0
    %3037 = vmatpush2.xpose.msra.mxu0 0.0
    %3038 = vmatprep.subr.mxu0 0.0
    %3039 = vmatpush2.xpose.msra.mxu0 0.0
    %3040 = vmatprep.mubr.f32.mxu0 %v555
    %3041 = vmatmul.mubr.f32.gmra.mxu0 %v553
    %v3042 = vpop.f32.mrf.mxu0
    %v3043 = vadd.f32 %v2973, %v3042
    %v3044 = vpop.f32.mrf.mxu0
    %3045 = vdwg.mxu0
    %3046 = vmatprep.subr.mxu0 0.0
    %3047 = vmatpush1.xpose.msra.mxu0 0.0
    %3048 = vmatprep.subr.mxu0 0.0
    %3049 = vmatpush1.xpose.msra.mxu0 0.0
    %3050 = vmatprep.subr.mxu0 0.0
    %3051 = vmatpush1.xpose.msra.mxu0 0.0
    %3052 = vmatprep.subr.mxu0 0.0
    %3053 = vmatpush1.xpose.msra.mxu0 0.0
    %3054 = vmatprep.subr.mxu0 0.0
    %3055 = vmatpush1.xpose.msra.mxu0 0.0
    %3056 = vmatprep.subr.mxu0 0.0
    %3057 = vmatpush1.xpose.msra.mxu0 0.0
    %3058 = vmatprep.subr.mxu0 0.0
    %3059 = vmatpush1.xpose.msra.mxu0 0.0
    %3060 = vmatprep.subr.mxu0 0.0
    %3061 = vmatpush1.xpose.msra.mxu0 0.0
    %3062 = vmatprep.subr.mxu0 0.0
    %3063 = vmatpush1.xpose.msra.mxu0 0.0
    %3064 = vmatprep.subr.mxu0 0.0
    %3065 = vmatpush1.xpose.msra.mxu0 0.0
    %3066 = vmatprep.subr.mxu0 0.0
    %3067 = vmatpush1.xpose.msra.mxu0 0.0
    %3068 = vmatprep.subr.mxu0 0.0
    %3069 = vmatpush1.xpose.msra.mxu0 0.0
    %3070 = vmatprep.subr.mxu0 0.0
    %3071 = vmatpush1.xpose.msra.mxu0 0.0
    %3072 = vmatprep.subr.mxu0 0.0
    %3073 = vmatpush1.xpose.msra.mxu0 0.0
    %3074 = vmatprep.subr.mxu0 0.0
    %3075 = vmatpush1.xpose.msra.mxu0 0.0
    %3076 = vmatprep.subr.mxu0 %v138
    %3077 = vmatpush1.xpose.msra.mxu0 %v137
    %3078 = vmatprep.subr.mxu0 0.0
    %3079 = vmatpush2.xpose.msra.mxu0 0.0
    %3080 = vmatprep.subr.mxu0 0.0
    %3081 = vmatpush2.xpose.msra.mxu0 0.0
    %3082 = vmatprep.subr.mxu0 0.0
    %3083 = vmatpush2.xpose.msra.mxu0 0.0
    %3084 = vmatprep.subr.mxu0 0.0
    %3085 = vmatpush2.xpose.msra.mxu0 0.0
    %3086 = vmatprep.subr.mxu0 0.0
    %3087 = vmatpush2.xpose.msra.mxu0 0.0
    %3088 = vmatprep.subr.mxu0 0.0
    %3089 = vmatpush2.xpose.msra.mxu0 0.0
    %3090 = vmatprep.subr.mxu0 0.0
    %3091 = vmatpush2.xpose.msra.mxu0 0.0
    %3092 = vmatprep.subr.mxu0 0.0
    %3093 = vmatpush2.xpose.msra.mxu0 0.0
    %3094 = vmatprep.subr.mxu0 0.0
    %3095 = vmatpush2.xpose.msra.mxu0 0.0
    %3096 = vmatprep.subr.mxu0 0.0
    %3097 = vmatpush2.xpose.msra.mxu0 0.0
    %3098 = vmatprep.subr.mxu0 0.0
    %3099 = vmatpush2.xpose.msra.mxu0 0.0
    %3100 = vmatprep.subr.mxu0 0.0
    %3101 = vmatpush2.xpose.msra.mxu0 0.0
    %3102 = vmatprep.subr.mxu0 0.0
    %3103 = vmatpush2.xpose.msra.mxu0 0.0
    %3104 = vmatprep.subr.mxu0 0.0
    %3105 = vmatpush2.xpose.msra.mxu0 0.0
    %3106 = vmatprep.subr.mxu0 0.0
    %3107 = vmatpush2.xpose.msra.mxu0 0.0
    %3108 = vmatprep.subr.mxu0 0.0
    %3109 = vmatpush2.xpose.msra.mxu0 0.0
    %3110 = vmatprep.mubr.f32.mxu0 %v571
    %3111 = vmatmul.mubr.f32.gmra.mxu0 %v563
    %v3112 = vpop.f32.mrf.mxu0
    %v3113 = vadd.f32 %v3043, %v3112
    %v3114 = vpop.f32.mrf.mxu0
    %3115 = vdwg.mxu0
    %3116 = vmatprep.subr.mxu0 0.0
    %3117 = vmatpush1.xpose.msra.mxu0 0.0
    %3118 = vmatprep.subr.mxu0 0.0
    %3119 = vmatpush1.xpose.msra.mxu0 0.0
    %3120 = vmatprep.subr.mxu0 0.0
    %3121 = vmatpush1.xpose.msra.mxu0 0.0
    %3122 = vmatprep.subr.mxu0 0.0
    %3123 = vmatpush1.xpose.msra.mxu0 0.0
    %3124 = vmatprep.subr.mxu0 0.0
    %3125 = vmatpush1.xpose.msra.mxu0 0.0
    %3126 = vmatprep.subr.mxu0 0.0
    %3127 = vmatpush1.xpose.msra.mxu0 0.0
    %3128 = vmatprep.subr.mxu0 0.0
    %3129 = vmatpush1.xpose.msra.mxu0 0.0
    %3130 = vmatprep.subr.mxu0 0.0
    %3131 = vmatpush1.xpose.msra.mxu0 0.0
    %3132 = vmatprep.subr.mxu0 0.0
    %3133 = vmatpush1.xpose.msra.mxu0 0.0
    %3134 = vmatprep.subr.mxu0 0.0
    %3135 = vmatpush1.xpose.msra.mxu0 0.0
    %3136 = vmatprep.subr.mxu0 0.0
    %3137 = vmatpush1.xpose.msra.mxu0 0.0
    %3138 = vmatprep.subr.mxu0 0.0
    %3139 = vmatpush1.xpose.msra.mxu0 0.0
    %3140 = vmatprep.subr.mxu0 0.0
    %3141 = vmatpush1.xpose.msra.mxu0 0.0
    %3142 = vmatprep.subr.mxu0 0.0
    %3143 = vmatpush1.xpose.msra.mxu0 0.0
    %3144 = vmatprep.subr.mxu0 0.0
    %3145 = vmatpush1.xpose.msra.mxu0 0.0
    %3146 = vmatprep.subr.mxu0 %v140
    %3147 = vmatpush1.xpose.msra.mxu0 %v139
    %3148 = vmatprep.subr.mxu0 0.0
    %3149 = vmatpush2.xpose.msra.mxu0 0.0
    %3150 = vmatprep.subr.mxu0 0.0
    %3151 = vmatpush2.xpose.msra.mxu0 0.0
    %3152 = vmatprep.subr.mxu0 0.0
    %3153 = vmatpush2.xpose.msra.mxu0 0.0
    %3154 = vmatprep.subr.mxu0 0.0
    %3155 = vmatpush2.xpose.msra.mxu0 0.0
    %3156 = vmatprep.subr.mxu0 0.0
    %3157 = vmatpush2.xpose.msra.mxu0 0.0
    %3158 = vmatprep.subr.mxu0 0.0
    %3159 = vmatpush2.xpose.msra.mxu0 0.0
    %3160 = vmatprep.subr.mxu0 0.0
    %3161 = vmatpush2.xpose.msra.mxu0 0.0
    %3162 = vmatprep.subr.mxu0 0.0
    %3163 = vmatpush2.xpose.msra.mxu0 0.0
    %3164 = vmatprep.subr.mxu0 0.0
    %3165 = vmatpush2.xpose.msra.mxu0 0.0
    %3166 = vmatprep.subr.mxu0 0.0
    %3167 = vmatpush2.xpose.msra.mxu0 0.0
    %3168 = vmatprep.subr.mxu0 0.0
    %3169 = vmatpush2.xpose.msra.mxu0 0.0
    %3170 = vmatprep.subr.mxu0 0.0
    %3171 = vmatpush2.xpose.msra.mxu0 0.0
    %3172 = vmatprep.subr.mxu0 0.0
    %3173 = vmatpush2.xpose.msra.mxu0 0.0
    %3174 = vmatprep.subr.mxu0 0.0
    %3175 = vmatpush2.xpose.msra.mxu0 0.0
    %3176 = vmatprep.subr.mxu0 0.0
    %3177 = vmatpush2.xpose.msra.mxu0 0.0
    %3178 = vmatprep.subr.mxu0 0.0
    %3179 = vmatpush2.xpose.msra.mxu0 0.0
    %3180 = vmatprep.mubr.f32.mxu0 %v572
    %3181 = vmatmul.mubr.f32.gmra.mxu0 %v570
    %v3182 = vpop.f32.mrf.mxu0
    %v3183 = vadd.f32 %v3113, %v3182
    %v3184 = vpop.f32.mrf.mxu0
    %3185 = vdwg.mxu0
    %3186 = vmatprep.subr.mxu0 0.0
    %3187 = vmatpush1.xpose.msra.mxu0 0.0
    %3188 = vmatprep.subr.mxu0 0.0
    %3189 = vmatpush1.xpose.msra.mxu0 0.0
    %3190 = vmatprep.subr.mxu0 0.0
    %3191 = vmatpush1.xpose.msra.mxu0 0.0
    %3192 = vmatprep.subr.mxu0 0.0
    %3193 = vmatpush1.xpose.msra.mxu0 0.0
    %3194 = vmatprep.subr.mxu0 0.0
    %3195 = vmatpush1.xpose.msra.mxu0 0.0
    %3196 = vmatprep.subr.mxu0 0.0
    %3197 = vmatpush1.xpose.msra.mxu0 0.0
    %3198 = vmatprep.subr.mxu0 0.0
    %3199 = vmatpush1.xpose.msra.mxu0 0.0
    %3200 = vmatprep.subr.mxu0 0.0
    %3201 = vmatpush1.xpose.msra.mxu0 0.0
    %3202 = vmatprep.subr.mxu0 0.0
    %3203 = vmatpush1.xpose.msra.mxu0 0.0
    %3204 = vmatprep.subr.mxu0 0.0
    %3205 = vmatpush1.xpose.msra.mxu0 0.0
    %3206 = vmatprep.subr.mxu0 0.0
    %3207 = vmatpush1.xpose.msra.mxu0 0.0
    %3208 = vmatprep.subr.mxu0 0.0
    %3209 = vmatpush1.xpose.msra.mxu0 0.0
    %3210 = vmatprep.subr.mxu0 0.0
    %3211 = vmatpush1.xpose.msra.mxu0 0.0
    %3212 = vmatprep.subr.mxu0 0.0
    %3213 = vmatpush1.xpose.msra.mxu0 0.0
    %3214 = vmatprep.subr.mxu0 0.0
    %3215 = vmatpush1.xpose.msra.mxu0 0.0
    %3216 = vmatprep.subr.mxu0 %v142
    %3217 = vmatpush1.xpose.msra.mxu0 %v141
    %3218 = vmatprep.subr.mxu0 0.0
    %3219 = vmatpush2.xpose.msra.mxu0 0.0
    %3220 = vmatprep.subr.mxu0 0.0
    %3221 = vmatpush2.xpose.msra.mxu0 0.0
    %3222 = vmatprep.subr.mxu0 0.0
    %3223 = vmatpush2.xpose.msra.mxu0 0.0
    %3224 = vmatprep.subr.mxu0 0.0
    %3225 = vmatpush2.xpose.msra.mxu0 0.0
    %3226 = vmatprep.subr.mxu0 0.0
    %3227 = vmatpush2.xpose.msra.mxu0 0.0
    %3228 = vmatprep.subr.mxu0 0.0
    %3229 = vmatpush2.xpose.msra.mxu0 0.0
    %3230 = vmatprep.subr.mxu0 0.0
    %3231 = vmatpush2.xpose.msra.mxu0 0.0
    %3232 = vmatprep.subr.mxu0 0.0
    %3233 = vmatpush2.xpose.msra.mxu0 0.0
    %3234 = vmatprep.subr.mxu0 0.0
    %3235 = vmatpush2.xpose.msra.mxu0 0.0
    %3236 = vmatprep.subr.mxu0 0.0
    %3237 = vmatpush2.xpose.msra.mxu0 0.0
    %3238 = vmatprep.subr.mxu0 0.0
    %3239 = vmatpush2.xpose.msra.mxu0 0.0
    %3240 = vmatprep.subr.mxu0 0.0
    %3241 = vmatpush2.xpose.msra.mxu0 0.0
    %3242 = vmatprep.subr.mxu0 0.0
    %3243 = vmatpush2.xpose.msra.mxu0 0.0
    %3244 = vmatprep.subr.mxu0 0.0
    %3245 = vmatpush2.xpose.msra.mxu0 0.0
    %3246 = vmatprep.subr.mxu0 0.0
    %3247 = vmatpush2.xpose.msra.mxu0 0.0
    %3248 = vmatprep.subr.mxu0 0.0
    %3249 = vmatpush2.xpose.msra.mxu0 0.0
    %3250 = vmatprep.mubr.f32.mxu0 %v588
    %3251 = vmatmul.mubr.f32.gmra.mxu0 %v580
    %v3252 = vpop.f32.mrf.mxu0
    %v3253 = vadd.f32 %v3183, %v3252
    %v3254 = vpop.f32.mrf.mxu0
    %3255 = vdwg.mxu0
    %3256 = vmatprep.subr.mxu0 0.0
    %3257 = vmatpush1.xpose.msra.mxu0 0.0
    %3258 = vmatprep.subr.mxu0 0.0
    %3259 = vmatpush1.xpose.msra.mxu0 0.0
    %3260 = vmatprep.subr.mxu0 0.0
    %3261 = vmatpush1.xpose.msra.mxu0 0.0
    %3262 = vmatprep.subr.mxu0 0.0
    %3263 = vmatpush1.xpose.msra.mxu0 0.0
    %3264 = vmatprep.subr.mxu0 0.0
    %3265 = vmatpush1.xpose.msra.mxu0 0.0
    %3266 = vmatprep.subr.mxu0 0.0
    %3267 = vmatpush1.xpose.msra.mxu0 0.0
    %3268 = vmatprep.subr.mxu0 0.0
    %3269 = vmatpush1.xpose.msra.mxu0 0.0
    %3270 = vmatprep.subr.mxu0 0.0
    %3271 = vmatpush1.xpose.msra.mxu0 0.0
    %3272 = vmatprep.subr.mxu0 0.0
    %3273 = vmatpush1.xpose.msra.mxu0 0.0
    %3274 = vmatprep.subr.mxu0 0.0
    %3275 = vmatpush1.xpose.msra.mxu0 0.0
    %3276 = vmatprep.subr.mxu0 0.0
    %3277 = vmatpush1.xpose.msra.mxu0 0.0
    %3278 = vmatprep.subr.mxu0 0.0
    %3279 = vmatpush1.xpose.msra.mxu0 0.0
    %3280 = vmatprep.subr.mxu0 0.0
    %3281 = vmatpush1.xpose.msra.mxu0 0.0
    %3282 = vmatprep.subr.mxu0 0.0
    %3283 = vmatpush1.xpose.msra.mxu0 0.0
    %3284 = vmatprep.subr.mxu0 0.0
    %3285 = vmatpush1.xpose.msra.mxu0 0.0
    %3286 = vmatprep.subr.mxu0 %v144
    %3287 = vmatpush1.xpose.msra.mxu0 %v143
    %3288 = vmatprep.subr.mxu0 0.0
    %3289 = vmatpush2.xpose.msra.mxu0 0.0
    %3290 = vmatprep.subr.mxu0 0.0
    %3291 = vmatpush2.xpose.msra.mxu0 0.0
    %3292 = vmatprep.subr.mxu0 0.0
    %3293 = vmatpush2.xpose.msra.mxu0 0.0
    %3294 = vmatprep.subr.mxu0 0.0
    %3295 = vmatpush2.xpose.msra.mxu0 0.0
    %3296 = vmatprep.subr.mxu0 0.0
    %3297 = vmatpush2.xpose.msra.mxu0 0.0
    %3298 = vmatprep.subr.mxu0 0.0
    %3299 = vmatpush2.xpose.msra.mxu0 0.0
    %3300 = vmatprep.subr.mxu0 0.0
    %3301 = vmatpush2.xpose.msra.mxu0 0.0
    %3302 = vmatprep.subr.mxu0 0.0
    %3303 = vmatpush2.xpose.msra.mxu0 0.0
    %3304 = vmatprep.subr.mxu0 0.0
    %3305 = vmatpush2.xpose.msra.mxu0 0.0
    %3306 = vmatprep.subr.mxu0 0.0
    %3307 = vmatpush2.xpose.msra.mxu0 0.0
    %3308 = vmatprep.subr.mxu0 0.0
    %3309 = vmatpush2.xpose.msra.mxu0 0.0
    %3310 = vmatprep.subr.mxu0 0.0
    %3311 = vmatpush2.xpose.msra.mxu0 0.0
    %3312 = vmatprep.subr.mxu0 0.0
    %3313 = vmatpush2.xpose.msra.mxu0 0.0
    %3314 = vmatprep.subr.mxu0 0.0
    %3315 = vmatpush2.xpose.msra.mxu0 0.0
    %3316 = vmatprep.subr.mxu0 0.0
    %3317 = vmatpush2.xpose.msra.mxu0 0.0
    %3318 = vmatprep.subr.mxu0 0.0
    %3319 = vmatpush2.xpose.msra.mxu0 0.0
    %3320 = vmatprep.mubr.f32.mxu0 %v589
    %3321 = vmatmul.mubr.f32.gmra.mxu0 %v587
    %v3322 = vpop.f32.mrf.mxu0
    %v3323 = vadd.f32 %v3253, %v3322
    %v3324 = vpop.f32.mrf.mxu0
    %3325 = vdwg.mxu0
    %3326 = vmatprep.subr.mxu0 0.0
    %3327 = vmatpush1.xpose.msra.mxu0 0.0
    %3328 = vmatprep.subr.mxu0 0.0
    %3329 = vmatpush1.xpose.msra.mxu0 0.0
    %3330 = vmatprep.subr.mxu0 0.0
    %3331 = vmatpush1.xpose.msra.mxu0 0.0
    %3332 = vmatprep.subr.mxu0 0.0
    %3333 = vmatpush1.xpose.msra.mxu0 0.0
    %3334 = vmatprep.subr.mxu0 0.0
    %3335 = vmatpush1.xpose.msra.mxu0 0.0
    %3336 = vmatprep.subr.mxu0 0.0
    %3337 = vmatpush1.xpose.msra.mxu0 0.0
    %3338 = vmatprep.subr.mxu0 0.0
    %3339 = vmatpush1.xpose.msra.mxu0 0.0
    %3340 = vmatprep.subr.mxu0 0.0
    %3341 = vmatpush1.xpose.msra.mxu0 0.0
    %3342 = vmatprep.subr.mxu0 0.0
    %3343 = vmatpush1.xpose.msra.mxu0 0.0
    %3344 = vmatprep.subr.mxu0 0.0
    %3345 = vmatpush1.xpose.msra.mxu0 0.0
    %3346 = vmatprep.subr.mxu0 0.0
    %3347 = vmatpush1.xpose.msra.mxu0 0.0
    %3348 = vmatprep.subr.mxu0 0.0
    %3349 = vmatpush1.xpose.msra.mxu0 0.0
    %3350 = vmatprep.subr.mxu0 0.0
    %3351 = vmatpush1.xpose.msra.mxu0 0.0
    %3352 = vmatprep.subr.mxu0 0.0
    %3353 = vmatpush1.xpose.msra.mxu0 0.0
    %3354 = vmatprep.subr.mxu0 0.0
    %3355 = vmatpush1.xpose.msra.mxu0 0.0
    %3356 = vmatprep.subr.mxu0 %v146
    %3357 = vmatpush1.xpose.msra.mxu0 %v145
    %3358 = vmatprep.subr.mxu0 0.0
    %3359 = vmatpush2.xpose.msra.mxu0 0.0
    %3360 = vmatprep.subr.mxu0 0.0
    %3361 = vmatpush2.xpose.msra.mxu0 0.0
    %3362 = vmatprep.subr.mxu0 0.0
    %3363 = vmatpush2.xpose.msra.mxu0 0.0
    %3364 = vmatprep.subr.mxu0 0.0
    %3365 = vmatpush2.xpose.msra.mxu0 0.0
    %3366 = vmatprep.subr.mxu0 0.0
    %3367 = vmatpush2.xpose.msra.mxu0 0.0
    %3368 = vmatprep.subr.mxu0 0.0
    %3369 = vmatpush2.xpose.msra.mxu0 0.0
    %3370 = vmatprep.subr.mxu0 0.0
    %3371 = vmatpush2.xpose.msra.mxu0 0.0
    %3372 = vmatprep.subr.mxu0 0.0
    %3373 = vmatpush2.xpose.msra.mxu0 0.0
    %3374 = vmatprep.subr.mxu0 0.0
    %3375 = vmatpush2.xpose.msra.mxu0 0.0
    %3376 = vmatprep.subr.mxu0 0.0
    %3377 = vmatpush2.xpose.msra.mxu0 0.0
    %3378 = vmatprep.subr.mxu0 0.0
    %3379 = vmatpush2.xpose.msra.mxu0 0.0
    %3380 = vmatprep.subr.mxu0 0.0
    %3381 = vmatpush2.xpose.msra.mxu0 0.0
    %3382 = vmatprep.subr.mxu0 0.0
    %3383 = vmatpush2.xpose.msra.mxu0 0.0
    %3384 = vmatprep.subr.mxu0 0.0
    %3385 = vmatpush2.xpose.msra.mxu0 0.0
    %3386 = vmatprep.subr.mxu0 0.0
    %3387 = vmatpush2.xpose.msra.mxu0 0.0
    %3388 = vmatprep.subr.mxu0 0.0
    %3389 = vmatpush2.xpose.msra.mxu0 0.0
    %3390 = vmatprep.mubr.f32.mxu0 %v605
    %3391 = vmatmul.mubr.f32.gmra.mxu0 %v597
    %v3392 = vpop.f32.mrf.mxu0
    %v3393 = vadd.f32 %v3323, %v3392
    %v3394 = vpop.f32.mrf.mxu0
    %3395 = vdwg.mxu0
    %3396 = vmatprep.subr.mxu0 0.0
    %3397 = vmatpush1.xpose.msra.mxu0 0.0
    %3398 = vmatprep.subr.mxu0 0.0
    %3399 = vmatpush1.xpose.msra.mxu0 0.0
    %3400 = vmatprep.subr.mxu0 0.0
    %3401 = vmatpush1.xpose.msra.mxu0 0.0
    %3402 = vmatprep.subr.mxu0 0.0
    %3403 = vmatpush1.xpose.msra.mxu0 0.0
    %3404 = vmatprep.subr.mxu0 0.0
    %3405 = vmatpush1.xpose.msra.mxu0 0.0
    %3406 = vmatprep.subr.mxu0 0.0
    %3407 = vmatpush1.xpose.msra.mxu0 0.0
    %3408 = vmatprep.subr.mxu0 0.0
    %3409 = vmatpush1.xpose.msra.mxu0 0.0
    %3410 = vmatprep.subr.mxu0 0.0
    %3411 = vmatpush1.xpose.msra.mxu0 0.0
    %3412 = vmatprep.subr.mxu0 0.0
    %3413 = vmatpush1.xpose.msra.mxu0 0.0
    %3414 = vmatprep.subr.mxu0 0.0
    %3415 = vmatpush1.xpose.msra.mxu0 0.0
    %3416 = vmatprep.subr.mxu0 0.0
    %3417 = vmatpush1.xpose.msra.mxu0 0.0
    %3418 = vmatprep.subr.mxu0 0.0
    %3419 = vmatpush1.xpose.msra.mxu0 0.0
    %3420 = vmatprep.subr.mxu0 0.0
    %3421 = vmatpush1.xpose.msra.mxu0 0.0
    %3422 = vmatprep.subr.mxu0 0.0
    %3423 = vmatpush1.xpose.msra.mxu0 0.0
    %3424 = vmatprep.subr.mxu0 0.0
    %3425 = vmatpush1.xpose.msra.mxu0 0.0
    %3426 = vmatprep.subr.mxu0 %v148
    %3427 = vmatpush1.xpose.msra.mxu0 %v147
    %3428 = vmatprep.subr.mxu0 0.0
    %3429 = vmatpush2.xpose.msra.mxu0 0.0
    %3430 = vmatprep.subr.mxu0 0.0
    %3431 = vmatpush2.xpose.msra.mxu0 0.0
    %3432 = vmatprep.subr.mxu0 0.0
    %3433 = vmatpush2.xpose.msra.mxu0 0.0
    %3434 = vmatprep.subr.mxu0 0.0
    %3435 = vmatpush2.xpose.msra.mxu0 0.0
    %3436 = vmatprep.subr.mxu0 0.0
    %3437 = vmatpush2.xpose.msra.mxu0 0.0
    %3438 = vmatprep.subr.mxu0 0.0
    %3439 = vmatpush2.xpose.msra.mxu0 0.0
    %3440 = vmatprep.subr.mxu0 0.0
    %3441 = vmatpush2.xpose.msra.mxu0 0.0
    %3442 = vmatprep.subr.mxu0 0.0
    %3443 = vmatpush2.xpose.msra.mxu0 0.0
    %3444 = vmatprep.subr.mxu0 0.0
    %3445 = vmatpush2.xpose.msra.mxu0 0.0
    %3446 = vmatprep.subr.mxu0 0.0
    %3447 = vmatpush2.xpose.msra.mxu0 0.0
    %3448 = vmatprep.subr.mxu0 0.0
    %3449 = vmatpush2.xpose.msra.mxu0 0.0
    %3450 = vmatprep.subr.mxu0 0.0
    %3451 = vmatpush2.xpose.msra.mxu0 0.0
    %3452 = vmatprep.subr.mxu0 0.0
    %3453 = vmatpush2.xpose.msra.mxu0 0.0
    %3454 = vmatprep.subr.mxu0 0.0
    %3455 = vmatpush2.xpose.msra.mxu0 0.0
    %3456 = vmatprep.subr.mxu0 0.0
    %3457 = vmatpush2.xpose.msra.mxu0 0.0
    %3458 = vmatprep.subr.mxu0 0.0
    %3459 = vmatpush2.xpose.msra.mxu0 0.0
    %3460 = vmatprep.mubr.f32.mxu0 %v606
    %3461 = vmatmul.mubr.f32.gmra.mxu0 %v604
    %v3462 = vpop.f32.mrf.mxu0
    %v3463 = vadd.f32 %v3393, %v3462
    %v3464 = vpop.f32.mrf.mxu0
    %3465 = vdwg.mxu0
    %3466 = vmatprep.subr.mxu0 0.0
    %3467 = vmatpush1.xpose.msra.mxu0 0.0
    %3468 = vmatprep.subr.mxu0 0.0
    %3469 = vmatpush1.xpose.msra.mxu0 0.0
    %3470 = vmatprep.subr.mxu0 0.0
    %3471 = vmatpush1.xpose.msra.mxu0 0.0
    %3472 = vmatprep.subr.mxu0 0.0
    %3473 = vmatpush1.xpose.msra.mxu0 0.0
    %3474 = vmatprep.subr.mxu0 0.0
    %3475 = vmatpush1.xpose.msra.mxu0 0.0
    %3476 = vmatprep.subr.mxu0 0.0
    %3477 = vmatpush1.xpose.msra.mxu0 0.0
    %3478 = vmatprep.subr.mxu0 0.0
    %3479 = vmatpush1.xpose.msra.mxu0 0.0
    %3480 = vmatprep.subr.mxu0 0.0
    %3481 = vmatpush1.xpose.msra.mxu0 0.0
    %3482 = vmatprep.subr.mxu0 0.0
    %3483 = vmatpush1.xpose.msra.mxu0 0.0
    %3484 = vmatprep.subr.mxu0 0.0
    %3485 = vmatpush1.xpose.msra.mxu0 0.0
    %3486 = vmatprep.subr.mxu0 0.0
    %3487 = vmatpush1.xpose.msra.mxu0 0.0
    %3488 = vmatprep.subr.mxu0 0.0
    %3489 = vmatpush1.xpose.msra.mxu0 0.0
    %3490 = vmatprep.subr.mxu0 0.0
    %3491 = vmatpush1.xpose.msra.mxu0 0.0
    %3492 = vmatprep.subr.mxu0 0.0
    %3493 = vmatpush1.xpose.msra.mxu0 0.0
    %3494 = vmatprep.subr.mxu0 0.0
    %3495 = vmatpush1.xpose.msra.mxu0 0.0
    %3496 = vmatprep.subr.mxu0 %v150
    %3497 = vmatpush1.xpose.msra.mxu0 %v149
    %3498 = vmatprep.subr.mxu0 0.0
    %3499 = vmatpush2.xpose.msra.mxu0 0.0
    %3500 = vmatprep.subr.mxu0 0.0
    %3501 = vmatpush2.xpose.msra.mxu0 0.0
    %3502 = vmatprep.subr.mxu0 0.0
    %3503 = vmatpush2.xpose.msra.mxu0 0.0
    %3504 = vmatprep.subr.mxu0 0.0
    %3505 = vmatpush2.xpose.msra.mxu0 0.0
    %3506 = vmatprep.subr.mxu0 0.0
    %3507 = vmatpush2.xpose.msra.mxu0 0.0
    %3508 = vmatprep.subr.mxu0 0.0
    %3509 = vmatpush2.xpose.msra.mxu0 0.0
    %3510 = vmatprep.subr.mxu0 0.0
    %3511 = vmatpush2.xpose.msra.mxu0 0.0
    %3512 = vmatprep.subr.mxu0 0.0
    %3513 = vmatpush2.xpose.msra.mxu0 0.0
    %3514 = vmatprep.subr.mxu0 0.0
    %3515 = vmatpush2.xpose.msra.mxu0 0.0
    %3516 = vmatprep.subr.mxu0 0.0
    %3517 = vmatpush2.xpose.msra.mxu0 0.0
    %3518 = vmatprep.subr.mxu0 0.0
    %3519 = vmatpush2.xpose.msra.mxu0 0.0
    %3520 = vmatprep.subr.mxu0 0.0
    %3521 = vmatpush2.xpose.msra.mxu0 0.0
    %3522 = vmatprep.subr.mxu0 0.0
    %3523 = vmatpush2.xpose.msra.mxu0 0.0
    %3524 = vmatprep.subr.mxu0 0.0
    %3525 = vmatpush2.xpose.msra.mxu0 0.0
    %3526 = vmatprep.subr.mxu0 0.0
    %3527 = vmatpush2.xpose.msra.mxu0 0.0
    %3528 = vmatprep.subr.mxu0 0.0
    %3529 = vmatpush2.xpose.msra.mxu0 0.0
    %3530 = vmatprep.mubr.f32.mxu0 %v622
    %3531 = vmatmul.mubr.f32.gmra.mxu0 %v614
    %v3532 = vpop.f32.mrf.mxu0
    %v3533 = vadd.f32 %v3463, %v3532
    %v3534 = vpop.f32.mrf.mxu0
    %3535 = vdwg.mxu0
    %3536 = vmatprep.subr.mxu0 0.0
    %3537 = vmatpush1.xpose.msra.mxu0 0.0
    %3538 = vmatprep.subr.mxu0 0.0
    %3539 = vmatpush1.xpose.msra.mxu0 0.0
    %3540 = vmatprep.subr.mxu0 0.0
    %3541 = vmatpush1.xpose.msra.mxu0 0.0
    %3542 = vmatprep.subr.mxu0 0.0
    %3543 = vmatpush1.xpose.msra.mxu0 0.0
    %3544 = vmatprep.subr.mxu0 0.0
    %3545 = vmatpush1.xpose.msra.mxu0 0.0
    %3546 = vmatprep.subr.mxu0 0.0
    %3547 = vmatpush1.xpose.msra.mxu0 0.0
    %3548 = vmatprep.subr.mxu0 0.0
    %3549 = vmatpush1.xpose.msra.mxu0 0.0
    %3550 = vmatprep.subr.mxu0 0.0
    %3551 = vmatpush1.xpose.msra.mxu0 0.0
    %3552 = vmatprep.subr.mxu0 0.0
    %3553 = vmatpush1.xpose.msra.mxu0 0.0
    %3554 = vmatprep.subr.mxu0 0.0
    %3555 = vmatpush1.xpose.msra.mxu0 0.0
    %3556 = vmatprep.subr.mxu0 0.0
    %3557 = vmatpush1.xpose.msra.mxu0 0.0
    %3558 = vmatprep.subr.mxu0 0.0
    %3559 = vmatpush1.xpose.msra.mxu0 0.0
    %3560 = vmatprep.subr.mxu0 0.0
    %3561 = vmatpush1.xpose.msra.mxu0 0.0
    %3562 = vmatprep.subr.mxu0 0.0
    %3563 = vmatpush1.xpose.msra.mxu0 0.0
    %3564 = vmatprep.subr.mxu0 0.0
    %3565 = vmatpush1.xpose.msra.mxu0 0.0
    %3566 = vmatprep.subr.mxu0 %v152
    %3567 = vmatpush1.xpose.msra.mxu0 %v151
    %3568 = vmatprep.subr.mxu0 0.0
    %3569 = vmatpush2.xpose.msra.mxu0 0.0
    %3570 = vmatprep.subr.mxu0 0.0
    %3571 = vmatpush2.xpose.msra.mxu0 0.0
    %3572 = vmatprep.subr.mxu0 0.0
    %3573 = vmatpush2.xpose.msra.mxu0 0.0
    %3574 = vmatprep.subr.mxu0 0.0
    %3575 = vmatpush2.xpose.msra.mxu0 0.0
    %3576 = vmatprep.subr.mxu0 0.0
    %3577 = vmatpush2.xpose.msra.mxu0 0.0
    %3578 = vmatprep.subr.mxu0 0.0
    %3579 = vmatpush2.xpose.msra.mxu0 0.0
    %3580 = vmatprep.subr.mxu0 0.0
    %3581 = vmatpush2.xpose.msra.mxu0 0.0
    %3582 = vmatprep.subr.mxu0 0.0
    %3583 = vmatpush2.xpose.msra.mxu0 0.0
    %3584 = vmatprep.subr.mxu0 0.0
    %3585 = vmatpush2.xpose.msra.mxu0 0.0
    %3586 = vmatprep.subr.mxu0 0.0
    %3587 = vmatpush2.xpose.msra.mxu0 0.0
    %3588 = vmatprep.subr.mxu0 0.0
    %3589 = vmatpush2.xpose.msra.mxu0 0.0
    %3590 = vmatprep.subr.mxu0 0.0
    %3591 = vmatpush2.xpose.msra.mxu0 0.0
    %3592 = vmatprep.subr.mxu0 0.0
    %3593 = vmatpush2.xpose.msra.mxu0 0.0
    %3594 = vmatprep.subr.mxu0 0.0
    %3595 = vmatpush2.xpose.msra.mxu0 0.0
    %3596 = vmatprep.subr.mxu0 0.0
    %3597 = vmatpush2.xpose.msra.mxu0 0.0
    %3598 = vmatprep.subr.mxu0 0.0
    %3599 = vmatpush2.xpose.msra.mxu0 0.0
    %3600 = vmatprep.mubr.f32.mxu0 %v623
    %3601 = vmatmul.mubr.f32.gmra.mxu0 %v621
    %v3602 = vpop.f32.mrf.mxu0
    %v3603 = vadd.f32 %v3533, %v3602
    %v3604 = vpop.f32.mrf.mxu0
    %3605 = vdwg.mxu0
    %3606 = vmatprep.subr.mxu0 0.0
    %3607 = vmatpush1.xpose.msra.mxu0 0.0
    %3608 = vmatprep.subr.mxu0 0.0
    %3609 = vmatpush1.xpose.msra.mxu0 0.0
    %3610 = vmatprep.subr.mxu0 0.0
    %3611 = vmatpush1.xpose.msra.mxu0 0.0
    %3612 = vmatprep.subr.mxu0 0.0
    %3613 = vmatpush1.xpose.msra.mxu0 0.0
    %3614 = vmatprep.subr.mxu0 0.0
    %3615 = vmatpush1.xpose.msra.mxu0 0.0
    %3616 = vmatprep.subr.mxu0 0.0
    %3617 = vmatpush1.xpose.msra.mxu0 0.0
    %3618 = vmatprep.subr.mxu0 0.0
    %3619 = vmatpush1.xpose.msra.mxu0 0.0
    %3620 = vmatprep.subr.mxu0 0.0
    %3621 = vmatpush1.xpose.msra.mxu0 0.0
    %3622 = vmatprep.subr.mxu0 0.0
    %3623 = vmatpush1.xpose.msra.mxu0 0.0
    %3624 = vmatprep.subr.mxu0 0.0
    %3625 = vmatpush1.xpose.msra.mxu0 0.0
    %3626 = vmatprep.subr.mxu0 0.0
    %3627 = vmatpush1.xpose.msra.mxu0 0.0
    %3628 = vmatprep.subr.mxu0 0.0
    %3629 = vmatpush1.xpose.msra.mxu0 0.0
    %3630 = vmatprep.subr.mxu0 0.0
    %3631 = vmatpush1.xpose.msra.mxu0 0.0
    %3632 = vmatprep.subr.mxu0 0.0
    %3633 = vmatpush1.xpose.msra.mxu0 0.0
    %3634 = vmatprep.subr.mxu0 0.0
    %3635 = vmatpush1.xpose.msra.mxu0 0.0
    %3636 = vmatprep.subr.mxu0 %v154
    %3637 = vmatpush1.xpose.msra.mxu0 %v153
    %3638 = vmatprep.subr.mxu0 0.0
    %3639 = vmatpush2.xpose.msra.mxu0 0.0
    %3640 = vmatprep.subr.mxu0 0.0
    %3641 = vmatpush2.xpose.msra.mxu0 0.0
    %3642 = vmatprep.subr.mxu0 0.0
    %3643 = vmatpush2.xpose.msra.mxu0 0.0
    %3644 = vmatprep.subr.mxu0 0.0
    %3645 = vmatpush2.xpose.msra.mxu0 0.0
    %3646 = vmatprep.subr.mxu0 0.0
    %3647 = vmatpush2.xpose.msra.mxu0 0.0
    %3648 = vmatprep.subr.mxu0 0.0
    %3649 = vmatpush2.xpose.msra.mxu0 0.0
    %3650 = vmatprep.subr.mxu0 0.0
    %3651 = vmatpush2.xpose.msra.mxu0 0.0
    %3652 = vmatprep.subr.mxu0 0.0
    %3653 = vmatpush2.xpose.msra.mxu0 0.0
    %3654 = vmatprep.subr.mxu0 0.0
    %3655 = vmatpush2.xpose.msra.mxu0 0.0
    %3656 = vmatprep.subr.mxu0 0.0
    %3657 = vmatpush2.xpose.msra.mxu0 0.0
    %3658 = vmatprep.subr.mxu0 0.0
    %3659 = vmatpush2.xpose.msra.mxu0 0.0
    %3660 = vmatprep.subr.mxu0 0.0
    %3661 = vmatpush2.xpose.msra.mxu0 0.0
    %3662 = vmatprep.subr.mxu0 0.0
    %3663 = vmatpush2.xpose.msra.mxu0 0.0
    %3664 = vmatprep.subr.mxu0 0.0
    %3665 = vmatpush2.xpose.msra.mxu0 0.0
    %3666 = vmatprep.subr.mxu0 0.0
    %3667 = vmatpush2.xpose.msra.mxu0 0.0
    %3668 = vmatprep.subr.mxu0 0.0
    %3669 = vmatpush2.xpose.msra.mxu0 0.0
    %3670 = vmatprep.mubr.f32.mxu0 %v639
    %3671 = vmatmul.mubr.f32.gmra.mxu0 %v631
    %v3672 = vpop.f32.mrf.mxu0
    %v3673 = vadd.f32 %v3603, %v3672
    %v3674 = vpop.f32.mrf.mxu0
    %3675 = vdwg.mxu0
    %3676 = vmatprep.subr.mxu0 0.0
    %3677 = vmatpush1.xpose.msra.mxu0 0.0
    %3678 = vmatprep.subr.mxu0 0.0
    %3679 = vmatpush1.xpose.msra.mxu0 0.0
    %3680 = vmatprep.subr.mxu0 0.0
    %3681 = vmatpush1.xpose.msra.mxu0 0.0
    %3682 = vmatprep.subr.mxu0 0.0
    %3683 = vmatpush1.xpose.msra.mxu0 0.0
    %3684 = vmatprep.subr.mxu0 0.0
    %3685 = vmatpush1.xpose.msra.mxu0 0.0
    %3686 = vmatprep.subr.mxu0 0.0
    %3687 = vmatpush1.xpose.msra.mxu0 0.0
    %3688 = vmatprep.subr.mxu0 0.0
    %3689 = vmatpush1.xpose.msra.mxu0 0.0
    %3690 = vmatprep.subr.mxu0 0.0
    %3691 = vmatpush1.xpose.msra.mxu0 0.0
    %3692 = vmatprep.subr.mxu0 0.0
    %3693 = vmatpush1.xpose.msra.mxu0 0.0
    %3694 = vmatprep.subr.mxu0 0.0
    %3695 = vmatpush1.xpose.msra.mxu0 0.0
    %3696 = vmatprep.subr.mxu0 0.0
    %3697 = vmatpush1.xpose.msra.mxu0 0.0
    %3698 = vmatprep.subr.mxu0 0.0
    %3699 = vmatpush1.xpose.msra.mxu0 0.0
    %3700 = vmatprep.subr.mxu0 0.0
    %3701 = vmatpush1.xpose.msra.mxu0 0.0
    %3702 = vmatprep.subr.mxu0 0.0
    %3703 = vmatpush1.xpose.msra.mxu0 0.0
    %3704 = vmatprep.subr.mxu0 0.0
    %3705 = vmatpush1.xpose.msra.mxu0 0.0
    %3706 = vmatprep.subr.mxu0 %v156
    %3707 = vmatpush1.xpose.msra.mxu0 %v155
    %3708 = vmatprep.subr.mxu0 0.0
    %3709 = vmatpush2.xpose.msra.mxu0 0.0
    %3710 = vmatprep.subr.mxu0 0.0
    %3711 = vmatpush2.xpose.msra.mxu0 0.0
    %3712 = vmatprep.subr.mxu0 0.0
    %3713 = vmatpush2.xpose.msra.mxu0 0.0
    %3714 = vmatprep.subr.mxu0 0.0
    %3715 = vmatpush2.xpose.msra.mxu0 0.0
    %3716 = vmatprep.subr.mxu0 0.0
    %3717 = vmatpush2.xpose.msra.mxu0 0.0
    %3718 = vmatprep.subr.mxu0 0.0
    %3719 = vmatpush2.xpose.msra.mxu0 0.0
    %3720 = vmatprep.subr.mxu0 0.0
    %3721 = vmatpush2.xpose.msra.mxu0 0.0
    %3722 = vmatprep.subr.mxu0 0.0
    %3723 = vmatpush2.xpose.msra.mxu0 0.0
    %3724 = vmatprep.subr.mxu0 0.0
    %3725 = vmatpush2.xpose.msra.mxu0 0.0
    %3726 = vmatprep.subr.mxu0 0.0
    %3727 = vmatpush2.xpose.msra.mxu0 0.0
    %3728 = vmatprep.subr.mxu0 0.0
    %3729 = vmatpush2.xpose.msra.mxu0 0.0
    %3730 = vmatprep.subr.mxu0 0.0
    %3731 = vmatpush2.xpose.msra.mxu0 0.0
    %3732 = vmatprep.subr.mxu0 0.0
    %3733 = vmatpush2.xpose.msra.mxu0 0.0
    %3734 = vmatprep.subr.mxu0 0.0
    %3735 = vmatpush2.xpose.msra.mxu0 0.0
    %3736 = vmatprep.subr.mxu0 0.0
    %3737 = vmatpush2.xpose.msra.mxu0 0.0
    %3738 = vmatprep.subr.mxu0 0.0
    %3739 = vmatpush2.xpose.msra.mxu0 0.0
    %3740 = vmatprep.mubr.f32.mxu0 %v640
    %3741 = vmatmul.mubr.f32.gmra.mxu0 %v638
    %v3742 = vpop.f32.mrf.mxu0
    %v3743 = vadd.f32 %v3673, %v3742
    %v3744 = vpop.f32.mrf.mxu0
    %3745 = vdwg.mxu0
    %3746 = vmatprep.subr.mxu0 0.0
    %3747 = vmatpush1.xpose.msra.mxu0 0.0
    %3748 = vmatprep.subr.mxu0 0.0
    %3749 = vmatpush1.xpose.msra.mxu0 0.0
    %3750 = vmatprep.subr.mxu0 0.0
    %3751 = vmatpush1.xpose.msra.mxu0 0.0
    %3752 = vmatprep.subr.mxu0 0.0
    %3753 = vmatpush1.xpose.msra.mxu0 0.0
    %3754 = vmatprep.subr.mxu0 0.0
    %3755 = vmatpush1.xpose.msra.mxu0 0.0
    %3756 = vmatprep.subr.mxu0 0.0
    %3757 = vmatpush1.xpose.msra.mxu0 0.0
    %3758 = vmatprep.subr.mxu0 0.0
    %3759 = vmatpush1.xpose.msra.mxu0 0.0
    %3760 = vmatprep.subr.mxu0 0.0
    %3761 = vmatpush1.xpose.msra.mxu0 0.0
    %3762 = vmatprep.subr.mxu0 0.0
    %3763 = vmatpush1.xpose.msra.mxu0 0.0
    %3764 = vmatprep.subr.mxu0 0.0
    %3765 = vmatpush1.xpose.msra.mxu0 0.0
    %3766 = vmatprep.subr.mxu0 0.0
    %3767 = vmatpush1.xpose.msra.mxu0 0.0
    %3768 = vmatprep.subr.mxu0 0.0
    %3769 = vmatpush1.xpose.msra.mxu0 0.0
    %3770 = vmatprep.subr.mxu0 0.0
    %3771 = vmatpush1.xpose.msra.mxu0 0.0
    %3772 = vmatprep.subr.mxu0 0.0
    %3773 = vmatpush1.xpose.msra.mxu0 0.0
    %3774 = vmatprep.subr.mxu0 0.0
    %3775 = vmatpush1.xpose.msra.mxu0 0.0
    %3776 = vmatprep.subr.mxu0 %v158
    %3777 = vmatpush1.xpose.msra.mxu0 %v157
    %3778 = vmatprep.subr.mxu0 0.0
    %3779 = vmatpush2.xpose.msra.mxu0 0.0
    %3780 = vmatprep.subr.mxu0 0.0
    %3781 = vmatpush2.xpose.msra.mxu0 0.0
    %3782 = vmatprep.subr.mxu0 0.0
    %3783 = vmatpush2.xpose.msra.mxu0 0.0
    %3784 = vmatprep.subr.mxu0 0.0
    %3785 = vmatpush2.xpose.msra.mxu0 0.0
    %3786 = vmatprep.subr.mxu0 0.0
    %3787 = vmatpush2.xpose.msra.mxu0 0.0
    %3788 = vmatprep.subr.mxu0 0.0
    %3789 = vmatpush2.xpose.msra.mxu0 0.0
    %3790 = vmatprep.subr.mxu0 0.0
    %3791 = vmatpush2.xpose.msra.mxu0 0.0
    %3792 = vmatprep.subr.mxu0 0.0
    %3793 = vmatpush2.xpose.msra.mxu0 0.0
    %3794 = vmatprep.subr.mxu0 0.0
    %3795 = vmatpush2.xpose.msra.mxu0 0.0
    %3796 = vmatprep.subr.mxu0 0.0
    %3797 = vmatpush2.xpose.msra.mxu0 0.0
    %3798 = vmatprep.subr.mxu0 0.0
    %3799 = vmatpush2.xpose.msra.mxu0 0.0
    %3800 = vmatprep.subr.mxu0 0.0
    %3801 = vmatpush2.xpose.msra.mxu0 0.0
    %3802 = vmatprep.subr.mxu0 0.0
    %3803 = vmatpush2.xpose.msra.mxu0 0.0
    %3804 = vmatprep.subr.mxu0 0.0
    %3805 = vmatpush2.xpose.msra.mxu0 0.0
    %3806 = vmatprep.subr.mxu0 0.0
    %3807 = vmatpush2.xpose.msra.mxu0 0.0
    %3808 = vmatprep.subr.mxu0 0.0
    %3809 = vmatpush2.xpose.msra.mxu0 0.0
    %3810 = vmatprep.mubr.f32.mxu0 %v656
    %3811 = vmatmul.mubr.f32.gmra.mxu0 %v648
    %v3812 = vpop.f32.mrf.mxu0
    %v3813 = vadd.f32 %v3743, %v3812
    %v3814 = vpop.f32.mrf.mxu0
    %3815 = vdwg.mxu0
    %3816 = vmatprep.subr.mxu0 0.0
    %3817 = vmatpush1.xpose.msra.mxu0 0.0
    %3818 = vmatprep.subr.mxu0 0.0
    %3819 = vmatpush1.xpose.msra.mxu0 0.0
    %3820 = vmatprep.subr.mxu0 0.0
    %3821 = vmatpush1.xpose.msra.mxu0 0.0
    %3822 = vmatprep.subr.mxu0 0.0
    %3823 = vmatpush1.xpose.msra.mxu0 0.0
    %3824 = vmatprep.subr.mxu0 0.0
    %3825 = vmatpush1.xpose.msra.mxu0 0.0
    %3826 = vmatprep.subr.mxu0 0.0
    %3827 = vmatpush1.xpose.msra.mxu0 0.0
    %3828 = vmatprep.subr.mxu0 0.0
    %3829 = vmatpush1.xpose.msra.mxu0 0.0
    %3830 = vmatprep.subr.mxu0 0.0
    %3831 = vmatpush1.xpose.msra.mxu0 0.0
    %3832 = vmatprep.subr.mxu0 0.0
    %3833 = vmatpush1.xpose.msra.mxu0 0.0
    %3834 = vmatprep.subr.mxu0 0.0
    %3835 = vmatpush1.xpose.msra.mxu0 0.0
    %3836 = vmatprep.subr.mxu0 0.0
    %3837 = vmatpush1.xpose.msra.mxu0 0.0
    %3838 = vmatprep.subr.mxu0 0.0
    %3839 = vmatpush1.xpose.msra.mxu0 0.0
    %3840 = vmatprep.subr.mxu0 0.0
    %3841 = vmatpush1.xpose.msra.mxu0 0.0
    %3842 = vmatprep.subr.mxu0 0.0
    %3843 = vmatpush1.xpose.msra.mxu0 0.0
    %3844 = vmatprep.subr.mxu0 0.0
    %3845 = vmatpush1.xpose.msra.mxu0 0.0
    %3846 = vmatprep.subr.mxu0 %v160
    %3847 = vmatpush1.xpose.msra.mxu0 %v159
    %3848 = vmatprep.subr.mxu0 0.0
    %3849 = vmatpush2.xpose.msra.mxu0 0.0
    %3850 = vmatprep.subr.mxu0 0.0
    %3851 = vmatpush2.xpose.msra.mxu0 0.0
    %3852 = vmatprep.subr.mxu0 0.0
    %3853 = vmatpush2.xpose.msra.mxu0 0.0
    %3854 = vmatprep.subr.mxu0 0.0
    %3855 = vmatpush2.xpose.msra.mxu0 0.0
    %3856 = vmatprep.subr.mxu0 0.0
    %3857 = vmatpush2.xpose.msra.mxu0 0.0
    %3858 = vmatprep.subr.mxu0 0.0
    %3859 = vmatpush2.xpose.msra.mxu0 0.0
    %3860 = vmatprep.subr.mxu0 0.0
    %3861 = vmatpush2.xpose.msra.mxu0 0.0
    %3862 = vmatprep.subr.mxu0 0.0
    %3863 = vmatpush2.xpose.msra.mxu0 0.0
    %3864 = vmatprep.subr.mxu0 0.0
    %3865 = vmatpush2.xpose.msra.mxu0 0.0
    %3866 = vmatprep.subr.mxu0 0.0
    %3867 = vmatpush2.xpose.msra.mxu0 0.0
    %3868 = vmatprep.subr.mxu0 0.0
    %3869 = vmatpush2.xpose.msra.mxu0 0.0
    %3870 = vmatprep.subr.mxu0 0.0
    %3871 = vmatpush2.xpose.msra.mxu0 0.0
    %3872 = vmatprep.subr.mxu0 0.0
    %3873 = vmatpush2.xpose.msra.mxu0 0.0
    %3874 = vmatprep.subr.mxu0 0.0
    %3875 = vmatpush2.xpose.msra.mxu0 0.0
    %3876 = vmatprep.subr.mxu0 0.0
    %3877 = vmatpush2.xpose.msra.mxu0 0.0
    %3878 = vmatprep.subr.mxu0 0.0
    %3879 = vmatpush2.xpose.msra.mxu0 0.0
    %3880 = vmatprep.mubr.f32.mxu0 %v657
    %3881 = vmatmul.mubr.f32.gmra.mxu0 %v655
    %v3882 = vpop.f32.mrf.mxu0
    %v3883 = vadd.f32 %v3813, %v3882
    %v3884 = vpop.f32.mrf.mxu0
    %3885 = vdwg.mxu0
    %3886 = vmatprep.subr.mxu0 0.0
    %3887 = vmatpush1.xpose.msra.mxu0 0.0
    %3888 = vmatprep.subr.mxu0 0.0
    %3889 = vmatpush1.xpose.msra.mxu0 0.0
    %3890 = vmatprep.subr.mxu0 0.0
    %3891 = vmatpush1.xpose.msra.mxu0 0.0
    %3892 = vmatprep.subr.mxu0 0.0
    %3893 = vmatpush1.xpose.msra.mxu0 0.0
    %3894 = vmatprep.subr.mxu0 0.0
    %3895 = vmatpush1.xpose.msra.mxu0 0.0
    %3896 = vmatprep.subr.mxu0 0.0
    %3897 = vmatpush1.xpose.msra.mxu0 0.0
    %3898 = vmatprep.subr.mxu0 0.0
    %3899 = vmatpush1.xpose.msra.mxu0 0.0
    %3900 = vmatprep.subr.mxu0 0.0
    %3901 = vmatpush1.xpose.msra.mxu0 0.0
    %3902 = vmatprep.subr.mxu0 0.0
    %3903 = vmatpush1.xpose.msra.mxu0 0.0
    %3904 = vmatprep.subr.mxu0 0.0
    %3905 = vmatpush1.xpose.msra.mxu0 0.0
    %3906 = vmatprep.subr.mxu0 0.0
    %3907 = vmatpush1.xpose.msra.mxu0 0.0
    %3908 = vmatprep.subr.mxu0 0.0
    %3909 = vmatpush1.xpose.msra.mxu0 0.0
    %3910 = vmatprep.subr.mxu0 0.0
    %3911 = vmatpush1.xpose.msra.mxu0 0.0
    %3912 = vmatprep.subr.mxu0 0.0
    %3913 = vmatpush1.xpose.msra.mxu0 0.0
    %3914 = vmatprep.subr.mxu0 0.0
    %3915 = vmatpush1.xpose.msra.mxu0 0.0
    %3916 = vmatprep.subr.mxu0 %v162
    %3917 = vmatpush1.xpose.msra.mxu0 %v161
    %3918 = vmatprep.subr.mxu0 0.0
    %3919 = vmatpush2.xpose.msra.mxu0 0.0
    %3920 = vmatprep.subr.mxu0 0.0
    %3921 = vmatpush2.xpose.msra.mxu0 0.0
    %3922 = vmatprep.subr.mxu0 0.0
    %3923 = vmatpush2.xpose.msra.mxu0 0.0
    %3924 = vmatprep.subr.mxu0 0.0
    %3925 = vmatpush2.xpose.msra.mxu0 0.0
    %3926 = vmatprep.subr.mxu0 0.0
    %3927 = vmatpush2.xpose.msra.mxu0 0.0
    %3928 = vmatprep.subr.mxu0 0.0
    %3929 = vmatpush2.xpose.msra.mxu0 0.0
    %3930 = vmatprep.subr.mxu0 0.0
    %3931 = vmatpush2.xpose.msra.mxu0 0.0
    %3932 = vmatprep.subr.mxu0 0.0
    %3933 = vmatpush2.xpose.msra.mxu0 0.0
    %3934 = vmatprep.subr.mxu0 0.0
    %3935 = vmatpush2.xpose.msra.mxu0 0.0
    %3936 = vmatprep.subr.mxu0 0.0
    %3937 = vmatpush2.xpose.msra.mxu0 0.0
    %3938 = vmatprep.subr.mxu0 0.0
    %3939 = vmatpush2.xpose.msra.mxu0 0.0
    %3940 = vmatprep.subr.mxu0 0.0
    %3941 = vmatpush2.xpose.msra.mxu0 0.0
    %3942 = vmatprep.subr.mxu0 0.0
    %3943 = vmatpush2.xpose.msra.mxu0 0.0
    %3944 = vmatprep.subr.mxu0 0.0
    %3945 = vmatpush2.xpose.msra.mxu0 0.0
    %3946 = vmatprep.subr.mxu0 0.0
    %3947 = vmatpush2.xpose.msra.mxu0 0.0
    %3948 = vmatprep.subr.mxu0 0.0
    %3949 = vmatpush2.xpose.msra.mxu0 0.0
    %3950 = vmatprep.mubr.f32.mxu0 %v673
    %3951 = vmatmul.mubr.f32.gmra.mxu0 %v665
    %v3952 = vpop.f32.mrf.mxu0
    %v3953 = vadd.f32 %v3883, %v3952
    %v3954 = vpop.f32.mrf.mxu0
    %3955 = vdwg.mxu0
    %3956 = vmatprep.subr.mxu0 0.0
    %3957 = vmatpush1.xpose.msra.mxu0 0.0
    %3958 = vmatprep.subr.mxu0 0.0
    %3959 = vmatpush1.xpose.msra.mxu0 0.0
    %3960 = vmatprep.subr.mxu0 0.0
    %3961 = vmatpush1.xpose.msra.mxu0 0.0
    %3962 = vmatprep.subr.mxu0 0.0
    %3963 = vmatpush1.xpose.msra.mxu0 0.0
    %3964 = vmatprep.subr.mxu0 0.0
    %3965 = vmatpush1.xpose.msra.mxu0 0.0
    %3966 = vmatprep.subr.mxu0 0.0
    %3967 = vmatpush1.xpose.msra.mxu0 0.0
    %3968 = vmatprep.subr.mxu0 0.0
    %3969 = vmatpush1.xpose.msra.mxu0 0.0
    %3970 = vmatprep.subr.mxu0 0.0
    %3971 = vmatpush1.xpose.msra.mxu0 0.0
    %3972 = vmatprep.subr.mxu0 0.0
    %3973 = vmatpush1.xpose.msra.mxu0 0.0
    %3974 = vmatprep.subr.mxu0 0.0
    %3975 = vmatpush1.xpose.msra.mxu0 0.0
    %3976 = vmatprep.subr.mxu0 0.0
    %3977 = vmatpush1.xpose.msra.mxu0 0.0
    %3978 = vmatprep.subr.mxu0 0.0
    %3979 = vmatpush1.xpose.msra.mxu0 0.0
    %3980 = vmatprep.subr.mxu0 0.0
    %3981 = vmatpush1.xpose.msra.mxu0 0.0
    %3982 = vmatprep.subr.mxu0 0.0
    %3983 = vmatpush1.xpose.msra.mxu0 0.0
    %3984 = vmatprep.subr.mxu0 0.0
    %3985 = vmatpush1.xpose.msra.mxu0 0.0
    %3986 = vmatprep.subr.mxu0 %v164
    %3987 = vmatpush1.xpose.msra.mxu0 %v163
    %3988 = vmatprep.subr.mxu0 0.0
    %3989 = vmatpush2.xpose.msra.mxu0 0.0
    %3990 = vmatprep.subr.mxu0 0.0
    %3991 = vmatpush2.xpose.msra.mxu0 0.0
    %3992 = vmatprep.subr.mxu0 0.0
    %3993 = vmatpush2.xpose.msra.mxu0 0.0
    %3994 = vmatprep.subr.mxu0 0.0
    %3995 = vmatpush2.xpose.msra.mxu0 0.0
    %3996 = vmatprep.subr.mxu0 0.0
    %3997 = vmatpush2.xpose.msra.mxu0 0.0
    %3998 = vmatprep.subr.mxu0 0.0
    %3999 = vmatpush2.xpose.msra.mxu0 0.0
    %4000 = vmatprep.subr.mxu0 0.0
    %4001 = vmatpush2.xpose.msra.mxu0 0.0
    %4002 = vmatprep.subr.mxu0 0.0
    %4003 = vmatpush2.xpose.msra.mxu0 0.0
    %4004 = vmatprep.subr.mxu0 0.0
    %4005 = vmatpush2.xpose.msra.mxu0 0.0
    %4006 = vmatprep.subr.mxu0 0.0
    %4007 = vmatpush2.xpose.msra.mxu0 0.0
    %4008 = vmatprep.subr.mxu0 0.0
    %4009 = vmatpush2.xpose.msra.mxu0 0.0
    %4010 = vmatprep.subr.mxu0 0.0
    %4011 = vmatpush2.xpose.msra.mxu0 0.0
    %4012 = vmatprep.subr.mxu0 0.0
    %4013 = vmatpush2.xpose.msra.mxu0 0.0
    %4014 = vmatprep.subr.mxu0 0.0
    %4015 = vmatpush2.xpose.msra.mxu0 0.0
    %4016 = vmatprep.subr.mxu0 0.0
    %4017 = vmatpush2.xpose.msra.mxu0 0.0
    %4018 = vmatprep.subr.mxu0 0.0
    %4019 = vmatpush2.xpose.msra.mxu0 0.0
    %4020 = vmatprep.mubr.f32.mxu0 %v674
    %4021 = vmatmul.mubr.f32.gmra.mxu0 %v672
    %v4022 = vpop.f32.mrf.mxu0
    %v4023 = vadd.f32 %v3953, %v4022
    %v4024 = vpop.f32.mrf.mxu0
    %4025 = vdwg.mxu0
    %4026 = vmatprep.subr.mxu0 0.0
    %4027 = vmatpush1.xpose.msra.mxu0 0.0
    %4028 = vmatprep.subr.mxu0 0.0
    %4029 = vmatpush1.xpose.msra.mxu0 0.0
    %4030 = vmatprep.subr.mxu0 0.0
    %4031 = vmatpush1.xpose.msra.mxu0 0.0
    %4032 = vmatprep.subr.mxu0 0.0
    %4033 = vmatpush1.xpose.msra.mxu0 0.0
    %4034 = vmatprep.subr.mxu0 0.0
    %4035 = vmatpush1.xpose.msra.mxu0 0.0
    %4036 = vmatprep.subr.mxu0 0.0
    %4037 = vmatpush1.xpose.msra.mxu0 0.0
    %4038 = vmatprep.subr.mxu0 0.0
    %4039 = vmatpush1.xpose.msra.mxu0 0.0
    %4040 = vmatprep.subr.mxu0 0.0
    %4041 = vmatpush1.xpose.msra.mxu0 0.0
    %4042 = vmatprep.subr.mxu0 0.0
    %4043 = vmatpush1.xpose.msra.mxu0 0.0
    %4044 = vmatprep.subr.mxu0 0.0
    %4045 = vmatpush1.xpose.msra.mxu0 0.0
    %4046 = vmatprep.subr.mxu0 0.0
    %4047 = vmatpush1.xpose.msra.mxu0 0.0
    %4048 = vmatprep.subr.mxu0 0.0
    %4049 = vmatpush1.xpose.msra.mxu0 0.0
    %4050 = vmatprep.subr.mxu0 0.0
    %4051 = vmatpush1.xpose.msra.mxu0 0.0
    %4052 = vmatprep.subr.mxu0 0.0
    %4053 = vmatpush1.xpose.msra.mxu0 0.0
    %4054 = vmatprep.subr.mxu0 0.0
    %4055 = vmatpush1.xpose.msra.mxu0 0.0
    %4056 = vmatprep.subr.mxu0 %v166
    %4057 = vmatpush1.xpose.msra.mxu0 %v165
    %4058 = vmatprep.subr.mxu0 0.0
    %4059 = vmatpush2.xpose.msra.mxu0 0.0
    %4060 = vmatprep.subr.mxu0 0.0
    %4061 = vmatpush2.xpose.msra.mxu0 0.0
    %4062 = vmatprep.subr.mxu0 0.0
    %4063 = vmatpush2.xpose.msra.mxu0 0.0
    %4064 = vmatprep.subr.mxu0 0.0
    %4065 = vmatpush2.xpose.msra.mxu0 0.0
    %4066 = vmatprep.subr.mxu0 0.0
    %4067 = vmatpush2.xpose.msra.mxu0 0.0
    %4068 = vmatprep.subr.mxu0 0.0
    %4069 = vmatpush2.xpose.msra.mxu0 0.0
    %4070 = vmatprep.subr.mxu0 0.0
    %4071 = vmatpush2.xpose.msra.mxu0 0.0
    %4072 = vmatprep.subr.mxu0 0.0
    %4073 = vmatpush2.xpose.msra.mxu0 0.0
    %4074 = vmatprep.subr.mxu0 0.0
    %4075 = vmatpush2.xpose.msra.mxu0 0.0
    %4076 = vmatprep.subr.mxu0 0.0
    %4077 = vmatpush2.xpose.msra.mxu0 0.0
    %4078 = vmatprep.subr.mxu0 0.0
    %4079 = vmatpush2.xpose.msra.mxu0 0.0
    %4080 = vmatprep.subr.mxu0 0.0
    %4081 = vmatpush2.xpose.msra.mxu0 0.0
    %4082 = vmatprep.subr.mxu0 0.0
    %4083 = vmatpush2.xpose.msra.mxu0 0.0
    %4084 = vmatprep.subr.mxu0 0.0
    %4085 = vmatpush2.xpose.msra.mxu0 0.0
    %4086 = vmatprep.subr.mxu0 0.0
    %4087 = vmatpush2.xpose.msra.mxu0 0.0
    %4088 = vmatprep.subr.mxu0 0.0
    %4089 = vmatpush2.xpose.msra.mxu0 0.0
    %4090 = vmatprep.mubr.f32.mxu0 %v690
    %4091 = vmatmul.mubr.f32.gmra.mxu0 %v682
    %v4092 = vpop.f32.mrf.mxu0
    %v4093 = vadd.f32 %v4023, %v4092
    %v4094 = vpop.f32.mrf.mxu0
    %4095 = vdwg.mxu0
    %4096 = vmatprep.subr.mxu0 0.0
    %4097 = vmatpush1.xpose.msra.mxu0 0.0
    %4098 = vmatprep.subr.mxu0 0.0
    %4099 = vmatpush1.xpose.msra.mxu0 0.0
    %4100 = vmatprep.subr.mxu0 0.0
    %4101 = vmatpush1.xpose.msra.mxu0 0.0
    %4102 = vmatprep.subr.mxu0 0.0
    %4103 = vmatpush1.xpose.msra.mxu0 0.0
    %4104 = vmatprep.subr.mxu0 0.0
    %4105 = vmatpush1.xpose.msra.mxu0 0.0
    %4106 = vmatprep.subr.mxu0 0.0
    %4107 = vmatpush1.xpose.msra.mxu0 0.0
    %4108 = vmatprep.subr.mxu0 0.0
    %4109 = vmatpush1.xpose.msra.mxu0 0.0
    %4110 = vmatprep.subr.mxu0 0.0
    %4111 = vmatpush1.xpose.msra.mxu0 0.0
    %4112 = vmatprep.subr.mxu0 0.0
    %4113 = vmatpush1.xpose.msra.mxu0 0.0
    %4114 = vmatprep.subr.mxu0 0.0
    %4115 = vmatpush1.xpose.msra.mxu0 0.0
    %4116 = vmatprep.subr.mxu0 0.0
    %4117 = vmatpush1.xpose.msra.mxu0 0.0
    %4118 = vmatprep.subr.mxu0 0.0
    %4119 = vmatpush1.xpose.msra.mxu0 0.0
    %4120 = vmatprep.subr.mxu0 0.0
    %4121 = vmatpush1.xpose.msra.mxu0 0.0
    %4122 = vmatprep.subr.mxu0 0.0
    %4123 = vmatpush1.xpose.msra.mxu0 0.0
    %4124 = vmatprep.subr.mxu0 0.0
    %4125 = vmatpush1.xpose.msra.mxu0 0.0
    %4126 = vmatprep.subr.mxu0 %v168
    %4127 = vmatpush1.xpose.msra.mxu0 %v167
    %4128 = vmatprep.subr.mxu0 0.0
    %4129 = vmatpush2.xpose.msra.mxu0 0.0
    %4130 = vmatprep.subr.mxu0 0.0
    %4131 = vmatpush2.xpose.msra.mxu0 0.0
    %4132 = vmatprep.subr.mxu0 0.0
    %4133 = vmatpush2.xpose.msra.mxu0 0.0
    %4134 = vmatprep.subr.mxu0 0.0
    %4135 = vmatpush2.xpose.msra.mxu0 0.0
    %4136 = vmatprep.subr.mxu0 0.0
    %4137 = vmatpush2.xpose.msra.mxu0 0.0
    %4138 = vmatprep.subr.mxu0 0.0
    %4139 = vmatpush2.xpose.msra.mxu0 0.0
    %4140 = vmatprep.subr.mxu0 0.0
    %4141 = vmatpush2.xpose.msra.mxu0 0.0
    %4142 = vmatprep.subr.mxu0 0.0
    %4143 = vmatpush2.xpose.msra.mxu0 0.0
    %4144 = vmatprep.subr.mxu0 0.0
    %4145 = vmatpush2.xpose.msra.mxu0 0.0
    %4146 = vmatprep.subr.mxu0 0.0
    %4147 = vmatpush2.xpose.msra.mxu0 0.0
    %4148 = vmatprep.subr.mxu0 0.0
    %4149 = vmatpush2.xpose.msra.mxu0 0.0
    %4150 = vmatprep.subr.mxu0 0.0
    %4151 = vmatpush2.xpose.msra.mxu0 0.0
    %4152 = vmatprep.subr.mxu0 0.0
    %4153 = vmatpush2.xpose.msra.mxu0 0.0
    %4154 = vmatprep.subr.mxu0 0.0
    %4155 = vmatpush2.xpose.msra.mxu0 0.0
    %4156 = vmatprep.subr.mxu0 0.0
    %4157 = vmatpush2.xpose.msra.mxu0 0.0
    %4158 = vmatprep.subr.mxu0 0.0
    %4159 = vmatpush2.xpose.msra.mxu0 0.0
    %4160 = vmatprep.mubr.f32.mxu0 %v691
    %4161 = vmatmul.mubr.f32.gmra.mxu0 %v689
    %v4162 = vpop.f32.mrf.mxu0
    %v4163 = vadd.f32 %v4093, %v4162
    %v4164 = vpop.f32.mrf.mxu0
    %4165 = vdwg.mxu0
    %4166 = vmatprep.subr.mxu0 0.0
    %4167 = vmatpush1.xpose.msra.mxu0 0.0
    %4168 = vmatprep.subr.mxu0 0.0
    %4169 = vmatpush1.xpose.msra.mxu0 0.0
    %4170 = vmatprep.subr.mxu0 0.0
    %4171 = vmatpush1.xpose.msra.mxu0 0.0
    %4172 = vmatprep.subr.mxu0 0.0
    %4173 = vmatpush1.xpose.msra.mxu0 0.0
    %4174 = vmatprep.subr.mxu0 0.0
    %4175 = vmatpush1.xpose.msra.mxu0 0.0
    %4176 = vmatprep.subr.mxu0 0.0
    %4177 = vmatpush1.xpose.msra.mxu0 0.0
    %4178 = vmatprep.subr.mxu0 0.0
    %4179 = vmatpush1.xpose.msra.mxu0 0.0
    %4180 = vmatprep.subr.mxu0 0.0
    %4181 = vmatpush1.xpose.msra.mxu0 0.0
    %4182 = vmatprep.subr.mxu0 0.0
    %4183 = vmatpush1.xpose.msra.mxu0 0.0
    %4184 = vmatprep.subr.mxu0 0.0
    %4185 = vmatpush1.xpose.msra.mxu0 0.0
    %4186 = vmatprep.subr.mxu0 0.0
    %4187 = vmatpush1.xpose.msra.mxu0 0.0
    %4188 = vmatprep.subr.mxu0 0.0
    %4189 = vmatpush1.xpose.msra.mxu0 0.0
    %4190 = vmatprep.subr.mxu0 0.0
    %4191 = vmatpush1.xpose.msra.mxu0 0.0
    %4192 = vmatprep.subr.mxu0 0.0
    %4193 = vmatpush1.xpose.msra.mxu0 0.0
    %4194 = vmatprep.subr.mxu0 0.0
    %4195 = vmatpush1.xpose.msra.mxu0 0.0
    %4196 = vmatprep.subr.mxu0 %v170
    %4197 = vmatpush1.xpose.msra.mxu0 %v169
    %4198 = vmatprep.subr.mxu0 0.0
    %4199 = vmatpush2.xpose.msra.mxu0 0.0
    %4200 = vmatprep.subr.mxu0 0.0
    %4201 = vmatpush2.xpose.msra.mxu0 0.0
    %4202 = vmatprep.subr.mxu0 0.0
    %4203 = vmatpush2.xpose.msra.mxu0 0.0
    %4204 = vmatprep.subr.mxu0 0.0
    %4205 = vmatpush2.xpose.msra.mxu0 0.0
    %4206 = vmatprep.subr.mxu0 0.0
    %4207 = vmatpush2.xpose.msra.mxu0 0.0
    %4208 = vmatprep.subr.mxu0 0.0
    %4209 = vmatpush2.xpose.msra.mxu0 0.0
    %4210 = vmatprep.subr.mxu0 0.0
    %4211 = vmatpush2.xpose.msra.mxu0 0.0
    %4212 = vmatprep.subr.mxu0 0.0
    %4213 = vmatpush2.xpose.msra.mxu0 0.0
    %4214 = vmatprep.subr.mxu0 0.0
    %4215 = vmatpush2.xpose.msra.mxu0 0.0
    %4216 = vmatprep.subr.mxu0 0.0
    %4217 = vmatpush2.xpose.msra.mxu0 0.0
    %4218 = vmatprep.subr.mxu0 0.0
    %4219 = vmatpush2.xpose.msra.mxu0 0.0
    %4220 = vmatprep.subr.mxu0 0.0
    %4221 = vmatpush2.xpose.msra.mxu0 0.0
    %4222 = vmatprep.subr.mxu0 0.0
    %4223 = vmatpush2.xpose.msra.mxu0 0.0
    %4224 = vmatprep.subr.mxu0 0.0
    %4225 = vmatpush2.xpose.msra.mxu0 0.0
    %4226 = vmatprep.subr.mxu0 0.0
    %4227 = vmatpush2.xpose.msra.mxu0 0.0
    %4228 = vmatprep.subr.mxu0 0.0
    %4229 = vmatpush2.xpose.msra.mxu0 0.0
    %4230 = vmatprep.mubr.f32.mxu0 %v707
    %4231 = vmatmul.mubr.f32.gmra.mxu0 %v699
    %v4232 = vpop.f32.mrf.mxu0
    %v4233 = vadd.f32 %v4163, %v4232
    %v4234 = vpop.f32.mrf.mxu0
    %4235 = vdwg.mxu0
    %4236 = vmatprep.subr.mxu0 0.0
    %4237 = vmatpush1.xpose.msra.mxu0 0.0
    %4238 = vmatprep.subr.mxu0 0.0
    %4239 = vmatpush1.xpose.msra.mxu0 0.0
    %4240 = vmatprep.subr.mxu0 0.0
    %4241 = vmatpush1.xpose.msra.mxu0 0.0
    %4242 = vmatprep.subr.mxu0 0.0
    %4243 = vmatpush1.xpose.msra.mxu0 0.0
    %4244 = vmatprep.subr.mxu0 0.0
    %4245 = vmatpush1.xpose.msra.mxu0 0.0
    %4246 = vmatprep.subr.mxu0 0.0
    %4247 = vmatpush1.xpose.msra.mxu0 0.0
    %4248 = vmatprep.subr.mxu0 0.0
    %4249 = vmatpush1.xpose.msra.mxu0 0.0
    %4250 = vmatprep.subr.mxu0 0.0
    %4251 = vmatpush1.xpose.msra.mxu0 0.0
    %4252 = vmatprep.subr.mxu0 0.0
    %4253 = vmatpush1.xpose.msra.mxu0 0.0
    %4254 = vmatprep.subr.mxu0 0.0
    %4255 = vmatpush1.xpose.msra.mxu0 0.0
    %4256 = vmatprep.subr.mxu0 0.0
    %4257 = vmatpush1.xpose.msra.mxu0 0.0
    %4258 = vmatprep.subr.mxu0 0.0
    %4259 = vmatpush1.xpose.msra.mxu0 0.0
    %4260 = vmatprep.subr.mxu0 0.0
    %4261 = vmatpush1.xpose.msra.mxu0 0.0
    %4262 = vmatprep.subr.mxu0 0.0
    %4263 = vmatpush1.xpose.msra.mxu0 0.0
    %4264 = vmatprep.subr.mxu0 0.0
    %4265 = vmatpush1.xpose.msra.mxu0 0.0
    %4266 = vmatprep.subr.mxu0 %v172
    %4267 = vmatpush1.xpose.msra.mxu0 %v171
    %4268 = vmatprep.subr.mxu0 0.0
    %4269 = vmatpush2.xpose.msra.mxu0 0.0
    %4270 = vmatprep.subr.mxu0 0.0
    %4271 = vmatpush2.xpose.msra.mxu0 0.0
    %4272 = vmatprep.subr.mxu0 0.0
    %4273 = vmatpush2.xpose.msra.mxu0 0.0
    %4274 = vmatprep.subr.mxu0 0.0
    %4275 = vmatpush2.xpose.msra.mxu0 0.0
    %4276 = vmatprep.subr.mxu0 0.0
    %4277 = vmatpush2.xpose.msra.mxu0 0.0
    %4278 = vmatprep.subr.mxu0 0.0
    %4279 = vmatpush2.xpose.msra.mxu0 0.0
    %4280 = vmatprep.subr.mxu0 0.0
    %4281 = vmatpush2.xpose.msra.mxu0 0.0
    %4282 = vmatprep.subr.mxu0 0.0
    %4283 = vmatpush2.xpose.msra.mxu0 0.0
    %4284 = vmatprep.subr.mxu0 0.0
    %4285 = vmatpush2.xpose.msra.mxu0 0.0
    %4286 = vmatprep.subr.mxu0 0.0
    %4287 = vmatpush2.xpose.msra.mxu0 0.0
    %4288 = vmatprep.subr.mxu0 0.0
    %4289 = vmatpush2.xpose.msra.mxu0 0.0
    %4290 = vmatprep.subr.mxu0 0.0
    %4291 = vmatpush2.xpose.msra.mxu0 0.0
    %4292 = vmatprep.subr.mxu0 0.0
    %4293 = vmatpush2.xpose.msra.mxu0 0.0
    %4294 = vmatprep.subr.mxu0 0.0
    %4295 = vmatpush2.xpose.msra.mxu0 0.0
    %4296 = vmatprep.subr.mxu0 0.0
    %4297 = vmatpush2.xpose.msra.mxu0 0.0
    %4298 = vmatprep.subr.mxu0 0.0
    %4299 = vmatpush2.xpose.msra.mxu0 0.0
    %4300 = vmatprep.mubr.f32.mxu0 %v708
    %4301 = vmatmul.mubr.f32.gmra.mxu0 %v706
    %v4302 = vpop.f32.mrf.mxu0
    %v4303 = vadd.f32 %v4233, %v4302
    %v4304 = vpop.f32.mrf.mxu0
    %4305 = vdwg.mxu0
    %4306 = vmatprep.subr.mxu0 0.0
    %4307 = vmatpush1.xpose.msra.mxu0 0.0
    %4308 = vmatprep.subr.mxu0 0.0
    %4309 = vmatpush1.xpose.msra.mxu0 0.0
    %4310 = vmatprep.subr.mxu0 0.0
    %4311 = vmatpush1.xpose.msra.mxu0 0.0
    %4312 = vmatprep.subr.mxu0 0.0
    %4313 = vmatpush1.xpose.msra.mxu0 0.0
    %4314 = vmatprep.subr.mxu0 0.0
    %4315 = vmatpush1.xpose.msra.mxu0 0.0
    %4316 = vmatprep.subr.mxu0 0.0
    %4317 = vmatpush1.xpose.msra.mxu0 0.0
    %4318 = vmatprep.subr.mxu0 0.0
    %4319 = vmatpush1.xpose.msra.mxu0 0.0
    %4320 = vmatprep.subr.mxu0 0.0
    %4321 = vmatpush1.xpose.msra.mxu0 0.0
    %4322 = vmatprep.subr.mxu0 0.0
    %4323 = vmatpush1.xpose.msra.mxu0 0.0
    %4324 = vmatprep.subr.mxu0 0.0
    %4325 = vmatpush1.xpose.msra.mxu0 0.0
    %4326 = vmatprep.subr.mxu0 0.0
    %4327 = vmatpush1.xpose.msra.mxu0 0.0
    %4328 = vmatprep.subr.mxu0 0.0
    %4329 = vmatpush1.xpose.msra.mxu0 0.0
    %4330 = vmatprep.subr.mxu0 0.0
    %4331 = vmatpush1.xpose.msra.mxu0 0.0
    %4332 = vmatprep.subr.mxu0 0.0
    %4333 = vmatpush1.xpose.msra.mxu0 0.0
    %4334 = vmatprep.subr.mxu0 0.0
    %4335 = vmatpush1.xpose.msra.mxu0 0.0
    %4336 = vmatprep.subr.mxu0 %v174
    %4337 = vmatpush1.xpose.msra.mxu0 %v173
    %4338 = vmatprep.subr.mxu0 0.0
    %4339 = vmatpush2.xpose.msra.mxu0 0.0
    %4340 = vmatprep.subr.mxu0 0.0
    %4341 = vmatpush2.xpose.msra.mxu0 0.0
    %4342 = vmatprep.subr.mxu0 0.0
    %4343 = vmatpush2.xpose.msra.mxu0 0.0
    %4344 = vmatprep.subr.mxu0 0.0
    %4345 = vmatpush2.xpose.msra.mxu0 0.0
    %4346 = vmatprep.subr.mxu0 0.0
    %4347 = vmatpush2.xpose.msra.mxu0 0.0
    %4348 = vmatprep.subr.mxu0 0.0
    %4349 = vmatpush2.xpose.msra.mxu0 0.0
    %4350 = vmatprep.subr.mxu0 0.0
    %4351 = vmatpush2.xpose.msra.mxu0 0.0
    %4352 = vmatprep.subr.mxu0 0.0
    %4353 = vmatpush2.xpose.msra.mxu0 0.0
    %4354 = vmatprep.subr.mxu0 0.0
    %4355 = vmatpush2.xpose.msra.mxu0 0.0
    %4356 = vmatprep.subr.mxu0 0.0
    %4357 = vmatpush2.xpose.msra.mxu0 0.0
    %4358 = vmatprep.subr.mxu0 0.0
    %4359 = vmatpush2.xpose.msra.mxu0 0.0
    %4360 = vmatprep.subr.mxu0 0.0
    %4361 = vmatpush2.xpose.msra.mxu0 0.0
    %4362 = vmatprep.subr.mxu0 0.0
    %4363 = vmatpush2.xpose.msra.mxu0 0.0
    %4364 = vmatprep.subr.mxu0 0.0
    %4365 = vmatpush2.xpose.msra.mxu0 0.0
    %4366 = vmatprep.subr.mxu0 0.0
    %4367 = vmatpush2.xpose.msra.mxu0 0.0
    %4368 = vmatprep.subr.mxu0 0.0
    %4369 = vmatpush2.xpose.msra.mxu0 0.0
    %4370 = vmatprep.mubr.f32.mxu0 %v724
    %4371 = vmatmul.mubr.f32.gmra.mxu0 %v716
    %v4372 = vpop.f32.mrf.mxu0
    %v4373 = vadd.f32 %v4303, %v4372
    %v4374 = vpop.f32.mrf.mxu0
    %4375 = vdwg.mxu0
    %4376 = vmatprep.subr.mxu0 0.0
    %4377 = vmatpush1.xpose.msra.mxu0 0.0
    %4378 = vmatprep.subr.mxu0 0.0
    %4379 = vmatpush1.xpose.msra.mxu0 0.0
    %4380 = vmatprep.subr.mxu0 0.0
    %4381 = vmatpush1.xpose.msra.mxu0 0.0
    %4382 = vmatprep.subr.mxu0 0.0
    %4383 = vmatpush1.xpose.msra.mxu0 0.0
    %4384 = vmatprep.subr.mxu0 0.0
    %4385 = vmatpush1.xpose.msra.mxu0 0.0
    %4386 = vmatprep.subr.mxu0 0.0
    %4387 = vmatpush1.xpose.msra.mxu0 0.0
    %4388 = vmatprep.subr.mxu0 0.0
    %4389 = vmatpush1.xpose.msra.mxu0 0.0
    %4390 = vmatprep.subr.mxu0 0.0
    %4391 = vmatpush1.xpose.msra.mxu0 0.0
    %4392 = vmatprep.subr.mxu0 0.0
    %4393 = vmatpush1.xpose.msra.mxu0 0.0
    %4394 = vmatprep.subr.mxu0 0.0
    %4395 = vmatpush1.xpose.msra.mxu0 0.0
    %4396 = vmatprep.subr.mxu0 0.0
    %4397 = vmatpush1.xpose.msra.mxu0 0.0
    %4398 = vmatprep.subr.mxu0 0.0
    %4399 = vmatpush1.xpose.msra.mxu0 0.0
    %4400 = vmatprep.subr.mxu0 0.0
    %4401 = vmatpush1.xpose.msra.mxu0 0.0
    %4402 = vmatprep.subr.mxu0 0.0
    %4403 = vmatpush1.xpose.msra.mxu0 0.0
    %4404 = vmatprep.subr.mxu0 0.0
    %4405 = vmatpush1.xpose.msra.mxu0 0.0
    %4406 = vmatprep.subr.mxu0 %v176
    %4407 = vmatpush1.xpose.msra.mxu0 %v175
    %4408 = vmatprep.subr.mxu0 0.0
    %4409 = vmatpush2.xpose.msra.mxu0 0.0
    %4410 = vmatprep.subr.mxu0 0.0
    %4411 = vmatpush2.xpose.msra.mxu0 0.0
    %4412 = vmatprep.subr.mxu0 0.0
    %4413 = vmatpush2.xpose.msra.mxu0 0.0
    %4414 = vmatprep.subr.mxu0 0.0
    %4415 = vmatpush2.xpose.msra.mxu0 0.0
    %4416 = vmatprep.subr.mxu0 0.0
    %4417 = vmatpush2.xpose.msra.mxu0 0.0
    %4418 = vmatprep.subr.mxu0 0.0
    %4419 = vmatpush2.xpose.msra.mxu0 0.0
    %4420 = vmatprep.subr.mxu0 0.0
    %4421 = vmatpush2.xpose.msra.mxu0 0.0
    %4422 = vmatprep.subr.mxu0 0.0
    %4423 = vmatpush2.xpose.msra.mxu0 0.0
    %4424 = vmatprep.subr.mxu0 0.0
    %4425 = vmatpush2.xpose.msra.mxu0 0.0
    %4426 = vmatprep.subr.mxu0 0.0
    %4427 = vmatpush2.xpose.msra.mxu0 0.0
    %4428 = vmatprep.subr.mxu0 0.0
    %4429 = vmatpush2.xpose.msra.mxu0 0.0
    %4430 = vmatprep.subr.mxu0 0.0
    %4431 = vmatpush2.xpose.msra.mxu0 0.0
    %4432 = vmatprep.subr.mxu0 0.0
    %4433 = vmatpush2.xpose.msra.mxu0 0.0
    %4434 = vmatprep.subr.mxu0 0.0
    %4435 = vmatpush2.xpose.msra.mxu0 0.0
    %4436 = vmatprep.subr.mxu0 0.0
    %4437 = vmatpush2.xpose.msra.mxu0 0.0
    %4438 = vmatprep.subr.mxu0 0.0
    %4439 = vmatpush2.xpose.msra.mxu0 0.0
    %4440 = vmatprep.mubr.f32.mxu0 %v725
    %4441 = vmatmul.mubr.f32.gmra.mxu0 %v723
    %v4442 = vpop.f32.mrf.mxu0
    %v4443 = vadd.f32 %v4373, %v4442
    %v4444 = vpop.f32.mrf.mxu0
    %4445 = vdwg.mxu0
    %4446 = vmatprep.subr.mxu0 0.0
    %4447 = vmatpush1.xpose.msra.mxu0 0.0
    %4448 = vmatprep.subr.mxu0 0.0
    %4449 = vmatpush1.xpose.msra.mxu0 0.0
    %4450 = vmatprep.subr.mxu0 0.0
    %4451 = vmatpush1.xpose.msra.mxu0 0.0
    %4452 = vmatprep.subr.mxu0 0.0
    %4453 = vmatpush1.xpose.msra.mxu0 0.0
    %4454 = vmatprep.subr.mxu0 0.0
    %4455 = vmatpush1.xpose.msra.mxu0 0.0
    %4456 = vmatprep.subr.mxu0 0.0
    %4457 = vmatpush1.xpose.msra.mxu0 0.0
    %4458 = vmatprep.subr.mxu0 0.0
    %4459 = vmatpush1.xpose.msra.mxu0 0.0
    %4460 = vmatprep.subr.mxu0 0.0
    %4461 = vmatpush1.xpose.msra.mxu0 0.0
    %4462 = vmatprep.subr.mxu0 0.0
    %4463 = vmatpush1.xpose.msra.mxu0 0.0
    %4464 = vmatprep.subr.mxu0 0.0
    %4465 = vmatpush1.xpose.msra.mxu0 0.0
    %4466 = vmatprep.subr.mxu0 0.0
    %4467 = vmatpush1.xpose.msra.mxu0 0.0
    %4468 = vmatprep.subr.mxu0 0.0
    %4469 = vmatpush1.xpose.msra.mxu0 0.0
    %4470 = vmatprep.subr.mxu0 0.0
    %4471 = vmatpush1.xpose.msra.mxu0 0.0
    %4472 = vmatprep.subr.mxu0 0.0
    %4473 = vmatpush1.xpose.msra.mxu0 0.0
    %4474 = vmatprep.subr.mxu0 0.0
    %4475 = vmatpush1.xpose.msra.mxu0 0.0
    %4476 = vmatprep.subr.mxu0 %v178
    %4477 = vmatpush1.xpose.msra.mxu0 %v177
    %4478 = vmatprep.subr.mxu0 0.0
    %4479 = vmatpush2.xpose.msra.mxu0 0.0
    %4480 = vmatprep.subr.mxu0 0.0
    %4481 = vmatpush2.xpose.msra.mxu0 0.0
    %4482 = vmatprep.subr.mxu0 0.0
    %4483 = vmatpush2.xpose.msra.mxu0 0.0
    %4484 = vmatprep.subr.mxu0 0.0
    %4485 = vmatpush2.xpose.msra.mxu0 0.0
    %4486 = vmatprep.subr.mxu0 0.0
    %4487 = vmatpush2.xpose.msra.mxu0 0.0
    %4488 = vmatprep.subr.mxu0 0.0
    %4489 = vmatpush2.xpose.msra.mxu0 0.0
    %4490 = vmatprep.subr.mxu0 0.0
    %4491 = vmatpush2.xpose.msra.mxu0 0.0
    %4492 = vmatprep.subr.mxu0 0.0
    %4493 = vmatpush2.xpose.msra.mxu0 0.0
    %4494 = vmatprep.subr.mxu0 0.0
    %4495 = vmatpush2.xpose.msra.mxu0 0.0
    %4496 = vmatprep.subr.mxu0 0.0
    %4497 = vmatpush2.xpose.msra.mxu0 0.0
    %4498 = vmatprep.subr.mxu0 0.0
    %4499 = vmatpush2.xpose.msra.mxu0 0.0
    %4500 = vmatprep.subr.mxu0 0.0
    %4501 = vmatpush2.xpose.msra.mxu0 0.0
    %4502 = vmatprep.subr.mxu0 0.0
    %4503 = vmatpush2.xpose.msra.mxu0 0.0
    %4504 = vmatprep.subr.mxu0 0.0
    %4505 = vmatpush2.xpose.msra.mxu0 0.0
    %4506 = vmatprep.subr.mxu0 0.0
    %4507 = vmatpush2.xpose.msra.mxu0 0.0
    %4508 = vmatprep.subr.mxu0 0.0
    %4509 = vmatpush2.xpose.msra.mxu0 0.0
    %4510 = vmatprep.mubr.f32.mxu0 %v741
    %4511 = vmatmul.mubr.f32.gmra.mxu0 %v733
    %v4512 = vpop.f32.mrf.mxu0
    %v4513 = vadd.f32 %v4443, %v4512
    %v4514 = vpop.f32.mrf.mxu0
    %4515 = vdwg.mxu0
    %4516 = vmatprep.subr.mxu0 0.0
    %4517 = vmatpush1.xpose.msra.mxu0 0.0
    %4518 = vmatprep.subr.mxu0 0.0
    %4519 = vmatpush1.xpose.msra.mxu0 0.0
    %4520 = vmatprep.subr.mxu0 0.0
    %4521 = vmatpush1.xpose.msra.mxu0 0.0
    %4522 = vmatprep.subr.mxu0 0.0
    %4523 = vmatpush1.xpose.msra.mxu0 0.0
    %4524 = vmatprep.subr.mxu0 0.0
    %4525 = vmatpush1.xpose.msra.mxu0 0.0
    %4526 = vmatprep.subr.mxu0 0.0
    %4527 = vmatpush1.xpose.msra.mxu0 0.0
    %4528 = vmatprep.subr.mxu0 0.0
    %4529 = vmatpush1.xpose.msra.mxu0 0.0
    %4530 = vmatprep.subr.mxu0 0.0
    %4531 = vmatpush1.xpose.msra.mxu0 0.0
    %4532 = vmatprep.subr.mxu0 0.0
    %4533 = vmatpush1.xpose.msra.mxu0 0.0
    %4534 = vmatprep.subr.mxu0 0.0
    %4535 = vmatpush1.xpose.msra.mxu0 0.0
    %4536 = vmatprep.subr.mxu0 0.0
    %4537 = vmatpush1.xpose.msra.mxu0 0.0
    %4538 = vmatprep.subr.mxu0 0.0
    %4539 = vmatpush1.xpose.msra.mxu0 0.0
    %4540 = vmatprep.subr.mxu0 0.0
    %4541 = vmatpush1.xpose.msra.mxu0 0.0
    %4542 = vmatprep.subr.mxu0 0.0
    %4543 = vmatpush1.xpose.msra.mxu0 0.0
    %4544 = vmatprep.subr.mxu0 0.0
    %4545 = vmatpush1.xpose.msra.mxu0 0.0
    %4546 = vmatprep.subr.mxu0 %v180
    %4547 = vmatpush1.xpose.msra.mxu0 %v179
    %4548 = vmatprep.subr.mxu0 0.0
    %4549 = vmatpush2.xpose.msra.mxu0 0.0
    %4550 = vmatprep.subr.mxu0 0.0
    %4551 = vmatpush2.xpose.msra.mxu0 0.0
    %4552 = vmatprep.subr.mxu0 0.0
    %4553 = vmatpush2.xpose.msra.mxu0 0.0
    %4554 = vmatprep.subr.mxu0 0.0
    %4555 = vmatpush2.xpose.msra.mxu0 0.0
    %4556 = vmatprep.subr.mxu0 0.0
    %4557 = vmatpush2.xpose.msra.mxu0 0.0
    %4558 = vmatprep.subr.mxu0 0.0
    %4559 = vmatpush2.xpose.msra.mxu0 0.0
    %4560 = vmatprep.subr.mxu0 0.0
    %4561 = vmatpush2.xpose.msra.mxu0 0.0
    %4562 = vmatprep.subr.mxu0 0.0
    %4563 = vmatpush2.xpose.msra.mxu0 0.0
    %4564 = vmatprep.subr.mxu0 0.0
    %4565 = vmatpush2.xpose.msra.mxu0 0.0
    %4566 = vmatprep.subr.mxu0 0.0
    %4567 = vmatpush2.xpose.msra.mxu0 0.0
    %4568 = vmatprep.subr.mxu0 0.0
    %4569 = vmatpush2.xpose.msra.mxu0 0.0
    %4570 = vmatprep.subr.mxu0 0.0
    %4571 = vmatpush2.xpose.msra.mxu0 0.0
    %4572 = vmatprep.subr.mxu0 0.0
    %4573 = vmatpush2.xpose.msra.mxu0 0.0
    %4574 = vmatprep.subr.mxu0 0.0
    %4575 = vmatpush2.xpose.msra.mxu0 0.0
    %4576 = vmatprep.subr.mxu0 0.0
    %4577 = vmatpush2.xpose.msra.mxu0 0.0
    %4578 = vmatprep.subr.mxu0 0.0
    %4579 = vmatpush2.xpose.msra.mxu0 0.0
    %4580 = vmatprep.mubr.f32.mxu0 %v742
    %4581 = vmatmul.mubr.f32.gmra.mxu0 %v740
    %v4582 = vpop.f32.mrf.mxu0
    %v4583 = vadd.f32 %v4513, %v4582
    %v4584 = vpop.f32.mrf.mxu0
    %4585 = vdwg.mxu0
    %4586 = vmatprep.subr.mxu0 0.0
    %4587 = vmatpush1.xpose.msra.mxu0 0.0
    %4588 = vmatprep.subr.mxu0 0.0
    %4589 = vmatpush1.xpose.msra.mxu0 0.0
    %4590 = vmatprep.subr.mxu0 0.0
    %4591 = vmatpush1.xpose.msra.mxu0 0.0
    %4592 = vmatprep.subr.mxu0 0.0
    %4593 = vmatpush1.xpose.msra.mxu0 0.0
    %4594 = vmatprep.subr.mxu0 0.0
    %4595 = vmatpush1.xpose.msra.mxu0 0.0
    %4596 = vmatprep.subr.mxu0 0.0
    %4597 = vmatpush1.xpose.msra.mxu0 0.0
    %4598 = vmatprep.subr.mxu0 0.0
    %4599 = vmatpush1.xpose.msra.mxu0 0.0
    %4600 = vmatprep.subr.mxu0 0.0
    %4601 = vmatpush1.xpose.msra.mxu0 0.0
    %4602 = vmatprep.subr.mxu0 0.0
    %4603 = vmatpush1.xpose.msra.mxu0 0.0
    %4604 = vmatprep.subr.mxu0 0.0
    %4605 = vmatpush1.xpose.msra.mxu0 0.0
    %4606 = vmatprep.subr.mxu0 0.0
    %4607 = vmatpush1.xpose.msra.mxu0 0.0
    %4608 = vmatprep.subr.mxu0 0.0
    %4609 = vmatpush1.xpose.msra.mxu0 0.0
    %4610 = vmatprep.subr.mxu0 0.0
    %4611 = vmatpush1.xpose.msra.mxu0 0.0
    %4612 = vmatprep.subr.mxu0 0.0
    %4613 = vmatpush1.xpose.msra.mxu0 0.0
    %4614 = vmatprep.subr.mxu0 0.0
    %4615 = vmatpush1.xpose.msra.mxu0 0.0
    %4616 = vmatprep.subr.mxu0 %v182
    %4617 = vmatpush1.xpose.msra.mxu0 %v181
    %4618 = vmatprep.subr.mxu0 0.0
    %4619 = vmatpush2.xpose.msra.mxu0 0.0
    %4620 = vmatprep.subr.mxu0 0.0
    %4621 = vmatpush2.xpose.msra.mxu0 0.0
    %4622 = vmatprep.subr.mxu0 0.0
    %4623 = vmatpush2.xpose.msra.mxu0 0.0
    %4624 = vmatprep.subr.mxu0 0.0
    %4625 = vmatpush2.xpose.msra.mxu0 0.0
    %4626 = vmatprep.subr.mxu0 0.0
    %4627 = vmatpush2.xpose.msra.mxu0 0.0
    %4628 = vmatprep.subr.mxu0 0.0
    %4629 = vmatpush2.xpose.msra.mxu0 0.0
    %4630 = vmatprep.subr.mxu0 0.0
    %4631 = vmatpush2.xpose.msra.mxu0 0.0
    %4632 = vmatprep.subr.mxu0 0.0
    %4633 = vmatpush2.xpose.msra.mxu0 0.0
    %4634 = vmatprep.subr.mxu0 0.0
    %4635 = vmatpush2.xpose.msra.mxu0 0.0
    %4636 = vmatprep.subr.mxu0 0.0
    %4637 = vmatpush2.xpose.msra.mxu0 0.0
    %4638 = vmatprep.subr.mxu0 0.0
    %4639 = vmatpush2.xpose.msra.mxu0 0.0
    %4640 = vmatprep.subr.mxu0 0.0
    %4641 = vmatpush2.xpose.msra.mxu0 0.0
    %4642 = vmatprep.subr.mxu0 0.0
    %4643 = vmatpush2.xpose.msra.mxu0 0.0
    %4644 = vmatprep.subr.mxu0 0.0
    %4645 = vmatpush2.xpose.msra.mxu0 0.0
    %4646 = vmatprep.subr.mxu0 0.0
    %4647 = vmatpush2.xpose.msra.mxu0 0.0
    %4648 = vmatprep.subr.mxu0 0.0
    %4649 = vmatpush2.xpose.msra.mxu0 0.0
    %4650 = vmatprep.mubr.f32.mxu0 %v758
    %4651 = vmatmul.mubr.f32.gmra.mxu0 %v750
    %v4652 = vpop.f32.mrf.mxu0
    %v4653 = vadd.f32 %v4583, %v4652
    %v4654 = vpop.f32.mrf.mxu0
    %4655 = vdwg.mxu0
    %4656 = vmatprep.subr.mxu0 0.0
    %4657 = vmatpush1.xpose.msra.mxu0 0.0
    %4658 = vmatprep.subr.mxu0 0.0
    %4659 = vmatpush1.xpose.msra.mxu0 0.0
    %4660 = vmatprep.subr.mxu0 0.0
    %4661 = vmatpush1.xpose.msra.mxu0 0.0
    %4662 = vmatprep.subr.mxu0 0.0
    %4663 = vmatpush1.xpose.msra.mxu0 0.0
    %4664 = vmatprep.subr.mxu0 0.0
    %4665 = vmatpush1.xpose.msra.mxu0 0.0
    %4666 = vmatprep.subr.mxu0 0.0
    %4667 = vmatpush1.xpose.msra.mxu0 0.0
    %4668 = vmatprep.subr.mxu0 0.0
    %4669 = vmatpush1.xpose.msra.mxu0 0.0
    %4670 = vmatprep.subr.mxu0 0.0
    %4671 = vmatpush1.xpose.msra.mxu0 0.0
    %4672 = vmatprep.subr.mxu0 0.0
    %4673 = vmatpush1.xpose.msra.mxu0 0.0
    %4674 = vmatprep.subr.mxu0 0.0
    %4675 = vmatpush1.xpose.msra.mxu0 0.0
    %4676 = vmatprep.subr.mxu0 0.0
    %4677 = vmatpush1.xpose.msra.mxu0 0.0
    %4678 = vmatprep.subr.mxu0 0.0
    %4679 = vmatpush1.xpose.msra.mxu0 0.0
    %4680 = vmatprep.subr.mxu0 0.0
    %4681 = vmatpush1.xpose.msra.mxu0 0.0
    %4682 = vmatprep.subr.mxu0 0.0
    %4683 = vmatpush1.xpose.msra.mxu0 0.0
    %4684 = vmatprep.subr.mxu0 0.0
    %4685 = vmatpush1.xpose.msra.mxu0 0.0
    %4686 = vmatprep.subr.mxu0 %v184
    %4687 = vmatpush1.xpose.msra.mxu0 %v183
    %4688 = vmatprep.subr.mxu0 0.0
    %4689 = vmatpush2.xpose.msra.mxu0 0.0
    %4690 = vmatprep.subr.mxu0 0.0
    %4691 = vmatpush2.xpose.msra.mxu0 0.0
    %4692 = vmatprep.subr.mxu0 0.0
    %4693 = vmatpush2.xpose.msra.mxu0 0.0
    %4694 = vmatprep.subr.mxu0 0.0
    %4695 = vmatpush2.xpose.msra.mxu0 0.0
    %4696 = vmatprep.subr.mxu0 0.0
    %4697 = vmatpush2.xpose.msra.mxu0 0.0
    %4698 = vmatprep.subr.mxu0 0.0
    %4699 = vmatpush2.xpose.msra.mxu0 0.0
    %4700 = vmatprep.subr.mxu0 0.0
    %4701 = vmatpush2.xpose.msra.mxu0 0.0
    %4702 = vmatprep.subr.mxu0 0.0
    %4703 = vmatpush2.xpose.msra.mxu0 0.0
    %4704 = vmatprep.subr.mxu0 0.0
    %4705 = vmatpush2.xpose.msra.mxu0 0.0
    %4706 = vmatprep.subr.mxu0 0.0
    %4707 = vmatpush2.xpose.msra.mxu0 0.0
    %4708 = vmatprep.subr.mxu0 0.0
    %4709 = vmatpush2.xpose.msra.mxu0 0.0
    %4710 = vmatprep.subr.mxu0 0.0
    %4711 = vmatpush2.xpose.msra.mxu0 0.0
    %4712 = vmatprep.subr.mxu0 0.0
    %4713 = vmatpush2.xpose.msra.mxu0 0.0
    %4714 = vmatprep.subr.mxu0 0.0
    %4715 = vmatpush2.xpose.msra.mxu0 0.0
    %4716 = vmatprep.subr.mxu0 0.0
    %4717 = vmatpush2.xpose.msra.mxu0 0.0
    %4718 = vmatprep.subr.mxu0 0.0
    %4719 = vmatpush2.xpose.msra.mxu0 0.0
    %4720 = vmatprep.mubr.f32.mxu0 %v759
    %4721 = vmatmul.mubr.f32.gmra.mxu0 %v757
    %v4722 = vpop.f32.mrf.mxu0
    %v4723 = vadd.f32 %v4653, %v4722
    %v4724 = vpop.f32.mrf.mxu0
    %4725 = vdwg.mxu0
    %4726 = vmatprep.subr.mxu0 0.0
    %4727 = vmatpush1.xpose.msra.mxu0 0.0
    %4728 = vmatprep.subr.mxu0 0.0
    %4729 = vmatpush1.xpose.msra.mxu0 0.0
    %4730 = vmatprep.subr.mxu0 0.0
    %4731 = vmatpush1.xpose.msra.mxu0 0.0
    %4732 = vmatprep.subr.mxu0 0.0
    %4733 = vmatpush1.xpose.msra.mxu0 0.0
    %4734 = vmatprep.subr.mxu0 0.0
    %4735 = vmatpush1.xpose.msra.mxu0 0.0
    %4736 = vmatprep.subr.mxu0 0.0
    %4737 = vmatpush1.xpose.msra.mxu0 0.0
    %4738 = vmatprep.subr.mxu0 0.0
    %4739 = vmatpush1.xpose.msra.mxu0 0.0
    %4740 = vmatprep.subr.mxu0 0.0
    %4741 = vmatpush1.xpose.msra.mxu0 0.0
    %4742 = vmatprep.subr.mxu0 0.0
    %4743 = vmatpush1.xpose.msra.mxu0 0.0
    %4744 = vmatprep.subr.mxu0 0.0
    %4745 = vmatpush1.xpose.msra.mxu0 0.0
    %4746 = vmatprep.subr.mxu0 0.0
    %4747 = vmatpush1.xpose.msra.mxu0 0.0
    %4748 = vmatprep.subr.mxu0 0.0
    %4749 = vmatpush1.xpose.msra.mxu0 0.0
    %4750 = vmatprep.subr.mxu0 0.0
    %4751 = vmatpush1.xpose.msra.mxu0 0.0
    %4752 = vmatprep.subr.mxu0 0.0
    %4753 = vmatpush1.xpose.msra.mxu0 0.0
    %4754 = vmatprep.subr.mxu0 0.0
    %4755 = vmatpush1.xpose.msra.mxu0 0.0
    %4756 = vmatprep.subr.mxu0 %v186
    %4757 = vmatpush1.xpose.msra.mxu0 %v185
    %4758 = vmatprep.subr.mxu0 0.0
    %4759 = vmatpush2.xpose.msra.mxu0 0.0
    %4760 = vmatprep.subr.mxu0 0.0
    %4761 = vmatpush2.xpose.msra.mxu0 0.0
    %4762 = vmatprep.subr.mxu0 0.0
    %4763 = vmatpush2.xpose.msra.mxu0 0.0
    %4764 = vmatprep.subr.mxu0 0.0
    %4765 = vmatpush2.xpose.msra.mxu0 0.0
    %4766 = vmatprep.subr.mxu0 0.0
    %4767 = vmatpush2.xpose.msra.mxu0 0.0
    %4768 = vmatprep.subr.mxu0 0.0
    %4769 = vmatpush2.xpose.msra.mxu0 0.0
    %4770 = vmatprep.subr.mxu0 0.0
    %4771 = vmatpush2.xpose.msra.mxu0 0.0
    %4772 = vmatprep.subr.mxu0 0.0
    %4773 = vmatpush2.xpose.msra.mxu0 0.0
    %4774 = vmatprep.subr.mxu0 0.0
    %4775 = vmatpush2.xpose.msra.mxu0 0.0
    %4776 = vmatprep.subr.mxu0 0.0
    %4777 = vmatpush2.xpose.msra.mxu0 0.0
    %4778 = vmatprep.subr.mxu0 0.0
    %4779 = vmatpush2.xpose.msra.mxu0 0.0
    %4780 = vmatprep.subr.mxu0 0.0
    %4781 = vmatpush2.xpose.msra.mxu0 0.0
    %4782 = vmatprep.subr.mxu0 0.0
    %4783 = vmatpush2.xpose.msra.mxu0 0.0
    %4784 = vmatprep.subr.mxu0 0.0
    %4785 = vmatpush2.xpose.msra.mxu0 0.0
    %4786 = vmatprep.subr.mxu0 0.0
    %4787 = vmatpush2.xpose.msra.mxu0 0.0
    %4788 = vmatprep.subr.mxu0 0.0
    %4789 = vmatpush2.xpose.msra.mxu0 0.0
    %4790 = vmatprep.mubr.f32.mxu0 %v775
    %4791 = vmatmul.mubr.f32.gmra.mxu0 %v767
    %v4792 = vpop.f32.mrf.mxu0
    %v4793 = vadd.f32 %v4723, %v4792
    %v4794 = vpop.f32.mrf.mxu0
    %4795 = vdwg.mxu0
    %4796 = vmatprep.subr.mxu0 0.0
    %4797 = vmatpush1.xpose.msra.mxu0 0.0
    %4798 = vmatprep.subr.mxu0 0.0
    %4799 = vmatpush1.xpose.msra.mxu0 0.0
    %4800 = vmatprep.subr.mxu0 0.0
    %4801 = vmatpush1.xpose.msra.mxu0 0.0
    %4802 = vmatprep.subr.mxu0 0.0
    %4803 = vmatpush1.xpose.msra.mxu0 0.0
    %4804 = vmatprep.subr.mxu0 0.0
    %4805 = vmatpush1.xpose.msra.mxu0 0.0
    %4806 = vmatprep.subr.mxu0 0.0
    %4807 = vmatpush1.xpose.msra.mxu0 0.0
    %4808 = vmatprep.subr.mxu0 0.0
    %4809 = vmatpush1.xpose.msra.mxu0 0.0
    %4810 = vmatprep.subr.mxu0 0.0
    %4811 = vmatpush1.xpose.msra.mxu0 0.0
    %4812 = vmatprep.subr.mxu0 0.0
    %4813 = vmatpush1.xpose.msra.mxu0 0.0
    %4814 = vmatprep.subr.mxu0 0.0
    %4815 = vmatpush1.xpose.msra.mxu0 0.0
    %4816 = vmatprep.subr.mxu0 0.0
    %4817 = vmatpush1.xpose.msra.mxu0 0.0
    %4818 = vmatprep.subr.mxu0 0.0
    %4819 = vmatpush1.xpose.msra.mxu0 0.0
    %4820 = vmatprep.subr.mxu0 0.0
    %4821 = vmatpush1.xpose.msra.mxu0 0.0
    %4822 = vmatprep.subr.mxu0 0.0
    %4823 = vmatpush1.xpose.msra.mxu0 0.0
    %4824 = vmatprep.subr.mxu0 0.0
    %4825 = vmatpush1.xpose.msra.mxu0 0.0
    %4826 = vmatprep.subr.mxu0 %v188
    %4827 = vmatpush1.xpose.msra.mxu0 %v187
    %4828 = vmatprep.subr.mxu0 0.0
    %4829 = vmatpush2.xpose.msra.mxu0 0.0
    %4830 = vmatprep.subr.mxu0 0.0
    %4831 = vmatpush2.xpose.msra.mxu0 0.0
    %4832 = vmatprep.subr.mxu0 0.0
    %4833 = vmatpush2.xpose.msra.mxu0 0.0
    %4834 = vmatprep.subr.mxu0 0.0
    %4835 = vmatpush2.xpose.msra.mxu0 0.0
    %4836 = vmatprep.subr.mxu0 0.0
    %4837 = vmatpush2.xpose.msra.mxu0 0.0
    %4838 = vmatprep.subr.mxu0 0.0
    %4839 = vmatpush2.xpose.msra.mxu0 0.0
    %4840 = vmatprep.subr.mxu0 0.0
    %4841 = vmatpush2.xpose.msra.mxu0 0.0
    %4842 = vmatprep.subr.mxu0 0.0
    %4843 = vmatpush2.xpose.msra.mxu0 0.0
    %4844 = vmatprep.subr.mxu0 0.0
    %4845 = vmatpush2.xpose.msra.mxu0 0.0
    %4846 = vmatprep.subr.mxu0 0.0
    %4847 = vmatpush2.xpose.msra.mxu0 0.0
    %4848 = vmatprep.subr.mxu0 0.0
    %4849 = vmatpush2.xpose.msra.mxu0 0.0
    %4850 = vmatprep.subr.mxu0 0.0
    %4851 = vmatpush2.xpose.msra.mxu0 0.0
    %4852 = vmatprep.subr.mxu0 0.0
    %4853 = vmatpush2.xpose.msra.mxu0 0.0
    %4854 = vmatprep.subr.mxu0 0.0
    %4855 = vmatpush2.xpose.msra.mxu0 0.0
    %4856 = vmatprep.subr.mxu0 0.0
    %4857 = vmatpush2.xpose.msra.mxu0 0.0
    %4858 = vmatprep.subr.mxu0 0.0
    %4859 = vmatpush2.xpose.msra.mxu0 0.0
    %4860 = vmatprep.mubr.f32.mxu0 %v776
    %4861 = vmatmul.mubr.f32.gmra.mxu0 %v774
    %v4862 = vpop.f32.mrf.mxu0
    %v4863 = vadd.f32 %v4793, %v4862
    %v4864 = vpop.f32.mrf.mxu0
    %4865 = vdwg.mxu0
    %4866 = vmatprep.subr.mxu0 0.0
    %4867 = vmatpush1.xpose.msra.mxu0 0.0
    %4868 = vmatprep.subr.mxu0 0.0
    %4869 = vmatpush1.xpose.msra.mxu0 0.0
    %4870 = vmatprep.subr.mxu0 0.0
    %4871 = vmatpush1.xpose.msra.mxu0 0.0
    %4872 = vmatprep.subr.mxu0 0.0
    %4873 = vmatpush1.xpose.msra.mxu0 0.0
    %4874 = vmatprep.subr.mxu0 0.0
    %4875 = vmatpush1.xpose.msra.mxu0 0.0
    %4876 = vmatprep.subr.mxu0 0.0
    %4877 = vmatpush1.xpose.msra.mxu0 0.0
    %4878 = vmatprep.subr.mxu0 0.0
    %4879 = vmatpush1.xpose.msra.mxu0 0.0
    %4880 = vmatprep.subr.mxu0 0.0
    %4881 = vmatpush1.xpose.msra.mxu0 0.0
    %4882 = vmatprep.subr.mxu0 0.0
    %4883 = vmatpush1.xpose.msra.mxu0 0.0
    %4884 = vmatprep.subr.mxu0 0.0
    %4885 = vmatpush1.xpose.msra.mxu0 0.0
    %4886 = vmatprep.subr.mxu0 0.0
    %4887 = vmatpush1.xpose.msra.mxu0 0.0
    %4888 = vmatprep.subr.mxu0 0.0
    %4889 = vmatpush1.xpose.msra.mxu0 0.0
    %4890 = vmatprep.subr.mxu0 0.0
    %4891 = vmatpush1.xpose.msra.mxu0 0.0
    %4892 = vmatprep.subr.mxu0 0.0
    %4893 = vmatpush1.xpose.msra.mxu0 0.0
    %4894 = vmatprep.subr.mxu0 0.0
    %4895 = vmatpush1.xpose.msra.mxu0 0.0
    %4896 = vmatprep.subr.mxu0 %v190
    %4897 = vmatpush1.xpose.msra.mxu0 %v189
    %4898 = vmatprep.subr.mxu0 0.0
    %4899 = vmatpush2.xpose.msra.mxu0 0.0
    %4900 = vmatprep.subr.mxu0 0.0
    %4901 = vmatpush2.xpose.msra.mxu0 0.0
    %4902 = vmatprep.subr.mxu0 0.0
    %4903 = vmatpush2.xpose.msra.mxu0 0.0
    %4904 = vmatprep.subr.mxu0 0.0
    %4905 = vmatpush2.xpose.msra.mxu0 0.0
    %4906 = vmatprep.subr.mxu0 0.0
    %4907 = vmatpush2.xpose.msra.mxu0 0.0
    %4908 = vmatprep.subr.mxu0 0.0
    %4909 = vmatpush2.xpose.msra.mxu0 0.0
    %4910 = vmatprep.subr.mxu0 0.0
    %4911 = vmatpush2.xpose.msra.mxu0 0.0
    %4912 = vmatprep.subr.mxu0 0.0
    %4913 = vmatpush2.xpose.msra.mxu0 0.0
    %4914 = vmatprep.subr.mxu0 0.0
    %4915 = vmatpush2.xpose.msra.mxu0 0.0
    %4916 = vmatprep.subr.mxu0 0.0
    %4917 = vmatpush2.xpose.msra.mxu0 0.0
    %4918 = vmatprep.subr.mxu0 0.0
    %4919 = vmatpush2.xpose.msra.mxu0 0.0
    %4920 = vmatprep.subr.mxu0 0.0
    %4921 = vmatpush2.xpose.msra.mxu0 0.0
    %4922 = vmatprep.subr.mxu0 0.0
    %4923 = vmatpush2.xpose.msra.mxu0 0.0
    %4924 = vmatprep.subr.mxu0 0.0
    %4925 = vmatpush2.xpose.msra.mxu0 0.0
    %4926 = vmatprep.subr.mxu0 0.0
    %4927 = vmatpush2.xpose.msra.mxu0 0.0
    %4928 = vmatprep.subr.mxu0 0.0
    %4929 = vmatpush2.xpose.msra.mxu0 0.0
    %4930 = vmatprep.mubr.f32.mxu0 %v792
    %4931 = vmatmul.mubr.f32.gmra.mxu0 %v784
    %v4932 = vpop.f32.mrf.mxu0
    %v4933 = vadd.f32 %v4863, %v4932
    %v4934 = vpop.f32.mrf.mxu0
    %4935 = vdwg.mxu0
    %4936 = vmatprep.subr.mxu0 0.0
    %4937 = vmatpush1.xpose.msra.mxu0 0.0
    %4938 = vmatprep.subr.mxu0 0.0
    %4939 = vmatpush1.xpose.msra.mxu0 0.0
    %4940 = vmatprep.subr.mxu0 0.0
    %4941 = vmatpush1.xpose.msra.mxu0 0.0
    %4942 = vmatprep.subr.mxu0 0.0
    %4943 = vmatpush1.xpose.msra.mxu0 0.0
    %4944 = vmatprep.subr.mxu0 0.0
    %4945 = vmatpush1.xpose.msra.mxu0 0.0
    %4946 = vmatprep.subr.mxu0 0.0
    %4947 = vmatpush1.xpose.msra.mxu0 0.0
    %4948 = vmatprep.subr.mxu0 0.0
    %4949 = vmatpush1.xpose.msra.mxu0 0.0
    %4950 = vmatprep.subr.mxu0 0.0
    %4951 = vmatpush1.xpose.msra.mxu0 0.0
    %4952 = vmatprep.subr.mxu0 0.0
    %4953 = vmatpush1.xpose.msra.mxu0 0.0
    %4954 = vmatprep.subr.mxu0 0.0
    %4955 = vmatpush1.xpose.msra.mxu0 0.0
    %4956 = vmatprep.subr.mxu0 0.0
    %4957 = vmatpush1.xpose.msra.mxu0 0.0
    %4958 = vmatprep.subr.mxu0 0.0
    %4959 = vmatpush1.xpose.msra.mxu0 0.0
    %4960 = vmatprep.subr.mxu0 0.0
    %4961 = vmatpush1.xpose.msra.mxu0 0.0
    %4962 = vmatprep.subr.mxu0 0.0
    %4963 = vmatpush1.xpose.msra.mxu0 0.0
    %4964 = vmatprep.subr.mxu0 0.0
    %4965 = vmatpush1.xpose.msra.mxu0 0.0
    %4966 = vmatprep.subr.mxu0 %v192
    %4967 = vmatpush1.xpose.msra.mxu0 %v191
    %4968 = vmatprep.subr.mxu0 0.0
    %4969 = vmatpush2.xpose.msra.mxu0 0.0
    %4970 = vmatprep.subr.mxu0 0.0
    %4971 = vmatpush2.xpose.msra.mxu0 0.0
    %4972 = vmatprep.subr.mxu0 0.0
    %4973 = vmatpush2.xpose.msra.mxu0 0.0
    %4974 = vmatprep.subr.mxu0 0.0
    %4975 = vmatpush2.xpose.msra.mxu0 0.0
    %4976 = vmatprep.subr.mxu0 0.0
    %4977 = vmatpush2.xpose.msra.mxu0 0.0
    %4978 = vmatprep.subr.mxu0 0.0
    %4979 = vmatpush2.xpose.msra.mxu0 0.0
    %4980 = vmatprep.subr.mxu0 0.0
    %4981 = vmatpush2.xpose.msra.mxu0 0.0
    %4982 = vmatprep.subr.mxu0 0.0
    %4983 = vmatpush2.xpose.msra.mxu0 0.0
    %4984 = vmatprep.subr.mxu0 0.0
    %4985 = vmatpush2.xpose.msra.mxu0 0.0
    %4986 = vmatprep.subr.mxu0 0.0
    %4987 = vmatpush2.xpose.msra.mxu0 0.0
    %4988 = vmatprep.subr.mxu0 0.0
    %4989 = vmatpush2.xpose.msra.mxu0 0.0
    %4990 = vmatprep.subr.mxu0 0.0
    %4991 = vmatpush2.xpose.msra.mxu0 0.0
    %4992 = vmatprep.subr.mxu0 0.0
    %4993 = vmatpush2.xpose.msra.mxu0 0.0
    %4994 = vmatprep.subr.mxu0 0.0
    %4995 = vmatpush2.xpose.msra.mxu0 0.0
    %4996 = vmatprep.subr.mxu0 0.0
    %4997 = vmatpush2.xpose.msra.mxu0 0.0
    %4998 = vmatprep.subr.mxu0 0.0
    %4999 = vmatpush2.xpose.msra.mxu0 0.0
    %5000 = vmatprep.mubr.f32.mxu0 %v793
    %5001 = vmatmul.mubr.f32.gmra.mxu0 %v791
    %v5002 = vpop.f32.mrf.mxu0
    %v5003 = vadd.f32 %v4933, %v5002
    %v5004 = vpop.f32.mrf.mxu0
    %5005 = vdwg.mxu0
    %5006 = vmatprep.subr.mxu0 0.0
    %5007 = vmatpush1.xpose.msra.mxu0 0.0
    %5008 = vmatprep.subr.mxu0 0.0
    %5009 = vmatpush1.xpose.msra.mxu0 0.0
    %5010 = vmatprep.subr.mxu0 0.0
    %5011 = vmatpush1.xpose.msra.mxu0 0.0
    %5012 = vmatprep.subr.mxu0 0.0
    %5013 = vmatpush1.xpose.msra.mxu0 0.0
    %5014 = vmatprep.subr.mxu0 0.0
    %5015 = vmatpush1.xpose.msra.mxu0 0.0
    %5016 = vmatprep.subr.mxu0 0.0
    %5017 = vmatpush1.xpose.msra.mxu0 0.0
    %5018 = vmatprep.subr.mxu0 0.0
    %5019 = vmatpush1.xpose.msra.mxu0 0.0
    %5020 = vmatprep.subr.mxu0 0.0
    %5021 = vmatpush1.xpose.msra.mxu0 0.0
    %5022 = vmatprep.subr.mxu0 0.0
    %5023 = vmatpush1.xpose.msra.mxu0 0.0
    %5024 = vmatprep.subr.mxu0 0.0
    %5025 = vmatpush1.xpose.msra.mxu0 0.0
    %5026 = vmatprep.subr.mxu0 0.0
    %5027 = vmatpush1.xpose.msra.mxu0 0.0
    %5028 = vmatprep.subr.mxu0 0.0
    %5029 = vmatpush1.xpose.msra.mxu0 0.0
    %5030 = vmatprep.subr.mxu0 0.0
    %5031 = vmatpush1.xpose.msra.mxu0 0.0
    %5032 = vmatprep.subr.mxu0 0.0
    %5033 = vmatpush1.xpose.msra.mxu0 0.0
    %5034 = vmatprep.subr.mxu0 0.0
    %5035 = vmatpush1.xpose.msra.mxu0 0.0
    %5036 = vmatprep.subr.mxu0 %v194
    %5037 = vmatpush1.xpose.msra.mxu0 %v193
    %5038 = vmatprep.subr.mxu0 0.0
    %5039 = vmatpush2.xpose.msra.mxu0 0.0
    %5040 = vmatprep.subr.mxu0 0.0
    %5041 = vmatpush2.xpose.msra.mxu0 0.0
    %5042 = vmatprep.subr.mxu0 0.0
    %5043 = vmatpush2.xpose.msra.mxu0 0.0
    %5044 = vmatprep.subr.mxu0 0.0
    %5045 = vmatpush2.xpose.msra.mxu0 0.0
    %5046 = vmatprep.subr.mxu0 0.0
    %5047 = vmatpush2.xpose.msra.mxu0 0.0
    %5048 = vmatprep.subr.mxu0 0.0
    %5049 = vmatpush2.xpose.msra.mxu0 0.0
    %5050 = vmatprep.subr.mxu0 0.0
    %5051 = vmatpush2.xpose.msra.mxu0 0.0
    %5052 = vmatprep.subr.mxu0 0.0
    %5053 = vmatpush2.xpose.msra.mxu0 0.0
    %5054 = vmatprep.subr.mxu0 0.0
    %5055 = vmatpush2.xpose.msra.mxu0 0.0
    %5056 = vmatprep.subr.mxu0 0.0
    %5057 = vmatpush2.xpose.msra.mxu0 0.0
    %5058 = vmatprep.subr.mxu0 0.0
    %5059 = vmatpush2.xpose.msra.mxu0 0.0
    %5060 = vmatprep.subr.mxu0 0.0
    %5061 = vmatpush2.xpose.msra.mxu0 0.0
    %5062 = vmatprep.subr.mxu0 0.0
    %5063 = vmatpush2.xpose.msra.mxu0 0.0
    %5064 = vmatprep.subr.mxu0 0.0
    %5065 = vmatpush2.xpose.msra.mxu0 0.0
    %5066 = vmatprep.subr.mxu0 0.0
    %5067 = vmatpush2.xpose.msra.mxu0 0.0
    %5068 = vmatprep.subr.mxu0 0.0
    %5069 = vmatpush2.xpose.msra.mxu0 0.0
    %5070 = vmatprep.mubr.f32.mxu0 %v809
    %5071 = vmatmul.mubr.f32.gmra.mxu0 %v801
    %v5072 = vpop.f32.mrf.mxu0
    %v5073 = vadd.f32 %v5003, %v5072
    %v5074 = vpop.f32.mrf.mxu0
    %5075 = vdwg.mxu0
    %5076 = vmatprep.subr.mxu0 0.0
    %5077 = vmatpush1.xpose.msra.mxu0 0.0
    %5078 = vmatprep.subr.mxu0 0.0
    %5079 = vmatpush1.xpose.msra.mxu0 0.0
    %5080 = vmatprep.subr.mxu0 0.0
    %5081 = vmatpush1.xpose.msra.mxu0 0.0
    %5082 = vmatprep.subr.mxu0 0.0
    %5083 = vmatpush1.xpose.msra.mxu0 0.0
    %5084 = vmatprep.subr.mxu0 0.0
    %5085 = vmatpush1.xpose.msra.mxu0 0.0
    %5086 = vmatprep.subr.mxu0 0.0
    %5087 = vmatpush1.xpose.msra.mxu0 0.0
    %5088 = vmatprep.subr.mxu0 0.0
    %5089 = vmatpush1.xpose.msra.mxu0 0.0
    %5090 = vmatprep.subr.mxu0 0.0
    %5091 = vmatpush1.xpose.msra.mxu0 0.0
    %5092 = vmatprep.subr.mxu0 0.0
    %5093 = vmatpush1.xpose.msra.mxu0 0.0
    %5094 = vmatprep.subr.mxu0 0.0
    %5095 = vmatpush1.xpose.msra.mxu0 0.0
    %5096 = vmatprep.subr.mxu0 0.0
    %5097 = vmatpush1.xpose.msra.mxu0 0.0
    %5098 = vmatprep.subr.mxu0 0.0
    %5099 = vmatpush1.xpose.msra.mxu0 0.0
    %5100 = vmatprep.subr.mxu0 0.0
    %5101 = vmatpush1.xpose.msra.mxu0 0.0
    %5102 = vmatprep.subr.mxu0 0.0
    %5103 = vmatpush1.xpose.msra.mxu0 0.0
    %5104 = vmatprep.subr.mxu0 0.0
    %5105 = vmatpush1.xpose.msra.mxu0 0.0
    %5106 = vmatprep.subr.mxu0 %v196
    %5107 = vmatpush1.xpose.msra.mxu0 %v195
    %5108 = vmatprep.subr.mxu0 0.0
    %5109 = vmatpush2.xpose.msra.mxu0 0.0
    %5110 = vmatprep.subr.mxu0 0.0
    %5111 = vmatpush2.xpose.msra.mxu0 0.0
    %5112 = vmatprep.subr.mxu0 0.0
    %5113 = vmatpush2.xpose.msra.mxu0 0.0
    %5114 = vmatprep.subr.mxu0 0.0
    %5115 = vmatpush2.xpose.msra.mxu0 0.0
    %5116 = vmatprep.subr.mxu0 0.0
    %5117 = vmatpush2.xpose.msra.mxu0 0.0
    %5118 = vmatprep.subr.mxu0 0.0
    %5119 = vmatpush2.xpose.msra.mxu0 0.0
    %5120 = vmatprep.subr.mxu0 0.0
    %5121 = vmatpush2.xpose.msra.mxu0 0.0
    %5122 = vmatprep.subr.mxu0 0.0
    %5123 = vmatpush2.xpose.msra.mxu0 0.0
    %5124 = vmatprep.subr.mxu0 0.0
    %5125 = vmatpush2.xpose.msra.mxu0 0.0
    %5126 = vmatprep.subr.mxu0 0.0
    %5127 = vmatpush2.xpose.msra.mxu0 0.0
    %5128 = vmatprep.subr.mxu0 0.0
    %5129 = vmatpush2.xpose.msra.mxu0 0.0
    %5130 = vmatprep.subr.mxu0 0.0
    %5131 = vmatpush2.xpose.msra.mxu0 0.0
    %5132 = vmatprep.subr.mxu0 0.0
    %5133 = vmatpush2.xpose.msra.mxu0 0.0
    %5134 = vmatprep.subr.mxu0 0.0
    %5135 = vmatpush2.xpose.msra.mxu0 0.0
    %5136 = vmatprep.subr.mxu0 0.0
    %5137 = vmatpush2.xpose.msra.mxu0 0.0
    %5138 = vmatprep.subr.mxu0 0.0
    %5139 = vmatpush2.xpose.msra.mxu0 0.0
    %5140 = vmatprep.mubr.f32.mxu0 %v810
    %5141 = vmatmul.mubr.f32.gmra.mxu0 %v808
    %v5142 = vpop.f32.mrf.mxu0
    %v5143 = vadd.f32 %v5073, %v5142
    %v5144 = vpop.f32.mrf.mxu0
    %5145 = vdwg.mxu0
    %5146 = vmatprep.subr.mxu0 0.0
    %5147 = vmatpush1.xpose.msra.mxu0 0.0
    %5148 = vmatprep.subr.mxu0 0.0
    %5149 = vmatpush1.xpose.msra.mxu0 0.0
    %5150 = vmatprep.subr.mxu0 0.0
    %5151 = vmatpush1.xpose.msra.mxu0 0.0
    %5152 = vmatprep.subr.mxu0 0.0
    %5153 = vmatpush1.xpose.msra.mxu0 0.0
    %5154 = vmatprep.subr.mxu0 0.0
    %5155 = vmatpush1.xpose.msra.mxu0 0.0
    %5156 = vmatprep.subr.mxu0 0.0
    %5157 = vmatpush1.xpose.msra.mxu0 0.0
    %5158 = vmatprep.subr.mxu0 0.0
    %5159 = vmatpush1.xpose.msra.mxu0 0.0
    %5160 = vmatprep.subr.mxu0 0.0
    %5161 = vmatpush1.xpose.msra.mxu0 0.0
    %5162 = vmatprep.subr.mxu0 0.0
    %5163 = vmatpush1.xpose.msra.mxu0 0.0
    %5164 = vmatprep.subr.mxu0 0.0
    %5165 = vmatpush1.xpose.msra.mxu0 0.0
    %5166 = vmatprep.subr.mxu0 0.0
    %5167 = vmatpush1.xpose.msra.mxu0 0.0
    %5168 = vmatprep.subr.mxu0 0.0
    %5169 = vmatpush1.xpose.msra.mxu0 0.0
    %5170 = vmatprep.subr.mxu0 0.0
    %5171 = vmatpush1.xpose.msra.mxu0 0.0
    %5172 = vmatprep.subr.mxu0 0.0
    %5173 = vmatpush1.xpose.msra.mxu0 0.0
    %5174 = vmatprep.subr.mxu0 0.0
    %5175 = vmatpush1.xpose.msra.mxu0 0.0
    %5176 = vmatprep.subr.mxu0 %v198
    %5177 = vmatpush1.xpose.msra.mxu0 %v197
    %5178 = vmatprep.subr.mxu0 0.0
    %5179 = vmatpush2.xpose.msra.mxu0 0.0
    %5180 = vmatprep.subr.mxu0 0.0
    %5181 = vmatpush2.xpose.msra.mxu0 0.0
    %5182 = vmatprep.subr.mxu0 0.0
    %5183 = vmatpush2.xpose.msra.mxu0 0.0
    %5184 = vmatprep.subr.mxu0 0.0
    %5185 = vmatpush2.xpose.msra.mxu0 0.0
    %5186 = vmatprep.subr.mxu0 0.0
    %5187 = vmatpush2.xpose.msra.mxu0 0.0
    %5188 = vmatprep.subr.mxu0 0.0
    %5189 = vmatpush2.xpose.msra.mxu0 0.0
    %5190 = vmatprep.subr.mxu0 0.0
    %5191 = vmatpush2.xpose.msra.mxu0 0.0
    %5192 = vmatprep.subr.mxu0 0.0
    %5193 = vmatpush2.xpose.msra.mxu0 0.0
    %5194 = vmatprep.subr.mxu0 0.0
    %5195 = vmatpush2.xpose.msra.mxu0 0.0
    %5196 = vmatprep.subr.mxu0 0.0
    %5197 = vmatpush2.xpose.msra.mxu0 0.0
    %5198 = vmatprep.subr.mxu0 0.0
    %5199 = vmatpush2.xpose.msra.mxu0 0.0
    %5200 = vmatprep.subr.mxu0 0.0
    %5201 = vmatpush2.xpose.msra.mxu0 0.0
    %5202 = vmatprep.subr.mxu0 0.0
    %5203 = vmatpush2.xpose.msra.mxu0 0.0
    %5204 = vmatprep.subr.mxu0 0.0
    %5205 = vmatpush2.xpose.msra.mxu0 0.0
    %5206 = vmatprep.subr.mxu0 0.0
    %5207 = vmatpush2.xpose.msra.mxu0 0.0
    %5208 = vmatprep.subr.mxu0 0.0
    %5209 = vmatpush2.xpose.msra.mxu0 0.0
    %5210 = vmatprep.mubr.f32.mxu0 %v826
    %5211 = vmatmul.mubr.f32.gmra.mxu0 %v818
    %v5212 = vpop.f32.mrf.mxu0
    %v5213 = vadd.f32 %v5143, %v5212
    %v5214 = vpop.f32.mrf.mxu0
    %5215 = vdwg.mxu0
    %5216 = vmatprep.subr.mxu0 0.0
    %5217 = vmatpush1.xpose.msra.mxu0 0.0
    %5218 = vmatprep.subr.mxu0 0.0
    %5219 = vmatpush1.xpose.msra.mxu0 0.0
    %5220 = vmatprep.subr.mxu0 0.0
    %5221 = vmatpush1.xpose.msra.mxu0 0.0
    %5222 = vmatprep.subr.mxu0 0.0
    %5223 = vmatpush1.xpose.msra.mxu0 0.0
    %5224 = vmatprep.subr.mxu0 0.0
    %5225 = vmatpush1.xpose.msra.mxu0 0.0
    %5226 = vmatprep.subr.mxu0 0.0
    %5227 = vmatpush1.xpose.msra.mxu0 0.0
    %5228 = vmatprep.subr.mxu0 0.0
    %5229 = vmatpush1.xpose.msra.mxu0 0.0
    %5230 = vmatprep.subr.mxu0 0.0
    %5231 = vmatpush1.xpose.msra.mxu0 0.0
    %5232 = vmatprep.subr.mxu0 0.0
    %5233 = vmatpush1.xpose.msra.mxu0 0.0
    %5234 = vmatprep.subr.mxu0 0.0
    %5235 = vmatpush1.xpose.msra.mxu0 0.0
    %5236 = vmatprep.subr.mxu0 0.0
    %5237 = vmatpush1.xpose.msra.mxu0 0.0
    %5238 = vmatprep.subr.mxu0 0.0
    %5239 = vmatpush1.xpose.msra.mxu0 0.0
    %5240 = vmatprep.subr.mxu0 0.0
    %5241 = vmatpush1.xpose.msra.mxu0 0.0
    %5242 = vmatprep.subr.mxu0 0.0
    %5243 = vmatpush1.xpose.msra.mxu0 0.0
    %5244 = vmatprep.subr.mxu0 0.0
    %5245 = vmatpush1.xpose.msra.mxu0 0.0
    %5246 = vmatprep.subr.mxu0 %v200
    %5247 = vmatpush1.xpose.msra.mxu0 %v199
    %5248 = vmatprep.subr.mxu0 0.0
    %5249 = vmatpush2.xpose.msra.mxu0 0.0
    %5250 = vmatprep.subr.mxu0 0.0
    %5251 = vmatpush2.xpose.msra.mxu0 0.0
    %5252 = vmatprep.subr.mxu0 0.0
    %5253 = vmatpush2.xpose.msra.mxu0 0.0
    %5254 = vmatprep.subr.mxu0 0.0
    %5255 = vmatpush2.xpose.msra.mxu0 0.0
    %5256 = vmatprep.subr.mxu0 0.0
    %5257 = vmatpush2.xpose.msra.mxu0 0.0
    %5258 = vmatprep.subr.mxu0 0.0
    %5259 = vmatpush2.xpose.msra.mxu0 0.0
    %5260 = vmatprep.subr.mxu0 0.0
    %5261 = vmatpush2.xpose.msra.mxu0 0.0
    %5262 = vmatprep.subr.mxu0 0.0
    %5263 = vmatpush2.xpose.msra.mxu0 0.0
    %5264 = vmatprep.subr.mxu0 0.0
    %5265 = vmatpush2.xpose.msra.mxu0 0.0
    %5266 = vmatprep.subr.mxu0 0.0
    %5267 = vmatpush2.xpose.msra.mxu0 0.0
    %5268 = vmatprep.subr.mxu0 0.0
    %5269 = vmatpush2.xpose.msra.mxu0 0.0
    %5270 = vmatprep.subr.mxu0 0.0
    %5271 = vmatpush2.xpose.msra.mxu0 0.0
    %5272 = vmatprep.subr.mxu0 0.0
    %5273 = vmatpush2.xpose.msra.mxu0 0.0
    %5274 = vmatprep.subr.mxu0 0.0
    %5275 = vmatpush2.xpose.msra.mxu0 0.0
    %5276 = vmatprep.subr.mxu0 0.0
    %5277 = vmatpush2.xpose.msra.mxu0 0.0
    %5278 = vmatprep.subr.mxu0 0.0
    %5279 = vmatpush2.xpose.msra.mxu0 0.0
    %5280 = vmatprep.mubr.f32.mxu0 %v827
    %5281 = vmatmul.mubr.f32.gmra.mxu0 %v825
    %v5282 = vpop.f32.mrf.mxu0
    %v5283 = vadd.f32 %v5213, %v5282
    %v5284 = vpop.f32.mrf.mxu0
    %5285 = vdwg.mxu0
    %5286 = vmatprep.subr.mxu0 0.0
    %5287 = vmatpush1.xpose.msra.mxu0 0.0
    %5288 = vmatprep.subr.mxu0 0.0
    %5289 = vmatpush1.xpose.msra.mxu0 0.0
    %5290 = vmatprep.subr.mxu0 0.0
    %5291 = vmatpush1.xpose.msra.mxu0 0.0
    %5292 = vmatprep.subr.mxu0 0.0
    %5293 = vmatpush1.xpose.msra.mxu0 0.0
    %5294 = vmatprep.subr.mxu0 0.0
    %5295 = vmatpush1.xpose.msra.mxu0 0.0
    %5296 = vmatprep.subr.mxu0 0.0
    %5297 = vmatpush1.xpose.msra.mxu0 0.0
    %5298 = vmatprep.subr.mxu0 0.0
    %5299 = vmatpush1.xpose.msra.mxu0 0.0
    %5300 = vmatprep.subr.mxu0 0.0
    %5301 = vmatpush1.xpose.msra.mxu0 0.0
    %5302 = vmatprep.subr.mxu0 0.0
    %5303 = vmatpush1.xpose.msra.mxu0 0.0
    %5304 = vmatprep.subr.mxu0 0.0
    %5305 = vmatpush1.xpose.msra.mxu0 0.0
    %5306 = vmatprep.subr.mxu0 0.0
    %5307 = vmatpush1.xpose.msra.mxu0 0.0
    %5308 = vmatprep.subr.mxu0 0.0
    %5309 = vmatpush1.xpose.msra.mxu0 0.0
    %5310 = vmatprep.subr.mxu0 0.0
    %5311 = vmatpush1.xpose.msra.mxu0 0.0
    %5312 = vmatprep.subr.mxu0 0.0
    %5313 = vmatpush1.xpose.msra.mxu0 0.0
    %5314 = vmatprep.subr.mxu0 0.0
    %5315 = vmatpush1.xpose.msra.mxu0 0.0
    %5316 = vmatprep.subr.mxu0 %v202
    %5317 = vmatpush1.xpose.msra.mxu0 %v201
    %5318 = vmatprep.subr.mxu0 0.0
    %5319 = vmatpush2.xpose.msra.mxu0 0.0
    %5320 = vmatprep.subr.mxu0 0.0
    %5321 = vmatpush2.xpose.msra.mxu0 0.0
    %5322 = vmatprep.subr.mxu0 0.0
    %5323 = vmatpush2.xpose.msra.mxu0 0.0
    %5324 = vmatprep.subr.mxu0 0.0
    %5325 = vmatpush2.xpose.msra.mxu0 0.0
    %5326 = vmatprep.subr.mxu0 0.0
    %5327 = vmatpush2.xpose.msra.mxu0 0.0
    %5328 = vmatprep.subr.mxu0 0.0
    %5329 = vmatpush2.xpose.msra.mxu0 0.0
    %5330 = vmatprep.subr.mxu0 0.0
    %5331 = vmatpush2.xpose.msra.mxu0 0.0
    %5332 = vmatprep.subr.mxu0 0.0
    %5333 = vmatpush2.xpose.msra.mxu0 0.0
    %5334 = vmatprep.subr.mxu0 0.0
    %5335 = vmatpush2.xpose.msra.mxu0 0.0
    %5336 = vmatprep.subr.mxu0 0.0
    %5337 = vmatpush2.xpose.msra.mxu0 0.0
    %5338 = vmatprep.subr.mxu0 0.0
    %5339 = vmatpush2.xpose.msra.mxu0 0.0
    %5340 = vmatprep.subr.mxu0 0.0
    %5341 = vmatpush2.xpose.msra.mxu0 0.0
    %5342 = vmatprep.subr.mxu0 0.0
    %5343 = vmatpush2.xpose.msra.mxu0 0.0
    %5344 = vmatprep.subr.mxu0 0.0
    %5345 = vmatpush2.xpose.msra.mxu0 0.0
    %5346 = vmatprep.subr.mxu0 0.0
    %5347 = vmatpush2.xpose.msra.mxu0 0.0
    %5348 = vmatprep.subr.mxu0 0.0
    %5349 = vmatpush2.xpose.msra.mxu0 0.0
    %5350 = vmatprep.mubr.f32.mxu0 %v843
    %5351 = vmatmul.mubr.f32.gmra.mxu0 %v835
    %v5352 = vpop.f32.mrf.mxu0
    %v5353 = vadd.f32 %v5283, %v5352
    %v5354 = vpop.f32.mrf.mxu0
    %5355 = vdwg.mxu0
    %5356 = vmatprep.subr.mxu0 0.0
    %5357 = vmatpush1.xpose.msra.mxu0 0.0
    %5358 = vmatprep.subr.mxu0 0.0
    %5359 = vmatpush1.xpose.msra.mxu0 0.0
    %5360 = vmatprep.subr.mxu0 0.0
    %5361 = vmatpush1.xpose.msra.mxu0 0.0
    %5362 = vmatprep.subr.mxu0 0.0
    %5363 = vmatpush1.xpose.msra.mxu0 0.0
    %5364 = vmatprep.subr.mxu0 0.0
    %5365 = vmatpush1.xpose.msra.mxu0 0.0
    %5366 = vmatprep.subr.mxu0 0.0
    %5367 = vmatpush1.xpose.msra.mxu0 0.0
    %5368 = vmatprep.subr.mxu0 0.0
    %5369 = vmatpush1.xpose.msra.mxu0 0.0
    %5370 = vmatprep.subr.mxu0 0.0
    %5371 = vmatpush1.xpose.msra.mxu0 0.0
    %5372 = vmatprep.subr.mxu0 0.0
    %5373 = vmatpush1.xpose.msra.mxu0 0.0
    %5374 = vmatprep.subr.mxu0 0.0
    %5375 = vmatpush1.xpose.msra.mxu0 0.0
    %5376 = vmatprep.subr.mxu0 0.0
    %5377 = vmatpush1.xpose.msra.mxu0 0.0
    %5378 = vmatprep.subr.mxu0 0.0
    %5379 = vmatpush1.xpose.msra.mxu0 0.0
    %5380 = vmatprep.subr.mxu0 0.0
    %5381 = vmatpush1.xpose.msra.mxu0 0.0
    %5382 = vmatprep.subr.mxu0 0.0
    %5383 = vmatpush1.xpose.msra.mxu0 0.0
    %5384 = vmatprep.subr.mxu0 0.0
    %5385 = vmatpush1.xpose.msra.mxu0 0.0
    %5386 = vmatprep.subr.mxu0 %v204
    %5387 = vmatpush1.xpose.msra.mxu0 %v203
    %5388 = vmatprep.subr.mxu0 0.0
    %5389 = vmatpush2.xpose.msra.mxu0 0.0
    %5390 = vmatprep.subr.mxu0 0.0
    %5391 = vmatpush2.xpose.msra.mxu0 0.0
    %5392 = vmatprep.subr.mxu0 0.0
    %5393 = vmatpush2.xpose.msra.mxu0 0.0
    %5394 = vmatprep.subr.mxu0 0.0
    %5395 = vmatpush2.xpose.msra.mxu0 0.0
    %5396 = vmatprep.subr.mxu0 0.0
    %5397 = vmatpush2.xpose.msra.mxu0 0.0
    %5398 = vmatprep.subr.mxu0 0.0
    %5399 = vmatpush2.xpose.msra.mxu0 0.0
    %5400 = vmatprep.subr.mxu0 0.0
    %5401 = vmatpush2.xpose.msra.mxu0 0.0
    %5402 = vmatprep.subr.mxu0 0.0
    %5403 = vmatpush2.xpose.msra.mxu0 0.0
    %5404 = vmatprep.subr.mxu0 0.0
    %5405 = vmatpush2.xpose.msra.mxu0 0.0
    %5406 = vmatprep.subr.mxu0 0.0
    %5407 = vmatpush2.xpose.msra.mxu0 0.0
    %5408 = vmatprep.subr.mxu0 0.0
    %5409 = vmatpush2.xpose.msra.mxu0 0.0
    %5410 = vmatprep.subr.mxu0 0.0
    %5411 = vmatpush2.xpose.msra.mxu0 0.0
    %5412 = vmatprep.subr.mxu0 0.0
    %5413 = vmatpush2.xpose.msra.mxu0 0.0
    %5414 = vmatprep.subr.mxu0 0.0
    %5415 = vmatpush2.xpose.msra.mxu0 0.0
    %5416 = vmatprep.subr.mxu0 0.0
    %5417 = vmatpush2.xpose.msra.mxu0 0.0
    %5418 = vmatprep.subr.mxu0 0.0
    %5419 = vmatpush2.xpose.msra.mxu0 0.0
    %5420 = vmatprep.mubr.f32.mxu0 %v844
    %5421 = vmatmul.mubr.f32.gmra.mxu0 %v842
    %v5422 = vpop.f32.mrf.mxu0
    %v5423 = vadd.f32 %v5353, %v5422
    %v5424 = vpop.f32.mrf.mxu0
    %5425 = vdwg.mxu0
    %5426 = vmatprep.subr.mxu0 0.0
    %5427 = vmatpush1.xpose.msra.mxu0 0.0
    %5428 = vmatprep.subr.mxu0 0.0
    %5429 = vmatpush1.xpose.msra.mxu0 0.0
    %5430 = vmatprep.subr.mxu0 0.0
    %5431 = vmatpush1.xpose.msra.mxu0 0.0
    %5432 = vmatprep.subr.mxu0 0.0
    %5433 = vmatpush1.xpose.msra.mxu0 0.0
    %5434 = vmatprep.subr.mxu0 0.0
    %5435 = vmatpush1.xpose.msra.mxu0 0.0
    %5436 = vmatprep.subr.mxu0 0.0
    %5437 = vmatpush1.xpose.msra.mxu0 0.0
    %5438 = vmatprep.subr.mxu0 0.0
    %5439 = vmatpush1.xpose.msra.mxu0 0.0
    %5440 = vmatprep.subr.mxu0 0.0
    %5441 = vmatpush1.xpose.msra.mxu0 0.0
    %5442 = vmatprep.subr.mxu0 0.0
    %5443 = vmatpush1.xpose.msra.mxu0 0.0
    %5444 = vmatprep.subr.mxu0 0.0
    %5445 = vmatpush1.xpose.msra.mxu0 0.0
    %5446 = vmatprep.subr.mxu0 0.0
    %5447 = vmatpush1.xpose.msra.mxu0 0.0
    %5448 = vmatprep.subr.mxu0 0.0
    %5449 = vmatpush1.xpose.msra.mxu0 0.0
    %5450 = vmatprep.subr.mxu0 0.0
    %5451 = vmatpush1.xpose.msra.mxu0 0.0
    %5452 = vmatprep.subr.mxu0 0.0
    %5453 = vmatpush1.xpose.msra.mxu0 0.0
    %5454 = vmatprep.subr.mxu0 0.0
    %5455 = vmatpush1.xpose.msra.mxu0 0.0
    %5456 = vmatprep.subr.mxu0 %v206
    %5457 = vmatpush1.xpose.msra.mxu0 %v205
    %5458 = vmatprep.subr.mxu0 0.0
    %5459 = vmatpush2.xpose.msra.mxu0 0.0
    %5460 = vmatprep.subr.mxu0 0.0
    %5461 = vmatpush2.xpose.msra.mxu0 0.0
    %5462 = vmatprep.subr.mxu0 0.0
    %5463 = vmatpush2.xpose.msra.mxu0 0.0
    %5464 = vmatprep.subr.mxu0 0.0
    %5465 = vmatpush2.xpose.msra.mxu0 0.0
    %5466 = vmatprep.subr.mxu0 0.0
    %5467 = vmatpush2.xpose.msra.mxu0 0.0
    %5468 = vmatprep.subr.mxu0 0.0
    %5469 = vmatpush2.xpose.msra.mxu0 0.0
    %5470 = vmatprep.subr.mxu0 0.0
    %5471 = vmatpush2.xpose.msra.mxu0 0.0
    %5472 = vmatprep.subr.mxu0 0.0
    %5473 = vmatpush2.xpose.msra.mxu0 0.0
    %5474 = vmatprep.subr.mxu0 0.0
    %5475 = vmatpush2.xpose.msra.mxu0 0.0
    %5476 = vmatprep.subr.mxu0 0.0
    %5477 = vmatpush2.xpose.msra.mxu0 0.0
    %5478 = vmatprep.subr.mxu0 0.0
    %5479 = vmatpush2.xpose.msra.mxu0 0.0
    %5480 = vmatprep.subr.mxu0 0.0
    %5481 = vmatpush2.xpose.msra.mxu0 0.0
    %5482 = vmatprep.subr.mxu0 0.0
    %5483 = vmatpush2.xpose.msra.mxu0 0.0
    %5484 = vmatprep.subr.mxu0 0.0
    %5485 = vmatpush2.xpose.msra.mxu0 0.0
    %5486 = vmatprep.subr.mxu0 0.0
    %5487 = vmatpush2.xpose.msra.mxu0 0.0
    %5488 = vmatprep.subr.mxu0 0.0
    %5489 = vmatpush2.xpose.msra.mxu0 0.0
    %5490 = vmatprep.mubr.f32.mxu0 %v860
    %5491 = vmatmul.mubr.f32.gmra.mxu0 %v852
    %v5492 = vpop.f32.mrf.mxu0
    %v5493 = vadd.f32 %v5423, %v5492
    %v5494 = vpop.f32.mrf.mxu0
    %5495 = vdwg.mxu0
    %5496 = vmatprep.subr.mxu0 0.0
    %5497 = vmatpush1.xpose.msra.mxu0 0.0
    %5498 = vmatprep.subr.mxu0 0.0
    %5499 = vmatpush1.xpose.msra.mxu0 0.0
    %5500 = vmatprep.subr.mxu0 0.0
    %5501 = vmatpush1.xpose.msra.mxu0 0.0
    %5502 = vmatprep.subr.mxu0 0.0
    %5503 = vmatpush1.xpose.msra.mxu0 0.0
    %5504 = vmatprep.subr.mxu0 0.0
    %5505 = vmatpush1.xpose.msra.mxu0 0.0
    %5506 = vmatprep.subr.mxu0 0.0
    %5507 = vmatpush1.xpose.msra.mxu0 0.0
    %5508 = vmatprep.subr.mxu0 0.0
    %5509 = vmatpush1.xpose.msra.mxu0 0.0
    %5510 = vmatprep.subr.mxu0 0.0
    %5511 = vmatpush1.xpose.msra.mxu0 0.0
    %5512 = vmatprep.subr.mxu0 0.0
    %5513 = vmatpush1.xpose.msra.mxu0 0.0
    %5514 = vmatprep.subr.mxu0 0.0
    %5515 = vmatpush1.xpose.msra.mxu0 0.0
    %5516 = vmatprep.subr.mxu0 0.0
    %5517 = vmatpush1.xpose.msra.mxu0 0.0
    %5518 = vmatprep.subr.mxu0 0.0
    %5519 = vmatpush1.xpose.msra.mxu0 0.0
    %5520 = vmatprep.subr.mxu0 0.0
    %5521 = vmatpush1.xpose.msra.mxu0 0.0
    %5522 = vmatprep.subr.mxu0 0.0
    %5523 = vmatpush1.xpose.msra.mxu0 0.0
    %5524 = vmatprep.subr.mxu0 0.0
    %5525 = vmatpush1.xpose.msra.mxu0 0.0
    %5526 = vmatprep.subr.mxu0 %v208
    %5527 = vmatpush1.xpose.msra.mxu0 %v207
    %5528 = vmatprep.subr.mxu0 0.0
    %5529 = vmatpush2.xpose.msra.mxu0 0.0
    %5530 = vmatprep.subr.mxu0 0.0
    %5531 = vmatpush2.xpose.msra.mxu0 0.0
    %5532 = vmatprep.subr.mxu0 0.0
    %5533 = vmatpush2.xpose.msra.mxu0 0.0
    %5534 = vmatprep.subr.mxu0 0.0
    %5535 = vmatpush2.xpose.msra.mxu0 0.0
    %5536 = vmatprep.subr.mxu0 0.0
    %5537 = vmatpush2.xpose.msra.mxu0 0.0
    %5538 = vmatprep.subr.mxu0 0.0
    %5539 = vmatpush2.xpose.msra.mxu0 0.0
    %5540 = vmatprep.subr.mxu0 0.0
    %5541 = vmatpush2.xpose.msra.mxu0 0.0
    %5542 = vmatprep.subr.mxu0 0.0
    %5543 = vmatpush2.xpose.msra.mxu0 0.0
    %5544 = vmatprep.subr.mxu0 0.0
    %5545 = vmatpush2.xpose.msra.mxu0 0.0
    %5546 = vmatprep.subr.mxu0 0.0
    %5547 = vmatpush2.xpose.msra.mxu0 0.0
    %5548 = vmatprep.subr.mxu0 0.0
    %5549 = vmatpush2.xpose.msra.mxu0 0.0
    %5550 = vmatprep.subr.mxu0 0.0
    %5551 = vmatpush2.xpose.msra.mxu0 0.0
    %5552 = vmatprep.subr.mxu0 0.0
    %5553 = vmatpush2.xpose.msra.mxu0 0.0
    %5554 = vmatprep.subr.mxu0 0.0
    %5555 = vmatpush2.xpose.msra.mxu0 0.0
    %5556 = vmatprep.subr.mxu0 0.0
    %5557 = vmatpush2.xpose.msra.mxu0 0.0
    %5558 = vmatprep.subr.mxu0 0.0
    %5559 = vmatpush2.xpose.msra.mxu0 0.0
    %5560 = vmatprep.mubr.f32.mxu0 %v861
    %5561 = vmatmul.mubr.f32.gmra.mxu0 %v859
    %v5562 = vpop.f32.mrf.mxu0
    %v5563 = vadd.f32 %v5493, %v5562
    %v5564 = vpop.f32.mrf.mxu0
    %5565 = vdwg.mxu0
    %5566 = vmatprep.subr.mxu0 0.0
    %5567 = vmatpush1.xpose.msra.mxu0 0.0
    %5568 = vmatprep.subr.mxu0 0.0
    %5569 = vmatpush1.xpose.msra.mxu0 0.0
    %5570 = vmatprep.subr.mxu0 0.0
    %5571 = vmatpush1.xpose.msra.mxu0 0.0
    %5572 = vmatprep.subr.mxu0 0.0
    %5573 = vmatpush1.xpose.msra.mxu0 0.0
    %5574 = vmatprep.subr.mxu0 0.0
    %5575 = vmatpush1.xpose.msra.mxu0 0.0
    %5576 = vmatprep.subr.mxu0 0.0
    %5577 = vmatpush1.xpose.msra.mxu0 0.0
    %5578 = vmatprep.subr.mxu0 0.0
    %5579 = vmatpush1.xpose.msra.mxu0 0.0
    %5580 = vmatprep.subr.mxu0 0.0
    %5581 = vmatpush1.xpose.msra.mxu0 0.0
    %5582 = vmatprep.subr.mxu0 0.0
    %5583 = vmatpush1.xpose.msra.mxu0 0.0
    %5584 = vmatprep.subr.mxu0 0.0
    %5585 = vmatpush1.xpose.msra.mxu0 0.0
    %5586 = vmatprep.subr.mxu0 0.0
    %5587 = vmatpush1.xpose.msra.mxu0 0.0
    %5588 = vmatprep.subr.mxu0 0.0
    %5589 = vmatpush1.xpose.msra.mxu0 0.0
    %5590 = vmatprep.subr.mxu0 0.0
    %5591 = vmatpush1.xpose.msra.mxu0 0.0
    %5592 = vmatprep.subr.mxu0 0.0
    %5593 = vmatpush1.xpose.msra.mxu0 0.0
    %5594 = vmatprep.subr.mxu0 0.0
    %5595 = vmatpush1.xpose.msra.mxu0 0.0
    %5596 = vmatprep.subr.mxu0 %v210
    %5597 = vmatpush1.xpose.msra.mxu0 %v209
    %5598 = vmatprep.subr.mxu0 0.0
    %5599 = vmatpush2.xpose.msra.mxu0 0.0
    %5600 = vmatprep.subr.mxu0 0.0
    %5601 = vmatpush2.xpose.msra.mxu0 0.0
    %5602 = vmatprep.subr.mxu0 0.0
    %5603 = vmatpush2.xpose.msra.mxu0 0.0
    %5604 = vmatprep.subr.mxu0 0.0
    %5605 = vmatpush2.xpose.msra.mxu0 0.0
    %5606 = vmatprep.subr.mxu0 0.0
    %5607 = vmatpush2.xpose.msra.mxu0 0.0
    %5608 = vmatprep.subr.mxu0 0.0
    %5609 = vmatpush2.xpose.msra.mxu0 0.0
    %5610 = vmatprep.subr.mxu0 0.0
    %5611 = vmatpush2.xpose.msra.mxu0 0.0
    %5612 = vmatprep.subr.mxu0 0.0
    %5613 = vmatpush2.xpose.msra.mxu0 0.0
    %5614 = vmatprep.subr.mxu0 0.0
    %5615 = vmatpush2.xpose.msra.mxu0 0.0
    %5616 = vmatprep.subr.mxu0 0.0
    %5617 = vmatpush2.xpose.msra.mxu0 0.0
    %5618 = vmatprep.subr.mxu0 0.0
    %5619 = vmatpush2.xpose.msra.mxu0 0.0
    %5620 = vmatprep.subr.mxu0 0.0
    %5621 = vmatpush2.xpose.msra.mxu0 0.0
    %5622 = vmatprep.subr.mxu0 0.0
    %5623 = vmatpush2.xpose.msra.mxu0 0.0
    %5624 = vmatprep.subr.mxu0 0.0
    %5625 = vmatpush2.xpose.msra.mxu0 0.0
    %5626 = vmatprep.subr.mxu0 0.0
    %5627 = vmatpush2.xpose.msra.mxu0 0.0
    %5628 = vmatprep.subr.mxu0 0.0
    %5629 = vmatpush2.xpose.msra.mxu0 0.0
    %5630 = vmatprep.mubr.f32.mxu0 %v877
    %5631 = vmatmul.mubr.f32.gmra.mxu0 %v869
    %v5632 = vpop.f32.mrf.mxu0
    %v5633 = vadd.f32 %v5563, %v5632
    %v5634 = vpop.f32.mrf.mxu0
    %5635 = vdwg.mxu0
    %5636 = vmatprep.subr.mxu0 0.0
    %5637 = vmatpush1.xpose.msra.mxu0 0.0
    %5638 = vmatprep.subr.mxu0 0.0
    %5639 = vmatpush1.xpose.msra.mxu0 0.0
    %5640 = vmatprep.subr.mxu0 0.0
    %5641 = vmatpush1.xpose.msra.mxu0 0.0
    %5642 = vmatprep.subr.mxu0 0.0
    %5643 = vmatpush1.xpose.msra.mxu0 0.0
    %5644 = vmatprep.subr.mxu0 0.0
    %5645 = vmatpush1.xpose.msra.mxu0 0.0
    %5646 = vmatprep.subr.mxu0 0.0
    %5647 = vmatpush1.xpose.msra.mxu0 0.0
    %5648 = vmatprep.subr.mxu0 0.0
    %5649 = vmatpush1.xpose.msra.mxu0 0.0
    %5650 = vmatprep.subr.mxu0 0.0
    %5651 = vmatpush1.xpose.msra.mxu0 0.0
    %5652 = vmatprep.subr.mxu0 0.0
    %5653 = vmatpush1.xpose.msra.mxu0 0.0
    %5654 = vmatprep.subr.mxu0 0.0
    %5655 = vmatpush1.xpose.msra.mxu0 0.0
    %5656 = vmatprep.subr.mxu0 0.0
    %5657 = vmatpush1.xpose.msra.mxu0 0.0
    %5658 = vmatprep.subr.mxu0 0.0
    %5659 = vmatpush1.xpose.msra.mxu0 0.0
    %5660 = vmatprep.subr.mxu0 0.0
    %5661 = vmatpush1.xpose.msra.mxu0 0.0
    %5662 = vmatprep.subr.mxu0 0.0
    %5663 = vmatpush1.xpose.msra.mxu0 0.0
    %5664 = vmatprep.subr.mxu0 0.0
    %5665 = vmatpush1.xpose.msra.mxu0 0.0
    %5666 = vmatprep.subr.mxu0 %v212
    %5667 = vmatpush1.xpose.msra.mxu0 %v211
    %5668 = vmatprep.subr.mxu0 0.0
    %5669 = vmatpush2.xpose.msra.mxu0 0.0
    %5670 = vmatprep.subr.mxu0 0.0
    %5671 = vmatpush2.xpose.msra.mxu0 0.0
    %5672 = vmatprep.subr.mxu0 0.0
    %5673 = vmatpush2.xpose.msra.mxu0 0.0
    %5674 = vmatprep.subr.mxu0 0.0
    %5675 = vmatpush2.xpose.msra.mxu0 0.0
    %5676 = vmatprep.subr.mxu0 0.0
    %5677 = vmatpush2.xpose.msra.mxu0 0.0
    %5678 = vmatprep.subr.mxu0 0.0
    %5679 = vmatpush2.xpose.msra.mxu0 0.0
    %5680 = vmatprep.subr.mxu0 0.0
    %5681 = vmatpush2.xpose.msra.mxu0 0.0
    %5682 = vmatprep.subr.mxu0 0.0
    %5683 = vmatpush2.xpose.msra.mxu0 0.0
    %5684 = vmatprep.subr.mxu0 0.0
    %5685 = vmatpush2.xpose.msra.mxu0 0.0
    %5686 = vmatprep.subr.mxu0 0.0
    %5687 = vmatpush2.xpose.msra.mxu0 0.0
    %5688 = vmatprep.subr.mxu0 0.0
    %5689 = vmatpush2.xpose.msra.mxu0 0.0
    %5690 = vmatprep.subr.mxu0 0.0
    %5691 = vmatpush2.xpose.msra.mxu0 0.0
    %5692 = vmatprep.subr.mxu0 0.0
    %5693 = vmatpush2.xpose.msra.mxu0 0.0
    %5694 = vmatprep.subr.mxu0 0.0
    %5695 = vmatpush2.xpose.msra.mxu0 0.0
    %5696 = vmatprep.subr.mxu0 0.0
    %5697 = vmatpush2.xpose.msra.mxu0 0.0
    %5698 = vmatprep.subr.mxu0 0.0
    %5699 = vmatpush2.xpose.msra.mxu0 0.0
    %5700 = vmatprep.mubr.f32.mxu0 %v878
    %5701 = vmatmul.mubr.f32.gmra.mxu0 %v876
    %v5702 = vpop.f32.mrf.mxu0
    %v5703 = vadd.f32 %v5633, %v5702
    %v5704 = vpop.f32.mrf.mxu0
    %5705 = vdwg.mxu0
    %5706 = vmatprep.subr.mxu0 0.0
    %5707 = vmatpush1.xpose.msra.mxu0 0.0
    %5708 = vmatprep.subr.mxu0 0.0
    %5709 = vmatpush1.xpose.msra.mxu0 0.0
    %5710 = vmatprep.subr.mxu0 0.0
    %5711 = vmatpush1.xpose.msra.mxu0 0.0
    %5712 = vmatprep.subr.mxu0 0.0
    %5713 = vmatpush1.xpose.msra.mxu0 0.0
    %5714 = vmatprep.subr.mxu0 0.0
    %5715 = vmatpush1.xpose.msra.mxu0 0.0
    %5716 = vmatprep.subr.mxu0 0.0
    %5717 = vmatpush1.xpose.msra.mxu0 0.0
    %5718 = vmatprep.subr.mxu0 0.0
    %5719 = vmatpush1.xpose.msra.mxu0 0.0
    %5720 = vmatprep.subr.mxu0 0.0
    %5721 = vmatpush1.xpose.msra.mxu0 0.0
    %5722 = vmatprep.subr.mxu0 0.0
    %5723 = vmatpush1.xpose.msra.mxu0 0.0
    %5724 = vmatprep.subr.mxu0 0.0
    %5725 = vmatpush1.xpose.msra.mxu0 0.0
    %5726 = vmatprep.subr.mxu0 0.0
    %5727 = vmatpush1.xpose.msra.mxu0 0.0
    %5728 = vmatprep.subr.mxu0 0.0
    %5729 = vmatpush1.xpose.msra.mxu0 0.0
    %5730 = vmatprep.subr.mxu0 0.0
    %5731 = vmatpush1.xpose.msra.mxu0 0.0
    %5732 = vmatprep.subr.mxu0 0.0
    %5733 = vmatpush1.xpose.msra.mxu0 0.0
    %5734 = vmatprep.subr.mxu0 0.0
    %5735 = vmatpush1.xpose.msra.mxu0 0.0
    %5736 = vmatprep.subr.mxu0 %v214
    %5737 = vmatpush1.xpose.msra.mxu0 %v213
    %5738 = vmatprep.subr.mxu0 0.0
    %5739 = vmatpush2.xpose.msra.mxu0 0.0
    %5740 = vmatprep.subr.mxu0 0.0
    %5741 = vmatpush2.xpose.msra.mxu0 0.0
    %5742 = vmatprep.subr.mxu0 0.0
    %5743 = vmatpush2.xpose.msra.mxu0 0.0
    %5744 = vmatprep.subr.mxu0 0.0
    %5745 = vmatpush2.xpose.msra.mxu0 0.0
    %5746 = vmatprep.subr.mxu0 0.0
    %5747 = vmatpush2.xpose.msra.mxu0 0.0
    %5748 = vmatprep.subr.mxu0 0.0
    %5749 = vmatpush2.xpose.msra.mxu0 0.0
    %5750 = vmatprep.subr.mxu0 0.0
    %5751 = vmatpush2.xpose.msra.mxu0 0.0
    %5752 = vmatprep.subr.mxu0 0.0
    %5753 = vmatpush2.xpose.msra.mxu0 0.0
    %5754 = vmatprep.subr.mxu0 0.0
    %5755 = vmatpush2.xpose.msra.mxu0 0.0
    %5756 = vmatprep.subr.mxu0 0.0
    %5757 = vmatpush2.xpose.msra.mxu0 0.0
    %5758 = vmatprep.subr.mxu0 0.0
    %5759 = vmatpush2.xpose.msra.mxu0 0.0
    %5760 = vmatprep.subr.mxu0 0.0
    %5761 = vmatpush2.xpose.msra.mxu0 0.0
    %5762 = vmatprep.subr.mxu0 0.0
    %5763 = vmatpush2.xpose.msra.mxu0 0.0
    %5764 = vmatprep.subr.mxu0 0.0
    %5765 = vmatpush2.xpose.msra.mxu0 0.0
    %5766 = vmatprep.subr.mxu0 0.0
    %5767 = vmatpush2.xpose.msra.mxu0 0.0
    %5768 = vmatprep.subr.mxu0 0.0
    %5769 = vmatpush2.xpose.msra.mxu0 0.0
    %5770 = vmatprep.mubr.f32.mxu0 %v894
    %5771 = vmatmul.mubr.f32.gmra.mxu0 %v886
    %v5772 = vpop.f32.mrf.mxu0
    %v5773 = vadd.f32 %v5703, %v5772
    %v5774 = vpop.f32.mrf.mxu0
    %5775 = vdwg.mxu0
    %5776 = vmatprep.subr.mxu0 0.0
    %5777 = vmatpush1.xpose.msra.mxu0 0.0
    %5778 = vmatprep.subr.mxu0 0.0
    %5779 = vmatpush1.xpose.msra.mxu0 0.0
    %5780 = vmatprep.subr.mxu0 0.0
    %5781 = vmatpush1.xpose.msra.mxu0 0.0
    %5782 = vmatprep.subr.mxu0 0.0
    %5783 = vmatpush1.xpose.msra.mxu0 0.0
    %5784 = vmatprep.subr.mxu0 0.0
    %5785 = vmatpush1.xpose.msra.mxu0 0.0
    %5786 = vmatprep.subr.mxu0 0.0
    %5787 = vmatpush1.xpose.msra.mxu0 0.0
    %5788 = vmatprep.subr.mxu0 0.0
    %5789 = vmatpush1.xpose.msra.mxu0 0.0
    %5790 = vmatprep.subr.mxu0 0.0
    %5791 = vmatpush1.xpose.msra.mxu0 0.0
    %5792 = vmatprep.subr.mxu0 0.0
    %5793 = vmatpush1.xpose.msra.mxu0 0.0
    %5794 = vmatprep.subr.mxu0 0.0
    %5795 = vmatpush1.xpose.msra.mxu0 0.0
    %5796 = vmatprep.subr.mxu0 0.0
    %5797 = vmatpush1.xpose.msra.mxu0 0.0
    %5798 = vmatprep.subr.mxu0 0.0
    %5799 = vmatpush1.xpose.msra.mxu0 0.0
    %5800 = vmatprep.subr.mxu0 0.0
    %5801 = vmatpush1.xpose.msra.mxu0 0.0
    %5802 = vmatprep.subr.mxu0 0.0
    %5803 = vmatpush1.xpose.msra.mxu0 0.0
    %5804 = vmatprep.subr.mxu0 0.0
    %5805 = vmatpush1.xpose.msra.mxu0 0.0
    %5806 = vmatprep.subr.mxu0 %v216
    %5807 = vmatpush1.xpose.msra.mxu0 %v215
    %5808 = vmatprep.subr.mxu0 0.0
    %5809 = vmatpush2.xpose.msra.mxu0 0.0
    %5810 = vmatprep.subr.mxu0 0.0
    %5811 = vmatpush2.xpose.msra.mxu0 0.0
    %5812 = vmatprep.subr.mxu0 0.0
    %5813 = vmatpush2.xpose.msra.mxu0 0.0
    %5814 = vmatprep.subr.mxu0 0.0
    %5815 = vmatpush2.xpose.msra.mxu0 0.0
    %5816 = vmatprep.subr.mxu0 0.0
    %5817 = vmatpush2.xpose.msra.mxu0 0.0
    %5818 = vmatprep.subr.mxu0 0.0
    %5819 = vmatpush2.xpose.msra.mxu0 0.0
    %5820 = vmatprep.subr.mxu0 0.0
    %5821 = vmatpush2.xpose.msra.mxu0 0.0
    %5822 = vmatprep.subr.mxu0 0.0
    %5823 = vmatpush2.xpose.msra.mxu0 0.0
    %5824 = vmatprep.subr.mxu0 0.0
    %5825 = vmatpush2.xpose.msra.mxu0 0.0
    %5826 = vmatprep.subr.mxu0 0.0
    %5827 = vmatpush2.xpose.msra.mxu0 0.0
    %5828 = vmatprep.subr.mxu0 0.0
    %5829 = vmatpush2.xpose.msra.mxu0 0.0
    %5830 = vmatprep.subr.mxu0 0.0
    %5831 = vmatpush2.xpose.msra.mxu0 0.0
    %5832 = vmatprep.subr.mxu0 0.0
    %5833 = vmatpush2.xpose.msra.mxu0 0.0
    %5834 = vmatprep.subr.mxu0 0.0
    %5835 = vmatpush2.xpose.msra.mxu0 0.0
    %5836 = vmatprep.subr.mxu0 0.0
    %5837 = vmatpush2.xpose.msra.mxu0 0.0
    %5838 = vmatprep.subr.mxu0 0.0
    %5839 = vmatpush2.xpose.msra.mxu0 0.0
    %5840 = vmatprep.mubr.f32.mxu0 %v895
    %5841 = vmatmul.mubr.f32.gmra.mxu0 %v893
    %v5842 = vpop.f32.mrf.mxu0
    %v5843 = vadd.f32 %v5773, %v5842
    %v5844 = vpop.f32.mrf.mxu0
    %5845 = vdwg.mxu0
    %5846 = vmatprep.subr.mxu0 0.0
    %5847 = vmatpush1.xpose.msra.mxu0 0.0
    %5848 = vmatprep.subr.mxu0 0.0
    %5849 = vmatpush1.xpose.msra.mxu0 0.0
    %5850 = vmatprep.subr.mxu0 0.0
    %5851 = vmatpush1.xpose.msra.mxu0 0.0
    %5852 = vmatprep.subr.mxu0 0.0
    %5853 = vmatpush1.xpose.msra.mxu0 0.0
    %5854 = vmatprep.subr.mxu0 0.0
    %5855 = vmatpush1.xpose.msra.mxu0 0.0
    %5856 = vmatprep.subr.mxu0 0.0
    %5857 = vmatpush1.xpose.msra.mxu0 0.0
    %5858 = vmatprep.subr.mxu0 0.0
    %5859 = vmatpush1.xpose.msra.mxu0 0.0
    %5860 = vmatprep.subr.mxu0 0.0
    %5861 = vmatpush1.xpose.msra.mxu0 0.0
    %5862 = vmatprep.subr.mxu0 0.0
    %5863 = vmatpush1.xpose.msra.mxu0 0.0
    %5864 = vmatprep.subr.mxu0 0.0
    %5865 = vmatpush1.xpose.msra.mxu0 0.0
    %5866 = vmatprep.subr.mxu0 0.0
    %5867 = vmatpush1.xpose.msra.mxu0 0.0
    %5868 = vmatprep.subr.mxu0 0.0
    %5869 = vmatpush1.xpose.msra.mxu0 0.0
    %5870 = vmatprep.subr.mxu0 0.0
    %5871 = vmatpush1.xpose.msra.mxu0 0.0
    %5872 = vmatprep.subr.mxu0 0.0
    %5873 = vmatpush1.xpose.msra.mxu0 0.0
    %5874 = vmatprep.subr.mxu0 0.0
    %5875 = vmatpush1.xpose.msra.mxu0 0.0
    %5876 = vmatprep.subr.mxu0 %v218
    %5877 = vmatpush1.xpose.msra.mxu0 %v217
    %5878 = vmatprep.subr.mxu0 0.0
    %5879 = vmatpush2.xpose.msra.mxu0 0.0
    %5880 = vmatprep.subr.mxu0 0.0
    %5881 = vmatpush2.xpose.msra.mxu0 0.0
    %5882 = vmatprep.subr.mxu0 0.0
    %5883 = vmatpush2.xpose.msra.mxu0 0.0
    %5884 = vmatprep.subr.mxu0 0.0
    %5885 = vmatpush2.xpose.msra.mxu0 0.0
    %5886 = vmatprep.subr.mxu0 0.0
    %5887 = vmatpush2.xpose.msra.mxu0 0.0
    %5888 = vmatprep.subr.mxu0 0.0
    %5889 = vmatpush2.xpose.msra.mxu0 0.0
    %5890 = vmatprep.subr.mxu0 0.0
    %5891 = vmatpush2.xpose.msra.mxu0 0.0
    %5892 = vmatprep.subr.mxu0 0.0
    %5893 = vmatpush2.xpose.msra.mxu0 0.0
    %5894 = vmatprep.subr.mxu0 0.0
    %5895 = vmatpush2.xpose.msra.mxu0 0.0
    %5896 = vmatprep.subr.mxu0 0.0
    %5897 = vmatpush2.xpose.msra.mxu0 0.0
    %5898 = vmatprep.subr.mxu0 0.0
    %5899 = vmatpush2.xpose.msra.mxu0 0.0
    %5900 = vmatprep.subr.mxu0 0.0
    %5901 = vmatpush2.xpose.msra.mxu0 0.0
    %5902 = vmatprep.subr.mxu0 0.0
    %5903 = vmatpush2.xpose.msra.mxu0 0.0
    %5904 = vmatprep.subr.mxu0 0.0
    %5905 = vmatpush2.xpose.msra.mxu0 0.0
    %5906 = vmatprep.subr.mxu0 0.0
    %5907 = vmatpush2.xpose.msra.mxu0 0.0
    %5908 = vmatprep.subr.mxu0 0.0
    %5909 = vmatpush2.xpose.msra.mxu0 0.0
    %5910 = vmatprep.mubr.f32.mxu0 %v911
    %5911 = vmatmul.mubr.f32.gmra.mxu0 %v903
    %v5912 = vpop.f32.mrf.mxu0
    %v5913 = vadd.f32 %v5843, %v5912
    %v5914 = vpop.f32.mrf.mxu0
    %5915 = vdwg.mxu0
    %5916 = vmatprep.subr.mxu0 0.0
    %5917 = vmatpush1.xpose.msra.mxu0 0.0
    %5918 = vmatprep.subr.mxu0 0.0
    %5919 = vmatpush1.xpose.msra.mxu0 0.0
    %5920 = vmatprep.subr.mxu0 0.0
    %5921 = vmatpush1.xpose.msra.mxu0 0.0
    %5922 = vmatprep.subr.mxu0 0.0
    %5923 = vmatpush1.xpose.msra.mxu0 0.0
    %5924 = vmatprep.subr.mxu0 0.0
    %5925 = vmatpush1.xpose.msra.mxu0 0.0
    %5926 = vmatprep.subr.mxu0 0.0
    %5927 = vmatpush1.xpose.msra.mxu0 0.0
    %5928 = vmatprep.subr.mxu0 0.0
    %5929 = vmatpush1.xpose.msra.mxu0 0.0
    %5930 = vmatprep.subr.mxu0 0.0
    %5931 = vmatpush1.xpose.msra.mxu0 0.0
    %5932 = vmatprep.subr.mxu0 0.0
    %5933 = vmatpush1.xpose.msra.mxu0 0.0
    %5934 = vmatprep.subr.mxu0 0.0
    %5935 = vmatpush1.xpose.msra.mxu0 0.0
    %5936 = vmatprep.subr.mxu0 0.0
    %5937 = vmatpush1.xpose.msra.mxu0 0.0
    %5938 = vmatprep.subr.mxu0 0.0
    %5939 = vmatpush1.xpose.msra.mxu0 0.0
    %5940 = vmatprep.subr.mxu0 0.0
    %5941 = vmatpush1.xpose.msra.mxu0 0.0
    %5942 = vmatprep.subr.mxu0 0.0
    %5943 = vmatpush1.xpose.msra.mxu0 0.0
    %5944 = vmatprep.subr.mxu0 0.0
    %5945 = vmatpush1.xpose.msra.mxu0 0.0
    %5946 = vmatprep.subr.mxu0 %v220
    %5947 = vmatpush1.xpose.msra.mxu0 %v219
    %5948 = vmatprep.subr.mxu0 0.0
    %5949 = vmatpush2.xpose.msra.mxu0 0.0
    %5950 = vmatprep.subr.mxu0 0.0
    %5951 = vmatpush2.xpose.msra.mxu0 0.0
    %5952 = vmatprep.subr.mxu0 0.0
    %5953 = vmatpush2.xpose.msra.mxu0 0.0
    %5954 = vmatprep.subr.mxu0 0.0
    %5955 = vmatpush2.xpose.msra.mxu0 0.0
    %5956 = vmatprep.subr.mxu0 0.0
    %5957 = vmatpush2.xpose.msra.mxu0 0.0
    %5958 = vmatprep.subr.mxu0 0.0
    %5959 = vmatpush2.xpose.msra.mxu0 0.0
    %5960 = vmatprep.subr.mxu0 0.0
    %5961 = vmatpush2.xpose.msra.mxu0 0.0
    %5962 = vmatprep.subr.mxu0 0.0
    %5963 = vmatpush2.xpose.msra.mxu0 0.0
    %5964 = vmatprep.subr.mxu0 0.0
    %5965 = vmatpush2.xpose.msra.mxu0 0.0
    %5966 = vmatprep.subr.mxu0 0.0
    %5967 = vmatpush2.xpose.msra.mxu0 0.0
    %5968 = vmatprep.subr.mxu0 0.0
    %5969 = vmatpush2.xpose.msra.mxu0 0.0
    %5970 = vmatprep.subr.mxu0 0.0
    %5971 = vmatpush2.xpose.msra.mxu0 0.0
    %5972 = vmatprep.subr.mxu0 0.0
    %5973 = vmatpush2.xpose.msra.mxu0 0.0
    %5974 = vmatprep.subr.mxu0 0.0
    %5975 = vmatpush2.xpose.msra.mxu0 0.0
    %5976 = vmatprep.subr.mxu0 0.0
    %5977 = vmatpush2.xpose.msra.mxu0 0.0
    %5978 = vmatprep.subr.mxu0 0.0
    %5979 = vmatpush2.xpose.msra.mxu0 0.0
    %5980 = vmatprep.mubr.f32.mxu0 %v912
    %5981 = vmatmul.mubr.f32.gmra.mxu0 %v910
    %v5982 = vpop.f32.mrf.mxu0
    %v5983 = vadd.f32 %v5913, %v5982
    %v5984 = vpop.f32.mrf.mxu0
    %5985 = vdwg.mxu0
    %5986 = vmatprep.subr.mxu0 0.0
    %5987 = vmatpush1.xpose.msra.mxu0 0.0
    %5988 = vmatprep.subr.mxu0 0.0
    %5989 = vmatpush1.xpose.msra.mxu0 0.0
    %5990 = vmatprep.subr.mxu0 0.0
    %5991 = vmatpush1.xpose.msra.mxu0 0.0
    %5992 = vmatprep.subr.mxu0 0.0
    %5993 = vmatpush1.xpose.msra.mxu0 0.0
    %5994 = vmatprep.subr.mxu0 0.0
    %5995 = vmatpush1.xpose.msra.mxu0 0.0
    %5996 = vmatprep.subr.mxu0 0.0
    %5997 = vmatpush1.xpose.msra.mxu0 0.0
    %5998 = vmatprep.subr.mxu0 0.0
    %5999 = vmatpush1.xpose.msra.mxu0 0.0
    %6000 = vmatprep.subr.mxu0 0.0
    %6001 = vmatpush1.xpose.msra.mxu0 0.0
    %6002 = vmatprep.subr.mxu0 0.0
    %6003 = vmatpush1.xpose.msra.mxu0 0.0
    %6004 = vmatprep.subr.mxu0 0.0
    %6005 = vmatpush1.xpose.msra.mxu0 0.0
    %6006 = vmatprep.subr.mxu0 0.0
    %6007 = vmatpush1.xpose.msra.mxu0 0.0
    %6008 = vmatprep.subr.mxu0 0.0
    %6009 = vmatpush1.xpose.msra.mxu0 0.0
    %6010 = vmatprep.subr.mxu0 0.0
    %6011 = vmatpush1.xpose.msra.mxu0 0.0
    %6012 = vmatprep.subr.mxu0 0.0
    %6013 = vmatpush1.xpose.msra.mxu0 0.0
    %6014 = vmatprep.subr.mxu0 0.0
    %6015 = vmatpush1.xpose.msra.mxu0 0.0
    %6016 = vmatprep.subr.mxu0 %v222
    %6017 = vmatpush1.xpose.msra.mxu0 %v221
    %6018 = vmatprep.subr.mxu0 0.0
    %6019 = vmatpush2.xpose.msra.mxu0 0.0
    %6020 = vmatprep.subr.mxu0 0.0
    %6021 = vmatpush2.xpose.msra.mxu0 0.0
    %6022 = vmatprep.subr.mxu0 0.0
    %6023 = vmatpush2.xpose.msra.mxu0 0.0
    %6024 = vmatprep.subr.mxu0 0.0
    %6025 = vmatpush2.xpose.msra.mxu0 0.0
    %6026 = vmatprep.subr.mxu0 0.0
    %6027 = vmatpush2.xpose.msra.mxu0 0.0
    %6028 = vmatprep.subr.mxu0 0.0
    %6029 = vmatpush2.xpose.msra.mxu0 0.0
    %6030 = vmatprep.subr.mxu0 0.0
    %6031 = vmatpush2.xpose.msra.mxu0 0.0
    %6032 = vmatprep.subr.mxu0 0.0
    %6033 = vmatpush2.xpose.msra.mxu0 0.0
    %6034 = vmatprep.subr.mxu0 0.0
    %6035 = vmatpush2.xpose.msra.mxu0 0.0
    %6036 = vmatprep.subr.mxu0 0.0
    %6037 = vmatpush2.xpose.msra.mxu0 0.0
    %6038 = vmatprep.subr.mxu0 0.0
    %6039 = vmatpush2.xpose.msra.mxu0 0.0
    %6040 = vmatprep.subr.mxu0 0.0
    %6041 = vmatpush2.xpose.msra.mxu0 0.0
    %6042 = vmatprep.subr.mxu0 0.0
    %6043 = vmatpush2.xpose.msra.mxu0 0.0
    %6044 = vmatprep.subr.mxu0 0.0
    %6045 = vmatpush2.xpose.msra.mxu0 0.0
    %6046 = vmatprep.subr.mxu0 0.0
    %6047 = vmatpush2.xpose.msra.mxu0 0.0
    %6048 = vmatprep.subr.mxu0 0.0
    %6049 = vmatpush2.xpose.msra.mxu0 0.0
    %6050 = vmatprep.mubr.f32.mxu0 %v928
    %6051 = vmatmul.mubr.f32.gmra.mxu0 %v920
    %v6052 = vpop.f32.mrf.mxu0
    %v6053 = vadd.f32 %v5983, %v6052
    %v6054 = vpop.f32.mrf.mxu0
    %6055 = vdwg.mxu0
    %6056 = vmatprep.subr.mxu0 0.0
    %6057 = vmatpush1.xpose.msra.mxu0 0.0
    %6058 = vmatprep.subr.mxu0 0.0
    %6059 = vmatpush1.xpose.msra.mxu0 0.0
    %6060 = vmatprep.subr.mxu0 0.0
    %6061 = vmatpush1.xpose.msra.mxu0 0.0
    %6062 = vmatprep.subr.mxu0 0.0
    %6063 = vmatpush1.xpose.msra.mxu0 0.0
    %6064 = vmatprep.subr.mxu0 0.0
    %6065 = vmatpush1.xpose.msra.mxu0 0.0
    %6066 = vmatprep.subr.mxu0 0.0
    %6067 = vmatpush1.xpose.msra.mxu0 0.0
    %6068 = vmatprep.subr.mxu0 0.0
    %6069 = vmatpush1.xpose.msra.mxu0 0.0
    %6070 = vmatprep.subr.mxu0 0.0
    %6071 = vmatpush1.xpose.msra.mxu0 0.0
    %6072 = vmatprep.subr.mxu0 0.0
    %6073 = vmatpush1.xpose.msra.mxu0 0.0
    %6074 = vmatprep.subr.mxu0 0.0
    %6075 = vmatpush1.xpose.msra.mxu0 0.0
    %6076 = vmatprep.subr.mxu0 0.0
    %6077 = vmatpush1.xpose.msra.mxu0 0.0
    %6078 = vmatprep.subr.mxu0 0.0
    %6079 = vmatpush1.xpose.msra.mxu0 0.0
    %6080 = vmatprep.subr.mxu0 0.0
    %6081 = vmatpush1.xpose.msra.mxu0 0.0
    %6082 = vmatprep.subr.mxu0 0.0
    %6083 = vmatpush1.xpose.msra.mxu0 0.0
    %6084 = vmatprep.subr.mxu0 0.0
    %6085 = vmatpush1.xpose.msra.mxu0 0.0
    %6086 = vmatprep.subr.mxu0 %v224
    %6087 = vmatpush1.xpose.msra.mxu0 %v223
    %6088 = vmatprep.subr.mxu0 0.0
    %6089 = vmatpush2.xpose.msra.mxu0 0.0
    %6090 = vmatprep.subr.mxu0 0.0
    %6091 = vmatpush2.xpose.msra.mxu0 0.0
    %6092 = vmatprep.subr.mxu0 0.0
    %6093 = vmatpush2.xpose.msra.mxu0 0.0
    %6094 = vmatprep.subr.mxu0 0.0
    %6095 = vmatpush2.xpose.msra.mxu0 0.0
    %6096 = vmatprep.subr.mxu0 0.0
    %6097 = vmatpush2.xpose.msra.mxu0 0.0
    %6098 = vmatprep.subr.mxu0 0.0
    %6099 = vmatpush2.xpose.msra.mxu0 0.0
    %6100 = vmatprep.subr.mxu0 0.0
    %6101 = vmatpush2.xpose.msra.mxu0 0.0
    %6102 = vmatprep.subr.mxu0 0.0
    %6103 = vmatpush2.xpose.msra.mxu0 0.0
    %6104 = vmatprep.subr.mxu0 0.0
    %6105 = vmatpush2.xpose.msra.mxu0 0.0
    %6106 = vmatprep.subr.mxu0 0.0
    %6107 = vmatpush2.xpose.msra.mxu0 0.0
    %6108 = vmatprep.subr.mxu0 0.0
    %6109 = vmatpush2.xpose.msra.mxu0 0.0
    %6110 = vmatprep.subr.mxu0 0.0
    %6111 = vmatpush2.xpose.msra.mxu0 0.0
    %6112 = vmatprep.subr.mxu0 0.0
    %6113 = vmatpush2.xpose.msra.mxu0 0.0
    %6114 = vmatprep.subr.mxu0 0.0
    %6115 = vmatpush2.xpose.msra.mxu0 0.0
    %6116 = vmatprep.subr.mxu0 0.0
    %6117 = vmatpush2.xpose.msra.mxu0 0.0
    %6118 = vmatprep.subr.mxu0 0.0
    %6119 = vmatpush2.xpose.msra.mxu0 0.0
    %6120 = vmatprep.mubr.f32.mxu0 %v929
    %6121 = vmatmul.mubr.f32.gmra.mxu0 %v927
    %v6122 = vpop.f32.mrf.mxu0
    %v6123 = vadd.f32 %v6053, %v6122
    %v6124 = vpop.f32.mrf.mxu0
    %6125 = vdwg.mxu0
    %6126 = vmatprep.subr.mxu0 0.0
    %6127 = vmatpush1.xpose.msra.mxu0 0.0
    %6128 = vmatprep.subr.mxu0 0.0
    %6129 = vmatpush1.xpose.msra.mxu0 0.0
    %6130 = vmatprep.subr.mxu0 0.0
    %6131 = vmatpush1.xpose.msra.mxu0 0.0
    %6132 = vmatprep.subr.mxu0 0.0
    %6133 = vmatpush1.xpose.msra.mxu0 0.0
    %6134 = vmatprep.subr.mxu0 0.0
    %6135 = vmatpush1.xpose.msra.mxu0 0.0
    %6136 = vmatprep.subr.mxu0 0.0
    %6137 = vmatpush1.xpose.msra.mxu0 0.0
    %6138 = vmatprep.subr.mxu0 0.0
    %6139 = vmatpush1.xpose.msra.mxu0 0.0
    %6140 = vmatprep.subr.mxu0 0.0
    %6141 = vmatpush1.xpose.msra.mxu0 0.0
    %6142 = vmatprep.subr.mxu0 0.0
    %6143 = vmatpush1.xpose.msra.mxu0 0.0
    %6144 = vmatprep.subr.mxu0 0.0
    %6145 = vmatpush1.xpose.msra.mxu0 0.0
    %6146 = vmatprep.subr.mxu0 0.0
    %6147 = vmatpush1.xpose.msra.mxu0 0.0
    %6148 = vmatprep.subr.mxu0 0.0
    %6149 = vmatpush1.xpose.msra.mxu0 0.0
    %6150 = vmatprep.subr.mxu0 0.0
    %6151 = vmatpush1.xpose.msra.mxu0 0.0
    %6152 = vmatprep.subr.mxu0 0.0
    %6153 = vmatpush1.xpose.msra.mxu0 0.0
    %6154 = vmatprep.subr.mxu0 0.0
    %6155 = vmatpush1.xpose.msra.mxu0 0.0
    %6156 = vmatprep.subr.mxu0 %v226
    %6157 = vmatpush1.xpose.msra.mxu0 %v225
    %6158 = vmatprep.subr.mxu0 0.0
    %6159 = vmatpush2.xpose.msra.mxu0 0.0
    %6160 = vmatprep.subr.mxu0 0.0
    %6161 = vmatpush2.xpose.msra.mxu0 0.0
    %6162 = vmatprep.subr.mxu0 0.0
    %6163 = vmatpush2.xpose.msra.mxu0 0.0
    %6164 = vmatprep.subr.mxu0 0.0
    %6165 = vmatpush2.xpose.msra.mxu0 0.0
    %6166 = vmatprep.subr.mxu0 0.0
    %6167 = vmatpush2.xpose.msra.mxu0 0.0
    %6168 = vmatprep.subr.mxu0 0.0
    %6169 = vmatpush2.xpose.msra.mxu0 0.0
    %6170 = vmatprep.subr.mxu0 0.0
    %6171 = vmatpush2.xpose.msra.mxu0 0.0
    %6172 = vmatprep.subr.mxu0 0.0
    %6173 = vmatpush2.xpose.msra.mxu0 0.0
    %6174 = vmatprep.subr.mxu0 0.0
    %6175 = vmatpush2.xpose.msra.mxu0 0.0
    %6176 = vmatprep.subr.mxu0 0.0
    %6177 = vmatpush2.xpose.msra.mxu0 0.0
    %6178 = vmatprep.subr.mxu0 0.0
    %6179 = vmatpush2.xpose.msra.mxu0 0.0
    %6180 = vmatprep.subr.mxu0 0.0
    %6181 = vmatpush2.xpose.msra.mxu0 0.0
    %6182 = vmatprep.subr.mxu0 0.0
    %6183 = vmatpush2.xpose.msra.mxu0 0.0
    %6184 = vmatprep.subr.mxu0 0.0
    %6185 = vmatpush2.xpose.msra.mxu0 0.0
    %6186 = vmatprep.subr.mxu0 0.0
    %6187 = vmatpush2.xpose.msra.mxu0 0.0
    %6188 = vmatprep.subr.mxu0 0.0
    %6189 = vmatpush2.xpose.msra.mxu0 0.0
    %6190 = vmatprep.mubr.f32.mxu0 %v945
    %6191 = vmatmul.mubr.f32.gmra.mxu0 %v937
    %v6192 = vpop.f32.mrf.mxu0
    %v6193 = vadd.f32 %v6123, %v6192
    %v6194 = vpop.f32.mrf.mxu0
    %6195 = vdwg.mxu0
    %6196 = vmatprep.subr.mxu0 0.0
    %6197 = vmatpush1.xpose.msra.mxu0 0.0
    %6198 = vmatprep.subr.mxu0 0.0
    %6199 = vmatpush1.xpose.msra.mxu0 0.0
    %6200 = vmatprep.subr.mxu0 0.0
    %6201 = vmatpush1.xpose.msra.mxu0 0.0
    %6202 = vmatprep.subr.mxu0 0.0
    %6203 = vmatpush1.xpose.msra.mxu0 0.0
    %6204 = vmatprep.subr.mxu0 0.0
    %6205 = vmatpush1.xpose.msra.mxu0 0.0
    %6206 = vmatprep.subr.mxu0 0.0
    %6207 = vmatpush1.xpose.msra.mxu0 0.0
    %6208 = vmatprep.subr.mxu0 0.0
    %6209 = vmatpush1.xpose.msra.mxu0 0.0
    %6210 = vmatprep.subr.mxu0 0.0
    %6211 = vmatpush1.xpose.msra.mxu0 0.0
    %6212 = vmatprep.subr.mxu0 0.0
    %6213 = vmatpush1.xpose.msra.mxu0 0.0
    %6214 = vmatprep.subr.mxu0 0.0
    %6215 = vmatpush1.xpose.msra.mxu0 0.0
    %6216 = vmatprep.subr.mxu0 0.0
    %6217 = vmatpush1.xpose.msra.mxu0 0.0
    %6218 = vmatprep.subr.mxu0 0.0
    %6219 = vmatpush1.xpose.msra.mxu0 0.0
    %6220 = vmatprep.subr.mxu0 0.0
    %6221 = vmatpush1.xpose.msra.mxu0 0.0
    %6222 = vmatprep.subr.mxu0 0.0
    %6223 = vmatpush1.xpose.msra.mxu0 0.0
    %6224 = vmatprep.subr.mxu0 0.0
    %6225 = vmatpush1.xpose.msra.mxu0 0.0
    %6226 = vmatprep.subr.mxu0 %v228
    %6227 = vmatpush1.xpose.msra.mxu0 %v227
    %6228 = vmatprep.subr.mxu0 0.0
    %6229 = vmatpush2.xpose.msra.mxu0 0.0
    %6230 = vmatprep.subr.mxu0 0.0
    %6231 = vmatpush2.xpose.msra.mxu0 0.0
    %6232 = vmatprep.subr.mxu0 0.0
    %6233 = vmatpush2.xpose.msra.mxu0 0.0
    %6234 = vmatprep.subr.mxu0 0.0
    %6235 = vmatpush2.xpose.msra.mxu0 0.0
    %6236 = vmatprep.subr.mxu0 0.0
    %6237 = vmatpush2.xpose.msra.mxu0 0.0
    %6238 = vmatprep.subr.mxu0 0.0
    %6239 = vmatpush2.xpose.msra.mxu0 0.0
    %6240 = vmatprep.subr.mxu0 0.0
    %6241 = vmatpush2.xpose.msra.mxu0 0.0
    %6242 = vmatprep.subr.mxu0 0.0
    %6243 = vmatpush2.xpose.msra.mxu0 0.0
    %6244 = vmatprep.subr.mxu0 0.0
    %6245 = vmatpush2.xpose.msra.mxu0 0.0
    %6246 = vmatprep.subr.mxu0 0.0
    %6247 = vmatpush2.xpose.msra.mxu0 0.0
    %6248 = vmatprep.subr.mxu0 0.0
    %6249 = vmatpush2.xpose.msra.mxu0 0.0
    %6250 = vmatprep.subr.mxu0 0.0
    %6251 = vmatpush2.xpose.msra.mxu0 0.0
    %6252 = vmatprep.subr.mxu0 0.0
    %6253 = vmatpush2.xpose.msra.mxu0 0.0
    %6254 = vmatprep.subr.mxu0 0.0
    %6255 = vmatpush2.xpose.msra.mxu0 0.0
    %6256 = vmatprep.subr.mxu0 0.0
    %6257 = vmatpush2.xpose.msra.mxu0 0.0
    %6258 = vmatprep.subr.mxu0 0.0
    %6259 = vmatpush2.xpose.msra.mxu0 0.0
    %6260 = vmatprep.mubr.f32.mxu0 %v946
    %6261 = vmatmul.mubr.f32.gmra.mxu0 %v944
    %v6262 = vpop.f32.mrf.mxu0
    %v6263 = vadd.f32 %v6193, %v6262
    %v6264 = vpop.f32.mrf.mxu0
    %6265 = vdwg.mxu0
    %6266 = vmatprep.subr.mxu0 0.0
    %6267 = vmatpush1.xpose.msra.mxu0 0.0
    %6268 = vmatprep.subr.mxu0 0.0
    %6269 = vmatpush1.xpose.msra.mxu0 0.0
    %6270 = vmatprep.subr.mxu0 0.0
    %6271 = vmatpush1.xpose.msra.mxu0 0.0
    %6272 = vmatprep.subr.mxu0 0.0
    %6273 = vmatpush1.xpose.msra.mxu0 0.0
    %6274 = vmatprep.subr.mxu0 0.0
    %6275 = vmatpush1.xpose.msra.mxu0 0.0
    %6276 = vmatprep.subr.mxu0 0.0
    %6277 = vmatpush1.xpose.msra.mxu0 0.0
    %6278 = vmatprep.subr.mxu0 0.0
    %6279 = vmatpush1.xpose.msra.mxu0 0.0
    %6280 = vmatprep.subr.mxu0 0.0
    %6281 = vmatpush1.xpose.msra.mxu0 0.0
    %6282 = vmatprep.subr.mxu0 0.0
    %6283 = vmatpush1.xpose.msra.mxu0 0.0
    %6284 = vmatprep.subr.mxu0 0.0
    %6285 = vmatpush1.xpose.msra.mxu0 0.0
    %6286 = vmatprep.subr.mxu0 0.0
    %6287 = vmatpush1.xpose.msra.mxu0 0.0
    %6288 = vmatprep.subr.mxu0 0.0
    %6289 = vmatpush1.xpose.msra.mxu0 0.0
    %6290 = vmatprep.subr.mxu0 0.0
    %6291 = vmatpush1.xpose.msra.mxu0 0.0
    %6292 = vmatprep.subr.mxu0 0.0
    %6293 = vmatpush1.xpose.msra.mxu0 0.0
    %6294 = vmatprep.subr.mxu0 0.0
    %6295 = vmatpush1.xpose.msra.mxu0 0.0
    %6296 = vmatprep.subr.mxu0 %v230
    %6297 = vmatpush1.xpose.msra.mxu0 %v229
    %6298 = vmatprep.subr.mxu0 0.0
    %6299 = vmatpush2.xpose.msra.mxu0 0.0
    %6300 = vmatprep.subr.mxu0 0.0
    %6301 = vmatpush2.xpose.msra.mxu0 0.0
    %6302 = vmatprep.subr.mxu0 0.0
    %6303 = vmatpush2.xpose.msra.mxu0 0.0
    %6304 = vmatprep.subr.mxu0 0.0
    %6305 = vmatpush2.xpose.msra.mxu0 0.0
    %6306 = vmatprep.subr.mxu0 0.0
    %6307 = vmatpush2.xpose.msra.mxu0 0.0
    %6308 = vmatprep.subr.mxu0 0.0
    %6309 = vmatpush2.xpose.msra.mxu0 0.0
    %6310 = vmatprep.subr.mxu0 0.0
    %6311 = vmatpush2.xpose.msra.mxu0 0.0
    %6312 = vmatprep.subr.mxu0 0.0
    %6313 = vmatpush2.xpose.msra.mxu0 0.0
    %6314 = vmatprep.subr.mxu0 0.0
    %6315 = vmatpush2.xpose.msra.mxu0 0.0
    %6316 = vmatprep.subr.mxu0 0.0
    %6317 = vmatpush2.xpose.msra.mxu0 0.0
    %6318 = vmatprep.subr.mxu0 0.0
    %6319 = vmatpush2.xpose.msra.mxu0 0.0
    %6320 = vmatprep.subr.mxu0 0.0
    %6321 = vmatpush2.xpose.msra.mxu0 0.0
    %6322 = vmatprep.subr.mxu0 0.0
    %6323 = vmatpush2.xpose.msra.mxu0 0.0
    %6324 = vmatprep.subr.mxu0 0.0
    %6325 = vmatpush2.xpose.msra.mxu0 0.0
    %6326 = vmatprep.subr.mxu0 0.0
    %6327 = vmatpush2.xpose.msra.mxu0 0.0
    %6328 = vmatprep.subr.mxu0 0.0
    %6329 = vmatpush2.xpose.msra.mxu0 0.0
    %6330 = vmatprep.mubr.f32.mxu0 %v962
    %6331 = vmatmul.mubr.f32.gmra.mxu0 %v954
    %v6332 = vpop.f32.mrf.mxu0
    %v6333 = vadd.f32 %v6263, %v6332
    %v6334 = vpop.f32.mrf.mxu0
    %6335 = vdwg.mxu0
    %6336 = vmatprep.subr.mxu0 0.0
    %6337 = vmatpush1.xpose.msra.mxu0 0.0
    %6338 = vmatprep.subr.mxu0 0.0
    %6339 = vmatpush1.xpose.msra.mxu0 0.0
    %6340 = vmatprep.subr.mxu0 0.0
    %6341 = vmatpush1.xpose.msra.mxu0 0.0
    %6342 = vmatprep.subr.mxu0 0.0
    %6343 = vmatpush1.xpose.msra.mxu0 0.0
    %6344 = vmatprep.subr.mxu0 0.0
    %6345 = vmatpush1.xpose.msra.mxu0 0.0
    %6346 = vmatprep.subr.mxu0 0.0
    %6347 = vmatpush1.xpose.msra.mxu0 0.0
    %6348 = vmatprep.subr.mxu0 0.0
    %6349 = vmatpush1.xpose.msra.mxu0 0.0
    %6350 = vmatprep.subr.mxu0 0.0
    %6351 = vmatpush1.xpose.msra.mxu0 0.0
    %6352 = vmatprep.subr.mxu0 0.0
    %6353 = vmatpush1.xpose.msra.mxu0 0.0
    %6354 = vmatprep.subr.mxu0 0.0
    %6355 = vmatpush1.xpose.msra.mxu0 0.0
    %6356 = vmatprep.subr.mxu0 0.0
    %6357 = vmatpush1.xpose.msra.mxu0 0.0
    %6358 = vmatprep.subr.mxu0 0.0
    %6359 = vmatpush1.xpose.msra.mxu0 0.0
    %6360 = vmatprep.subr.mxu0 0.0
    %6361 = vmatpush1.xpose.msra.mxu0 0.0
    %6362 = vmatprep.subr.mxu0 0.0
    %6363 = vmatpush1.xpose.msra.mxu0 0.0
    %6364 = vmatprep.subr.mxu0 0.0
    %6365 = vmatpush1.xpose.msra.mxu0 0.0
    %6366 = vmatprep.subr.mxu0 %v232
    %6367 = vmatpush1.xpose.msra.mxu0 %v231
    %6368 = vmatprep.subr.mxu0 0.0
    %6369 = vmatpush2.xpose.msra.mxu0 0.0
    %6370 = vmatprep.subr.mxu0 0.0
    %6371 = vmatpush2.xpose.msra.mxu0 0.0
    %6372 = vmatprep.subr.mxu0 0.0
    %6373 = vmatpush2.xpose.msra.mxu0 0.0
    %6374 = vmatprep.subr.mxu0 0.0
    %6375 = vmatpush2.xpose.msra.mxu0 0.0
    %6376 = vmatprep.subr.mxu0 0.0
    %6377 = vmatpush2.xpose.msra.mxu0 0.0
    %6378 = vmatprep.subr.mxu0 0.0
    %6379 = vmatpush2.xpose.msra.mxu0 0.0
    %6380 = vmatprep.subr.mxu0 0.0
    %6381 = vmatpush2.xpose.msra.mxu0 0.0
    %6382 = vmatprep.subr.mxu0 0.0
    %6383 = vmatpush2.xpose.msra.mxu0 0.0
    %6384 = vmatprep.subr.mxu0 0.0
    %6385 = vmatpush2.xpose.msra.mxu0 0.0
    %6386 = vmatprep.subr.mxu0 0.0
    %6387 = vmatpush2.xpose.msra.mxu0 0.0
    %6388 = vmatprep.subr.mxu0 0.0
    %6389 = vmatpush2.xpose.msra.mxu0 0.0
    %6390 = vmatprep.subr.mxu0 0.0
    %6391 = vmatpush2.xpose.msra.mxu0 0.0
    %6392 = vmatprep.subr.mxu0 0.0
    %6393 = vmatpush2.xpose.msra.mxu0 0.0
    %6394 = vmatprep.subr.mxu0 0.0
    %6395 = vmatpush2.xpose.msra.mxu0 0.0
    %6396 = vmatprep.subr.mxu0 0.0
    %6397 = vmatpush2.xpose.msra.mxu0 0.0
    %6398 = vmatprep.subr.mxu0 0.0
    %6399 = vmatpush2.xpose.msra.mxu0 0.0
    %6400 = vmatprep.mubr.f32.mxu0 %v963
    %6401 = vmatmul.mubr.f32.gmra.mxu0 %v961
    %v6402 = vpop.f32.mrf.mxu0
    %v6403 = vadd.f32 %v6333, %v6402
    %v6404 = vpop.f32.mrf.mxu0
    %6405 = vdwg.mxu0
    %6406 = vmatprep.subr.mxu0 0.0
    %6407 = vmatpush1.xpose.msra.mxu0 0.0
    %6408 = vmatprep.subr.mxu0 0.0
    %6409 = vmatpush1.xpose.msra.mxu0 0.0
    %6410 = vmatprep.subr.mxu0 0.0
    %6411 = vmatpush1.xpose.msra.mxu0 0.0
    %6412 = vmatprep.subr.mxu0 0.0
    %6413 = vmatpush1.xpose.msra.mxu0 0.0
    %6414 = vmatprep.subr.mxu0 0.0
    %6415 = vmatpush1.xpose.msra.mxu0 0.0
    %6416 = vmatprep.subr.mxu0 0.0
    %6417 = vmatpush1.xpose.msra.mxu0 0.0
    %6418 = vmatprep.subr.mxu0 0.0
    %6419 = vmatpush1.xpose.msra.mxu0 0.0
    %6420 = vmatprep.subr.mxu0 0.0
    %6421 = vmatpush1.xpose.msra.mxu0 0.0
    %6422 = vmatprep.subr.mxu0 0.0
    %6423 = vmatpush1.xpose.msra.mxu0 0.0
    %6424 = vmatprep.subr.mxu0 0.0
    %6425 = vmatpush1.xpose.msra.mxu0 0.0
    %6426 = vmatprep.subr.mxu0 0.0
    %6427 = vmatpush1.xpose.msra.mxu0 0.0
    %6428 = vmatprep.subr.mxu0 0.0
    %6429 = vmatpush1.xpose.msra.mxu0 0.0
    %6430 = vmatprep.subr.mxu0 0.0
    %6431 = vmatpush1.xpose.msra.mxu0 0.0
    %6432 = vmatprep.subr.mxu0 0.0
    %6433 = vmatpush1.xpose.msra.mxu0 0.0
    %6434 = vmatprep.subr.mxu0 0.0
    %6435 = vmatpush1.xpose.msra.mxu0 0.0
    %6436 = vmatprep.subr.mxu0 %v234
    %6437 = vmatpush1.xpose.msra.mxu0 %v233
    %6438 = vmatprep.subr.mxu0 0.0
    %6439 = vmatpush2.xpose.msra.mxu0 0.0
    %6440 = vmatprep.subr.mxu0 0.0
    %6441 = vmatpush2.xpose.msra.mxu0 0.0
    %6442 = vmatprep.subr.mxu0 0.0
    %6443 = vmatpush2.xpose.msra.mxu0 0.0
    %6444 = vmatprep.subr.mxu0 0.0
    %6445 = vmatpush2.xpose.msra.mxu0 0.0
    %6446 = vmatprep.subr.mxu0 0.0
    %6447 = vmatpush2.xpose.msra.mxu0 0.0
    %6448 = vmatprep.subr.mxu0 0.0
    %6449 = vmatpush2.xpose.msra.mxu0 0.0
    %6450 = vmatprep.subr.mxu0 0.0
    %6451 = vmatpush2.xpose.msra.mxu0 0.0
    %6452 = vmatprep.subr.mxu0 0.0
    %6453 = vmatpush2.xpose.msra.mxu0 0.0
    %6454 = vmatprep.subr.mxu0 0.0
    %6455 = vmatpush2.xpose.msra.mxu0 0.0
    %6456 = vmatprep.subr.mxu0 0.0
    %6457 = vmatpush2.xpose.msra.mxu0 0.0
    %6458 = vmatprep.subr.mxu0 0.0
    %6459 = vmatpush2.xpose.msra.mxu0 0.0
    %6460 = vmatprep.subr.mxu0 0.0
    %6461 = vmatpush2.xpose.msra.mxu0 0.0
    %6462 = vmatprep.subr.mxu0 0.0
    %6463 = vmatpush2.xpose.msra.mxu0 0.0
    %6464 = vmatprep.subr.mxu0 0.0
    %6465 = vmatpush2.xpose.msra.mxu0 0.0
    %6466 = vmatprep.subr.mxu0 0.0
    %6467 = vmatpush2.xpose.msra.mxu0 0.0
    %6468 = vmatprep.subr.mxu0 0.0
    %6469 = vmatpush2.xpose.msra.mxu0 0.0
    %6470 = vmatprep.mubr.f32.mxu0 %v979
    %6471 = vmatmul.mubr.f32.gmra.mxu0 %v971
    %v6472 = vpop.f32.mrf.mxu0
    %v6473 = vadd.f32 %v6403, %v6472
    %v6474 = vpop.f32.mrf.mxu0
    %6475 = vdwg.mxu0
    %6476 = vmatprep.subr.mxu0 0.0
    %6477 = vmatpush1.xpose.msra.mxu0 0.0
    %6478 = vmatprep.subr.mxu0 0.0
    %6479 = vmatpush1.xpose.msra.mxu0 0.0
    %6480 = vmatprep.subr.mxu0 0.0
    %6481 = vmatpush1.xpose.msra.mxu0 0.0
    %6482 = vmatprep.subr.mxu0 0.0
    %6483 = vmatpush1.xpose.msra.mxu0 0.0
    %6484 = vmatprep.subr.mxu0 0.0
    %6485 = vmatpush1.xpose.msra.mxu0 0.0
    %6486 = vmatprep.subr.mxu0 0.0
    %6487 = vmatpush1.xpose.msra.mxu0 0.0
    %6488 = vmatprep.subr.mxu0 0.0
    %6489 = vmatpush1.xpose.msra.mxu0 0.0
    %6490 = vmatprep.subr.mxu0 0.0
    %6491 = vmatpush1.xpose.msra.mxu0 0.0
    %6492 = vmatprep.subr.mxu0 0.0
    %6493 = vmatpush1.xpose.msra.mxu0 0.0
    %6494 = vmatprep.subr.mxu0 0.0
    %6495 = vmatpush1.xpose.msra.mxu0 0.0
    %6496 = vmatprep.subr.mxu0 0.0
    %6497 = vmatpush1.xpose.msra.mxu0 0.0
    %6498 = vmatprep.subr.mxu0 0.0
    %6499 = vmatpush1.xpose.msra.mxu0 0.0
    %6500 = vmatprep.subr.mxu0 0.0
    %6501 = vmatpush1.xpose.msra.mxu0 0.0
    %6502 = vmatprep.subr.mxu0 0.0
    %6503 = vmatpush1.xpose.msra.mxu0 0.0
    %6504 = vmatprep.subr.mxu0 0.0
    %6505 = vmatpush1.xpose.msra.mxu0 0.0
    %6506 = vmatprep.subr.mxu0 %v236
    %6507 = vmatpush1.xpose.msra.mxu0 %v235
    %6508 = vmatprep.subr.mxu0 0.0
    %6509 = vmatpush2.xpose.msra.mxu0 0.0
    %6510 = vmatprep.subr.mxu0 0.0
    %6511 = vmatpush2.xpose.msra.mxu0 0.0
    %6512 = vmatprep.subr.mxu0 0.0
    %6513 = vmatpush2.xpose.msra.mxu0 0.0
    %6514 = vmatprep.subr.mxu0 0.0
    %6515 = vmatpush2.xpose.msra.mxu0 0.0
    %6516 = vmatprep.subr.mxu0 0.0
    %6517 = vmatpush2.xpose.msra.mxu0 0.0
    %6518 = vmatprep.subr.mxu0 0.0
    %6519 = vmatpush2.xpose.msra.mxu0 0.0
    %6520 = vmatprep.subr.mxu0 0.0
    %6521 = vmatpush2.xpose.msra.mxu0 0.0
    %6522 = vmatprep.subr.mxu0 0.0
    %6523 = vmatpush2.xpose.msra.mxu0 0.0
    %6524 = vmatprep.subr.mxu0 0.0
    %6525 = vmatpush2.xpose.msra.mxu0 0.0
    %6526 = vmatprep.subr.mxu0 0.0
    %6527 = vmatpush2.xpose.msra.mxu0 0.0
    %6528 = vmatprep.subr.mxu0 0.0
    %6529 = vmatpush2.xpose.msra.mxu0 0.0
    %6530 = vmatprep.subr.mxu0 0.0
    %6531 = vmatpush2.xpose.msra.mxu0 0.0
    %6532 = vmatprep.subr.mxu0 0.0
    %6533 = vmatpush2.xpose.msra.mxu0 0.0
    %6534 = vmatprep.subr.mxu0 0.0
    %6535 = vmatpush2.xpose.msra.mxu0 0.0
    %6536 = vmatprep.subr.mxu0 0.0
    %6537 = vmatpush2.xpose.msra.mxu0 0.0
    %6538 = vmatprep.subr.mxu0 0.0
    %6539 = vmatpush2.xpose.msra.mxu0 0.0
    %6540 = vmatprep.mubr.f32.mxu0 %v980
    %6541 = vmatmul.mubr.f32.gmra.mxu0 %v978
    %v6542 = vpop.f32.mrf.mxu0
    %v6543 = vadd.f32 %v6473, %v6542
    %v6544 = vpop.f32.mrf.mxu0
    %6545 = vdwg.mxu0
    %6546 = vmatprep.subr.mxu0 0.0
    %6547 = vmatpush1.xpose.msra.mxu0 0.0
    %6548 = vmatprep.subr.mxu0 0.0
    %6549 = vmatpush1.xpose.msra.mxu0 0.0
    %6550 = vmatprep.subr.mxu0 0.0
    %6551 = vmatpush1.xpose.msra.mxu0 0.0
    %6552 = vmatprep.subr.mxu0 0.0
    %6553 = vmatpush1.xpose.msra.mxu0 0.0
    %6554 = vmatprep.subr.mxu0 0.0
    %6555 = vmatpush1.xpose.msra.mxu0 0.0
    %6556 = vmatprep.subr.mxu0 0.0
    %6557 = vmatpush1.xpose.msra.mxu0 0.0
    %6558 = vmatprep.subr.mxu0 0.0
    %6559 = vmatpush1.xpose.msra.mxu0 0.0
    %6560 = vmatprep.subr.mxu0 0.0
    %6561 = vmatpush1.xpose.msra.mxu0 0.0
    %6562 = vmatprep.subr.mxu0 0.0
    %6563 = vmatpush1.xpose.msra.mxu0 0.0
    %6564 = vmatprep.subr.mxu0 0.0
    %6565 = vmatpush1.xpose.msra.mxu0 0.0
    %6566 = vmatprep.subr.mxu0 0.0
    %6567 = vmatpush1.xpose.msra.mxu0 0.0
    %6568 = vmatprep.subr.mxu0 0.0
    %6569 = vmatpush1.xpose.msra.mxu0 0.0
    %6570 = vmatprep.subr.mxu0 0.0
    %6571 = vmatpush1.xpose.msra.mxu0 0.0
    %6572 = vmatprep.subr.mxu0 0.0
    %6573 = vmatpush1.xpose.msra.mxu0 0.0
    %6574 = vmatprep.subr.mxu0 0.0
    %6575 = vmatpush1.xpose.msra.mxu0 0.0
    %6576 = vmatprep.subr.mxu0 %v238
    %6577 = vmatpush1.xpose.msra.mxu0 %v237
    %6578 = vmatprep.subr.mxu0 0.0
    %6579 = vmatpush2.xpose.msra.mxu0 0.0
    %6580 = vmatprep.subr.mxu0 0.0
    %6581 = vmatpush2.xpose.msra.mxu0 0.0
    %6582 = vmatprep.subr.mxu0 0.0
    %6583 = vmatpush2.xpose.msra.mxu0 0.0
    %6584 = vmatprep.subr.mxu0 0.0
    %6585 = vmatpush2.xpose.msra.mxu0 0.0
    %6586 = vmatprep.subr.mxu0 0.0
    %6587 = vmatpush2.xpose.msra.mxu0 0.0
    %6588 = vmatprep.subr.mxu0 0.0
    %6589 = vmatpush2.xpose.msra.mxu0 0.0
    %6590 = vmatprep.subr.mxu0 0.0
    %6591 = vmatpush2.xpose.msra.mxu0 0.0
    %6592 = vmatprep.subr.mxu0 0.0
    %6593 = vmatpush2.xpose.msra.mxu0 0.0
    %6594 = vmatprep.subr.mxu0 0.0
    %6595 = vmatpush2.xpose.msra.mxu0 0.0
    %6596 = vmatprep.subr.mxu0 0.0
    %6597 = vmatpush2.xpose.msra.mxu0 0.0
    %6598 = vmatprep.subr.mxu0 0.0
    %6599 = vmatpush2.xpose.msra.mxu0 0.0
    %6600 = vmatprep.subr.mxu0 0.0
    %6601 = vmatpush2.xpose.msra.mxu0 0.0
    %6602 = vmatprep.subr.mxu0 0.0
    %6603 = vmatpush2.xpose.msra.mxu0 0.0
    %6604 = vmatprep.subr.mxu0 0.0
    %6605 = vmatpush2.xpose.msra.mxu0 0.0
    %6606 = vmatprep.subr.mxu0 0.0
    %6607 = vmatpush2.xpose.msra.mxu0 0.0
    %6608 = vmatprep.subr.mxu0 0.0
    %6609 = vmatpush2.xpose.msra.mxu0 0.0
    %6610 = vmatprep.mubr.f32.mxu0 %v996
    %6611 = vmatmul.mubr.f32.gmra.mxu0 %v988
    %v6612 = vpop.f32.mrf.mxu0
    %v6613 = vadd.f32 %v6543, %v6612
    %v6614 = vpop.f32.mrf.mxu0
    %6615 = vdwg.mxu0
    %6616 = vmatprep.subr.mxu0 0.0
    %6617 = vmatpush1.xpose.msra.mxu0 0.0
    %6618 = vmatprep.subr.mxu0 0.0
    %6619 = vmatpush1.xpose.msra.mxu0 0.0
    %6620 = vmatprep.subr.mxu0 0.0
    %6621 = vmatpush1.xpose.msra.mxu0 0.0
    %6622 = vmatprep.subr.mxu0 0.0
    %6623 = vmatpush1.xpose.msra.mxu0 0.0
    %6624 = vmatprep.subr.mxu0 0.0
    %6625 = vmatpush1.xpose.msra.mxu0 0.0
    %6626 = vmatprep.subr.mxu0 0.0
    %6627 = vmatpush1.xpose.msra.mxu0 0.0
    %6628 = vmatprep.subr.mxu0 0.0
    %6629 = vmatpush1.xpose.msra.mxu0 0.0
    %6630 = vmatprep.subr.mxu0 0.0
    %6631 = vmatpush1.xpose.msra.mxu0 0.0
    %6632 = vmatprep.subr.mxu0 0.0
    %6633 = vmatpush1.xpose.msra.mxu0 0.0
    %6634 = vmatprep.subr.mxu0 0.0
    %6635 = vmatpush1.xpose.msra.mxu0 0.0
    %6636 = vmatprep.subr.mxu0 0.0
    %6637 = vmatpush1.xpose.msra.mxu0 0.0
    %6638 = vmatprep.subr.mxu0 0.0
    %6639 = vmatpush1.xpose.msra.mxu0 0.0
    %6640 = vmatprep.subr.mxu0 0.0
    %6641 = vmatpush1.xpose.msra.mxu0 0.0
    %6642 = vmatprep.subr.mxu0 0.0
    %6643 = vmatpush1.xpose.msra.mxu0 0.0
    %6644 = vmatprep.subr.mxu0 0.0
    %6645 = vmatpush1.xpose.msra.mxu0 0.0
    %6646 = vmatprep.subr.mxu0 %v240
    %6647 = vmatpush1.xpose.msra.mxu0 %v239
    %6648 = vmatprep.subr.mxu0 0.0
    %6649 = vmatpush2.xpose.msra.mxu0 0.0
    %6650 = vmatprep.subr.mxu0 0.0
    %6651 = vmatpush2.xpose.msra.mxu0 0.0
    %6652 = vmatprep.subr.mxu0 0.0
    %6653 = vmatpush2.xpose.msra.mxu0 0.0
    %6654 = vmatprep.subr.mxu0 0.0
    %6655 = vmatpush2.xpose.msra.mxu0 0.0
    %6656 = vmatprep.subr.mxu0 0.0
    %6657 = vmatpush2.xpose.msra.mxu0 0.0
    %6658 = vmatprep.subr.mxu0 0.0
    %6659 = vmatpush2.xpose.msra.mxu0 0.0
    %6660 = vmatprep.subr.mxu0 0.0
    %6661 = vmatpush2.xpose.msra.mxu0 0.0
    %6662 = vmatprep.subr.mxu0 0.0
    %6663 = vmatpush2.xpose.msra.mxu0 0.0
    %6664 = vmatprep.subr.mxu0 0.0
    %6665 = vmatpush2.xpose.msra.mxu0 0.0
    %6666 = vmatprep.subr.mxu0 0.0
    %6667 = vmatpush2.xpose.msra.mxu0 0.0
    %6668 = vmatprep.subr.mxu0 0.0
    %6669 = vmatpush2.xpose.msra.mxu0 0.0
    %6670 = vmatprep.subr.mxu0 0.0
    %6671 = vmatpush2.xpose.msra.mxu0 0.0
    %6672 = vmatprep.subr.mxu0 0.0
    %6673 = vmatpush2.xpose.msra.mxu0 0.0
    %6674 = vmatprep.subr.mxu0 0.0
    %6675 = vmatpush2.xpose.msra.mxu0 0.0
    %6676 = vmatprep.subr.mxu0 0.0
    %6677 = vmatpush2.xpose.msra.mxu0 0.0
    %6678 = vmatprep.subr.mxu0 0.0
    %6679 = vmatpush2.xpose.msra.mxu0 0.0
    %6680 = vmatprep.mubr.f32.mxu0 %v997
    %6681 = vmatmul.mubr.f32.gmra.mxu0 %v995
    %v6682 = vpop.f32.mrf.mxu0
    %v6683 = vadd.f32 %v6613, %v6682
    %v6684 = vpop.f32.mrf.mxu0
    %6685 = vdwg.mxu0
    %6686 = vmatprep.subr.mxu0 0.0
    %6687 = vmatpush1.xpose.msra.mxu0 0.0
    %6688 = vmatprep.subr.mxu0 0.0
    %6689 = vmatpush1.xpose.msra.mxu0 0.0
    %6690 = vmatprep.subr.mxu0 0.0
    %6691 = vmatpush1.xpose.msra.mxu0 0.0
    %6692 = vmatprep.subr.mxu0 0.0
    %6693 = vmatpush1.xpose.msra.mxu0 0.0
    %6694 = vmatprep.subr.mxu0 0.0
    %6695 = vmatpush1.xpose.msra.mxu0 0.0
    %6696 = vmatprep.subr.mxu0 0.0
    %6697 = vmatpush1.xpose.msra.mxu0 0.0
    %6698 = vmatprep.subr.mxu0 0.0
    %6699 = vmatpush1.xpose.msra.mxu0 0.0
    %6700 = vmatprep.subr.mxu0 0.0
    %6701 = vmatpush1.xpose.msra.mxu0 0.0
    %6702 = vmatprep.subr.mxu0 0.0
    %6703 = vmatpush1.xpose.msra.mxu0 0.0
    %6704 = vmatprep.subr.mxu0 0.0
    %6705 = vmatpush1.xpose.msra.mxu0 0.0
    %6706 = vmatprep.subr.mxu0 0.0
    %6707 = vmatpush1.xpose.msra.mxu0 0.0
    %6708 = vmatprep.subr.mxu0 0.0
    %6709 = vmatpush1.xpose.msra.mxu0 0.0
    %6710 = vmatprep.subr.mxu0 0.0
    %6711 = vmatpush1.xpose.msra.mxu0 0.0
    %6712 = vmatprep.subr.mxu0 0.0
    %6713 = vmatpush1.xpose.msra.mxu0 0.0
    %6714 = vmatprep.subr.mxu0 0.0
    %6715 = vmatpush1.xpose.msra.mxu0 0.0
    %6716 = vmatprep.subr.mxu0 %v242
    %6717 = vmatpush1.xpose.msra.mxu0 %v241
    %6718 = vmatprep.subr.mxu0 0.0
    %6719 = vmatpush2.xpose.msra.mxu0 0.0
    %6720 = vmatprep.subr.mxu0 0.0
    %6721 = vmatpush2.xpose.msra.mxu0 0.0
    %6722 = vmatprep.subr.mxu0 0.0
    %6723 = vmatpush2.xpose.msra.mxu0 0.0
    %6724 = vmatprep.subr.mxu0 0.0
    %6725 = vmatpush2.xpose.msra.mxu0 0.0
    %6726 = vmatprep.subr.mxu0 0.0
    %6727 = vmatpush2.xpose.msra.mxu0 0.0
    %6728 = vmatprep.subr.mxu0 0.0
    %6729 = vmatpush2.xpose.msra.mxu0 0.0
    %6730 = vmatprep.subr.mxu0 0.0
    %6731 = vmatpush2.xpose.msra.mxu0 0.0
    %6732 = vmatprep.subr.mxu0 0.0
    %6733 = vmatpush2.xpose.msra.mxu0 0.0
    %6734 = vmatprep.subr.mxu0 0.0
    %6735 = vmatpush2.xpose.msra.mxu0 0.0
    %6736 = vmatprep.subr.mxu0 0.0
    %6737 = vmatpush2.xpose.msra.mxu0 0.0
    %6738 = vmatprep.subr.mxu0 0.0
    %6739 = vmatpush2.xpose.msra.mxu0 0.0
    %6740 = vmatprep.subr.mxu0 0.0
    %6741 = vmatpush2.xpose.msra.mxu0 0.0
    %6742 = vmatprep.subr.mxu0 0.0
    %6743 = vmatpush2.xpose.msra.mxu0 0.0
    %6744 = vmatprep.subr.mxu0 0.0
    %6745 = vmatpush2.xpose.msra.mxu0 0.0
    %6746 = vmatprep.subr.mxu0 0.0
    %6747 = vmatpush2.xpose.msra.mxu0 0.0
    %6748 = vmatprep.subr.mxu0 0.0
    %6749 = vmatpush2.xpose.msra.mxu0 0.0
    %6750 = vmatprep.mubr.f32.mxu0 %v1013
    %6751 = vmatmul.mubr.f32.gmra.mxu0 %v1005
    %v6752 = vpop.f32.mrf.mxu0
    %v6753 = vadd.f32 %v6683, %v6752
    %v6754 = vpop.f32.mrf.mxu0
    %6755 = vdwg.mxu0
    %6756 = vmatprep.subr.mxu0 0.0
    %6757 = vmatpush1.xpose.msra.mxu0 0.0
    %6758 = vmatprep.subr.mxu0 0.0
    %6759 = vmatpush1.xpose.msra.mxu0 0.0
    %6760 = vmatprep.subr.mxu0 0.0
    %6761 = vmatpush1.xpose.msra.mxu0 0.0
    %6762 = vmatprep.subr.mxu0 0.0
    %6763 = vmatpush1.xpose.msra.mxu0 0.0
    %6764 = vmatprep.subr.mxu0 0.0
    %6765 = vmatpush1.xpose.msra.mxu0 0.0
    %6766 = vmatprep.subr.mxu0 0.0
    %6767 = vmatpush1.xpose.msra.mxu0 0.0
    %6768 = vmatprep.subr.mxu0 0.0
    %6769 = vmatpush1.xpose.msra.mxu0 0.0
    %6770 = vmatprep.subr.mxu0 0.0
    %6771 = vmatpush1.xpose.msra.mxu0 0.0
    %6772 = vmatprep.subr.mxu0 0.0
    %6773 = vmatpush1.xpose.msra.mxu0 0.0
    %6774 = vmatprep.subr.mxu0 0.0
    %6775 = vmatpush1.xpose.msra.mxu0 0.0
    %6776 = vmatprep.subr.mxu0 0.0
    %6777 = vmatpush1.xpose.msra.mxu0 0.0
    %6778 = vmatprep.subr.mxu0 0.0
    %6779 = vmatpush1.xpose.msra.mxu0 0.0
    %6780 = vmatprep.subr.mxu0 0.0
    %6781 = vmatpush1.xpose.msra.mxu0 0.0
    %6782 = vmatprep.subr.mxu0 0.0
    %6783 = vmatpush1.xpose.msra.mxu0 0.0
    %6784 = vmatprep.subr.mxu0 0.0
    %6785 = vmatpush1.xpose.msra.mxu0 0.0
    %6786 = vmatprep.subr.mxu0 %v244
    %6787 = vmatpush1.xpose.msra.mxu0 %v243
    %6788 = vmatprep.subr.mxu0 0.0
    %6789 = vmatpush2.xpose.msra.mxu0 0.0
    %6790 = vmatprep.subr.mxu0 0.0
    %6791 = vmatpush2.xpose.msra.mxu0 0.0
    %6792 = vmatprep.subr.mxu0 0.0
    %6793 = vmatpush2.xpose.msra.mxu0 0.0
    %6794 = vmatprep.subr.mxu0 0.0
    %6795 = vmatpush2.xpose.msra.mxu0 0.0
    %6796 = vmatprep.subr.mxu0 0.0
    %6797 = vmatpush2.xpose.msra.mxu0 0.0
    %6798 = vmatprep.subr.mxu0 0.0
    %6799 = vmatpush2.xpose.msra.mxu0 0.0
    %6800 = vmatprep.subr.mxu0 0.0
    %6801 = vmatpush2.xpose.msra.mxu0 0.0
    %6802 = vmatprep.subr.mxu0 0.0
    %6803 = vmatpush2.xpose.msra.mxu0 0.0
    %6804 = vmatprep.subr.mxu0 0.0
    %6805 = vmatpush2.xpose.msra.mxu0 0.0
    %6806 = vmatprep.subr.mxu0 0.0
    %6807 = vmatpush2.xpose.msra.mxu0 0.0
    %6808 = vmatprep.subr.mxu0 0.0
    %6809 = vmatpush2.xpose.msra.mxu0 0.0
    %6810 = vmatprep.subr.mxu0 0.0
    %6811 = vmatpush2.xpose.msra.mxu0 0.0
    %6812 = vmatprep.subr.mxu0 0.0
    %6813 = vmatpush2.xpose.msra.mxu0 0.0
    %6814 = vmatprep.subr.mxu0 0.0
    %6815 = vmatpush2.xpose.msra.mxu0 0.0
    %6816 = vmatprep.subr.mxu0 0.0
    %6817 = vmatpush2.xpose.msra.mxu0 0.0
    %6818 = vmatprep.subr.mxu0 0.0
    %6819 = vmatpush2.xpose.msra.mxu0 0.0
    %6820 = vmatprep.mubr.f32.mxu0 %v1014
    %6821 = vmatmul.mubr.f32.gmra.mxu0 %v1012
    %v6822 = vpop.f32.mrf.mxu0
    %v6823 = vadd.f32 %v6753, %v6822
    %v6824 = vpop.f32.mrf.mxu0
    %6825 = vdwg.mxu0
    %6826 = vmatprep.subr.mxu0 0.0
    %6827 = vmatpush1.xpose.msra.mxu0 0.0
    %6828 = vmatprep.subr.mxu0 0.0
    %6829 = vmatpush1.xpose.msra.mxu0 0.0
    %6830 = vmatprep.subr.mxu0 0.0
    %6831 = vmatpush1.xpose.msra.mxu0 0.0
    %6832 = vmatprep.subr.mxu0 0.0
    %6833 = vmatpush1.xpose.msra.mxu0 0.0
    %6834 = vmatprep.subr.mxu0 0.0
    %6835 = vmatpush1.xpose.msra.mxu0 0.0
    %6836 = vmatprep.subr.mxu0 0.0
    %6837 = vmatpush1.xpose.msra.mxu0 0.0
    %6838 = vmatprep.subr.mxu0 0.0
    %6839 = vmatpush1.xpose.msra.mxu0 0.0
    %6840 = vmatprep.subr.mxu0 0.0
    %6841 = vmatpush1.xpose.msra.mxu0 0.0
    %6842 = vmatprep.subr.mxu0 0.0
    %6843 = vmatpush1.xpose.msra.mxu0 0.0
    %6844 = vmatprep.subr.mxu0 0.0
    %6845 = vmatpush1.xpose.msra.mxu0 0.0
    %6846 = vmatprep.subr.mxu0 0.0
    %6847 = vmatpush1.xpose.msra.mxu0 0.0
    %6848 = vmatprep.subr.mxu0 0.0
    %6849 = vmatpush1.xpose.msra.mxu0 0.0
    %6850 = vmatprep.subr.mxu0 0.0
    %6851 = vmatpush1.xpose.msra.mxu0 0.0
    %6852 = vmatprep.subr.mxu0 0.0
    %6853 = vmatpush1.xpose.msra.mxu0 0.0
    %6854 = vmatprep.subr.mxu0 0.0
    %6855 = vmatpush1.xpose.msra.mxu0 0.0
    %6856 = vmatprep.subr.mxu0 %v246
    %6857 = vmatpush1.xpose.msra.mxu0 %v245
    %6858 = vmatprep.subr.mxu0 0.0
    %6859 = vmatpush2.xpose.msra.mxu0 0.0
    %6860 = vmatprep.subr.mxu0 0.0
    %6861 = vmatpush2.xpose.msra.mxu0 0.0
    %6862 = vmatprep.subr.mxu0 0.0
    %6863 = vmatpush2.xpose.msra.mxu0 0.0
    %6864 = vmatprep.subr.mxu0 0.0
    %6865 = vmatpush2.xpose.msra.mxu0 0.0
    %6866 = vmatprep.subr.mxu0 0.0
    %6867 = vmatpush2.xpose.msra.mxu0 0.0
    %6868 = vmatprep.subr.mxu0 0.0
    %6869 = vmatpush2.xpose.msra.mxu0 0.0
    %6870 = vmatprep.subr.mxu0 0.0
    %6871 = vmatpush2.xpose.msra.mxu0 0.0
    %6872 = vmatprep.subr.mxu0 0.0
    %6873 = vmatpush2.xpose.msra.mxu0 0.0
    %6874 = vmatprep.subr.mxu0 0.0
    %6875 = vmatpush2.xpose.msra.mxu0 0.0
    %6876 = vmatprep.subr.mxu0 0.0
    %6877 = vmatpush2.xpose.msra.mxu0 0.0
    %6878 = vmatprep.subr.mxu0 0.0
    %6879 = vmatpush2.xpose.msra.mxu0 0.0
    %6880 = vmatprep.subr.mxu0 0.0
    %6881 = vmatpush2.xpose.msra.mxu0 0.0
    %6882 = vmatprep.subr.mxu0 0.0
    %6883 = vmatpush2.xpose.msra.mxu0 0.0
    %6884 = vmatprep.subr.mxu0 0.0
    %6885 = vmatpush2.xpose.msra.mxu0 0.0
    %6886 = vmatprep.subr.mxu0 0.0
    %6887 = vmatpush2.xpose.msra.mxu0 0.0
    %6888 = vmatprep.subr.mxu0 0.0
    %6889 = vmatpush2.xpose.msra.mxu0 0.0
    %6890 = vmatprep.mubr.f32.mxu0 %v1030
    %6891 = vmatmul.mubr.f32.gmra.mxu0 %v1022
    %v6892 = vpop.f32.mrf.mxu0
    %v6893 = vadd.f32 %v6823, %v6892
    %v6894 = vpop.f32.mrf.mxu0
    %6895 = vdwg.mxu0
    %6896 = vmatprep.subr.mxu0 0.0
    %6897 = vmatpush1.xpose.msra.mxu0 0.0
    %6898 = vmatprep.subr.mxu0 0.0
    %6899 = vmatpush1.xpose.msra.mxu0 0.0
    %6900 = vmatprep.subr.mxu0 0.0
    %6901 = vmatpush1.xpose.msra.mxu0 0.0
    %6902 = vmatprep.subr.mxu0 0.0
    %6903 = vmatpush1.xpose.msra.mxu0 0.0
    %6904 = vmatprep.subr.mxu0 0.0
    %6905 = vmatpush1.xpose.msra.mxu0 0.0
    %6906 = vmatprep.subr.mxu0 0.0
    %6907 = vmatpush1.xpose.msra.mxu0 0.0
    %6908 = vmatprep.subr.mxu0 0.0
    %6909 = vmatpush1.xpose.msra.mxu0 0.0
    %6910 = vmatprep.subr.mxu0 0.0
    %6911 = vmatpush1.xpose.msra.mxu0 0.0
    %6912 = vmatprep.subr.mxu0 0.0
    %6913 = vmatpush1.xpose.msra.mxu0 0.0
    %6914 = vmatprep.subr.mxu0 0.0
    %6915 = vmatpush1.xpose.msra.mxu0 0.0
    %6916 = vmatprep.subr.mxu0 0.0
    %6917 = vmatpush1.xpose.msra.mxu0 0.0
    %6918 = vmatprep.subr.mxu0 0.0
    %6919 = vmatpush1.xpose.msra.mxu0 0.0
    %6920 = vmatprep.subr.mxu0 0.0
    %6921 = vmatpush1.xpose.msra.mxu0 0.0
    %6922 = vmatprep.subr.mxu0 0.0
    %6923 = vmatpush1.xpose.msra.mxu0 0.0
    %6924 = vmatprep.subr.mxu0 0.0
    %6925 = vmatpush1.xpose.msra.mxu0 0.0
    %6926 = vmatprep.subr.mxu0 %v248
    %6927 = vmatpush1.xpose.msra.mxu0 %v247
    %6928 = vmatprep.subr.mxu0 0.0
    %6929 = vmatpush2.xpose.msra.mxu0 0.0
    %6930 = vmatprep.subr.mxu0 0.0
    %6931 = vmatpush2.xpose.msra.mxu0 0.0
    %6932 = vmatprep.subr.mxu0 0.0
    %6933 = vmatpush2.xpose.msra.mxu0 0.0
    %6934 = vmatprep.subr.mxu0 0.0
    %6935 = vmatpush2.xpose.msra.mxu0 0.0
    %6936 = vmatprep.subr.mxu0 0.0
    %6937 = vmatpush2.xpose.msra.mxu0 0.0
    %6938 = vmatprep.subr.mxu0 0.0
    %6939 = vmatpush2.xpose.msra.mxu0 0.0
    %6940 = vmatprep.subr.mxu0 0.0
    %6941 = vmatpush2.xpose.msra.mxu0 0.0
    %6942 = vmatprep.subr.mxu0 0.0
    %6943 = vmatpush2.xpose.msra.mxu0 0.0
    %6944 = vmatprep.subr.mxu0 0.0
    %6945 = vmatpush2.xpose.msra.mxu0 0.0
    %6946 = vmatprep.subr.mxu0 0.0
    %6947 = vmatpush2.xpose.msra.mxu0 0.0
    %6948 = vmatprep.subr.mxu0 0.0
    %6949 = vmatpush2.xpose.msra.mxu0 0.0
    %6950 = vmatprep.subr.mxu0 0.0
    %6951 = vmatpush2.xpose.msra.mxu0 0.0
    %6952 = vmatprep.subr.mxu0 0.0
    %6953 = vmatpush2.xpose.msra.mxu0 0.0
    %6954 = vmatprep.subr.mxu0 0.0
    %6955 = vmatpush2.xpose.msra.mxu0 0.0
    %6956 = vmatprep.subr.mxu0 0.0
    %6957 = vmatpush2.xpose.msra.mxu0 0.0
    %6958 = vmatprep.subr.mxu0 0.0
    %6959 = vmatpush2.xpose.msra.mxu0 0.0
    %6960 = vmatprep.mubr.f32.mxu0 %v1031
    %6961 = vmatmul.mubr.f32.gmra.mxu0 %v1029
    %v6962 = vpop.f32.mrf.mxu0
    %v6963 = vadd.f32 %v6893, %v6962
    %v6964 = vpop.f32.mrf.mxu0
    %6965 = vdwg.mxu0
    %6966 = vmatprep.subr.mxu0 0.0
    %6967 = vmatpush1.xpose.msra.mxu0 0.0
    %6968 = vmatprep.subr.mxu0 0.0
    %6969 = vmatpush1.xpose.msra.mxu0 0.0
    %6970 = vmatprep.subr.mxu0 0.0
    %6971 = vmatpush1.xpose.msra.mxu0 0.0
    %6972 = vmatprep.subr.mxu0 0.0
    %6973 = vmatpush1.xpose.msra.mxu0 0.0
    %6974 = vmatprep.subr.mxu0 0.0
    %6975 = vmatpush1.xpose.msra.mxu0 0.0
    %6976 = vmatprep.subr.mxu0 0.0
    %6977 = vmatpush1.xpose.msra.mxu0 0.0
    %6978 = vmatprep.subr.mxu0 0.0
    %6979 = vmatpush1.xpose.msra.mxu0 0.0
    %6980 = vmatprep.subr.mxu0 0.0
    %6981 = vmatpush1.xpose.msra.mxu0 0.0
    %6982 = vmatprep.subr.mxu0 0.0
    %6983 = vmatpush1.xpose.msra.mxu0 0.0
    %6984 = vmatprep.subr.mxu0 0.0
    %6985 = vmatpush1.xpose.msra.mxu0 0.0
    %6986 = vmatprep.subr.mxu0 0.0
    %6987 = vmatpush1.xpose.msra.mxu0 0.0
    %6988 = vmatprep.subr.mxu0 0.0
    %6989 = vmatpush1.xpose.msra.mxu0 0.0
    %6990 = vmatprep.subr.mxu0 0.0
    %6991 = vmatpush1.xpose.msra.mxu0 0.0
    %6992 = vmatprep.subr.mxu0 0.0
    %6993 = vmatpush1.xpose.msra.mxu0 0.0
    %6994 = vmatprep.subr.mxu0 0.0
    %6995 = vmatpush1.xpose.msra.mxu0 0.0
    %6996 = vmatprep.subr.mxu0 %v250
    %6997 = vmatpush1.xpose.msra.mxu0 %v249
    %6998 = vmatprep.subr.mxu0 0.0
    %6999 = vmatpush2.xpose.msra.mxu0 0.0
    %7000 = vmatprep.subr.mxu0 0.0
    %7001 = vmatpush2.xpose.msra.mxu0 0.0
    %7002 = vmatprep.subr.mxu0 0.0
    %7003 = vmatpush2.xpose.msra.mxu0 0.0
    %7004 = vmatprep.subr.mxu0 0.0
    %7005 = vmatpush2.xpose.msra.mxu0 0.0
    %7006 = vmatprep.subr.mxu0 0.0
    %7007 = vmatpush2.xpose.msra.mxu0 0.0
    %7008 = vmatprep.subr.mxu0 0.0
    %7009 = vmatpush2.xpose.msra.mxu0 0.0
    %7010 = vmatprep.subr.mxu0 0.0
    %7011 = vmatpush2.xpose.msra.mxu0 0.0
    %7012 = vmatprep.subr.mxu0 0.0
    %7013 = vmatpush2.xpose.msra.mxu0 0.0
    %7014 = vmatprep.subr.mxu0 0.0
    %7015 = vmatpush2.xpose.msra.mxu0 0.0
    %7016 = vmatprep.subr.mxu0 0.0
    %7017 = vmatpush2.xpose.msra.mxu0 0.0
    %7018 = vmatprep.subr.mxu0 0.0
    %7019 = vmatpush2.xpose.msra.mxu0 0.0
    %7020 = vmatprep.subr.mxu0 0.0
    %7021 = vmatpush2.xpose.msra.mxu0 0.0
    %7022 = vmatprep.subr.mxu0 0.0
    %7023 = vmatpush2.xpose.msra.mxu0 0.0
    %7024 = vmatprep.subr.mxu0 0.0
    %7025 = vmatpush2.xpose.msra.mxu0 0.0
    %7026 = vmatprep.subr.mxu0 0.0
    %7027 = vmatpush2.xpose.msra.mxu0 0.0
    %7028 = vmatprep.subr.mxu0 0.0
    %7029 = vmatpush2.xpose.msra.mxu0 0.0
    %7030 = vmatprep.mubr.f32.mxu0 %v1047
    %7031 = vmatmul.mubr.f32.gmra.mxu0 %v1039
    %v7032 = vpop.f32.mrf.mxu0
    %v7033 = vadd.f32 %v6963, %v7032
    %v7034 = vpop.f32.mrf.mxu0
    %7035 = vdwg.mxu0
    %7036 = vmatprep.subr.mxu0 0.0
    %7037 = vmatpush1.xpose.msra.mxu0 0.0
    %7038 = vmatprep.subr.mxu0 0.0
    %7039 = vmatpush1.xpose.msra.mxu0 0.0
    %7040 = vmatprep.subr.mxu0 0.0
    %7041 = vmatpush1.xpose.msra.mxu0 0.0
    %7042 = vmatprep.subr.mxu0 0.0
    %7043 = vmatpush1.xpose.msra.mxu0 0.0
    %7044 = vmatprep.subr.mxu0 0.0
    %7045 = vmatpush1.xpose.msra.mxu0 0.0
    %7046 = vmatprep.subr.mxu0 0.0
    %7047 = vmatpush1.xpose.msra.mxu0 0.0
    %7048 = vmatprep.subr.mxu0 0.0
    %7049 = vmatpush1.xpose.msra.mxu0 0.0
    %7050 = vmatprep.subr.mxu0 0.0
    %7051 = vmatpush1.xpose.msra.mxu0 0.0
    %7052 = vmatprep.subr.mxu0 0.0
    %7053 = vmatpush1.xpose.msra.mxu0 0.0
    %7054 = vmatprep.subr.mxu0 0.0
    %7055 = vmatpush1.xpose.msra.mxu0 0.0
    %7056 = vmatprep.subr.mxu0 0.0
    %7057 = vmatpush1.xpose.msra.mxu0 0.0
    %7058 = vmatprep.subr.mxu0 0.0
    %7059 = vmatpush1.xpose.msra.mxu0 0.0
    %7060 = vmatprep.subr.mxu0 0.0
    %7061 = vmatpush1.xpose.msra.mxu0 0.0
    %7062 = vmatprep.subr.mxu0 0.0
    %7063 = vmatpush1.xpose.msra.mxu0 0.0
    %7064 = vmatprep.subr.mxu0 0.0
    %7065 = vmatpush1.xpose.msra.mxu0 0.0
    %7066 = vmatprep.subr.mxu0 %v252
    %7067 = vmatpush1.xpose.msra.mxu0 %v251
    %7068 = vmatprep.subr.mxu0 0.0
    %7069 = vmatpush2.xpose.msra.mxu0 0.0
    %7070 = vmatprep.subr.mxu0 0.0
    %7071 = vmatpush2.xpose.msra.mxu0 0.0
    %7072 = vmatprep.subr.mxu0 0.0
    %7073 = vmatpush2.xpose.msra.mxu0 0.0
    %7074 = vmatprep.subr.mxu0 0.0
    %7075 = vmatpush2.xpose.msra.mxu0 0.0
    %7076 = vmatprep.subr.mxu0 0.0
    %7077 = vmatpush2.xpose.msra.mxu0 0.0
    %7078 = vmatprep.subr.mxu0 0.0
    %7079 = vmatpush2.xpose.msra.mxu0 0.0
    %7080 = vmatprep.subr.mxu0 0.0
    %7081 = vmatpush2.xpose.msra.mxu0 0.0
    %7082 = vmatprep.subr.mxu0 0.0
    %7083 = vmatpush2.xpose.msra.mxu0 0.0
    %7084 = vmatprep.subr.mxu0 0.0
    %7085 = vmatpush2.xpose.msra.mxu0 0.0
    %7086 = vmatprep.subr.mxu0 0.0
    %7087 = vmatpush2.xpose.msra.mxu0 0.0
    %7088 = vmatprep.subr.mxu0 0.0
    %7089 = vmatpush2.xpose.msra.mxu0 0.0
    %7090 = vmatprep.subr.mxu0 0.0
    %7091 = vmatpush2.xpose.msra.mxu0 0.0
    %7092 = vmatprep.subr.mxu0 0.0
    %7093 = vmatpush2.xpose.msra.mxu0 0.0
    %7094 = vmatprep.subr.mxu0 0.0
    %7095 = vmatpush2.xpose.msra.mxu0 0.0
    %7096 = vmatprep.subr.mxu0 0.0
    %7097 = vmatpush2.xpose.msra.mxu0 0.0
    %7098 = vmatprep.subr.mxu0 0.0
    %7099 = vmatpush2.xpose.msra.mxu0 0.0
    %7100 = vmatprep.mubr.f32.mxu0 %v1048
    %7101 = vmatmul.mubr.f32.gmra.mxu0 %v1046
    %v7102 = vpop.f32.mrf.mxu0
    %v7103 = vadd.f32 %v7033, %v7102
    %v7104 = vpop.f32.mrf.mxu0
    %7105 = vdwg.mxu0
    %7106 = vmatprep.subr.mxu0 0.0
    %7107 = vmatpush1.xpose.msra.mxu0 0.0
    %7108 = vmatprep.subr.mxu0 0.0
    %7109 = vmatpush1.xpose.msra.mxu0 0.0
    %7110 = vmatprep.subr.mxu0 0.0
    %7111 = vmatpush1.xpose.msra.mxu0 0.0
    %7112 = vmatprep.subr.mxu0 0.0
    %7113 = vmatpush1.xpose.msra.mxu0 0.0
    %7114 = vmatprep.subr.mxu0 0.0
    %7115 = vmatpush1.xpose.msra.mxu0 0.0
    %7116 = vmatprep.subr.mxu0 0.0
    %7117 = vmatpush1.xpose.msra.mxu0 0.0
    %7118 = vmatprep.subr.mxu0 0.0
    %7119 = vmatpush1.xpose.msra.mxu0 0.0
    %7120 = vmatprep.subr.mxu0 0.0
    %7121 = vmatpush1.xpose.msra.mxu0 0.0
    %7122 = vmatprep.subr.mxu0 0.0
    %7123 = vmatpush1.xpose.msra.mxu0 0.0
    %7124 = vmatprep.subr.mxu0 0.0
    %7125 = vmatpush1.xpose.msra.mxu0 0.0
    %7126 = vmatprep.subr.mxu0 0.0
    %7127 = vmatpush1.xpose.msra.mxu0 0.0
    %7128 = vmatprep.subr.mxu0 0.0
    %7129 = vmatpush1.xpose.msra.mxu0 0.0
    %7130 = vmatprep.subr.mxu0 0.0
    %7131 = vmatpush1.xpose.msra.mxu0 0.0
    %7132 = vmatprep.subr.mxu0 0.0
    %7133 = vmatpush1.xpose.msra.mxu0 0.0
    %7134 = vmatprep.subr.mxu0 0.0
    %7135 = vmatpush1.xpose.msra.mxu0 0.0
    %7136 = vmatprep.subr.mxu0 %v254
    %7137 = vmatpush1.xpose.msra.mxu0 %v253
    %7138 = vmatprep.subr.mxu0 0.0
    %7139 = vmatpush2.xpose.msra.mxu0 0.0
    %7140 = vmatprep.subr.mxu0 0.0
    %7141 = vmatpush2.xpose.msra.mxu0 0.0
    %7142 = vmatprep.subr.mxu0 0.0
    %7143 = vmatpush2.xpose.msra.mxu0 0.0
    %7144 = vmatprep.subr.mxu0 0.0
    %7145 = vmatpush2.xpose.msra.mxu0 0.0
    %7146 = vmatprep.subr.mxu0 0.0
    %7147 = vmatpush2.xpose.msra.mxu0 0.0
    %7148 = vmatprep.subr.mxu0 0.0
    %7149 = vmatpush2.xpose.msra.mxu0 0.0
    %7150 = vmatprep.subr.mxu0 0.0
    %7151 = vmatpush2.xpose.msra.mxu0 0.0
    %7152 = vmatprep.subr.mxu0 0.0
    %7153 = vmatpush2.xpose.msra.mxu0 0.0
    %7154 = vmatprep.subr.mxu0 0.0
    %7155 = vmatpush2.xpose.msra.mxu0 0.0
    %7156 = vmatprep.subr.mxu0 0.0
    %7157 = vmatpush2.xpose.msra.mxu0 0.0
    %7158 = vmatprep.subr.mxu0 0.0
    %7159 = vmatpush2.xpose.msra.mxu0 0.0
    %7160 = vmatprep.subr.mxu0 0.0
    %7161 = vmatpush2.xpose.msra.mxu0 0.0
    %7162 = vmatprep.subr.mxu0 0.0
    %7163 = vmatpush2.xpose.msra.mxu0 0.0
    %7164 = vmatprep.subr.mxu0 0.0
    %7165 = vmatpush2.xpose.msra.mxu0 0.0
    %7166 = vmatprep.subr.mxu0 0.0
    %7167 = vmatpush2.xpose.msra.mxu0 0.0
    %7168 = vmatprep.subr.mxu0 0.0
    %7169 = vmatpush2.xpose.msra.mxu0 0.0
    %7170 = vmatprep.mubr.f32.mxu0 %v1064
    %7171 = vmatmul.mubr.f32.gmra.mxu0 %v1056
    %v7172 = vpop.f32.mrf.mxu0
    %v7173 = vadd.f32 %v7103, %v7172
    %v7174 = vpop.f32.mrf.mxu0
    %7175 = vdwg.mxu0
    %7176 = vmatprep.subr.mxu0 0.0
    %7177 = vmatpush1.xpose.msra.mxu0 0.0
    %7178 = vmatprep.subr.mxu0 0.0
    %7179 = vmatpush1.xpose.msra.mxu0 0.0
    %7180 = vmatprep.subr.mxu0 0.0
    %7181 = vmatpush1.xpose.msra.mxu0 0.0
    %7182 = vmatprep.subr.mxu0 0.0
    %7183 = vmatpush1.xpose.msra.mxu0 0.0
    %7184 = vmatprep.subr.mxu0 0.0
    %7185 = vmatpush1.xpose.msra.mxu0 0.0
    %7186 = vmatprep.subr.mxu0 0.0
    %7187 = vmatpush1.xpose.msra.mxu0 0.0
    %7188 = vmatprep.subr.mxu0 0.0
    %7189 = vmatpush1.xpose.msra.mxu0 0.0
    %7190 = vmatprep.subr.mxu0 0.0
    %7191 = vmatpush1.xpose.msra.mxu0 0.0
    %7192 = vmatprep.subr.mxu0 0.0
    %7193 = vmatpush1.xpose.msra.mxu0 0.0
    %7194 = vmatprep.subr.mxu0 0.0
    %7195 = vmatpush1.xpose.msra.mxu0 0.0
    %7196 = vmatprep.subr.mxu0 0.0
    %7197 = vmatpush1.xpose.msra.mxu0 0.0
    %7198 = vmatprep.subr.mxu0 0.0
    %7199 = vmatpush1.xpose.msra.mxu0 0.0
    %7200 = vmatprep.subr.mxu0 0.0
    %7201 = vmatpush1.xpose.msra.mxu0 0.0
    %7202 = vmatprep.subr.mxu0 0.0
    %7203 = vmatpush1.xpose.msra.mxu0 0.0
    %7204 = vmatprep.subr.mxu0 0.0
    %7205 = vmatpush1.xpose.msra.mxu0 0.0
    %7206 = vmatprep.subr.mxu0 %v256
    %7207 = vmatpush1.xpose.msra.mxu0 %v255
    %7208 = vmatprep.subr.mxu0 0.0
    %7209 = vmatpush2.xpose.msra.mxu0 0.0
    %7210 = vmatprep.subr.mxu0 0.0
    %7211 = vmatpush2.xpose.msra.mxu0 0.0
    %7212 = vmatprep.subr.mxu0 0.0
    %7213 = vmatpush2.xpose.msra.mxu0 0.0
    %7214 = vmatprep.subr.mxu0 0.0
    %7215 = vmatpush2.xpose.msra.mxu0 0.0
    %7216 = vmatprep.subr.mxu0 0.0
    %7217 = vmatpush2.xpose.msra.mxu0 0.0
    %7218 = vmatprep.subr.mxu0 0.0
    %7219 = vmatpush2.xpose.msra.mxu0 0.0
    %7220 = vmatprep.subr.mxu0 0.0
    %7221 = vmatpush2.xpose.msra.mxu0 0.0
    %7222 = vmatprep.subr.mxu0 0.0
    %7223 = vmatpush2.xpose.msra.mxu0 0.0
    %7224 = vmatprep.subr.mxu0 0.0
    %7225 = vmatpush2.xpose.msra.mxu0 0.0
    %7226 = vmatprep.subr.mxu0 0.0
    %7227 = vmatpush2.xpose.msra.mxu0 0.0
    %7228 = vmatprep.subr.mxu0 0.0
    %7229 = vmatpush2.xpose.msra.mxu0 0.0
    %7230 = vmatprep.subr.mxu0 0.0
    %7231 = vmatpush2.xpose.msra.mxu0 0.0
    %7232 = vmatprep.subr.mxu0 0.0
    %7233 = vmatpush2.xpose.msra.mxu0 0.0
    %7234 = vmatprep.subr.mxu0 0.0
    %7235 = vmatpush2.xpose.msra.mxu0 0.0
    %7236 = vmatprep.subr.mxu0 0.0
    %7237 = vmatpush2.xpose.msra.mxu0 0.0
    %7238 = vmatprep.subr.mxu0 0.0
    %7239 = vmatpush2.xpose.msra.mxu0 0.0
    %7240 = vmatprep.mubr.f32.mxu0 %v1065
    %7241 = vmatmul.mubr.f32.gmra.mxu0 %v1063
    %v7242 = vpop.f32.mrf.mxu0
    %v7243 = vadd.f32 %v7173, %v7242
    %v7244 = vpop.f32.mrf.mxu0
    %7245 = vdwg.mxu0
    %7246 = vmatprep.subr.mxu0 0.0
    %7247 = vmatpush1.xpose.msra.mxu0 0.0
    %7248 = vmatprep.subr.mxu0 0.0
    %7249 = vmatpush1.xpose.msra.mxu0 0.0
    %7250 = vmatprep.subr.mxu0 0.0
    %7251 = vmatpush1.xpose.msra.mxu0 0.0
    %7252 = vmatprep.subr.mxu0 0.0
    %7253 = vmatpush1.xpose.msra.mxu0 0.0
    %7254 = vmatprep.subr.mxu0 0.0
    %7255 = vmatpush1.xpose.msra.mxu0 0.0
    %7256 = vmatprep.subr.mxu0 0.0
    %7257 = vmatpush1.xpose.msra.mxu0 0.0
    %7258 = vmatprep.subr.mxu0 0.0
    %7259 = vmatpush1.xpose.msra.mxu0 0.0
    %7260 = vmatprep.subr.mxu0 0.0
    %7261 = vmatpush1.xpose.msra.mxu0 0.0
    %7262 = vmatprep.subr.mxu0 0.0
    %7263 = vmatpush1.xpose.msra.mxu0 0.0
    %7264 = vmatprep.subr.mxu0 0.0
    %7265 = vmatpush1.xpose.msra.mxu0 0.0
    %7266 = vmatprep.subr.mxu0 0.0
    %7267 = vmatpush1.xpose.msra.mxu0 0.0
    %7268 = vmatprep.subr.mxu0 0.0
    %7269 = vmatpush1.xpose.msra.mxu0 0.0
    %7270 = vmatprep.subr.mxu0 0.0
    %7271 = vmatpush1.xpose.msra.mxu0 0.0
    %7272 = vmatprep.subr.mxu0 0.0
    %7273 = vmatpush1.xpose.msra.mxu0 0.0
    %7274 = vmatprep.subr.mxu0 0.0
    %7275 = vmatpush1.xpose.msra.mxu0 0.0
    %7276 = vmatprep.subr.mxu0 %v258
    %7277 = vmatpush1.xpose.msra.mxu0 %v257
    %7278 = vmatprep.subr.mxu0 0.0
    %7279 = vmatpush2.xpose.msra.mxu0 0.0
    %7280 = vmatprep.subr.mxu0 0.0
    %7281 = vmatpush2.xpose.msra.mxu0 0.0
    %7282 = vmatprep.subr.mxu0 0.0
    %7283 = vmatpush2.xpose.msra.mxu0 0.0
    %7284 = vmatprep.subr.mxu0 0.0
    %7285 = vmatpush2.xpose.msra.mxu0 0.0
    %7286 = vmatprep.subr.mxu0 0.0
    %7287 = vmatpush2.xpose.msra.mxu0 0.0
    %7288 = vmatprep.subr.mxu0 0.0
    %7289 = vmatpush2.xpose.msra.mxu0 0.0
    %7290 = vmatprep.subr.mxu0 0.0
    %7291 = vmatpush2.xpose.msra.mxu0 0.0
    %7292 = vmatprep.subr.mxu0 0.0
    %7293 = vmatpush2.xpose.msra.mxu0 0.0
    %7294 = vmatprep.subr.mxu0 0.0
    %7295 = vmatpush2.xpose.msra.mxu0 0.0
    %7296 = vmatprep.subr.mxu0 0.0
    %7297 = vmatpush2.xpose.msra.mxu0 0.0
    %7298 = vmatprep.subr.mxu0 0.0
    %7299 = vmatpush2.xpose.msra.mxu0 0.0
    %7300 = vmatprep.subr.mxu0 0.0
    %7301 = vmatpush2.xpose.msra.mxu0 0.0
    %7302 = vmatprep.subr.mxu0 0.0
    %7303 = vmatpush2.xpose.msra.mxu0 0.0
    %7304 = vmatprep.subr.mxu0 0.0
    %7305 = vmatpush2.xpose.msra.mxu0 0.0
    %7306 = vmatprep.subr.mxu0 0.0
    %7307 = vmatpush2.xpose.msra.mxu0 0.0
    %7308 = vmatprep.subr.mxu0 0.0
    %7309 = vmatpush2.xpose.msra.mxu0 0.0
    %7310 = vmatprep.mubr.f32.mxu0 %v1081
    %7311 = vmatmul.mubr.f32.gmra.mxu0 %v1073
    %v7312 = vpop.f32.mrf.mxu0
    %v7313 = vadd.f32 %v7243, %v7312
    %v7314 = vpop.f32.mrf.mxu0
    %7315 = vdwg.mxu0
    %7316 = vmatprep.subr.mxu0 0.0
    %7317 = vmatpush1.xpose.msra.mxu0 0.0
    %7318 = vmatprep.subr.mxu0 0.0
    %7319 = vmatpush1.xpose.msra.mxu0 0.0
    %7320 = vmatprep.subr.mxu0 0.0
    %7321 = vmatpush1.xpose.msra.mxu0 0.0
    %7322 = vmatprep.subr.mxu0 0.0
    %7323 = vmatpush1.xpose.msra.mxu0 0.0
    %7324 = vmatprep.subr.mxu0 0.0
    %7325 = vmatpush1.xpose.msra.mxu0 0.0
    %7326 = vmatprep.subr.mxu0 0.0
    %7327 = vmatpush1.xpose.msra.mxu0 0.0
    %7328 = vmatprep.subr.mxu0 0.0
    %7329 = vmatpush1.xpose.msra.mxu0 0.0
    %7330 = vmatprep.subr.mxu0 0.0
    %7331 = vmatpush1.xpose.msra.mxu0 0.0
    %7332 = vmatprep.subr.mxu0 0.0
    %7333 = vmatpush1.xpose.msra.mxu0 0.0
    %7334 = vmatprep.subr.mxu0 0.0
    %7335 = vmatpush1.xpose.msra.mxu0 0.0
    %7336 = vmatprep.subr.mxu0 0.0
    %7337 = vmatpush1.xpose.msra.mxu0 0.0
    %7338 = vmatprep.subr.mxu0 0.0
    %7339 = vmatpush1.xpose.msra.mxu0 0.0
    %7340 = vmatprep.subr.mxu0 0.0
    %7341 = vmatpush1.xpose.msra.mxu0 0.0
    %7342 = vmatprep.subr.mxu0 0.0
    %7343 = vmatpush1.xpose.msra.mxu0 0.0
    %7344 = vmatprep.subr.mxu0 0.0
    %7345 = vmatpush1.xpose.msra.mxu0 0.0
    %7346 = vmatprep.subr.mxu0 %v260
    %7347 = vmatpush1.xpose.msra.mxu0 %v259
    %7348 = vmatprep.subr.mxu0 0.0
    %7349 = vmatpush2.xpose.msra.mxu0 0.0
    %7350 = vmatprep.subr.mxu0 0.0
    %7351 = vmatpush2.xpose.msra.mxu0 0.0
    %7352 = vmatprep.subr.mxu0 0.0
    %7353 = vmatpush2.xpose.msra.mxu0 0.0
    %7354 = vmatprep.subr.mxu0 0.0
    %7355 = vmatpush2.xpose.msra.mxu0 0.0
    %7356 = vmatprep.subr.mxu0 0.0
    %7357 = vmatpush2.xpose.msra.mxu0 0.0
    %7358 = vmatprep.subr.mxu0 0.0
    %7359 = vmatpush2.xpose.msra.mxu0 0.0
    %7360 = vmatprep.subr.mxu0 0.0
    %7361 = vmatpush2.xpose.msra.mxu0 0.0
    %7362 = vmatprep.subr.mxu0 0.0
    %7363 = vmatpush2.xpose.msra.mxu0 0.0
    %7364 = vmatprep.subr.mxu0 0.0
    %7365 = vmatpush2.xpose.msra.mxu0 0.0
    %7366 = vmatprep.subr.mxu0 0.0
    %7367 = vmatpush2.xpose.msra.mxu0 0.0
    %7368 = vmatprep.subr.mxu0 0.0
    %7369 = vmatpush2.xpose.msra.mxu0 0.0
    %7370 = vmatprep.subr.mxu0 0.0
    %7371 = vmatpush2.xpose.msra.mxu0 0.0
    %7372 = vmatprep.subr.mxu0 0.0
    %7373 = vmatpush2.xpose.msra.mxu0 0.0
    %7374 = vmatprep.subr.mxu0 0.0
    %7375 = vmatpush2.xpose.msra.mxu0 0.0
    %7376 = vmatprep.subr.mxu0 0.0
    %7377 = vmatpush2.xpose.msra.mxu0 0.0
    %7378 = vmatprep.subr.mxu0 0.0
    %7379 = vmatpush2.xpose.msra.mxu0 0.0
    %7380 = vmatprep.mubr.f32.mxu0 %v1082
    %7381 = vmatmul.mubr.f32.gmra.mxu0 %v1080
    %v7382 = vpop.f32.mrf.mxu0
    %v7383 = vadd.f32 %v7313, %v7382
    %v7384 = vpop.f32.mrf.mxu0
    %7385 = vdwg.mxu0
    %7386 = vmatprep.subr.mxu0 0.0
    %7387 = vmatpush1.xpose.msra.mxu0 0.0
    %7388 = vmatprep.subr.mxu0 0.0
    %7389 = vmatpush1.xpose.msra.mxu0 0.0
    %7390 = vmatprep.subr.mxu0 0.0
    %7391 = vmatpush1.xpose.msra.mxu0 0.0
    %7392 = vmatprep.subr.mxu0 0.0
    %7393 = vmatpush1.xpose.msra.mxu0 0.0
    %7394 = vmatprep.subr.mxu0 0.0
    %7395 = vmatpush1.xpose.msra.mxu0 0.0
    %7396 = vmatprep.subr.mxu0 0.0
    %7397 = vmatpush1.xpose.msra.mxu0 0.0
    %7398 = vmatprep.subr.mxu0 0.0
    %7399 = vmatpush1.xpose.msra.mxu0 0.0
    %7400 = vmatprep.subr.mxu0 0.0
    %7401 = vmatpush1.xpose.msra.mxu0 0.0
    %7402 = vmatprep.subr.mxu0 0.0
    %7403 = vmatpush1.xpose.msra.mxu0 0.0
    %7404 = vmatprep.subr.mxu0 0.0
    %7405 = vmatpush1.xpose.msra.mxu0 0.0
    %7406 = vmatprep.subr.mxu0 0.0
    %7407 = vmatpush1.xpose.msra.mxu0 0.0
    %7408 = vmatprep.subr.mxu0 0.0
    %7409 = vmatpush1.xpose.msra.mxu0 0.0
    %7410 = vmatprep.subr.mxu0 0.0
    %7411 = vmatpush1.xpose.msra.mxu0 0.0
    %7412 = vmatprep.subr.mxu0 0.0
    %7413 = vmatpush1.xpose.msra.mxu0 0.0
    %7414 = vmatprep.subr.mxu0 0.0
    %7415 = vmatpush1.xpose.msra.mxu0 0.0
    %7416 = vmatprep.subr.mxu0 %v262
    %7417 = vmatpush1.xpose.msra.mxu0 %v261
    %7418 = vmatprep.subr.mxu0 0.0
    %7419 = vmatpush2.xpose.msra.mxu0 0.0
    %7420 = vmatprep.subr.mxu0 0.0
    %7421 = vmatpush2.xpose.msra.mxu0 0.0
    %7422 = vmatprep.subr.mxu0 0.0
    %7423 = vmatpush2.xpose.msra.mxu0 0.0
    %7424 = vmatprep.subr.mxu0 0.0
    %7425 = vmatpush2.xpose.msra.mxu0 0.0
    %7426 = vmatprep.subr.mxu0 0.0
    %7427 = vmatpush2.xpose.msra.mxu0 0.0
    %7428 = vmatprep.subr.mxu0 0.0
    %7429 = vmatpush2.xpose.msra.mxu0 0.0
    %7430 = vmatprep.subr.mxu0 0.0
    %7431 = vmatpush2.xpose.msra.mxu0 0.0
    %7432 = vmatprep.subr.mxu0 0.0
    %7433 = vmatpush2.xpose.msra.mxu0 0.0
    %7434 = vmatprep.subr.mxu0 0.0
    %7435 = vmatpush2.xpose.msra.mxu0 0.0
    %7436 = vmatprep.subr.mxu0 0.0
    %7437 = vmatpush2.xpose.msra.mxu0 0.0
    %7438 = vmatprep.subr.mxu0 0.0
    %7439 = vmatpush2.xpose.msra.mxu0 0.0
    %7440 = vmatprep.subr.mxu0 0.0
    %7441 = vmatpush2.xpose.msra.mxu0 0.0
    %7442 = vmatprep.subr.mxu0 0.0
    %7443 = vmatpush2.xpose.msra.mxu0 0.0
    %7444 = vmatprep.subr.mxu0 0.0
    %7445 = vmatpush2.xpose.msra.mxu0 0.0
    %7446 = vmatprep.subr.mxu0 0.0
    %7447 = vmatpush2.xpose.msra.mxu0 0.0
    %7448 = vmatprep.subr.mxu0 0.0
    %7449 = vmatpush2.xpose.msra.mxu0 0.0
    %7450 = vmatprep.mubr.f32.mxu0 %v1098
    %7451 = vmatmul.mubr.f32.gmra.mxu0 %v1090
    %v7452 = vpop.f32.mrf.mxu0
    %v7453 = vadd.f32 %v7383, %v7452
    %v7454 = vpop.f32.mrf.mxu0
    %7455 = vdwg.mxu0
    %7456 = vmatprep.subr.mxu0 0.0
    %7457 = vmatpush1.xpose.msra.mxu0 0.0
    %7458 = vmatprep.subr.mxu0 0.0
    %7459 = vmatpush1.xpose.msra.mxu0 0.0
    %7460 = vmatprep.subr.mxu0 0.0
    %7461 = vmatpush1.xpose.msra.mxu0 0.0
    %7462 = vmatprep.subr.mxu0 0.0
    %7463 = vmatpush1.xpose.msra.mxu0 0.0
    %7464 = vmatprep.subr.mxu0 0.0
    %7465 = vmatpush1.xpose.msra.mxu0 0.0
    %7466 = vmatprep.subr.mxu0 0.0
    %7467 = vmatpush1.xpose.msra.mxu0 0.0
    %7468 = vmatprep.subr.mxu0 0.0
    %7469 = vmatpush1.xpose.msra.mxu0 0.0
    %7470 = vmatprep.subr.mxu0 0.0
    %7471 = vmatpush1.xpose.msra.mxu0 0.0
    %7472 = vmatprep.subr.mxu0 0.0
    %7473 = vmatpush1.xpose.msra.mxu0 0.0
    %7474 = vmatprep.subr.mxu0 0.0
    %7475 = vmatpush1.xpose.msra.mxu0 0.0
    %7476 = vmatprep.subr.mxu0 0.0
    %7477 = vmatpush1.xpose.msra.mxu0 0.0
    %7478 = vmatprep.subr.mxu0 0.0
    %7479 = vmatpush1.xpose.msra.mxu0 0.0
    %7480 = vmatprep.subr.mxu0 0.0
    %7481 = vmatpush1.xpose.msra.mxu0 0.0
    %7482 = vmatprep.subr.mxu0 0.0
    %7483 = vmatpush1.xpose.msra.mxu0 0.0
    %7484 = vmatprep.subr.mxu0 0.0
    %7485 = vmatpush1.xpose.msra.mxu0 0.0
    %7486 = vmatprep.subr.mxu0 %v264
    %7487 = vmatpush1.xpose.msra.mxu0 %v263
    %7488 = vmatprep.subr.mxu0 0.0
    %7489 = vmatpush2.xpose.msra.mxu0 0.0
    %7490 = vmatprep.subr.mxu0 0.0
    %7491 = vmatpush2.xpose.msra.mxu0 0.0
    %7492 = vmatprep.subr.mxu0 0.0
    %7493 = vmatpush2.xpose.msra.mxu0 0.0
    %7494 = vmatprep.subr.mxu0 0.0
    %7495 = vmatpush2.xpose.msra.mxu0 0.0
    %7496 = vmatprep.subr.mxu0 0.0
    %7497 = vmatpush2.xpose.msra.mxu0 0.0
    %7498 = vmatprep.subr.mxu0 0.0
    %7499 = vmatpush2.xpose.msra.mxu0 0.0
    %7500 = vmatprep.subr.mxu0 0.0
    %7501 = vmatpush2.xpose.msra.mxu0 0.0
    %7502 = vmatprep.subr.mxu0 0.0
    %7503 = vmatpush2.xpose.msra.mxu0 0.0
    %7504 = vmatprep.subr.mxu0 0.0
    %7505 = vmatpush2.xpose.msra.mxu0 0.0
    %7506 = vmatprep.subr.mxu0 0.0
    %7507 = vmatpush2.xpose.msra.mxu0 0.0
    %7508 = vmatprep.subr.mxu0 0.0
    %7509 = vmatpush2.xpose.msra.mxu0 0.0
    %7510 = vmatprep.subr.mxu0 0.0
    %7511 = vmatpush2.xpose.msra.mxu0 0.0
    %7512 = vmatprep.subr.mxu0 0.0
    %7513 = vmatpush2.xpose.msra.mxu0 0.0
    %7514 = vmatprep.subr.mxu0 0.0
    %7515 = vmatpush2.xpose.msra.mxu0 0.0
    %7516 = vmatprep.subr.mxu0 0.0
    %7517 = vmatpush2.xpose.msra.mxu0 0.0
    %7518 = vmatprep.subr.mxu0 0.0
    %7519 = vmatpush2.xpose.msra.mxu0 0.0
    %7520 = vmatprep.mubr.f32.mxu0 %v1099
    %7521 = vmatmul.mubr.f32.gmra.mxu0 %v1097
    %v7522 = vpop.f32.mrf.mxu0
    %v7523 = vadd.f32 %v7453, %v7522
    %v7524 = vpop.f32.mrf.mxu0
    %7525 = vdwg.mxu0
    %7526 = vmatprep.subr.mxu0 0.0
    %7527 = vmatpush1.xpose.msra.mxu0 0.0
    %7528 = vmatprep.subr.mxu0 0.0
    %7529 = vmatpush1.xpose.msra.mxu0 0.0
    %7530 = vmatprep.subr.mxu0 0.0
    %7531 = vmatpush1.xpose.msra.mxu0 0.0
    %7532 = vmatprep.subr.mxu0 0.0
    %7533 = vmatpush1.xpose.msra.mxu0 0.0
    %7534 = vmatprep.subr.mxu0 0.0
    %7535 = vmatpush1.xpose.msra.mxu0 0.0
    %7536 = vmatprep.subr.mxu0 0.0
    %7537 = vmatpush1.xpose.msra.mxu0 0.0
    %7538 = vmatprep.subr.mxu0 0.0
    %7539 = vmatpush1.xpose.msra.mxu0 0.0
    %7540 = vmatprep.subr.mxu0 0.0
    %7541 = vmatpush1.xpose.msra.mxu0 0.0
    %7542 = vmatprep.subr.mxu0 0.0
    %7543 = vmatpush1.xpose.msra.mxu0 0.0
    %7544 = vmatprep.subr.mxu0 0.0
    %7545 = vmatpush1.xpose.msra.mxu0 0.0
    %7546 = vmatprep.subr.mxu0 0.0
    %7547 = vmatpush1.xpose.msra.mxu0 0.0
    %7548 = vmatprep.subr.mxu0 0.0
    %7549 = vmatpush1.xpose.msra.mxu0 0.0
    %7550 = vmatprep.subr.mxu0 0.0
    %7551 = vmatpush1.xpose.msra.mxu0 0.0
    %7552 = vmatprep.subr.mxu0 0.0
    %7553 = vmatpush1.xpose.msra.mxu0 0.0
    %7554 = vmatprep.subr.mxu0 0.0
    %7555 = vmatpush1.xpose.msra.mxu0 0.0
    %7556 = vmatprep.subr.mxu0 %v266
    %7557 = vmatpush1.xpose.msra.mxu0 %v265
    %7558 = vmatprep.subr.mxu0 0.0
    %7559 = vmatpush2.xpose.msra.mxu0 0.0
    %7560 = vmatprep.subr.mxu0 0.0
    %7561 = vmatpush2.xpose.msra.mxu0 0.0
    %7562 = vmatprep.subr.mxu0 0.0
    %7563 = vmatpush2.xpose.msra.mxu0 0.0
    %7564 = vmatprep.subr.mxu0 0.0
    %7565 = vmatpush2.xpose.msra.mxu0 0.0
    %7566 = vmatprep.subr.mxu0 0.0
    %7567 = vmatpush2.xpose.msra.mxu0 0.0
    %7568 = vmatprep.subr.mxu0 0.0
    %7569 = vmatpush2.xpose.msra.mxu0 0.0
    %7570 = vmatprep.subr.mxu0 0.0
    %7571 = vmatpush2.xpose.msra.mxu0 0.0
    %7572 = vmatprep.subr.mxu0 0.0
    %7573 = vmatpush2.xpose.msra.mxu0 0.0
    %7574 = vmatprep.subr.mxu0 0.0
    %7575 = vmatpush2.xpose.msra.mxu0 0.0
    %7576 = vmatprep.subr.mxu0 0.0
    %7577 = vmatpush2.xpose.msra.mxu0 0.0
    %7578 = vmatprep.subr.mxu0 0.0
    %7579 = vmatpush2.xpose.msra.mxu0 0.0
    %7580 = vmatprep.subr.mxu0 0.0
    %7581 = vmatpush2.xpose.msra.mxu0 0.0
    %7582 = vmatprep.subr.mxu0 0.0
    %7583 = vmatpush2.xpose.msra.mxu0 0.0
    %7584 = vmatprep.subr.mxu0 0.0
    %7585 = vmatpush2.xpose.msra.mxu0 0.0
    %7586 = vmatprep.subr.mxu0 0.0
    %7587 = vmatpush2.xpose.msra.mxu0 0.0
    %7588 = vmatprep.subr.mxu0 0.0
    %7589 = vmatpush2.xpose.msra.mxu0 0.0
    %7590 = vmatprep.mubr.f32.mxu0 %v1115
    %7591 = vmatmul.mubr.f32.gmra.mxu0 %v1107
    %v7592 = vpop.f32.mrf.mxu0
    %v7593 = vadd.f32 %v7523, %v7592
    %v7594 = vpop.f32.mrf.mxu0
    %7595 = vdwg.mxu0
    %7596 = vmatprep.subr.mxu0 0.0
    %7597 = vmatpush1.xpose.msra.mxu0 0.0
    %7598 = vmatprep.subr.mxu0 0.0
    %7599 = vmatpush1.xpose.msra.mxu0 0.0
    %7600 = vmatprep.subr.mxu0 0.0
    %7601 = vmatpush1.xpose.msra.mxu0 0.0
    %7602 = vmatprep.subr.mxu0 0.0
    %7603 = vmatpush1.xpose.msra.mxu0 0.0
    %7604 = vmatprep.subr.mxu0 0.0
    %7605 = vmatpush1.xpose.msra.mxu0 0.0
    %7606 = vmatprep.subr.mxu0 0.0
    %7607 = vmatpush1.xpose.msra.mxu0 0.0
    %7608 = vmatprep.subr.mxu0 0.0
    %7609 = vmatpush1.xpose.msra.mxu0 0.0
    %7610 = vmatprep.subr.mxu0 0.0
    %7611 = vmatpush1.xpose.msra.mxu0 0.0
    %7612 = vmatprep.subr.mxu0 0.0
    %7613 = vmatpush1.xpose.msra.mxu0 0.0
    %7614 = vmatprep.subr.mxu0 0.0
    %7615 = vmatpush1.xpose.msra.mxu0 0.0
    %7616 = vmatprep.subr.mxu0 0.0
    %7617 = vmatpush1.xpose.msra.mxu0 0.0
    %7618 = vmatprep.subr.mxu0 0.0
    %7619 = vmatpush1.xpose.msra.mxu0 0.0
    %7620 = vmatprep.subr.mxu0 0.0
    %7621 = vmatpush1.xpose.msra.mxu0 0.0
    %7622 = vmatprep.subr.mxu0 0.0
    %7623 = vmatpush1.xpose.msra.mxu0 0.0
    %7624 = vmatprep.subr.mxu0 0.0
    %7625 = vmatpush1.xpose.msra.mxu0 0.0
    %7626 = vmatprep.subr.mxu0 %v268
    %7627 = vmatpush1.xpose.msra.mxu0 %v267
    %7628 = vmatprep.subr.mxu0 0.0
    %7629 = vmatpush2.xpose.msra.mxu0 0.0
    %7630 = vmatprep.subr.mxu0 0.0
    %7631 = vmatpush2.xpose.msra.mxu0 0.0
    %7632 = vmatprep.subr.mxu0 0.0
    %7633 = vmatpush2.xpose.msra.mxu0 0.0
    %7634 = vmatprep.subr.mxu0 0.0
    %7635 = vmatpush2.xpose.msra.mxu0 0.0
    %7636 = vmatprep.subr.mxu0 0.0
    %7637 = vmatpush2.xpose.msra.mxu0 0.0
    %7638 = vmatprep.subr.mxu0 0.0
    %7639 = vmatpush2.xpose.msra.mxu0 0.0
    %7640 = vmatprep.subr.mxu0 0.0
    %7641 = vmatpush2.xpose.msra.mxu0 0.0
    %7642 = vmatprep.subr.mxu0 0.0
    %7643 = vmatpush2.xpose.msra.mxu0 0.0
    %7644 = vmatprep.subr.mxu0 0.0
    %7645 = vmatpush2.xpose.msra.mxu0 0.0
    %7646 = vmatprep.subr.mxu0 0.0
    %7647 = vmatpush2.xpose.msra.mxu0 0.0
    %7648 = vmatprep.subr.mxu0 0.0
    %7649 = vmatpush2.xpose.msra.mxu0 0.0
    %7650 = vmatprep.subr.mxu0 0.0
    %7651 = vmatpush2.xpose.msra.mxu0 0.0
    %7652 = vmatprep.subr.mxu0 0.0
    %7653 = vmatpush2.xpose.msra.mxu0 0.0
    %7654 = vmatprep.subr.mxu0 0.0
    %7655 = vmatpush2.xpose.msra.mxu0 0.0
    %7656 = vmatprep.subr.mxu0 0.0
    %7657 = vmatpush2.xpose.msra.mxu0 0.0
    %7658 = vmatprep.subr.mxu0 0.0
    %7659 = vmatpush2.xpose.msra.mxu0 0.0
    %7660 = vmatprep.mubr.f32.mxu0 %v1116
    %7661 = vmatmul.mubr.f32.gmra.mxu0 %v1114
    %v7662 = vpop.f32.mrf.mxu0
    %v7663 = vadd.f32 %v7593, %v7662
    %v7664 = vpop.f32.mrf.mxu0
    %7665 = vdwg.mxu0
    %7666 = vmatprep.subr.mxu0 0.0
    %7667 = vmatpush1.xpose.msra.mxu0 0.0
    %7668 = vmatprep.subr.mxu0 0.0
    %7669 = vmatpush1.xpose.msra.mxu0 0.0
    %7670 = vmatprep.subr.mxu0 0.0
    %7671 = vmatpush1.xpose.msra.mxu0 0.0
    %7672 = vmatprep.subr.mxu0 0.0
    %7673 = vmatpush1.xpose.msra.mxu0 0.0
    %7674 = vmatprep.subr.mxu0 0.0
    %7675 = vmatpush1.xpose.msra.mxu0 0.0
    %7676 = vmatprep.subr.mxu0 0.0
    %7677 = vmatpush1.xpose.msra.mxu0 0.0
    %7678 = vmatprep.subr.mxu0 0.0
    %7679 = vmatpush1.xpose.msra.mxu0 0.0
    %7680 = vmatprep.subr.mxu0 0.0
    %7681 = vmatpush1.xpose.msra.mxu0 0.0
    %7682 = vmatprep.subr.mxu0 0.0
    %7683 = vmatpush1.xpose.msra.mxu0 0.0
    %7684 = vmatprep.subr.mxu0 0.0
    %7685 = vmatpush1.xpose.msra.mxu0 0.0
    %7686 = vmatprep.subr.mxu0 0.0
    %7687 = vmatpush1.xpose.msra.mxu0 0.0
    %7688 = vmatprep.subr.mxu0 0.0
    %7689 = vmatpush1.xpose.msra.mxu0 0.0
    %7690 = vmatprep.subr.mxu0 0.0
    %7691 = vmatpush1.xpose.msra.mxu0 0.0
    %7692 = vmatprep.subr.mxu0 0.0
    %7693 = vmatpush1.xpose.msra.mxu0 0.0
    %7694 = vmatprep.subr.mxu0 0.0
    %7695 = vmatpush1.xpose.msra.mxu0 0.0
    %7696 = vmatprep.subr.mxu0 %v270
    %7697 = vmatpush1.xpose.msra.mxu0 %v269
    %7698 = vmatprep.subr.mxu0 0.0
    %7699 = vmatpush2.xpose.msra.mxu0 0.0
    %7700 = vmatprep.subr.mxu0 0.0
    %7701 = vmatpush2.xpose.msra.mxu0 0.0
    %7702 = vmatprep.subr.mxu0 0.0
    %7703 = vmatpush2.xpose.msra.mxu0 0.0
    %7704 = vmatprep.subr.mxu0 0.0
    %7705 = vmatpush2.xpose.msra.mxu0 0.0
    %7706 = vmatprep.subr.mxu0 0.0
    %7707 = vmatpush2.xpose.msra.mxu0 0.0
    %7708 = vmatprep.subr.mxu0 0.0
    %7709 = vmatpush2.xpose.msra.mxu0 0.0
    %7710 = vmatprep.subr.mxu0 0.0
    %7711 = vmatpush2.xpose.msra.mxu0 0.0
    %7712 = vmatprep.subr.mxu0 0.0
    %7713 = vmatpush2.xpose.msra.mxu0 0.0
    %7714 = vmatprep.subr.mxu0 0.0
    %7715 = vmatpush2.xpose.msra.mxu0 0.0
    %7716 = vmatprep.subr.mxu0 0.0
    %7717 = vmatpush2.xpose.msra.mxu0 0.0
    %7718 = vmatprep.subr.mxu0 0.0
    %7719 = vmatpush2.xpose.msra.mxu0 0.0
    %7720 = vmatprep.subr.mxu0 0.0
    %7721 = vmatpush2.xpose.msra.mxu0 0.0
    %7722 = vmatprep.subr.mxu0 0.0
    %7723 = vmatpush2.xpose.msra.mxu0 0.0
    %7724 = vmatprep.subr.mxu0 0.0
    %7725 = vmatpush2.xpose.msra.mxu0 0.0
    %7726 = vmatprep.subr.mxu0 0.0
    %7727 = vmatpush2.xpose.msra.mxu0 0.0
    %7728 = vmatprep.subr.mxu0 0.0
    %7729 = vmatpush2.xpose.msra.mxu0 0.0
    %7730 = vmatprep.mubr.f32.mxu0 %v1132
    %7731 = vmatmul.mubr.f32.gmra.mxu0 %v1124
    %v7732 = vpop.f32.mrf.mxu0
    %v7733 = vadd.f32 %v7663, %v7732
    %v7734 = vpop.f32.mrf.mxu0
    %7735 = vdwg.mxu0
    %7736 = vmatprep.subr.mxu0 0.0
    %7737 = vmatpush1.xpose.msra.mxu0 0.0
    %7738 = vmatprep.subr.mxu0 0.0
    %7739 = vmatpush1.xpose.msra.mxu0 0.0
    %7740 = vmatprep.subr.mxu0 0.0
    %7741 = vmatpush1.xpose.msra.mxu0 0.0
    %7742 = vmatprep.subr.mxu0 0.0
    %7743 = vmatpush1.xpose.msra.mxu0 0.0
    %7744 = vmatprep.subr.mxu0 0.0
    %7745 = vmatpush1.xpose.msra.mxu0 0.0
    %7746 = vmatprep.subr.mxu0 0.0
    %7747 = vmatpush1.xpose.msra.mxu0 0.0
    %7748 = vmatprep.subr.mxu0 0.0
    %7749 = vmatpush1.xpose.msra.mxu0 0.0
    %7750 = vmatprep.subr.mxu0 0.0
    %7751 = vmatpush1.xpose.msra.mxu0 0.0
    %7752 = vmatprep.subr.mxu0 0.0
    %7753 = vmatpush1.xpose.msra.mxu0 0.0
    %7754 = vmatprep.subr.mxu0 0.0
    %7755 = vmatpush1.xpose.msra.mxu0 0.0
    %7756 = vmatprep.subr.mxu0 0.0
    %7757 = vmatpush1.xpose.msra.mxu0 0.0
    %7758 = vmatprep.subr.mxu0 0.0
    %7759 = vmatpush1.xpose.msra.mxu0 0.0
    %7760 = vmatprep.subr.mxu0 0.0
    %7761 = vmatpush1.xpose.msra.mxu0 0.0
    %7762 = vmatprep.subr.mxu0 0.0
    %7763 = vmatpush1.xpose.msra.mxu0 0.0
    %7764 = vmatprep.subr.mxu0 0.0
    %7765 = vmatpush1.xpose.msra.mxu0 0.0
    %7766 = vmatprep.subr.mxu0 %v272
    %7767 = vmatpush1.xpose.msra.mxu0 %v271
    %7768 = vmatprep.subr.mxu0 0.0
    %7769 = vmatpush2.xpose.msra.mxu0 0.0
    %7770 = vmatprep.subr.mxu0 0.0
    %7771 = vmatpush2.xpose.msra.mxu0 0.0
    %7772 = vmatprep.subr.mxu0 0.0
    %7773 = vmatpush2.xpose.msra.mxu0 0.0
    %7774 = vmatprep.subr.mxu0 0.0
    %7775 = vmatpush2.xpose.msra.mxu0 0.0
    %7776 = vmatprep.subr.mxu0 0.0
    %7777 = vmatpush2.xpose.msra.mxu0 0.0
    %7778 = vmatprep.subr.mxu0 0.0
    %7779 = vmatpush2.xpose.msra.mxu0 0.0
    %7780 = vmatprep.subr.mxu0 0.0
    %7781 = vmatpush2.xpose.msra.mxu0 0.0
    %7782 = vmatprep.subr.mxu0 0.0
    %7783 = vmatpush2.xpose.msra.mxu0 0.0
    %7784 = vmatprep.subr.mxu0 0.0
    %7785 = vmatpush2.xpose.msra.mxu0 0.0
    %7786 = vmatprep.subr.mxu0 0.0
    %7787 = vmatpush2.xpose.msra.mxu0 0.0
    %7788 = vmatprep.subr.mxu0 0.0
    %7789 = vmatpush2.xpose.msra.mxu0 0.0
    %7790 = vmatprep.subr.mxu0 0.0
    %7791 = vmatpush2.xpose.msra.mxu0 0.0
    %7792 = vmatprep.subr.mxu0 0.0
    %7793 = vmatpush2.xpose.msra.mxu0 0.0
    %7794 = vmatprep.subr.mxu0 0.0
    %7795 = vmatpush2.xpose.msra.mxu0 0.0
    %7796 = vmatprep.subr.mxu0 0.0
    %7797 = vmatpush2.xpose.msra.mxu0 0.0
    %7798 = vmatprep.subr.mxu0 0.0
    %7799 = vmatpush2.xpose.msra.mxu0 0.0
    %7800 = vmatprep.mubr.f32.mxu0 %v1133
    %7801 = vmatmul.mubr.f32.gmra.mxu0 %v1131
    %v7802 = vpop.f32.mrf.mxu0
    %v7803 = vadd.f32 %v7733, %v7802
    %v7804 = vpop.f32.mrf.mxu0
    %7805 = vdwg.mxu0
    %7806 = vmatprep.subr.mxu0 0.0
    %7807 = vmatpush1.xpose.msra.mxu0 0.0
    %7808 = vmatprep.subr.mxu0 0.0
    %7809 = vmatpush1.xpose.msra.mxu0 0.0
    %7810 = vmatprep.subr.mxu0 0.0
    %7811 = vmatpush1.xpose.msra.mxu0 0.0
    %7812 = vmatprep.subr.mxu0 0.0
    %7813 = vmatpush1.xpose.msra.mxu0 0.0
    %7814 = vmatprep.subr.mxu0 0.0
    %7815 = vmatpush1.xpose.msra.mxu0 0.0
    %7816 = vmatprep.subr.mxu0 0.0
    %7817 = vmatpush1.xpose.msra.mxu0 0.0
    %7818 = vmatprep.subr.mxu0 0.0
    %7819 = vmatpush1.xpose.msra.mxu0 0.0
    %7820 = vmatprep.subr.mxu0 0.0
    %7821 = vmatpush1.xpose.msra.mxu0 0.0
    %7822 = vmatprep.subr.mxu0 0.0
    %7823 = vmatpush1.xpose.msra.mxu0 0.0
    %7824 = vmatprep.subr.mxu0 0.0
    %7825 = vmatpush1.xpose.msra.mxu0 0.0
    %7826 = vmatprep.subr.mxu0 0.0
    %7827 = vmatpush1.xpose.msra.mxu0 0.0
    %7828 = vmatprep.subr.mxu0 0.0
    %7829 = vmatpush1.xpose.msra.mxu0 0.0
    %7830 = vmatprep.subr.mxu0 0.0
    %7831 = vmatpush1.xpose.msra.mxu0 0.0
    %7832 = vmatprep.subr.mxu0 0.0
    %7833 = vmatpush1.xpose.msra.mxu0 0.0
    %7834 = vmatprep.subr.mxu0 0.0
    %7835 = vmatpush1.xpose.msra.mxu0 0.0
    %7836 = vmatprep.subr.mxu0 %v274
    %7837 = vmatpush1.xpose.msra.mxu0 %v273
    %7838 = vmatprep.subr.mxu0 0.0
    %7839 = vmatpush2.xpose.msra.mxu0 0.0
    %7840 = vmatprep.subr.mxu0 0.0
    %7841 = vmatpush2.xpose.msra.mxu0 0.0
    %7842 = vmatprep.subr.mxu0 0.0
    %7843 = vmatpush2.xpose.msra.mxu0 0.0
    %7844 = vmatprep.subr.mxu0 0.0
    %7845 = vmatpush2.xpose.msra.mxu0 0.0
    %7846 = vmatprep.subr.mxu0 0.0
    %7847 = vmatpush2.xpose.msra.mxu0 0.0
    %7848 = vmatprep.subr.mxu0 0.0
    %7849 = vmatpush2.xpose.msra.mxu0 0.0
    %7850 = vmatprep.subr.mxu0 0.0
    %7851 = vmatpush2.xpose.msra.mxu0 0.0
    %7852 = vmatprep.subr.mxu0 0.0
    %7853 = vmatpush2.xpose.msra.mxu0 0.0
    %7854 = vmatprep.subr.mxu0 0.0
    %7855 = vmatpush2.xpose.msra.mxu0 0.0
    %7856 = vmatprep.subr.mxu0 0.0
    %7857 = vmatpush2.xpose.msra.mxu0 0.0
    %7858 = vmatprep.subr.mxu0 0.0
    %7859 = vmatpush2.xpose.msra.mxu0 0.0
    %7860 = vmatprep.subr.mxu0 0.0
    %7861 = vmatpush2.xpose.msra.mxu0 0.0
    %7862 = vmatprep.subr.mxu0 0.0
    %7863 = vmatpush2.xpose.msra.mxu0 0.0
    %7864 = vmatprep.subr.mxu0 0.0
    %7865 = vmatpush2.xpose.msra.mxu0 0.0
    %7866 = vmatprep.subr.mxu0 0.0
    %7867 = vmatpush2.xpose.msra.mxu0 0.0
    %7868 = vmatprep.subr.mxu0 0.0
    %7869 = vmatpush2.xpose.msra.mxu0 0.0
    %7870 = vmatprep.mubr.f32.mxu0 %v1149
    %7871 = vmatmul.mubr.f32.gmra.mxu0 %v1141
    %v7872 = vpop.f32.mrf.mxu0
    %v7873 = vadd.f32 %v7803, %v7872
    %v7874 = vpop.f32.mrf.mxu0
    %7875 = vdwg.mxu0
    %7876 = vmatprep.subr.mxu0 0.0
    %7877 = vmatpush1.xpose.msra.mxu0 0.0
    %7878 = vmatprep.subr.mxu0 0.0
    %7879 = vmatpush1.xpose.msra.mxu0 0.0
    %7880 = vmatprep.subr.mxu0 0.0
    %7881 = vmatpush1.xpose.msra.mxu0 0.0
    %7882 = vmatprep.subr.mxu0 0.0
    %7883 = vmatpush1.xpose.msra.mxu0 0.0
    %7884 = vmatprep.subr.mxu0 0.0
    %7885 = vmatpush1.xpose.msra.mxu0 0.0
    %7886 = vmatprep.subr.mxu0 0.0
    %7887 = vmatpush1.xpose.msra.mxu0 0.0
    %7888 = vmatprep.subr.mxu0 0.0
    %7889 = vmatpush1.xpose.msra.mxu0 0.0
    %7890 = vmatprep.subr.mxu0 0.0
    %7891 = vmatpush1.xpose.msra.mxu0 0.0
    %7892 = vmatprep.subr.mxu0 0.0
    %7893 = vmatpush1.xpose.msra.mxu0 0.0
    %7894 = vmatprep.subr.mxu0 0.0
    %7895 = vmatpush1.xpose.msra.mxu0 0.0
    %7896 = vmatprep.subr.mxu0 0.0
    %7897 = vmatpush1.xpose.msra.mxu0 0.0
    %7898 = vmatprep.subr.mxu0 0.0
    %7899 = vmatpush1.xpose.msra.mxu0 0.0
    %7900 = vmatprep.subr.mxu0 0.0
    %7901 = vmatpush1.xpose.msra.mxu0 0.0
    %7902 = vmatprep.subr.mxu0 0.0
    %7903 = vmatpush1.xpose.msra.mxu0 0.0
    %7904 = vmatprep.subr.mxu0 0.0
    %7905 = vmatpush1.xpose.msra.mxu0 0.0
    %7906 = vmatprep.subr.mxu0 %v276
    %7907 = vmatpush1.xpose.msra.mxu0 %v275
    %7908 = vmatprep.subr.mxu0 0.0
    %7909 = vmatpush2.xpose.msra.mxu0 0.0
    %7910 = vmatprep.subr.mxu0 0.0
    %7911 = vmatpush2.xpose.msra.mxu0 0.0
    %7912 = vmatprep.subr.mxu0 0.0
    %7913 = vmatpush2.xpose.msra.mxu0 0.0
    %7914 = vmatprep.subr.mxu0 0.0
    %7915 = vmatpush2.xpose.msra.mxu0 0.0
    %7916 = vmatprep.subr.mxu0 0.0
    %7917 = vmatpush2.xpose.msra.mxu0 0.0
    %7918 = vmatprep.subr.mxu0 0.0
    %7919 = vmatpush2.xpose.msra.mxu0 0.0
    %7920 = vmatprep.subr.mxu0 0.0
    %7921 = vmatpush2.xpose.msra.mxu0 0.0
    %7922 = vmatprep.subr.mxu0 0.0
    %7923 = vmatpush2.xpose.msra.mxu0 0.0
    %7924 = vmatprep.subr.mxu0 0.0
    %7925 = vmatpush2.xpose.msra.mxu0 0.0
    %7926 = vmatprep.subr.mxu0 0.0
    %7927 = vmatpush2.xpose.msra.mxu0 0.0
    %7928 = vmatprep.subr.mxu0 0.0
    %7929 = vmatpush2.xpose.msra.mxu0 0.0
    %7930 = vmatprep.subr.mxu0 0.0
    %7931 = vmatpush2.xpose.msra.mxu0 0.0
    %7932 = vmatprep.subr.mxu0 0.0
    %7933 = vmatpush2.xpose.msra.mxu0 0.0
    %7934 = vmatprep.subr.mxu0 0.0
    %7935 = vmatpush2.xpose.msra.mxu0 0.0
    %7936 = vmatprep.subr.mxu0 0.0
    %7937 = vmatpush2.xpose.msra.mxu0 0.0
    %7938 = vmatprep.subr.mxu0 0.0
    %7939 = vmatpush2.xpose.msra.mxu0 0.0
    %7940 = vmatprep.mubr.f32.mxu0 %v1150
    %7941 = vmatmul.mubr.f32.gmra.mxu0 %v1148
    %v7942 = vpop.f32.mrf.mxu0
    %v7943 = vadd.f32 %v7873, %v7942
    %v7944 = vpop.f32.mrf.mxu0
    %7945 = vdwg.mxu0
    %7946 = vmatprep.subr.mxu0 0.0
    %7947 = vmatpush1.xpose.msra.mxu0 0.0
    %7948 = vmatprep.subr.mxu0 0.0
    %7949 = vmatpush1.xpose.msra.mxu0 0.0
    %7950 = vmatprep.subr.mxu0 0.0
    %7951 = vmatpush1.xpose.msra.mxu0 0.0
    %7952 = vmatprep.subr.mxu0 0.0
    %7953 = vmatpush1.xpose.msra.mxu0 0.0
    %7954 = vmatprep.subr.mxu0 0.0
    %7955 = vmatpush1.xpose.msra.mxu0 0.0
    %7956 = vmatprep.subr.mxu0 0.0
    %7957 = vmatpush1.xpose.msra.mxu0 0.0
    %7958 = vmatprep.subr.mxu0 0.0
    %7959 = vmatpush1.xpose.msra.mxu0 0.0
    %7960 = vmatprep.subr.mxu0 0.0
    %7961 = vmatpush1.xpose.msra.mxu0 0.0
    %7962 = vmatprep.subr.mxu0 0.0
    %7963 = vmatpush1.xpose.msra.mxu0 0.0
    %7964 = vmatprep.subr.mxu0 0.0
    %7965 = vmatpush1.xpose.msra.mxu0 0.0
    %7966 = vmatprep.subr.mxu0 0.0
    %7967 = vmatpush1.xpose.msra.mxu0 0.0
    %7968 = vmatprep.subr.mxu0 0.0
    %7969 = vmatpush1.xpose.msra.mxu0 0.0
    %7970 = vmatprep.subr.mxu0 0.0
    %7971 = vmatpush1.xpose.msra.mxu0 0.0
    %7972 = vmatprep.subr.mxu0 0.0
    %7973 = vmatpush1.xpose.msra.mxu0 0.0
    %7974 = vmatprep.subr.mxu0 0.0
    %7975 = vmatpush1.xpose.msra.mxu0 0.0
    %7976 = vmatprep.subr.mxu0 %v278
    %7977 = vmatpush1.xpose.msra.mxu0 %v277
    %7978 = vmatprep.subr.mxu0 0.0
    %7979 = vmatpush2.xpose.msra.mxu0 0.0
    %7980 = vmatprep.subr.mxu0 0.0
    %7981 = vmatpush2.xpose.msra.mxu0 0.0
    %7982 = vmatprep.subr.mxu0 0.0
    %7983 = vmatpush2.xpose.msra.mxu0 0.0
    %7984 = vmatprep.subr.mxu0 0.0
    %7985 = vmatpush2.xpose.msra.mxu0 0.0
    %7986 = vmatprep.subr.mxu0 0.0
    %7987 = vmatpush2.xpose.msra.mxu0 0.0
    %7988 = vmatprep.subr.mxu0 0.0
    %7989 = vmatpush2.xpose.msra.mxu0 0.0
    %7990 = vmatprep.subr.mxu0 0.0
    %7991 = vmatpush2.xpose.msra.mxu0 0.0
    %7992 = vmatprep.subr.mxu0 0.0
    %7993 = vmatpush2.xpose.msra.mxu0 0.0
    %7994 = vmatprep.subr.mxu0 0.0
    %7995 = vmatpush2.xpose.msra.mxu0 0.0
    %7996 = vmatprep.subr.mxu0 0.0
    %7997 = vmatpush2.xpose.msra.mxu0 0.0
    %7998 = vmatprep.subr.mxu0 0.0
    %7999 = vmatpush2.xpose.msra.mxu0 0.0
    %8000 = vmatprep.subr.mxu0 0.0
    %8001 = vmatpush2.xpose.msra.mxu0 0.0
    %8002 = vmatprep.subr.mxu0 0.0
    %8003 = vmatpush2.xpose.msra.mxu0 0.0
    %8004 = vmatprep.subr.mxu0 0.0
    %8005 = vmatpush2.xpose.msra.mxu0 0.0
    %8006 = vmatprep.subr.mxu0 0.0
    %8007 = vmatpush2.xpose.msra.mxu0 0.0
    %8008 = vmatprep.subr.mxu0 0.0
    %8009 = vmatpush2.xpose.msra.mxu0 0.0
    %8010 = vmatprep.mubr.f32.mxu0 %v1166
    %8011 = vmatmul.mubr.f32.gmra.mxu0 %v1158
    %v8012 = vpop.f32.mrf.mxu0
    %v8013 = vadd.f32 %v7943, %v8012
    %v8014 = vpop.f32.mrf.mxu0
    %8015 = vdwg.mxu0
    %8016 = vmatprep.subr.mxu0 0.0
    %8017 = vmatpush1.xpose.msra.mxu0 0.0
    %8018 = vmatprep.subr.mxu0 0.0
    %8019 = vmatpush1.xpose.msra.mxu0 0.0
    %8020 = vmatprep.subr.mxu0 0.0
    %8021 = vmatpush1.xpose.msra.mxu0 0.0
    %8022 = vmatprep.subr.mxu0 0.0
    %8023 = vmatpush1.xpose.msra.mxu0 0.0
    %8024 = vmatprep.subr.mxu0 0.0
    %8025 = vmatpush1.xpose.msra.mxu0 0.0
    %8026 = vmatprep.subr.mxu0 0.0
    %8027 = vmatpush1.xpose.msra.mxu0 0.0
    %8028 = vmatprep.subr.mxu0 0.0
    %8029 = vmatpush1.xpose.msra.mxu0 0.0
    %8030 = vmatprep.subr.mxu0 0.0
    %8031 = vmatpush1.xpose.msra.mxu0 0.0
    %8032 = vmatprep.subr.mxu0 0.0
    %8033 = vmatpush1.xpose.msra.mxu0 0.0
    %8034 = vmatprep.subr.mxu0 0.0
    %8035 = vmatpush1.xpose.msra.mxu0 0.0
    %8036 = vmatprep.subr.mxu0 0.0
    %8037 = vmatpush1.xpose.msra.mxu0 0.0
    %8038 = vmatprep.subr.mxu0 0.0
    %8039 = vmatpush1.xpose.msra.mxu0 0.0
    %8040 = vmatprep.subr.mxu0 0.0
    %8041 = vmatpush1.xpose.msra.mxu0 0.0
    %8042 = vmatprep.subr.mxu0 0.0
    %8043 = vmatpush1.xpose.msra.mxu0 0.0
    %8044 = vmatprep.subr.mxu0 0.0
    %8045 = vmatpush1.xpose.msra.mxu0 0.0
    %8046 = vmatprep.subr.mxu0 %v280
    %8047 = vmatpush1.xpose.msra.mxu0 %v279
    %8048 = vmatprep.subr.mxu0 0.0
    %8049 = vmatpush2.xpose.msra.mxu0 0.0
    %8050 = vmatprep.subr.mxu0 0.0
    %8051 = vmatpush2.xpose.msra.mxu0 0.0
    %8052 = vmatprep.subr.mxu0 0.0
    %8053 = vmatpush2.xpose.msra.mxu0 0.0
    %8054 = vmatprep.subr.mxu0 0.0
    %8055 = vmatpush2.xpose.msra.mxu0 0.0
    %8056 = vmatprep.subr.mxu0 0.0
    %8057 = vmatpush2.xpose.msra.mxu0 0.0
    %8058 = vmatprep.subr.mxu0 0.0
    %8059 = vmatpush2.xpose.msra.mxu0 0.0
    %8060 = vmatprep.subr.mxu0 0.0
    %8061 = vmatpush2.xpose.msra.mxu0 0.0
    %8062 = vmatprep.subr.mxu0 0.0
    %8063 = vmatpush2.xpose.msra.mxu0 0.0
    %8064 = vmatprep.subr.mxu0 0.0
    %8065 = vmatpush2.xpose.msra.mxu0 0.0
    %8066 = vmatprep.subr.mxu0 0.0
    %8067 = vmatpush2.xpose.msra.mxu0 0.0
    %8068 = vmatprep.subr.mxu0 0.0
    %8069 = vmatpush2.xpose.msra.mxu0 0.0
    %8070 = vmatprep.subr.mxu0 0.0
    %8071 = vmatpush2.xpose.msra.mxu0 0.0
    %8072 = vmatprep.subr.mxu0 0.0
    %8073 = vmatpush2.xpose.msra.mxu0 0.0
    %8074 = vmatprep.subr.mxu0 0.0
    %8075 = vmatpush2.xpose.msra.mxu0 0.0
    %8076 = vmatprep.subr.mxu0 0.0
    %8077 = vmatpush2.xpose.msra.mxu0 0.0
    %8078 = vmatprep.subr.mxu0 0.0
    %8079 = vmatpush2.xpose.msra.mxu0 0.0
    %8080 = vmatprep.mubr.f32.mxu0 %v1167
    %8081 = vmatmul.mubr.f32.gmra.mxu0 %v1165
    %v8082 = vpop.f32.mrf.mxu0
    %v8083 = vadd.f32 %v8013, %v8082
    %v8084 = vpop.f32.mrf.mxu0
    %8085 = vdwg.mxu0
    %8086 = vmatprep.subr.mxu0 0.0
    %8087 = vmatpush1.xpose.msra.mxu0 0.0
    %8088 = vmatprep.subr.mxu0 0.0
    %8089 = vmatpush1.xpose.msra.mxu0 0.0
    %8090 = vmatprep.subr.mxu0 0.0
    %8091 = vmatpush1.xpose.msra.mxu0 0.0
    %8092 = vmatprep.subr.mxu0 0.0
    %8093 = vmatpush1.xpose.msra.mxu0 0.0
    %8094 = vmatprep.subr.mxu0 0.0
    %8095 = vmatpush1.xpose.msra.mxu0 0.0
    %8096 = vmatprep.subr.mxu0 0.0
    %8097 = vmatpush1.xpose.msra.mxu0 0.0
    %8098 = vmatprep.subr.mxu0 0.0
    %8099 = vmatpush1.xpose.msra.mxu0 0.0
    %8100 = vmatprep.subr.mxu0 0.0
    %8101 = vmatpush1.xpose.msra.mxu0 0.0
    %8102 = vmatprep.subr.mxu0 0.0
    %8103 = vmatpush1.xpose.msra.mxu0 0.0
    %8104 = vmatprep.subr.mxu0 0.0
    %8105 = vmatpush1.xpose.msra.mxu0 0.0
    %8106 = vmatprep.subr.mxu0 0.0
    %8107 = vmatpush1.xpose.msra.mxu0 0.0
    %8108 = vmatprep.subr.mxu0 0.0
    %8109 = vmatpush1.xpose.msra.mxu0 0.0
    %8110 = vmatprep.subr.mxu0 0.0
    %8111 = vmatpush1.xpose.msra.mxu0 0.0
    %8112 = vmatprep.subr.mxu0 0.0
    %8113 = vmatpush1.xpose.msra.mxu0 0.0
    %8114 = vmatprep.subr.mxu0 0.0
    %8115 = vmatpush1.xpose.msra.mxu0 0.0
    %8116 = vmatprep.subr.mxu0 %v282
    %8117 = vmatpush1.xpose.msra.mxu0 %v281
    %8118 = vmatprep.subr.mxu0 0.0
    %8119 = vmatpush2.xpose.msra.mxu0 0.0
    %8120 = vmatprep.subr.mxu0 0.0
    %8121 = vmatpush2.xpose.msra.mxu0 0.0
    %8122 = vmatprep.subr.mxu0 0.0
    %8123 = vmatpush2.xpose.msra.mxu0 0.0
    %8124 = vmatprep.subr.mxu0 0.0
    %8125 = vmatpush2.xpose.msra.mxu0 0.0
    %8126 = vmatprep.subr.mxu0 0.0
    %8127 = vmatpush2.xpose.msra.mxu0 0.0
    %8128 = vmatprep.subr.mxu0 0.0
    %8129 = vmatpush2.xpose.msra.mxu0 0.0
    %8130 = vmatprep.subr.mxu0 0.0
    %8131 = vmatpush2.xpose.msra.mxu0 0.0
    %8132 = vmatprep.subr.mxu0 0.0
    %8133 = vmatpush2.xpose.msra.mxu0 0.0
    %8134 = vmatprep.subr.mxu0 0.0
    %8135 = vmatpush2.xpose.msra.mxu0 0.0
    %8136 = vmatprep.subr.mxu0 0.0
    %8137 = vmatpush2.xpose.msra.mxu0 0.0
    %8138 = vmatprep.subr.mxu0 0.0
    %8139 = vmatpush2.xpose.msra.mxu0 0.0
    %8140 = vmatprep.subr.mxu0 0.0
    %8141 = vmatpush2.xpose.msra.mxu0 0.0
    %8142 = vmatprep.subr.mxu0 0.0
    %8143 = vmatpush2.xpose.msra.mxu0 0.0
    %8144 = vmatprep.subr.mxu0 0.0
    %8145 = vmatpush2.xpose.msra.mxu0 0.0
    %8146 = vmatprep.subr.mxu0 0.0
    %8147 = vmatpush2.xpose.msra.mxu0 0.0
    %8148 = vmatprep.subr.mxu0 0.0
    %8149 = vmatpush2.xpose.msra.mxu0 0.0
    %8150 = vmatprep.mubr.f32.mxu0 %v1183
    %8151 = vmatmul.mubr.f32.gmra.mxu0 %v1175
    %v8152 = vpop.f32.mrf.mxu0
    %v8153 = vadd.f32 %v8083, %v8152
    %v8154 = vpop.f32.mrf.mxu0
    %8155 = vdwg.mxu0
    %8156 = vmatprep.subr.mxu0 0.0
    %8157 = vmatpush1.xpose.msra.mxu0 0.0
    %8158 = vmatprep.subr.mxu0 0.0
    %8159 = vmatpush1.xpose.msra.mxu0 0.0
    %8160 = vmatprep.subr.mxu0 0.0
    %8161 = vmatpush1.xpose.msra.mxu0 0.0
    %8162 = vmatprep.subr.mxu0 0.0
    %8163 = vmatpush1.xpose.msra.mxu0 0.0
    %8164 = vmatprep.subr.mxu0 0.0
    %8165 = vmatpush1.xpose.msra.mxu0 0.0
    %8166 = vmatprep.subr.mxu0 0.0
    %8167 = vmatpush1.xpose.msra.mxu0 0.0
    %8168 = vmatprep.subr.mxu0 0.0
    %8169 = vmatpush1.xpose.msra.mxu0 0.0
    %8170 = vmatprep.subr.mxu0 0.0
    %8171 = vmatpush1.xpose.msra.mxu0 0.0
    %8172 = vmatprep.subr.mxu0 0.0
    %8173 = vmatpush1.xpose.msra.mxu0 0.0
    %8174 = vmatprep.subr.mxu0 0.0
    %8175 = vmatpush1.xpose.msra.mxu0 0.0
    %8176 = vmatprep.subr.mxu0 0.0
    %8177 = vmatpush1.xpose.msra.mxu0 0.0
    %8178 = vmatprep.subr.mxu0 0.0
    %8179 = vmatpush1.xpose.msra.mxu0 0.0
    %8180 = vmatprep.subr.mxu0 0.0
    %8181 = vmatpush1.xpose.msra.mxu0 0.0
    %8182 = vmatprep.subr.mxu0 0.0
    %8183 = vmatpush1.xpose.msra.mxu0 0.0
    %8184 = vmatprep.subr.mxu0 0.0
    %8185 = vmatpush1.xpose.msra.mxu0 0.0
    %8186 = vmatprep.subr.mxu0 %v284
    %8187 = vmatpush1.xpose.msra.mxu0 %v283
    %8188 = vmatprep.subr.mxu0 0.0
    %8189 = vmatpush2.xpose.msra.mxu0 0.0
    %8190 = vmatprep.subr.mxu0 0.0
    %8191 = vmatpush2.xpose.msra.mxu0 0.0
    %8192 = vmatprep.subr.mxu0 0.0
    %8193 = vmatpush2.xpose.msra.mxu0 0.0
    %8194 = vmatprep.subr.mxu0 0.0
    %8195 = vmatpush2.xpose.msra.mxu0 0.0
    %8196 = vmatprep.subr.mxu0 0.0
    %8197 = vmatpush2.xpose.msra.mxu0 0.0
    %8198 = vmatprep.subr.mxu0 0.0
    %8199 = vmatpush2.xpose.msra.mxu0 0.0
    %8200 = vmatprep.subr.mxu0 0.0
    %8201 = vmatpush2.xpose.msra.mxu0 0.0
    %8202 = vmatprep.subr.mxu0 0.0
    %8203 = vmatpush2.xpose.msra.mxu0 0.0
    %8204 = vmatprep.subr.mxu0 0.0
    %8205 = vmatpush2.xpose.msra.mxu0 0.0
    %8206 = vmatprep.subr.mxu0 0.0
    %8207 = vmatpush2.xpose.msra.mxu0 0.0
    %8208 = vmatprep.subr.mxu0 0.0
    %8209 = vmatpush2.xpose.msra.mxu0 0.0
    %8210 = vmatprep.subr.mxu0 0.0
    %8211 = vmatpush2.xpose.msra.mxu0 0.0
    %8212 = vmatprep.subr.mxu0 0.0
    %8213 = vmatpush2.xpose.msra.mxu0 0.0
    %8214 = vmatprep.subr.mxu0 0.0
    %8215 = vmatpush2.xpose.msra.mxu0 0.0
    %8216 = vmatprep.subr.mxu0 0.0
    %8217 = vmatpush2.xpose.msra.mxu0 0.0
    %8218 = vmatprep.subr.mxu0 0.0
    %8219 = vmatpush2.xpose.msra.mxu0 0.0
    %8220 = vmatprep.mubr.f32.mxu0 %v1184
    %8221 = vmatmul.mubr.f32.gmra.mxu0 %v1182
    %v8222 = vpop.f32.mrf.mxu0
    %v8223 = vadd.f32 %v8153, %v8222
    %v8224 = vpop.f32.mrf.mxu0
    %8225 = vdwg.mxu0
    %8226 = vmatprep.subr.mxu0 0.0
    %8227 = vmatpush1.xpose.msra.mxu0 0.0
    %8228 = vmatprep.subr.mxu0 0.0
    %8229 = vmatpush1.xpose.msra.mxu0 0.0
    %8230 = vmatprep.subr.mxu0 0.0
    %8231 = vmatpush1.xpose.msra.mxu0 0.0
    %8232 = vmatprep.subr.mxu0 0.0
    %8233 = vmatpush1.xpose.msra.mxu0 0.0
    %8234 = vmatprep.subr.mxu0 0.0
    %8235 = vmatpush1.xpose.msra.mxu0 0.0
    %8236 = vmatprep.subr.mxu0 0.0
    %8237 = vmatpush1.xpose.msra.mxu0 0.0
    %8238 = vmatprep.subr.mxu0 0.0
    %8239 = vmatpush1.xpose.msra.mxu0 0.0
    %8240 = vmatprep.subr.mxu0 0.0
    %8241 = vmatpush1.xpose.msra.mxu0 0.0
    %8242 = vmatprep.subr.mxu0 0.0
    %8243 = vmatpush1.xpose.msra.mxu0 0.0
    %8244 = vmatprep.subr.mxu0 0.0
    %8245 = vmatpush1.xpose.msra.mxu0 0.0
    %8246 = vmatprep.subr.mxu0 0.0
    %8247 = vmatpush1.xpose.msra.mxu0 0.0
    %8248 = vmatprep.subr.mxu0 0.0
    %8249 = vmatpush1.xpose.msra.mxu0 0.0
    %8250 = vmatprep.subr.mxu0 0.0
    %8251 = vmatpush1.xpose.msra.mxu0 0.0
    %8252 = vmatprep.subr.mxu0 0.0
    %8253 = vmatpush1.xpose.msra.mxu0 0.0
    %8254 = vmatprep.subr.mxu0 0.0
    %8255 = vmatpush1.xpose.msra.mxu0 0.0
    %8256 = vmatprep.subr.mxu0 %v286
    %8257 = vmatpush1.xpose.msra.mxu0 %v285
    %8258 = vmatprep.subr.mxu0 0.0
    %8259 = vmatpush2.xpose.msra.mxu0 0.0
    %8260 = vmatprep.subr.mxu0 0.0
    %8261 = vmatpush2.xpose.msra.mxu0 0.0
    %8262 = vmatprep.subr.mxu0 0.0
    %8263 = vmatpush2.xpose.msra.mxu0 0.0
    %8264 = vmatprep.subr.mxu0 0.0
    %8265 = vmatpush2.xpose.msra.mxu0 0.0
    %8266 = vmatprep.subr.mxu0 0.0
    %8267 = vmatpush2.xpose.msra.mxu0 0.0
    %8268 = vmatprep.subr.mxu0 0.0
    %8269 = vmatpush2.xpose.msra.mxu0 0.0
    %8270 = vmatprep.subr.mxu0 0.0
    %8271 = vmatpush2.xpose.msra.mxu0 0.0
    %8272 = vmatprep.subr.mxu0 0.0
    %8273 = vmatpush2.xpose.msra.mxu0 0.0
    %8274 = vmatprep.subr.mxu0 0.0
    %8275 = vmatpush2.xpose.msra.mxu0 0.0
    %8276 = vmatprep.subr.mxu0 0.0
    %8277 = vmatpush2.xpose.msra.mxu0 0.0
    %8278 = vmatprep.subr.mxu0 0.0
    %8279 = vmatpush2.xpose.msra.mxu0 0.0
    %8280 = vmatprep.subr.mxu0 0.0
    %8281 = vmatpush2.xpose.msra.mxu0 0.0
    %8282 = vmatprep.subr.mxu0 0.0
    %8283 = vmatpush2.xpose.msra.mxu0 0.0
    %8284 = vmatprep.subr.mxu0 0.0
    %8285 = vmatpush2.xpose.msra.mxu0 0.0
    %8286 = vmatprep.subr.mxu0 0.0
    %8287 = vmatpush2.xpose.msra.mxu0 0.0
    %8288 = vmatprep.subr.mxu0 0.0
    %8289 = vmatpush2.xpose.msra.mxu0 0.0
    %8290 = vmatprep.mubr.f32.mxu0 %v1200
    %8291 = vmatmul.mubr.f32.gmra.mxu0 %v1192
    %v8292 = vpop.f32.mrf.mxu0
    %v8293 = vadd.f32 %v8223, %v8292
    %v8294 = vpop.f32.mrf.mxu0
    %8295 = vdwg.mxu0
    %8296 = vmatprep.subr.mxu0 0.0
    %8297 = vmatpush1.xpose.msra.mxu0 0.0
    %8298 = vmatprep.subr.mxu0 0.0
    %8299 = vmatpush1.xpose.msra.mxu0 0.0
    %8300 = vmatprep.subr.mxu0 0.0
    %8301 = vmatpush1.xpose.msra.mxu0 0.0
    %8302 = vmatprep.subr.mxu0 0.0
    %8303 = vmatpush1.xpose.msra.mxu0 0.0
    %8304 = vmatprep.subr.mxu0 0.0
    %8305 = vmatpush1.xpose.msra.mxu0 0.0
    %8306 = vmatprep.subr.mxu0 0.0
    %8307 = vmatpush1.xpose.msra.mxu0 0.0
    %8308 = vmatprep.subr.mxu0 0.0
    %8309 = vmatpush1.xpose.msra.mxu0 0.0
    %8310 = vmatprep.subr.mxu0 0.0
    %8311 = vmatpush1.xpose.msra.mxu0 0.0
    %8312 = vmatprep.subr.mxu0 0.0
    %8313 = vmatpush1.xpose.msra.mxu0 0.0
    %8314 = vmatprep.subr.mxu0 0.0
    %8315 = vmatpush1.xpose.msra.mxu0 0.0
    %8316 = vmatprep.subr.mxu0 0.0
    %8317 = vmatpush1.xpose.msra.mxu0 0.0
    %8318 = vmatprep.subr.mxu0 0.0
    %8319 = vmatpush1.xpose.msra.mxu0 0.0
    %8320 = vmatprep.subr.mxu0 0.0
    %8321 = vmatpush1.xpose.msra.mxu0 0.0
    %8322 = vmatprep.subr.mxu0 0.0
    %8323 = vmatpush1.xpose.msra.mxu0 0.0
    %8324 = vmatprep.subr.mxu0 0.0
    %8325 = vmatpush1.xpose.msra.mxu0 0.0
    %8326 = vmatprep.subr.mxu0 %v288
    %8327 = vmatpush1.xpose.msra.mxu0 %v287
    %8328 = vmatprep.subr.mxu0 0.0
    %8329 = vmatpush2.xpose.msra.mxu0 0.0
    %8330 = vmatprep.subr.mxu0 0.0
    %8331 = vmatpush2.xpose.msra.mxu0 0.0
    %8332 = vmatprep.subr.mxu0 0.0
    %8333 = vmatpush2.xpose.msra.mxu0 0.0
    %8334 = vmatprep.subr.mxu0 0.0
    %8335 = vmatpush2.xpose.msra.mxu0 0.0
    %8336 = vmatprep.subr.mxu0 0.0
    %8337 = vmatpush2.xpose.msra.mxu0 0.0
    %8338 = vmatprep.subr.mxu0 0.0
    %8339 = vmatpush2.xpose.msra.mxu0 0.0
    %8340 = vmatprep.subr.mxu0 0.0
    %8341 = vmatpush2.xpose.msra.mxu0 0.0
    %8342 = vmatprep.subr.mxu0 0.0
    %8343 = vmatpush2.xpose.msra.mxu0 0.0
    %8344 = vmatprep.subr.mxu0 0.0
    %8345 = vmatpush2.xpose.msra.mxu0 0.0
    %8346 = vmatprep.subr.mxu0 0.0
    %8347 = vmatpush2.xpose.msra.mxu0 0.0
    %8348 = vmatprep.subr.mxu0 0.0
    %8349 = vmatpush2.xpose.msra.mxu0 0.0
    %8350 = vmatprep.subr.mxu0 0.0
    %8351 = vmatpush2.xpose.msra.mxu0 0.0
    %8352 = vmatprep.subr.mxu0 0.0
    %8353 = vmatpush2.xpose.msra.mxu0 0.0
    %8354 = vmatprep.subr.mxu0 0.0
    %8355 = vmatpush2.xpose.msra.mxu0 0.0
    %8356 = vmatprep.subr.mxu0 0.0
    %8357 = vmatpush2.xpose.msra.mxu0 0.0
    %8358 = vmatprep.subr.mxu0 0.0
    %8359 = vmatpush2.xpose.msra.mxu0 0.0
    %8360 = vmatprep.mubr.f32.mxu0 %v1201
    %8361 = vmatmul.mubr.f32.gmra.mxu0 %v1199
    %v8362 = vpop.f32.mrf.mxu0
    %v8363 = vadd.f32 %v8293, %v8362
    %v8364 = vpop.f32.mrf.mxu0
    %8365 = vdwg.mxu0
    %8366 = vmatprep.subr.mxu0 0.0
    %8367 = vmatpush1.xpose.msra.mxu0 0.0
    %8368 = vmatprep.subr.mxu0 0.0
    %8369 = vmatpush1.xpose.msra.mxu0 0.0
    %8370 = vmatprep.subr.mxu0 0.0
    %8371 = vmatpush1.xpose.msra.mxu0 0.0
    %8372 = vmatprep.subr.mxu0 0.0
    %8373 = vmatpush1.xpose.msra.mxu0 0.0
    %8374 = vmatprep.subr.mxu0 0.0
    %8375 = vmatpush1.xpose.msra.mxu0 0.0
    %8376 = vmatprep.subr.mxu0 0.0
    %8377 = vmatpush1.xpose.msra.mxu0 0.0
    %8378 = vmatprep.subr.mxu0 0.0
    %8379 = vmatpush1.xpose.msra.mxu0 0.0
    %8380 = vmatprep.subr.mxu0 0.0
    %8381 = vmatpush1.xpose.msra.mxu0 0.0
    %8382 = vmatprep.subr.mxu0 0.0
    %8383 = vmatpush1.xpose.msra.mxu0 0.0
    %8384 = vmatprep.subr.mxu0 0.0
    %8385 = vmatpush1.xpose.msra.mxu0 0.0
    %8386 = vmatprep.subr.mxu0 0.0
    %8387 = vmatpush1.xpose.msra.mxu0 0.0
    %8388 = vmatprep.subr.mxu0 0.0
    %8389 = vmatpush1.xpose.msra.mxu0 0.0
    %8390 = vmatprep.subr.mxu0 0.0
    %8391 = vmatpush1.xpose.msra.mxu0 0.0
    %8392 = vmatprep.subr.mxu0 0.0
    %8393 = vmatpush1.xpose.msra.mxu0 0.0
    %8394 = vmatprep.subr.mxu0 0.0
    %8395 = vmatpush1.xpose.msra.mxu0 0.0
    %8396 = vmatprep.subr.mxu0 %v290
    %8397 = vmatpush1.xpose.msra.mxu0 %v289
    %8398 = vmatprep.subr.mxu0 0.0
    %8399 = vmatpush2.xpose.msra.mxu0 0.0
    %8400 = vmatprep.subr.mxu0 0.0
    %8401 = vmatpush2.xpose.msra.mxu0 0.0
    %8402 = vmatprep.subr.mxu0 0.0
    %8403 = vmatpush2.xpose.msra.mxu0 0.0
    %8404 = vmatprep.subr.mxu0 0.0
    %8405 = vmatpush2.xpose.msra.mxu0 0.0
    %8406 = vmatprep.subr.mxu0 0.0
    %8407 = vmatpush2.xpose.msra.mxu0 0.0
    %8408 = vmatprep.subr.mxu0 0.0
    %8409 = vmatpush2.xpose.msra.mxu0 0.0
    %8410 = vmatprep.subr.mxu0 0.0
    %8411 = vmatpush2.xpose.msra.mxu0 0.0
    %8412 = vmatprep.subr.mxu0 0.0
    %8413 = vmatpush2.xpose.msra.mxu0 0.0
    %8414 = vmatprep.subr.mxu0 0.0
    %8415 = vmatpush2.xpose.msra.mxu0 0.0
    %8416 = vmatprep.subr.mxu0 0.0
    %8417 = vmatpush2.xpose.msra.mxu0 0.0
    %8418 = vmatprep.subr.mxu0 0.0
    %8419 = vmatpush2.xpose.msra.mxu0 0.0
    %8420 = vmatprep.subr.mxu0 0.0
    %8421 = vmatpush2.xpose.msra.mxu0 0.0
    %8422 = vmatprep.subr.mxu0 0.0
    %8423 = vmatpush2.xpose.msra.mxu0 0.0
    %8424 = vmatprep.subr.mxu0 0.0
    %8425 = vmatpush2.xpose.msra.mxu0 0.0
    %8426 = vmatprep.subr.mxu0 0.0
    %8427 = vmatpush2.xpose.msra.mxu0 0.0
    %8428 = vmatprep.subr.mxu0 0.0
    %8429 = vmatpush2.xpose.msra.mxu0 0.0
    %8430 = vmatprep.mubr.f32.mxu0 %v1217
    %8431 = vmatmul.mubr.f32.gmra.mxu0 %v1209
    %v8432 = vpop.f32.mrf.mxu0
    %v8433 = vadd.f32 %v8363, %v8432
    %v8434 = vpop.f32.mrf.mxu0
    %8435 = vdwg.mxu0
    %8436 = vmatprep.subr.mxu0 0.0
    %8437 = vmatpush1.xpose.msra.mxu0 0.0
    %8438 = vmatprep.subr.mxu0 0.0
    %8439 = vmatpush1.xpose.msra.mxu0 0.0
    %8440 = vmatprep.subr.mxu0 0.0
    %8441 = vmatpush1.xpose.msra.mxu0 0.0
    %8442 = vmatprep.subr.mxu0 0.0
    %8443 = vmatpush1.xpose.msra.mxu0 0.0
    %8444 = vmatprep.subr.mxu0 0.0
    %8445 = vmatpush1.xpose.msra.mxu0 0.0
    %8446 = vmatprep.subr.mxu0 0.0
    %8447 = vmatpush1.xpose.msra.mxu0 0.0
    %8448 = vmatprep.subr.mxu0 0.0
    %8449 = vmatpush1.xpose.msra.mxu0 0.0
    %8450 = vmatprep.subr.mxu0 0.0
    %8451 = vmatpush1.xpose.msra.mxu0 0.0
    %8452 = vmatprep.subr.mxu0 0.0
    %8453 = vmatpush1.xpose.msra.mxu0 0.0
    %8454 = vmatprep.subr.mxu0 0.0
    %8455 = vmatpush1.xpose.msra.mxu0 0.0
    %8456 = vmatprep.subr.mxu0 0.0
    %8457 = vmatpush1.xpose.msra.mxu0 0.0
    %8458 = vmatprep.subr.mxu0 0.0
    %8459 = vmatpush1.xpose.msra.mxu0 0.0
    %8460 = vmatprep.subr.mxu0 0.0
    %8461 = vmatpush1.xpose.msra.mxu0 0.0
    %8462 = vmatprep.subr.mxu0 0.0
    %8463 = vmatpush1.xpose.msra.mxu0 0.0
    %8464 = vmatprep.subr.mxu0 0.0
    %8465 = vmatpush1.xpose.msra.mxu0 0.0
    %8466 = vmatprep.subr.mxu0 %v292
    %8467 = vmatpush1.xpose.msra.mxu0 %v291
    %8468 = vmatprep.subr.mxu0 0.0
    %8469 = vmatpush2.xpose.msra.mxu0 0.0
    %8470 = vmatprep.subr.mxu0 0.0
    %8471 = vmatpush2.xpose.msra.mxu0 0.0
    %8472 = vmatprep.subr.mxu0 0.0
    %8473 = vmatpush2.xpose.msra.mxu0 0.0
    %8474 = vmatprep.subr.mxu0 0.0
    %8475 = vmatpush2.xpose.msra.mxu0 0.0
    %8476 = vmatprep.subr.mxu0 0.0
    %8477 = vmatpush2.xpose.msra.mxu0 0.0
    %8478 = vmatprep.subr.mxu0 0.0
    %8479 = vmatpush2.xpose.msra.mxu0 0.0
    %8480 = vmatprep.subr.mxu0 0.0
    %8481 = vmatpush2.xpose.msra.mxu0 0.0
    %8482 = vmatprep.subr.mxu0 0.0
    %8483 = vmatpush2.xpose.msra.mxu0 0.0
    %8484 = vmatprep.subr.mxu0 0.0
    %8485 = vmatpush2.xpose.msra.mxu0 0.0
    %8486 = vmatprep.subr.mxu0 0.0
    %8487 = vmatpush2.xpose.msra.mxu0 0.0
    %8488 = vmatprep.subr.mxu0 0.0
    %8489 = vmatpush2.xpose.msra.mxu0 0.0
    %8490 = vmatprep.subr.mxu0 0.0
    %8491 = vmatpush2.xpose.msra.mxu0 0.0
    %8492 = vmatprep.subr.mxu0 0.0
    %8493 = vmatpush2.xpose.msra.mxu0 0.0
    %8494 = vmatprep.subr.mxu0 0.0
    %8495 = vmatpush2.xpose.msra.mxu0 0.0
    %8496 = vmatprep.subr.mxu0 0.0
    %8497 = vmatpush2.xpose.msra.mxu0 0.0
    %8498 = vmatprep.subr.mxu0 0.0
    %8499 = vmatpush2.xpose.msra.mxu0 0.0
    %8500 = vmatprep.mubr.f32.mxu0 %v1218
    %8501 = vmatmul.mubr.f32.gmra.mxu0 %v1216
    %v8502 = vpop.f32.mrf.mxu0
    %v8503 = vadd.f32 %v8433, %v8502
    %v8504 = vpop.f32.mrf.mxu0
    %8505 = vdwg.mxu0
    %8506 = vmatprep.subr.mxu0 0.0
    %8507 = vmatpush1.xpose.msra.mxu0 0.0
    %8508 = vmatprep.subr.mxu0 0.0
    %8509 = vmatpush1.xpose.msra.mxu0 0.0
    %8510 = vmatprep.subr.mxu0 0.0
    %8511 = vmatpush1.xpose.msra.mxu0 0.0
    %8512 = vmatprep.subr.mxu0 0.0
    %8513 = vmatpush1.xpose.msra.mxu0 0.0
    %8514 = vmatprep.subr.mxu0 0.0
    %8515 = vmatpush1.xpose.msra.mxu0 0.0
    %8516 = vmatprep.subr.mxu0 0.0
    %8517 = vmatpush1.xpose.msra.mxu0 0.0
    %8518 = vmatprep.subr.mxu0 0.0
    %8519 = vmatpush1.xpose.msra.mxu0 0.0
    %8520 = vmatprep.subr.mxu0 0.0
    %8521 = vmatpush1.xpose.msra.mxu0 0.0
    %8522 = vmatprep.subr.mxu0 0.0
    %8523 = vmatpush1.xpose.msra.mxu0 0.0
    %8524 = vmatprep.subr.mxu0 0.0
    %8525 = vmatpush1.xpose.msra.mxu0 0.0
    %8526 = vmatprep.subr.mxu0 0.0
    %8527 = vmatpush1.xpose.msra.mxu0 0.0
    %8528 = vmatprep.subr.mxu0 0.0
    %8529 = vmatpush1.xpose.msra.mxu0 0.0
    %8530 = vmatprep.subr.mxu0 0.0
    %8531 = vmatpush1.xpose.msra.mxu0 0.0
    %8532 = vmatprep.subr.mxu0 0.0
    %8533 = vmatpush1.xpose.msra.mxu0 0.0
    %8534 = vmatprep.subr.mxu0 0.0
    %8535 = vmatpush1.xpose.msra.mxu0 0.0
    %8536 = vmatprep.subr.mxu0 %v294
    %8537 = vmatpush1.xpose.msra.mxu0 %v293
    %8538 = vmatprep.subr.mxu0 0.0
    %8539 = vmatpush2.xpose.msra.mxu0 0.0
    %8540 = vmatprep.subr.mxu0 0.0
    %8541 = vmatpush2.xpose.msra.mxu0 0.0
    %8542 = vmatprep.subr.mxu0 0.0
    %8543 = vmatpush2.xpose.msra.mxu0 0.0
    %8544 = vmatprep.subr.mxu0 0.0
    %8545 = vmatpush2.xpose.msra.mxu0 0.0
    %8546 = vmatprep.subr.mxu0 0.0
    %8547 = vmatpush2.xpose.msra.mxu0 0.0
    %8548 = vmatprep.subr.mxu0 0.0
    %8549 = vmatpush2.xpose.msra.mxu0 0.0
    %8550 = vmatprep.subr.mxu0 0.0
    %8551 = vmatpush2.xpose.msra.mxu0 0.0
    %8552 = vmatprep.subr.mxu0 0.0
    %8553 = vmatpush2.xpose.msra.mxu0 0.0
    %8554 = vmatprep.subr.mxu0 0.0
    %8555 = vmatpush2.xpose.msra.mxu0 0.0
    %8556 = vmatprep.subr.mxu0 0.0
    %8557 = vmatpush2.xpose.msra.mxu0 0.0
    %8558 = vmatprep.subr.mxu0 0.0
    %8559 = vmatpush2.xpose.msra.mxu0 0.0
    %8560 = vmatprep.subr.mxu0 0.0
    %8561 = vmatpush2.xpose.msra.mxu0 0.0
    %8562 = vmatprep.subr.mxu0 0.0
    %8563 = vmatpush2.xpose.msra.mxu0 0.0
    %8564 = vmatprep.subr.mxu0 0.0
    %8565 = vmatpush2.xpose.msra.mxu0 0.0
    %8566 = vmatprep.subr.mxu0 0.0
    %8567 = vmatpush2.xpose.msra.mxu0 0.0
    %8568 = vmatprep.subr.mxu0 0.0
    %8569 = vmatpush2.xpose.msra.mxu0 0.0
    %8570 = vmatprep.mubr.f32.mxu0 %v1234
    %8571 = vmatmul.mubr.f32.gmra.mxu0 %v1226
    %v8572 = vpop.f32.mrf.mxu0
    %v8573 = vadd.f32 %v8503, %v8572
    %v8574 = vpop.f32.mrf.mxu0
    %8575 = vdwg.mxu0
    %8576 = vmatprep.subr.mxu0 0.0
    %8577 = vmatpush1.xpose.msra.mxu0 0.0
    %8578 = vmatprep.subr.mxu0 0.0
    %8579 = vmatpush1.xpose.msra.mxu0 0.0
    %8580 = vmatprep.subr.mxu0 0.0
    %8581 = vmatpush1.xpose.msra.mxu0 0.0
    %8582 = vmatprep.subr.mxu0 0.0
    %8583 = vmatpush1.xpose.msra.mxu0 0.0
    %8584 = vmatprep.subr.mxu0 0.0
    %8585 = vmatpush1.xpose.msra.mxu0 0.0
    %8586 = vmatprep.subr.mxu0 0.0
    %8587 = vmatpush1.xpose.msra.mxu0 0.0
    %8588 = vmatprep.subr.mxu0 0.0
    %8589 = vmatpush1.xpose.msra.mxu0 0.0
    %8590 = vmatprep.subr.mxu0 0.0
    %8591 = vmatpush1.xpose.msra.mxu0 0.0
    %8592 = vmatprep.subr.mxu0 0.0
    %8593 = vmatpush1.xpose.msra.mxu0 0.0
    %8594 = vmatprep.subr.mxu0 0.0
    %8595 = vmatpush1.xpose.msra.mxu0 0.0
    %8596 = vmatprep.subr.mxu0 0.0
    %8597 = vmatpush1.xpose.msra.mxu0 0.0
    %8598 = vmatprep.subr.mxu0 0.0
    %8599 = vmatpush1.xpose.msra.mxu0 0.0
    %8600 = vmatprep.subr.mxu0 0.0
    %8601 = vmatpush1.xpose.msra.mxu0 0.0
    %8602 = vmatprep.subr.mxu0 0.0
    %8603 = vmatpush1.xpose.msra.mxu0 0.0
    %8604 = vmatprep.subr.mxu0 0.0
    %8605 = vmatpush1.xpose.msra.mxu0 0.0
    %8606 = vmatprep.subr.mxu0 %v296
    %8607 = vmatpush1.xpose.msra.mxu0 %v295
    %8608 = vmatprep.subr.mxu0 0.0
    %8609 = vmatpush2.xpose.msra.mxu0 0.0
    %8610 = vmatprep.subr.mxu0 0.0
    %8611 = vmatpush2.xpose.msra.mxu0 0.0
    %8612 = vmatprep.subr.mxu0 0.0
    %8613 = vmatpush2.xpose.msra.mxu0 0.0
    %8614 = vmatprep.subr.mxu0 0.0
    %8615 = vmatpush2.xpose.msra.mxu0 0.0
    %8616 = vmatprep.subr.mxu0 0.0
    %8617 = vmatpush2.xpose.msra.mxu0 0.0
    %8618 = vmatprep.subr.mxu0 0.0
    %8619 = vmatpush2.xpose.msra.mxu0 0.0
    %8620 = vmatprep.subr.mxu0 0.0
    %8621 = vmatpush2.xpose.msra.mxu0 0.0
    %8622 = vmatprep.subr.mxu0 0.0
    %8623 = vmatpush2.xpose.msra.mxu0 0.0
    %8624 = vmatprep.subr.mxu0 0.0
    %8625 = vmatpush2.xpose.msra.mxu0 0.0
    %8626 = vmatprep.subr.mxu0 0.0
    %8627 = vmatpush2.xpose.msra.mxu0 0.0
    %8628 = vmatprep.subr.mxu0 0.0
    %8629 = vmatpush2.xpose.msra.mxu0 0.0
    %8630 = vmatprep.subr.mxu0 0.0
    %8631 = vmatpush2.xpose.msra.mxu0 0.0
    %8632 = vmatprep.subr.mxu0 0.0
    %8633 = vmatpush2.xpose.msra.mxu0 0.0
    %8634 = vmatprep.subr.mxu0 0.0
    %8635 = vmatpush2.xpose.msra.mxu0 0.0
    %8636 = vmatprep.subr.mxu0 0.0
    %8637 = vmatpush2.xpose.msra.mxu0 0.0
    %8638 = vmatprep.subr.mxu0 0.0
    %8639 = vmatpush2.xpose.msra.mxu0 0.0
    %8640 = vmatprep.mubr.f32.mxu0 %v1235
    %8641 = vmatmul.mubr.f32.gmra.mxu0 %v1233
    %v8642 = vpop.f32.mrf.mxu0
    %v8643 = vadd.f32 %v8573, %v8642
    %v8644 = vpop.f32.mrf.mxu0
    %8645 = vdwg.mxu0
    %8646 = vmatprep.subr.mxu0 0.0
    %8647 = vmatpush1.xpose.msra.mxu0 0.0
    %8648 = vmatprep.subr.mxu0 0.0
    %8649 = vmatpush1.xpose.msra.mxu0 0.0
    %8650 = vmatprep.subr.mxu0 0.0
    %8651 = vmatpush1.xpose.msra.mxu0 0.0
    %8652 = vmatprep.subr.mxu0 0.0
    %8653 = vmatpush1.xpose.msra.mxu0 0.0
    %8654 = vmatprep.subr.mxu0 0.0
    %8655 = vmatpush1.xpose.msra.mxu0 0.0
    %8656 = vmatprep.subr.mxu0 0.0
    %8657 = vmatpush1.xpose.msra.mxu0 0.0
    %8658 = vmatprep.subr.mxu0 0.0
    %8659 = vmatpush1.xpose.msra.mxu0 0.0
    %8660 = vmatprep.subr.mxu0 0.0
    %8661 = vmatpush1.xpose.msra.mxu0 0.0
    %8662 = vmatprep.subr.mxu0 0.0
    %8663 = vmatpush1.xpose.msra.mxu0 0.0
    %8664 = vmatprep.subr.mxu0 0.0
    %8665 = vmatpush1.xpose.msra.mxu0 0.0
    %8666 = vmatprep.subr.mxu0 0.0
    %8667 = vmatpush1.xpose.msra.mxu0 0.0
    %8668 = vmatprep.subr.mxu0 0.0
    %8669 = vmatpush1.xpose.msra.mxu0 0.0
    %8670 = vmatprep.subr.mxu0 0.0
    %8671 = vmatpush1.xpose.msra.mxu0 0.0
    %8672 = vmatprep.subr.mxu0 0.0
    %8673 = vmatpush1.xpose.msra.mxu0 0.0
    %8674 = vmatprep.subr.mxu0 0.0
    %8675 = vmatpush1.xpose.msra.mxu0 0.0
    %8676 = vmatprep.subr.mxu0 %v298
    %8677 = vmatpush1.xpose.msra.mxu0 %v297
    %8678 = vmatprep.subr.mxu0 0.0
    %8679 = vmatpush2.xpose.msra.mxu0 0.0
    %8680 = vmatprep.subr.mxu0 0.0
    %8681 = vmatpush2.xpose.msra.mxu0 0.0
    %8682 = vmatprep.subr.mxu0 0.0
    %8683 = vmatpush2.xpose.msra.mxu0 0.0
    %8684 = vmatprep.subr.mxu0 0.0
    %8685 = vmatpush2.xpose.msra.mxu0 0.0
    %8686 = vmatprep.subr.mxu0 0.0
    %8687 = vmatpush2.xpose.msra.mxu0 0.0
    %8688 = vmatprep.subr.mxu0 0.0
    %8689 = vmatpush2.xpose.msra.mxu0 0.0
    %8690 = vmatprep.subr.mxu0 0.0
    %8691 = vmatpush2.xpose.msra.mxu0 0.0
    %8692 = vmatprep.subr.mxu0 0.0
    %8693 = vmatpush2.xpose.msra.mxu0 0.0
    %8694 = vmatprep.subr.mxu0 0.0
    %8695 = vmatpush2.xpose.msra.mxu0 0.0
    %8696 = vmatprep.subr.mxu0 0.0
    %8697 = vmatpush2.xpose.msra.mxu0 0.0
    %8698 = vmatprep.subr.mxu0 0.0
    %8699 = vmatpush2.xpose.msra.mxu0 0.0
    %8700 = vmatprep.subr.mxu0 0.0
    %8701 = vmatpush2.xpose.msra.mxu0 0.0
    %8702 = vmatprep.subr.mxu0 0.0
    %8703 = vmatpush2.xpose.msra.mxu0 0.0
    %8704 = vmatprep.subr.mxu0 0.0
    %8705 = vmatpush2.xpose.msra.mxu0 0.0
    %8706 = vmatprep.subr.mxu0 0.0
    %8707 = vmatpush2.xpose.msra.mxu0 0.0
    %8708 = vmatprep.subr.mxu0 0.0
    %8709 = vmatpush2.xpose.msra.mxu0 0.0
    %8710 = vmatprep.mubr.f32.mxu0 %v1251
    %8711 = vmatmul.mubr.f32.gmra.mxu0 %v1243
    %v8712 = vpop.f32.mrf.mxu0
    %v8713 = vadd.f32 %v8643, %v8712
    %v8714 = vpop.f32.mrf.mxu0
    %8715 = vdwg.mxu0
    %8716 = vmatprep.subr.mxu0 0.0
    %8717 = vmatpush1.xpose.msra.mxu0 0.0
    %8718 = vmatprep.subr.mxu0 0.0
    %8719 = vmatpush1.xpose.msra.mxu0 0.0
    %8720 = vmatprep.subr.mxu0 0.0
    %8721 = vmatpush1.xpose.msra.mxu0 0.0
    %8722 = vmatprep.subr.mxu0 0.0
    %8723 = vmatpush1.xpose.msra.mxu0 0.0
    %8724 = vmatprep.subr.mxu0 0.0
    %8725 = vmatpush1.xpose.msra.mxu0 0.0
    %8726 = vmatprep.subr.mxu0 0.0
    %8727 = vmatpush1.xpose.msra.mxu0 0.0
    %8728 = vmatprep.subr.mxu0 0.0
    %8729 = vmatpush1.xpose.msra.mxu0 0.0
    %8730 = vmatprep.subr.mxu0 0.0
    %8731 = vmatpush1.xpose.msra.mxu0 0.0
    %8732 = vmatprep.subr.mxu0 0.0
    %8733 = vmatpush1.xpose.msra.mxu0 0.0
    %8734 = vmatprep.subr.mxu0 0.0
    %8735 = vmatpush1.xpose.msra.mxu0 0.0
    %8736 = vmatprep.subr.mxu0 0.0
    %8737 = vmatpush1.xpose.msra.mxu0 0.0
    %8738 = vmatprep.subr.mxu0 0.0
    %8739 = vmatpush1.xpose.msra.mxu0 0.0
    %8740 = vmatprep.subr.mxu0 0.0
    %8741 = vmatpush1.xpose.msra.mxu0 0.0
    %8742 = vmatprep.subr.mxu0 0.0
    %8743 = vmatpush1.xpose.msra.mxu0 0.0
    %8744 = vmatprep.subr.mxu0 0.0
    %8745 = vmatpush1.xpose.msra.mxu0 0.0
    %8746 = vmatprep.subr.mxu0 %v300
    %8747 = vmatpush1.xpose.msra.mxu0 %v299
    %8748 = vmatprep.subr.mxu0 0.0
    %8749 = vmatpush2.xpose.msra.mxu0 0.0
    %8750 = vmatprep.subr.mxu0 0.0
    %8751 = vmatpush2.xpose.msra.mxu0 0.0
    %8752 = vmatprep.subr.mxu0 0.0
    %8753 = vmatpush2.xpose.msra.mxu0 0.0
    %8754 = vmatprep.subr.mxu0 0.0
    %8755 = vmatpush2.xpose.msra.mxu0 0.0
    %8756 = vmatprep.subr.mxu0 0.0
    %8757 = vmatpush2.xpose.msra.mxu0 0.0
    %8758 = vmatprep.subr.mxu0 0.0
    %8759 = vmatpush2.xpose.msra.mxu0 0.0
    %8760 = vmatprep.subr.mxu0 0.0
    %8761 = vmatpush2.xpose.msra.mxu0 0.0
    %8762 = vmatprep.subr.mxu0 0.0
    %8763 = vmatpush2.xpose.msra.mxu0 0.0
    %8764 = vmatprep.subr.mxu0 0.0
    %8765 = vmatpush2.xpose.msra.mxu0 0.0
    %8766 = vmatprep.subr.mxu0 0.0
    %8767 = vmatpush2.xpose.msra.mxu0 0.0
    %8768 = vmatprep.subr.mxu0 0.0
    %8769 = vmatpush2.xpose.msra.mxu0 0.0
    %8770 = vmatprep.subr.mxu0 0.0
    %8771 = vmatpush2.xpose.msra.mxu0 0.0
    %8772 = vmatprep.subr.mxu0 0.0
    %8773 = vmatpush2.xpose.msra.mxu0 0.0
    %8774 = vmatprep.subr.mxu0 0.0
    %8775 = vmatpush2.xpose.msra.mxu0 0.0
    %8776 = vmatprep.subr.mxu0 0.0
    %8777 = vmatpush2.xpose.msra.mxu0 0.0
    %8778 = vmatprep.subr.mxu0 0.0
    %8779 = vmatpush2.xpose.msra.mxu0 0.0
    %8780 = vmatprep.mubr.f32.mxu0 %v1252
    %8781 = vmatmul.mubr.f32.gmra.mxu0 %v1250
    %v8782 = vpop.f32.mrf.mxu0
    %v8783 = vadd.f32 %v8713, %v8782
    %v8784 = vpop.f32.mrf.mxu0
    %8785 = vdwg.mxu0
    %8786 = vmatprep.subr.mxu0 0.0
    %8787 = vmatpush1.xpose.msra.mxu0 0.0
    %8788 = vmatprep.subr.mxu0 0.0
    %8789 = vmatpush1.xpose.msra.mxu0 0.0
    %8790 = vmatprep.subr.mxu0 0.0
    %8791 = vmatpush1.xpose.msra.mxu0 0.0
    %8792 = vmatprep.subr.mxu0 0.0
    %8793 = vmatpush1.xpose.msra.mxu0 0.0
    %8794 = vmatprep.subr.mxu0 0.0
    %8795 = vmatpush1.xpose.msra.mxu0 0.0
    %8796 = vmatprep.subr.mxu0 0.0
    %8797 = vmatpush1.xpose.msra.mxu0 0.0
    %8798 = vmatprep.subr.mxu0 0.0
    %8799 = vmatpush1.xpose.msra.mxu0 0.0
    %8800 = vmatprep.subr.mxu0 0.0
    %8801 = vmatpush1.xpose.msra.mxu0 0.0
    %8802 = vmatprep.subr.mxu0 0.0
    %8803 = vmatpush1.xpose.msra.mxu0 0.0
    %8804 = vmatprep.subr.mxu0 0.0
    %8805 = vmatpush1.xpose.msra.mxu0 0.0
    %8806 = vmatprep.subr.mxu0 0.0
    %8807 = vmatpush1.xpose.msra.mxu0 0.0
    %8808 = vmatprep.subr.mxu0 0.0
    %8809 = vmatpush1.xpose.msra.mxu0 0.0
    %8810 = vmatprep.subr.mxu0 0.0
    %8811 = vmatpush1.xpose.msra.mxu0 0.0
    %8812 = vmatprep.subr.mxu0 0.0
    %8813 = vmatpush1.xpose.msra.mxu0 0.0
    %8814 = vmatprep.subr.mxu0 0.0
    %8815 = vmatpush1.xpose.msra.mxu0 0.0
    %8816 = vmatprep.subr.mxu0 %v302
    %8817 = vmatpush1.xpose.msra.mxu0 %v301
    %8818 = vmatprep.subr.mxu0 0.0
    %8819 = vmatpush2.xpose.msra.mxu0 0.0
    %8820 = vmatprep.subr.mxu0 0.0
    %8821 = vmatpush2.xpose.msra.mxu0 0.0
    %8822 = vmatprep.subr.mxu0 0.0
    %8823 = vmatpush2.xpose.msra.mxu0 0.0
    %8824 = vmatprep.subr.mxu0 0.0
    %8825 = vmatpush2.xpose.msra.mxu0 0.0
    %8826 = vmatprep.subr.mxu0 0.0
    %8827 = vmatpush2.xpose.msra.mxu0 0.0
    %8828 = vmatprep.subr.mxu0 0.0
    %8829 = vmatpush2.xpose.msra.mxu0 0.0
    %8830 = vmatprep.subr.mxu0 0.0
    %8831 = vmatpush2.xpose.msra.mxu0 0.0
    %8832 = vmatprep.subr.mxu0 0.0
    %8833 = vmatpush2.xpose.msra.mxu0 0.0
    %8834 = vmatprep.subr.mxu0 0.0
    %8835 = vmatpush2.xpose.msra.mxu0 0.0
    %8836 = vmatprep.subr.mxu0 0.0
    %8837 = vmatpush2.xpose.msra.mxu0 0.0
    %8838 = vmatprep.subr.mxu0 0.0
    %8839 = vmatpush2.xpose.msra.mxu0 0.0
    %8840 = vmatprep.subr.mxu0 0.0
    %8841 = vmatpush2.xpose.msra.mxu0 0.0
    %8842 = vmatprep.subr.mxu0 0.0
    %8843 = vmatpush2.xpose.msra.mxu0 0.0
    %8844 = vmatprep.subr.mxu0 0.0
    %8845 = vmatpush2.xpose.msra.mxu0 0.0
    %8846 = vmatprep.subr.mxu0 0.0
    %8847 = vmatpush2.xpose.msra.mxu0 0.0
    %8848 = vmatprep.subr.mxu0 0.0
    %8849 = vmatpush2.xpose.msra.mxu0 0.0
    %8850 = vmatprep.mubr.f32.mxu0 %v1268
    %8851 = vmatmul.mubr.f32.gmra.mxu0 %v1260
    %v8852 = vpop.f32.mrf.mxu0
    %v8853 = vadd.f32 %v8783, %v8852
    %v8854 = vpop.f32.mrf.mxu0
    %8855 = vdwg.mxu0
    %8856 = vmatprep.subr.mxu0 0.0
    %8857 = vmatpush1.xpose.msra.mxu0 0.0
    %8858 = vmatprep.subr.mxu0 0.0
    %8859 = vmatpush1.xpose.msra.mxu0 0.0
    %8860 = vmatprep.subr.mxu0 0.0
    %8861 = vmatpush1.xpose.msra.mxu0 0.0
    %8862 = vmatprep.subr.mxu0 0.0
    %8863 = vmatpush1.xpose.msra.mxu0 0.0
    %8864 = vmatprep.subr.mxu0 0.0
    %8865 = vmatpush1.xpose.msra.mxu0 0.0
    %8866 = vmatprep.subr.mxu0 0.0
    %8867 = vmatpush1.xpose.msra.mxu0 0.0
    %8868 = vmatprep.subr.mxu0 0.0
    %8869 = vmatpush1.xpose.msra.mxu0 0.0
    %8870 = vmatprep.subr.mxu0 0.0
    %8871 = vmatpush1.xpose.msra.mxu0 0.0
    %8872 = vmatprep.subr.mxu0 0.0
    %8873 = vmatpush1.xpose.msra.mxu0 0.0
    %8874 = vmatprep.subr.mxu0 0.0
    %8875 = vmatpush1.xpose.msra.mxu0 0.0
    %8876 = vmatprep.subr.mxu0 0.0
    %8877 = vmatpush1.xpose.msra.mxu0 0.0
    %8878 = vmatprep.subr.mxu0 0.0
    %8879 = vmatpush1.xpose.msra.mxu0 0.0
    %8880 = vmatprep.subr.mxu0 0.0
    %8881 = vmatpush1.xpose.msra.mxu0 0.0
    %8882 = vmatprep.subr.mxu0 0.0
    %8883 = vmatpush1.xpose.msra.mxu0 0.0
    %8884 = vmatprep.subr.mxu0 0.0
    %8885 = vmatpush1.xpose.msra.mxu0 0.0
    %8886 = vmatprep.subr.mxu0 %v304
    %8887 = vmatpush1.xpose.msra.mxu0 %v303
    %8888 = vmatprep.subr.mxu0 0.0
    %8889 = vmatpush2.xpose.msra.mxu0 0.0
    %8890 = vmatprep.subr.mxu0 0.0
    %8891 = vmatpush2.xpose.msra.mxu0 0.0
    %8892 = vmatprep.subr.mxu0 0.0
    %8893 = vmatpush2.xpose.msra.mxu0 0.0
    %8894 = vmatprep.subr.mxu0 0.0
    %8895 = vmatpush2.xpose.msra.mxu0 0.0
    %8896 = vmatprep.subr.mxu0 0.0
    %8897 = vmatpush2.xpose.msra.mxu0 0.0
    %8898 = vmatprep.subr.mxu0 0.0
    %8899 = vmatpush2.xpose.msra.mxu0 0.0
    %8900 = vmatprep.subr.mxu0 0.0
    %8901 = vmatpush2.xpose.msra.mxu0 0.0
    %8902 = vmatprep.subr.mxu0 0.0
    %8903 = vmatpush2.xpose.msra.mxu0 0.0
    %8904 = vmatprep.subr.mxu0 0.0
    %8905 = vmatpush2.xpose.msra.mxu0 0.0
    %8906 = vmatprep.subr.mxu0 0.0
    %8907 = vmatpush2.xpose.msra.mxu0 0.0
    %8908 = vmatprep.subr.mxu0 0.0
    %8909 = vmatpush2.xpose.msra.mxu0 0.0
    %8910 = vmatprep.subr.mxu0 0.0
    %8911 = vmatpush2.xpose.msra.mxu0 0.0
    %8912 = vmatprep.subr.mxu0 0.0
    %8913 = vmatpush2.xpose.msra.mxu0 0.0
    %8914 = vmatprep.subr.mxu0 0.0
    %8915 = vmatpush2.xpose.msra.mxu0 0.0
    %8916 = vmatprep.subr.mxu0 0.0
    %8917 = vmatpush2.xpose.msra.mxu0 0.0
    %8918 = vmatprep.subr.mxu0 0.0
    %8919 = vmatpush2.xpose.msra.mxu0 0.0
    %8920 = vmatprep.mubr.f32.mxu0 %v1269
    %8921 = vmatmul.mubr.f32.gmra.mxu0 %v1267
    %v8922 = vpop.f32.mrf.mxu0
    %v8923 = vadd.f32 %v8853, %v8922
    %v8924 = vpop.f32.mrf.mxu0
    %8925 = vdwg.mxu0
    %8926 = vmatprep.subr.mxu0 0.0
    %8927 = vmatpush1.xpose.msra.mxu0 0.0
    %8928 = vmatprep.subr.mxu0 0.0
    %8929 = vmatpush1.xpose.msra.mxu0 0.0
    %8930 = vmatprep.subr.mxu0 0.0
    %8931 = vmatpush1.xpose.msra.mxu0 0.0
    %8932 = vmatprep.subr.mxu0 0.0
    %8933 = vmatpush1.xpose.msra.mxu0 0.0
    %8934 = vmatprep.subr.mxu0 0.0
    %8935 = vmatpush1.xpose.msra.mxu0 0.0
    %8936 = vmatprep.subr.mxu0 0.0
    %8937 = vmatpush1.xpose.msra.mxu0 0.0
    %8938 = vmatprep.subr.mxu0 0.0
    %8939 = vmatpush1.xpose.msra.mxu0 0.0
    %8940 = vmatprep.subr.mxu0 0.0
    %8941 = vmatpush1.xpose.msra.mxu0 0.0
    %8942 = vmatprep.subr.mxu0 0.0
    %8943 = vmatpush1.xpose.msra.mxu0 0.0
    %8944 = vmatprep.subr.mxu0 0.0
    %8945 = vmatpush1.xpose.msra.mxu0 0.0
    %8946 = vmatprep.subr.mxu0 0.0
    %8947 = vmatpush1.xpose.msra.mxu0 0.0
    %8948 = vmatprep.subr.mxu0 0.0
    %8949 = vmatpush1.xpose.msra.mxu0 0.0
    %8950 = vmatprep.subr.mxu0 0.0
    %8951 = vmatpush1.xpose.msra.mxu0 0.0
    %8952 = vmatprep.subr.mxu0 0.0
    %8953 = vmatpush1.xpose.msra.mxu0 0.0
    %8954 = vmatprep.subr.mxu0 0.0
    %8955 = vmatpush1.xpose.msra.mxu0 0.0
    %8956 = vmatprep.subr.mxu0 %v306
    %8957 = vmatpush1.xpose.msra.mxu0 %v305
    %8958 = vmatprep.subr.mxu0 0.0
    %8959 = vmatpush2.xpose.msra.mxu0 0.0
    %8960 = vmatprep.subr.mxu0 0.0
    %8961 = vmatpush2.xpose.msra.mxu0 0.0
    %8962 = vmatprep.subr.mxu0 0.0
    %8963 = vmatpush2.xpose.msra.mxu0 0.0
    %8964 = vmatprep.subr.mxu0 0.0
    %8965 = vmatpush2.xpose.msra.mxu0 0.0
    %8966 = vmatprep.subr.mxu0 0.0
    %8967 = vmatpush2.xpose.msra.mxu0 0.0
    %8968 = vmatprep.subr.mxu0 0.0
    %8969 = vmatpush2.xpose.msra.mxu0 0.0
    %8970 = vmatprep.subr.mxu0 0.0
    %8971 = vmatpush2.xpose.msra.mxu0 0.0
    %8972 = vmatprep.subr.mxu0 0.0
    %8973 = vmatpush2.xpose.msra.mxu0 0.0
    %8974 = vmatprep.subr.mxu0 0.0
    %8975 = vmatpush2.xpose.msra.mxu0 0.0
    %8976 = vmatprep.subr.mxu0 0.0
    %8977 = vmatpush2.xpose.msra.mxu0 0.0
    %8978 = vmatprep.subr.mxu0 0.0
    %8979 = vmatpush2.xpose.msra.mxu0 0.0
    %8980 = vmatprep.subr.mxu0 0.0
    %8981 = vmatpush2.xpose.msra.mxu0 0.0
    %8982 = vmatprep.subr.mxu0 0.0
    %8983 = vmatpush2.xpose.msra.mxu0 0.0
    %8984 = vmatprep.subr.mxu0 0.0
    %8985 = vmatpush2.xpose.msra.mxu0 0.0
    %8986 = vmatprep.subr.mxu0 0.0
    %8987 = vmatpush2.xpose.msra.mxu0 0.0
    %8988 = vmatprep.subr.mxu0 0.0
    %8989 = vmatpush2.xpose.msra.mxu0 0.0
    %8990 = vmatprep.mubr.f32.mxu0 %v1285
    %8991 = vmatmul.mubr.f32.gmra.mxu0 %v1277
    %v8992 = vpop.f32.mrf.mxu0
    %v8993 = vadd.f32 %v8923, %v8992
    %v8994 = vpop.f32.mrf.mxu0
    %8995 = vdwg.mxu0
    %8996 = vmatprep.subr.mxu0 0.0
    %8997 = vmatpush1.xpose.msra.mxu0 0.0
    %8998 = vmatprep.subr.mxu0 0.0
    %8999 = vmatpush1.xpose.msra.mxu0 0.0
    %9000 = vmatprep.subr.mxu0 0.0
    %9001 = vmatpush1.xpose.msra.mxu0 0.0
    %9002 = vmatprep.subr.mxu0 0.0
    %9003 = vmatpush1.xpose.msra.mxu0 0.0
    %9004 = vmatprep.subr.mxu0 0.0
    %9005 = vmatpush1.xpose.msra.mxu0 0.0
    %9006 = vmatprep.subr.mxu0 0.0
    %9007 = vmatpush1.xpose.msra.mxu0 0.0
    %9008 = vmatprep.subr.mxu0 0.0
    %9009 = vmatpush1.xpose.msra.mxu0 0.0
    %9010 = vmatprep.subr.mxu0 0.0
    %9011 = vmatpush1.xpose.msra.mxu0 0.0
    %9012 = vmatprep.subr.mxu0 0.0
    %9013 = vmatpush1.xpose.msra.mxu0 0.0
    %9014 = vmatprep.subr.mxu0 0.0
    %9015 = vmatpush1.xpose.msra.mxu0 0.0
    %9016 = vmatprep.subr.mxu0 0.0
    %9017 = vmatpush1.xpose.msra.mxu0 0.0
    %9018 = vmatprep.subr.mxu0 0.0
    %9019 = vmatpush1.xpose.msra.mxu0 0.0
    %9020 = vmatprep.subr.mxu0 0.0
    %9021 = vmatpush1.xpose.msra.mxu0 0.0
    %9022 = vmatprep.subr.mxu0 0.0
    %9023 = vmatpush1.xpose.msra.mxu0 0.0
    %9024 = vmatprep.subr.mxu0 0.0
    %9025 = vmatpush1.xpose.msra.mxu0 0.0
    %9026 = vmatprep.subr.mxu0 0.0
    %9027 = vmatpush1.xpose.msra.mxu0 %v1504
    %9028 = vmatprep.subr.mxu0 0.0
    %9029 = vmatpush2.xpose.msra.mxu0 0.0
    %9030 = vmatprep.subr.mxu0 0.0
    %9031 = vmatpush2.xpose.msra.mxu0 0.0
    %9032 = vmatprep.subr.mxu0 0.0
    %9033 = vmatpush2.xpose.msra.mxu0 0.0
    %9034 = vmatprep.subr.mxu0 0.0
    %9035 = vmatpush2.xpose.msra.mxu0 0.0
    %9036 = vmatprep.subr.mxu0 0.0
    %9037 = vmatpush2.xpose.msra.mxu0 0.0
    %9038 = vmatprep.subr.mxu0 0.0
    %9039 = vmatpush2.xpose.msra.mxu0 0.0
    %9040 = vmatprep.subr.mxu0 0.0
    %9041 = vmatpush2.xpose.msra.mxu0 0.0
    %9042 = vmatprep.subr.mxu0 0.0
    %9043 = vmatpush2.xpose.msra.mxu0 0.0
    %9044 = vmatprep.subr.mxu0 0.0
    %9045 = vmatpush2.xpose.msra.mxu0 0.0
    %9046 = vmatprep.subr.mxu0 0.0
    %9047 = vmatpush2.xpose.msra.mxu0 0.0
    %9048 = vmatprep.subr.mxu0 0.0
    %9049 = vmatpush2.xpose.msra.mxu0 0.0
    %9050 = vmatprep.subr.mxu0 0.0
    %9051 = vmatpush2.xpose.msra.mxu0 0.0
    %9052 = vmatprep.subr.mxu0 0.0
    %9053 = vmatpush2.xpose.msra.mxu0 0.0
    %9054 = vmatprep.subr.mxu0 0.0
    %9055 = vmatpush2.xpose.msra.mxu0 0.0
    %9056 = vmatprep.subr.mxu0 0.0
    %9057 = vmatpush2.xpose.msra.mxu0 0.0
    %9058 = vmatprep.subr.mxu0 0.0
    %9059 = vmatpush2.xpose.msra.mxu0 0.0
    %9060 = vmatprep.mubr.f32.mxu0 0.0
    %9061 = vmatmul.mubr.f32.gmra.mxu0 %v1501
    %v9062 = vpop.f32.mrf.mxu0
    %v9063 = vadd.f32 %v8993, %v9062
    %v9064 = vpop.f32.mrf.mxu0
    %9065 = vdwg.mxu0
    %vm9066 = vcmask 33792
    %9067 = vst.msk [vmem:[#allocation7] sm:$0x3] %vm9066, %v9063
    // Predicated region
    $region22: #{tpu_custom_call.1} parent=1 // pred_check
      _
    $region23: #{tpu_custom_call.1} parent=1 // pred_check_branch
      %9069 = sbr.rel (0) target = $region25
    $region24: #{tpu_custom_call.1} parent=1 // pred_region
      %s9071 = ssub.s32 32, 32
      %9072 = vsyncadd [#allocation4], %s9071
      %s9074 = sshll.u32 [#allocation7], 4
      %s9075 = int_to_ptr.vmem [resolvable:$true] %s9074
      %9077 = dma.vmem_to_hbm [thread:$0]  %s9075, 32, %s3, [#allocation4]
    $region25: #{tpu_custom_call.1} parent=1 // pred_fallthru
      _
    // Predicated region
    $region26: #{tpu_custom_call.1} parent=1 // pred_check
      _
    $region27: #{tpu_custom_call.1} parent=1 // pred_check_branch
      %9079 = sbr.rel (0) target = $region29
    $region28: #{tpu_custom_call.1} parent=1 // pred_region
      %9080 = dma.done [#allocation4], 32
    $region29: #{tpu_custom_call.1} parent=1 // pred_fallthru
      _
    %9081 = vsyncpa [#allocation3], 1
    %9082 = vsyncpa [#allocation6], 1
    %9083 = vsyncpa [#allocation4], 1

</llo_original>
